<compile_context>
chip_gen: v5e
topology: v5e:2x2
jax: 0.10.0
libtpu: 0.0.40
codegen_flags: <defaults>
</compile_context>

<pallas_src>
import jax
import jax.numpy as jnp
import numpy as np
from jax import lax
from jax.experimental import pallas as pl
from jax.experimental.pallas import tpu as pltpu

# ---------------------------------------------------------------- shapes ----
H_IN, W_IN = 120, 172
C1_OUT, K1 = 8, 3
C2_OUT, C2_IN, K2 = 4, 8, 2
H1, W1 = H_IN - K1 + 1, W_IN - K1 + 1        # 118, 170
H1P, W1P = H1 // 2, W1 // 2                  # 59, 85
H2, W2 = H1P - K2 + 1, W1P - K2 + 1          # 58, 84
H2P, W2P = H2 // 2, W2 // 2                  # 29, 42
FLAT = C2_OUT * H2P * W2P                    # 4872 == 4 * 29 * 42
FC1_OUT = 128
FC2_OUT = 5749
FC2_PAD = 6144                               # 48 * 128 (lane-dense stores)
TN = 3072                                    # fc2 N-tile (24 * 128), 2 tiles

TAPS2 = ((0, 0), (0, 1), (1, 0), (1, 1))     # conv2 tap order = di*K2 + dj


# ---------------------------------------------- host-built pool selectors ---
def _make_pool_selectors(h, w):
    """rsel (h/2, h-1) picks even rows; csel (w-1, w/2) picks even cols.
    Combined with a neighbor-max, one matmul per axis implements maxpool2x2."""
    hp, wp = h // 2, w // 2
    rsel = np.zeros((hp, h - 1), np.float32)
    rsel[np.arange(hp), 2 * np.arange(hp)] = 1.0
    csel = np.zeros((w - 1, wp), np.float32)
    csel[2 * np.arange(wp), np.arange(wp)] = 1.0
    return jnp.asarray(rsel), jnp.asarray(csel)


# -------------------------------------------------- fused conv stage kernel -
def conv_stage_kernel(x_ref, rsel1_ref, csel1_ref, rsel2_ref, csel2_ref,
                      w1_ref, b1_ref, w2_ref, b2_ref, o_ref,
                      xs1_ref, xs2_ref):
    # x_ref:  (1, 120, 172) VMEM            o_ref: (1, 4, 29, 42) VMEM
    # w1_ref: (8, 9) SMEM   b1_ref: (8,) SMEM
    # w2_ref: (4, 32) SMEM  b2_ref: (4,) SMEM
    # xs1_ref: (9, 118, 170) VMEM scratch  -- all (di,dj)-shifted conv1 inputs
    # xs2_ref: (8, 4, 58, 84) VMEM scratch -- all (di,dj)-shifted conv2 inputs

    # Hoist ALL 9 shifted conv1 input planes once (9 shifted ref reads total);
    # every tap read inside the channel loop below is then fully aligned.
    for di in range(K1):
        for dj in range(K1):
            xs1_ref[di * K1 + dj] = x_ref[0, di:di + H1, dj:dj + W1]

    # ---- conv1 -> ReLU -> maxpool, one output channel per fori iteration ---
    # (fori_loop bounds vreg live ranges to a single channel's temporaries)
    def conv1_channel(co, carry):
        acc = w1_ref[co, 0] * xs1_ref[0]
        for t in range(1, K1 * K1):
            acc = acc + w1_ref[co, t] * xs1_ref[t]
        acc = jnp.maximum(acc + b1_ref[co], 0.0)                    # (118,170)
        # 2x2 max-pool: neighbor max (VPU) + 0/1 selection matmuls (idle MXU)
        rm = jnp.maximum(acc[0:H1 - 1, :], acc[1:H1, :])            # (117,170)
        rs = jnp.dot(rsel1_ref[...], rm,
                     preferred_element_type=jnp.float32)            # (59, 170)
        cm = jnp.maximum(rs[:, 0:W1 - 1], rs[:, 1:W1])              # (59, 169)
        pooled = jnp.dot(cm, csel1_ref[...],
                         preferred_element_type=jnp.float32)        # (59, 85)
        # store the 4 (di,dj)-shifted views conv2 needs (aligned reads later)
        for t, (di, dj) in enumerate(TAPS2):
            xs2_ref[co, t] = pooled[di:di + H2, dj:dj + W2]
        return carry

    lax.fori_loop(0, C1_OUT, conv1_channel, 0)

    # ---- conv2 -> ReLU -> maxpool, one output channel per fori iteration ---
    def conv2_channel(co, carry):
        acc = w2_ref[co, 0] * xs2_ref[0, 0]
        for ci in range(C2_IN):
            for t in range(K2 * K2):
                if ci == 0 and t == 0:
                    continue
                acc = acc + w2_ref[co, ci * (K2 * K2) + t] * xs2_ref[ci, t]
        acc = jnp.maximum(acc + b2_ref[co], 0.0)                    # (58, 84)
        rm = jnp.maximum(acc[0:H2 - 1, :], acc[1:H2, :])            # (57, 84)
        rs = jnp.dot(rsel2_ref[...], rm,
                     preferred_element_type=jnp.float32)            # (29, 84)
        cm = jnp.maximum(rs[:, 0:W2 - 1], rs[:, 1:W2])              # (29, 83)
        o_ref[0, co] = jnp.dot(cm, csel2_ref[...],
                               preferred_element_type=jnp.float32)  # (29, 42)
        return carry

    lax.fori_loop(0, C2_OUT, conv2_channel, 0)


# ------------------------------------------------------------- MLP kernel ---
def mlp_kernel(x_ref, w1_ref, b1_ref, w2_ref, b2_ref, o_ref, h_ref):
    # grid = (M tiles [parallel], 2 fc2 N tiles [arbitrary])
    # x_ref: (TM, 4872) f32   w1_ref: (4872, 128) bf16  b1_ref: (1, 128) f32
    # w2_ref: (128, TN) bf16  b2_ref: (1, TN) f32        o_ref: (TM, TN) f32
    # h_ref:  (TM, 128) f32 VMEM scratch -- fc1 output, computed once per M tile
    @pl.when(pl.program_id(1) == 0)
    def _():
        xb = x_ref[...].astype(jnp.bfloat16)
        h = jnp.dot(xb, w1_ref[...], preferred_element_type=jnp.float32)
        h_ref[...] = jnp.maximum(h + b1_ref[...], 0.0)

    y = jnp.dot(h_ref[...].astype(jnp.bfloat16), w2_ref[...],
                preferred_element_type=jnp.float32)
    o_ref[...] = jnp.maximum(y + b2_ref[...], 0.0)


# ------------------------------------------------------------- wrappers -----
def conv_stage(x3, rsel1, csel1, rsel2, csel2, w1_flat, b1, w2_flat, b2):
    B = x3.shape[0]
    return pl.pallas_call(
        conv_stage_kernel,
        out_shape=jax.ShapeDtypeStruct((B, C2_OUT, H2P, W2P), jnp.float32),
        grid=(B,),
        in_specs=[
            pl.BlockSpec((1, H_IN, W_IN), lambda b: (b, 0, 0)),
            pl.BlockSpec((H1P, H1 - 1), lambda b: (0, 0)),      # rsel1 (59,117)
            pl.BlockSpec((W1 - 1, W1P), lambda b: (0, 0)),      # csel1 (169,85)
            pl.BlockSpec((H2P, H2 - 1), lambda b: (0, 0)),      # rsel2 (29,57)
            pl.BlockSpec((W2 - 1, W2P), lambda b: (0, 0)),      # csel2 (83,42)
            pl.BlockSpec(memory_space=pltpu.MemorySpace.SMEM),  # w1 (8,9)
            pl.BlockSpec(memory_space=pltpu.MemorySpace.SMEM),  # b1 (8,)
            pl.BlockSpec(memory_space=pltpu.MemorySpace.SMEM),  # w2 (4,32)
            pl.BlockSpec(memory_space=pltpu.MemorySpace.SMEM),  # b2 (4,)
        ],
        out_specs=pl.BlockSpec((1, C2_OUT, H2P, W2P), lambda b: (b, 0, 0, 0)),
        scratch_shapes=[
            pltpu.VMEM((K1 * K1, H1, W1), jnp.float32),         # xs1 ~0.72 MiB
            pltpu.VMEM((C2_IN, K2 * K2, H2, W2), jnp.float32),  # xs2 ~0.62 MiB
        ],
        compiler_params=pltpu.CompilerParams(dimension_semantics=("parallel",)),
    )(x3, rsel1, csel1, rsel2, csel2, w1_flat, b1, w2_flat, b2)


def mlp(x_flat, w1_bf, b1, w2_bf_pad, b2_pad):
    B = x_flat.shape[0]
    TM = B if B <= 128 else 128            # batch tiling for large B (v7x VMEM)
    nm = pl.cdiv(B, TM)
    nt = FC2_PAD // TN                     # 2 fc2 N tiles
    return pl.pallas_call(
        mlp_kernel,
        out_shape=jax.ShapeDtypeStruct((B, FC2_PAD), jnp.float32),
        grid=(nm, nt),
        in_specs=[
            pl.BlockSpec((TM, FLAT), lambda i, j: (i, 0)),       # activations
            pl.BlockSpec((FLAT, FC1_OUT), lambda i, j: (0, 0)),  # wf1 (resident)
            pl.BlockSpec((1, FC1_OUT), lambda i, j: (0, 0)),     # bf1
            pl.BlockSpec((FC1_OUT, TN), lambda i, j: (0, j)),    # wf2 N-tile
            pl.BlockSpec((1, TN), lambda i, j: (0, j)),          # bf2 N-tile
        ],
        out_specs=pl.BlockSpec((TM, TN), lambda i, j: (i, j)),
        scratch_shapes=[pltpu.VMEM((TM, FC1_OUT), jnp.float32)],  # fc1 result
        compiler_params=pltpu.CompilerParams(
            dimension_semantics=("parallel", "arbitrary")),
    )(x_flat, w1_bf, b1, w2_bf_pad, b2_pad)


def model_forward(x, p):
    B = x.shape[0]
    x3 = x.reshape(B, H_IN, W_IN)            # squeeze C_in == 1 (glue)
    h2 = conv_stage(x3, p["rsel1"], p["csel1"], p["rsel2"], p["csel2"],
                    p["w1c_flat"], p["b1c"], p["w2c_flat"], p["b2c"])
    flat = h2.reshape(B, FLAT)               # == torch .view(-1, 4872), NCHW order
    out_pad = mlp(flat, p["wf1_bf16"], p["bf1"], p["wf2_pad_bf16"], p["bf2_pad"])
    return out_pad[:, :FC2_OUT]              # drop the fc2 lane padding


# ---------------------------------------------------- deterministic params --
def init_params(key):
    ks = jax.random.split(key, 8)
    w1c = jax.random.normal(ks[0], (C1_OUT, 1, K1, K1), jnp.float32) * 0.2
    b1c = jax.random.normal(ks[1], (C1_OUT,), jnp.float32) * 0.1
    w2c = jax.random.normal(ks[2], (C2_OUT, C2_IN, K2, K2), jnp.float32) * 0.1
    b2c = jax.random.normal(ks[3], (C2_OUT,), jnp.float32) * 0.1
    wf1 = jax.random.normal(ks[4], (FLAT, FC1_OUT), jnp.float32) * 0.02
    bf1 = jax.random.normal(ks[5], (FC1_OUT,), jnp.float32) * 0.02
    wf2 = jax.random.normal(ks[6], (FC1_OUT, FC2_OUT), jnp.float32) * 0.05
    bf2 = jax.random.normal(ks[7], (FC2_OUT,), jnp.float32) * 0.02

    # fc2 padded to a multiple of 128 lanes; zero pad columns are sliced away.
    wf2_pad = jnp.zeros((FC1_OUT, FC2_PAD), jnp.float32).at[:, :FC2_OUT].set(wf2)
    bf2_pad = jnp.zeros((1, FC2_PAD), jnp.float32).at[:, :FC2_OUT].set(bf2[None, :])

    rsel1, csel1 = _make_pool_selectors(H1, W1)
    rsel2, csel2 = _make_pool_selectors(H2, W2)

    return dict(
        w1c=w1c, w2c=w2c,                                     # OIHW, for reference
        w1c_flat=w1c.reshape(C1_OUT, K1 * K1),                # (co, di*3+dj)
        w2c_flat=w2c.reshape(C2_OUT, C2_IN * K2 * K2),        # (co, ci*4+di*2+dj)
        b1c=b1c, b2c=b2c,
        wf1=wf1, bf1=bf1.reshape(1, FC1_OUT),
        wf2=wf2, bf2=bf2.reshape(1, FC2_OUT),
        wf1_bf16=wf1.astype(jnp.bfloat16),                    # bf16 MXU path
        wf2_pad_bf16=wf2_pad.astype(jnp.bfloat16),            # (precision note)
        bf2_pad=bf2_pad,
        rsel1=rsel1, csel1=csel1, rsel2=rsel2, csel2=csel2,
    )


# ------------------------------------------------------- pure-JAX reference -
def reference_forward(x, p):
    B = x.shape[0]
    dn = ("NCHW", "OIHW", "NCHW")
    y = jax.lax.conv_general_dilated(x, p["w1c"], (1, 1), "VALID", dimension_numbers=dn)
    y = jax.nn.relu(y + p["b1c"][None, :, None, None])
    y = jax.lax.reduce_window(y, -jnp.inf, jax.lax.max, (1, 1, 2, 2), (1, 1, 2, 2), "VALID")
    y = jax.lax.conv_general_dilated(y, p["w2c"], (1, 1), "VALID", dimension_numbers=dn)
    y = jax.nn.relu(y + p["b2c"][None, :, None, None])
    y = jax.lax.reduce_window(y, -jnp.inf, jax.lax.max, (1, 1, 2, 2), (1, 1, 2, 2), "VALID")
    y = y.reshape(B, FLAT)
    y = jax.nn.relu(y @ p["wf1"] + p["bf1"])
    y = jax.nn.relu(y @ p["wf2"] + p["bf2"])
    return y


# ----------------------------------------------------------------- main -----
if __name__ == "__main__":
    key = jax.random.PRNGKey(0)
    kx, kp = jax.random.split(key)
    B = 2
    x = jax.random.normal(kx, (B, 1, H_IN, W_IN), jnp.float32)
    params = init_params(kp)

    fwd = jax.jit(model_forward)
    out = jax.block_until_ready(fwd(x, params))
    assert out.shape == (B, FC2_OUT), out.shape

    ref = jax.block_until_ready(reference_forward(x, params))
    np.testing.assert_allclose(np.asarray(out), np.asarray(ref), rtol=5e-2, atol=5e-2)

    print("KERNEL_OK")
</pallas_src>

<mosaic_0001>
module attributes {stable_mosaic.version = 11 : i64} {
  func.func @conv_stage_kernel(%arg0: i32, %arg1: memref<1x120x172xf32, #tpu.memory_space<vmem>>, %arg2: memref<59x117xf32, #tpu.memory_space<vmem>>, %arg3: memref<169x85xf32, #tpu.memory_space<vmem>>, %arg4: memref<29x57xf32, #tpu.memory_space<vmem>>, %arg5: memref<83x42xf32, #tpu.memory_space<vmem>>, %arg6: memref<8x9xf32, #tpu.memory_space<smem>>, %arg7: memref<8xf32, #tpu.memory_space<smem>>, %arg8: memref<4x32xf32, #tpu.memory_space<smem>>, %arg9: memref<4xf32, #tpu.memory_space<smem>>, %arg10: memref<1x4x29x42xf32, #tpu.memory_space<vmem>>, %arg11: memref<9x118x170xf32, #tpu.memory_space<vmem>>, %arg12: memref<8x4x58x84xf32, #tpu.memory_space<vmem>>) attributes {dimension_semantics = [#tpu.dimension_semantics<parallel>], iteration_bounds = array<i64: 2>, scalar_prefetch = 0 : i64, scratch_operands = 2 : i64, tpu.core_type = #tpu.core_type<tc>, window_params = [{transform_indices = @transform_0, window_bounds = array<i64: 1, 120, 172>}, {pipeline_mode = #tpu.pipeline_mode<synchronous>, transform_indices = @transform_1, window_bounds = array<i64: 59, 117>}, {pipeline_mode = #tpu.pipeline_mode<synchronous>, transform_indices = @transform_2, window_bounds = array<i64: 169, 85>}, {pipeline_mode = #tpu.pipeline_mode<synchronous>, transform_indices = @transform_3, window_bounds = array<i64: 29, 57>}, {pipeline_mode = #tpu.pipeline_mode<synchronous>, transform_indices = @transform_4, window_bounds = array<i64: 83, 42>}, {transform_indices = @transform_5, window_bounds = array<i64: 8, 9>}, {transform_indices = @transform_6, window_bounds = array<i64: 8>}, {transform_indices = @transform_7, window_bounds = array<i64: 4, 32>}, {transform_indices = @transform_8, window_bounds = array<i64: 4>}, {transform_indices = @transform_9, window_bounds = array<i64: 1, 4, 29, 42>}]} {
    %c0 = arith.constant 0 : index
    %c0_0 = arith.constant 0 : index
    %c0_1 = arith.constant 0 : index
    %0 = vector.load %arg1[%c0, %c0_0, %c0_1] : memref<1x120x172xf32, #tpu.memory_space<vmem>>, vector<1x118x170xf32>
    %1 = vector.shape_cast %0 : vector<1x118x170xf32> to vector<118x170xf32>
    %c0_2 = arith.constant 0 : index
    %c0_3 = arith.constant 0 : index
    %c0_4 = arith.constant 0 : index
    %2 = vector.load %arg11[%c0_2, %c0_3, %c0_4] : memref<9x118x170xf32, #tpu.memory_space<vmem>>, vector<1x118x170xf32>
    %3 = vector.shape_cast %2 : vector<1x118x170xf32> to vector<118x170xf32>
    %4 = vector.shape_cast %1 : vector<118x170xf32> to vector<1x118x170xf32>
    tpu.vector_store %arg11[%c0_2, %c0_3, %c0_4], %4 {strides = array<i32>} : memref<9x118x170xf32, #tpu.memory_space<vmem>>, vector<1x118x170xf32>,
    %c0_5 = arith.constant 0 : index
    %c0_6 = arith.constant 0 : index
    %c1 = arith.constant 1 : index
    %5 = vector.load %arg1[%c0_5, %c0_6, %c1] : memref<1x120x172xf32, #tpu.memory_space<vmem>>, vector<1x118x170xf32>
    %6 = vector.shape_cast %5 : vector<1x118x170xf32> to vector<118x170xf32>
    %c1_7 = arith.constant 1 : index
    %c0_8 = arith.constant 0 : index
    %c0_9 = arith.constant 0 : index
    %7 = vector.load %arg11[%c1_7, %c0_8, %c0_9] : memref<9x118x170xf32, #tpu.memory_space<vmem>>, vector<1x118x170xf32>
    %8 = vector.shape_cast %7 : vector<1x118x170xf32> to vector<118x170xf32>
    %9 = vector.shape_cast %6 : vector<118x170xf32> to vector<1x118x170xf32>
    tpu.vector_store %arg11[%c1_7, %c0_8, %c0_9], %9 {strides = array<i32>} : memref<9x118x170xf32, #tpu.memory_space<vmem>>, vector<1x118x170xf32>,
    %c0_10 = arith.constant 0 : index
    %c0_11 = arith.constant 0 : index
    %c2 = arith.constant 2 : index
    %10 = vector.load %arg1[%c0_10, %c0_11, %c2] : memref<1x120x172xf32, #tpu.memory_space<vmem>>, vector<1x118x170xf32>
    %11 = vector.shape_cast %10 : vector<1x118x170xf32> to vector<118x170xf32>
    %c2_12 = arith.constant 2 : index
    %c0_13 = arith.constant 0 : index
    %c0_14 = arith.constant 0 : index
    %12 = vector.load %arg11[%c2_12, %c0_13, %c0_14] : memref<9x118x170xf32, #tpu.memory_space<vmem>>, vector<1x118x170xf32>
    %13 = vector.shape_cast %12 : vector<1x118x170xf32> to vector<118x170xf32>
    %14 = vector.shape_cast %11 : vector<118x170xf32> to vector<1x118x170xf32>
    tpu.vector_store %arg11[%c2_12, %c0_13, %c0_14], %14 {strides = array<i32>} : memref<9x118x170xf32, #tpu.memory_space<vmem>>, vector<1x118x170xf32>,
    %c0_15 = arith.constant 0 : index
    %c1_16 = arith.constant 1 : index
    %c0_17 = arith.constant 0 : index
    %15 = vector.load %arg1[%c0_15, %c1_16, %c0_17] : memref<1x120x172xf32, #tpu.memory_space<vmem>>, vector<1x118x170xf32>
    %16 = vector.shape_cast %15 : vector<1x118x170xf32> to vector<118x170xf32>
    %c3 = arith.constant 3 : index
    %c0_18 = arith.constant 0 : index
    %c0_19 = arith.constant 0 : index
    %17 = vector.load %arg11[%c3, %c0_18, %c0_19] : memref<9x118x170xf32, #tpu.memory_space<vmem>>, vector<1x118x170xf32>
    %18 = vector.shape_cast %17 : vector<1x118x170xf32> to vector<118x170xf32>
    %19 = vector.shape_cast %16 : vector<118x170xf32> to vector<1x118x170xf32>
    tpu.vector_store %arg11[%c3, %c0_18, %c0_19], %19 {strides = array<i32>} : memref<9x118x170xf32, #tpu.memory_space<vmem>>, vector<1x118x170xf32>,
    %c0_20 = arith.constant 0 : index
    %c1_21 = arith.constant 1 : index
    %c1_22 = arith.constant 1 : index
    %20 = vector.load %arg1[%c0_20, %c1_21, %c1_22] : memref<1x120x172xf32, #tpu.memory_space<vmem>>, vector<1x118x170xf32>
    %21 = vector.shape_cast %20 : vector<1x118x170xf32> to vector<118x170xf32>
    %c4 = arith.constant 4 : index
    %c0_23 = arith.constant 0 : index
    %c0_24 = arith.constant 0 : index
    %22 = vector.load %arg11[%c4, %c0_23, %c0_24] : memref<9x118x170xf32, #tpu.memory_space<vmem>>, vector<1x118x170xf32>
    %23 = vector.shape_cast %22 : vector<1x118x170xf32> to vector<118x170xf32>
    %24 = vector.shape_cast %21 : vector<118x170xf32> to vector<1x118x170xf32>
    tpu.vector_store %arg11[%c4, %c0_23, %c0_24], %24 {strides = array<i32>} : memref<9x118x170xf32, #tpu.memory_space<vmem>>, vector<1x118x170xf32>,
    %c0_25 = arith.constant 0 : index
    %c1_26 = arith.constant 1 : index
    %c2_27 = arith.constant 2 : index
    %25 = vector.load %arg1[%c0_25, %c1_26, %c2_27] : memref<1x120x172xf32, #tpu.memory_space<vmem>>, vector<1x118x170xf32>
    %26 = vector.shape_cast %25 : vector<1x118x170xf32> to vector<118x170xf32>
    %c5 = arith.constant 5 : index
    %c0_28 = arith.constant 0 : index
    %c0_29 = arith.constant 0 : index
    %27 = vector.load %arg11[%c5, %c0_28, %c0_29] : memref<9x118x170xf32, #tpu.memory_space<vmem>>, vector<1x118x170xf32>
    %28 = vector.shape_cast %27 : vector<1x118x170xf32> to vector<118x170xf32>
    %29 = vector.shape_cast %26 : vector<118x170xf32> to vector<1x118x170xf32>
    tpu.vector_store %arg11[%c5, %c0_28, %c0_29], %29 {strides = array<i32>} : memref<9x118x170xf32, #tpu.memory_space<vmem>>, vector<1x118x170xf32>,
    %c0_30 = arith.constant 0 : index
    %c2_31 = arith.constant 2 : index
    %c0_32 = arith.constant 0 : index
    %30 = vector.load %arg1[%c0_30, %c2_31, %c0_32] : memref<1x120x172xf32, #tpu.memory_space<vmem>>, vector<1x118x170xf32>
    %31 = vector.shape_cast %30 : vector<1x118x170xf32> to vector<118x170xf32>
    %c6 = arith.constant 6 : index
    %c0_33 = arith.constant 0 : index
    %c0_34 = arith.constant 0 : index
    %32 = vector.load %arg11[%c6, %c0_33, %c0_34] : memref<9x118x170xf32, #tpu.memory_space<vmem>>, vector<1x118x170xf32>
    %33 = vector.shape_cast %32 : vector<1x118x170xf32> to vector<118x170xf32>
    %34 = vector.shape_cast %31 : vector<118x170xf32> to vector<1x118x170xf32>
    tpu.vector_store %arg11[%c6, %c0_33, %c0_34], %34 {strides = array<i32>} : memref<9x118x170xf32, #tpu.memory_space<vmem>>, vector<1x118x170xf32>,
    %c0_35 = arith.constant 0 : index
    %c2_36 = arith.constant 2 : index
    %c1_37 = arith.constant 1 : index
    %35 = vector.load %arg1[%c0_35, %c2_36, %c1_37] : memref<1x120x172xf32, #tpu.memory_space<vmem>>, vector<1x118x170xf32>
    %36 = vector.shape_cast %35 : vector<1x118x170xf32> to vector<118x170xf32>
    %c7 = arith.constant 7 : index
    %c0_38 = arith.constant 0 : index
    %c0_39 = arith.constant 0 : index
    %37 = vector.load %arg11[%c7, %c0_38, %c0_39] : memref<9x118x170xf32, #tpu.memory_space<vmem>>, vector<1x118x170xf32>
    %38 = vector.shape_cast %37 : vector<1x118x170xf32> to vector<118x170xf32>
    %39 = vector.shape_cast %36 : vector<118x170xf32> to vector<1x118x170xf32>
    tpu.vector_store %arg11[%c7, %c0_38, %c0_39], %39 {strides = array<i32>} : memref<9x118x170xf32, #tpu.memory_space<vmem>>, vector<1x118x170xf32>,
    %c0_40 = arith.constant 0 : index
    %c2_41 = arith.constant 2 : index
    %c2_42 = arith.constant 2 : index
    %40 = vector.load %arg1[%c0_40, %c2_41, %c2_42] : memref<1x120x172xf32, #tpu.memory_space<vmem>>, vector<1x118x170xf32>
    %41 = vector.shape_cast %40 : vector<1x118x170xf32> to vector<118x170xf32>
    %c8 = arith.constant 8 : index
    %c0_43 = arith.constant 0 : index
    %c0_44 = arith.constant 0 : index
    %42 = vector.load %arg11[%c8, %c0_43, %c0_44] : memref<9x118x170xf32, #tpu.memory_space<vmem>>, vector<1x118x170xf32>
    %43 = vector.shape_cast %42 : vector<1x118x170xf32> to vector<118x170xf32>
    %44 = vector.shape_cast %41 : vector<118x170xf32> to vector<1x118x170xf32>
    tpu.vector_store %arg11[%c8, %c0_43, %c0_44], %44 {strides = array<i32>} : memref<9x118x170xf32, #tpu.memory_space<vmem>>, vector<1x118x170xf32>,
    %c0_i32 = arith.constant 0 : i32
    %c8_i32 = arith.constant 8 : i32
    %45 = arith.addi %c0_i32, %c8_i32 : i32
    %c1_i32 = arith.constant 1 : i32
    scf.for %arg13 = %c0_i32 to %45 step %c1_i32  : i32 {
      %47 = arith.index_cast %arg13 : i32 to index
      %c0_49 = arith.constant 0 : index
      %48 = memref.load %arg6[%47, %c0_49] : memref<8x9xf32, #tpu.memory_space<smem>>
      %c0_50 = arith.constant 0 : index
      %c0_51 = arith.constant 0 : index
      %c0_52 = arith.constant 0 : index
      %49 = vector.load %arg11[%c0_50, %c0_51, %c0_52] : memref<9x118x170xf32, #tpu.memory_space<vmem>>, vector<1x118x170xf32>
      %50 = vector.shape_cast %49 : vector<1x118x170xf32> to vector<118x170xf32>
      %51 = vector.broadcast %48 : f32 to vector<118x170xf32>
      %52 = arith.mulf %51, %50 : vector<118x170xf32>
      %53 = arith.index_cast %arg13 : i32 to index
      %c1_53 = arith.constant 1 : index
      %54 = memref.load %arg6[%53, %c1_53] : memref<8x9xf32, #tpu.memory_space<smem>>
      %c1_54 = arith.constant 1 : index
      %c0_55 = arith.constant 0 : index
      %c0_56 = arith.constant 0 : index
      %55 = vector.load %arg11[%c1_54, %c0_55, %c0_56] : memref<9x118x170xf32, #tpu.memory_space<vmem>>, vector<1x118x170xf32>
      %56 = vector.shape_cast %55 : vector<1x118x170xf32> to vector<118x170xf32>
      %57 = vector.broadcast %54 : f32 to vector<118x170xf32>
      %58 = arith.mulf %57, %56 : vector<118x170xf32>
      %59 = arith.addf %52, %58 : vector<118x170xf32>
      %60 = arith.index_cast %arg13 : i32 to index
      %c2_57 = arith.constant 2 : index
      %61 = memref.load %arg6[%60, %c2_57] : memref<8x9xf32, #tpu.memory_space<smem>>
      %c2_58 = arith.constant 2 : index
      %c0_59 = arith.constant 0 : index
      %c0_60 = arith.constant 0 : index
      %62 = vector.load %arg11[%c2_58, %c0_59, %c0_60] : memref<9x118x170xf32, #tpu.memory_space<vmem>>, vector<1x118x170xf32>
      %63 = vector.shape_cast %62 : vector<1x118x170xf32> to vector<118x170xf32>
      %64 = vector.broadcast %61 : f32 to vector<118x170xf32>
      %65 = arith.mulf %64, %63 : vector<118x170xf32>
      %66 = arith.addf %59, %65 : vector<118x170xf32>
      %67 = arith.index_cast %arg13 : i32 to index
      %c3_61 = arith.constant 3 : index
      %68 = memref.load %arg6[%67, %c3_61] : memref<8x9xf32, #tpu.memory_space<smem>>
      %c3_62 = arith.constant 3 : index
      %c0_63 = arith.constant 0 : index
      %c0_64 = arith.constant 0 : index
      %69 = vector.load %arg11[%c3_62, %c0_63, %c0_64] : memref<9x118x170xf32, #tpu.memory_space<vmem>>, vector<1x118x170xf32>
      %70 = vector.shape_cast %69 : vector<1x118x170xf32> to vector<118x170xf32>
      %71 = vector.broadcast %68 : f32 to vector<118x170xf32>
      %72 = arith.mulf %71, %70 : vector<118x170xf32>
      %73 = arith.addf %66, %72 : vector<118x170xf32>
      %74 = arith.index_cast %arg13 : i32 to index
      %c4_65 = arith.constant 4 : index
      %75 = memref.load %arg6[%74, %c4_65] : memref<8x9xf32, #tpu.memory_space<smem>>
      %c4_66 = arith.constant 4 : index
      %c0_67 = arith.constant 0 : index
      %c0_68 = arith.constant 0 : index
      %76 = vector.load %arg11[%c4_66, %c0_67, %c0_68] : memref<9x118x170xf32, #tpu.memory_space<vmem>>, vector<1x118x170xf32>
      %77 = vector.shape_cast %76 : vector<1x118x170xf32> to vector<118x170xf32>
      %78 = vector.broadcast %75 : f32 to vector<118x170xf32>
      %79 = arith.mulf %78, %77 : vector<118x170xf32>
      %80 = arith.addf %73, %79 : vector<118x170xf32>
      %81 = arith.index_cast %arg13 : i32 to index
      %c5_69 = arith.constant 5 : index
      %82 = memref.load %arg6[%81, %c5_69] : memref<8x9xf32, #tpu.memory_space<smem>>
      %c5_70 = arith.constant 5 : index
      %c0_71 = arith.constant 0 : index
      %c0_72 = arith.constant 0 : index
      %83 = vector.load %arg11[%c5_70, %c0_71, %c0_72] : memref<9x118x170xf32, #tpu.memory_space<vmem>>, vector<1x118x170xf32>
      %84 = vector.shape_cast %83 : vector<1x118x170xf32> to vector<118x170xf32>
      %85 = vector.broadcast %82 : f32 to vector<118x170xf32>
      %86 = arith.mulf %85, %84 : vector<118x170xf32>
      %87 = arith.addf %80, %86 : vector<118x170xf32>
      %88 = arith.index_cast %arg13 : i32 to index
      %c6_73 = arith.constant 6 : index
      %89 = memref.load %arg6[%88, %c6_73] : memref<8x9xf32, #tpu.memory_space<smem>>
      %c6_74 = arith.constant 6 : index
      %c0_75 = arith.constant 0 : index
      %c0_76 = arith.constant 0 : index
      %90 = vector.load %arg11[%c6_74, %c0_75, %c0_76] : memref<9x118x170xf32, #tpu.memory_space<vmem>>, vector<1x118x170xf32>
      %91 = vector.shape_cast %90 : vector<1x118x170xf32> to vector<118x170xf32>
      %92 = vector.broadcast %89 : f32 to vector<118x170xf32>
      %93 = arith.mulf %92, %91 : vector<118x170xf32>
      %94 = arith.addf %87, %93 : vector<118x170xf32>
      %95 = arith.index_cast %arg13 : i32 to index
      %c7_77 = arith.constant 7 : index
      %96 = memref.load %arg6[%95, %c7_77] : memref<8x9xf32, #tpu.memory_space<smem>>
      %c7_78 = arith.constant 7 : index
      %c0_79 = arith.constant 0 : index
      %c0_80 = arith.constant 0 : index
      %97 = vector.load %arg11[%c7_78, %c0_79, %c0_80] : memref<9x118x170xf32, #tpu.memory_space<vmem>>, vector<1x118x170xf32>
      %98 = vector.shape_cast %97 : vector<1x118x170xf32> to vector<118x170xf32>
      %99 = vector.broadcast %96 : f32 to vector<118x170xf32>
      %100 = arith.mulf %99, %98 : vector<118x170xf32>
      %101 = arith.addf %94, %100 : vector<118x170xf32>
      %102 = arith.index_cast %arg13 : i32 to index
      %c8_81 = arith.constant 8 : index
      %103 = memref.load %arg6[%102, %c8_81] : memref<8x9xf32, #tpu.memory_space<smem>>
      %c8_82 = arith.constant 8 : index
      %c0_83 = arith.constant 0 : index
      %c0_84 = arith.constant 0 : index
      %104 = vector.load %arg11[%c8_82, %c0_83, %c0_84] : memref<9x118x170xf32, #tpu.memory_space<vmem>>, vector<1x118x170xf32>
      %105 = vector.shape_cast %104 : vector<1x118x170xf32> to vector<118x170xf32>
      %106 = vector.broadcast %103 : f32 to vector<118x170xf32>
      %107 = arith.mulf %106, %105 : vector<118x170xf32>
      %108 = arith.addf %101, %107 : vector<118x170xf32>
      %109 = arith.index_cast %arg13 : i32 to index
      %110 = memref.load %arg7[%109] : memref<8xf32, #tpu.memory_space<smem>>
      %111 = vector.broadcast %110 : f32 to vector<118x170xf32>
      %112 = arith.addf %108, %111 : vector<118x170xf32>
      %cst = arith.constant 0.000000e+00 : f32
      %113 = vector.broadcast %cst : f32 to vector<118x170xf32>
      %114 = arith.maximumf %112, %113 : vector<118x170xf32>
      %115 = vector.extract_strided_slice %114 {offsets = [0, 0], sizes = [117, 170], strides = [1, 1]} : vector<118x170xf32> to vector<117x170xf32>
      %116 = vector.extract_strided_slice %114 {offsets = [1, 0], sizes = [117, 170], strides = [1, 1]} : vector<118x170xf32> to vector<117x170xf32>
      %117 = arith.maximumf %115, %116 : vector<117x170xf32>
      %c0_85 = arith.constant 0 : index
      %c0_86 = arith.constant 0 : index
      %118 = vector.load %arg2[%c0_85, %c0_86] : memref<59x117xf32, #tpu.memory_space<vmem>>, vector<59x117xf32>
      %cst_87 = arith.constant dense<0.000000e+00> : vector<59x170xf32>
      %119 = tpu.matmul %118, %117, %cst_87 {dimension_numbers = #tpu.dot_dimension_numbers<[1], [0], [0], [1], [0, 0, 1, 1], [], []>} : vector<59x117xf32>, vector<117x170xf32>, vector<59x170xf32> -> vector<59x170xf32>
      %120 = vector.extract_strided_slice %119 {offsets = [0, 0], sizes = [59, 169], strides = [1, 1]} : vector<59x170xf32> to vector<59x169xf32>
      %121 = vector.extract_strided_slice %119 {offsets = [0, 1], sizes = [59, 169], strides = [1, 1]} : vector<59x170xf32> to vector<59x169xf32>
      %122 = arith.maximumf %120, %121 : vector<59x169xf32>
      %c0_88 = arith.constant 0 : index
      %c0_89 = arith.constant 0 : index
      %123 = vector.load %arg3[%c0_88, %c0_89] : memref<169x85xf32, #tpu.memory_space<vmem>>, vector<169x85xf32>
      %cst_90 = arith.constant dense<0.000000e+00> : vector<59x85xf32>
      %124 = tpu.matmul %122, %123, %cst_90 {dimension_numbers = #tpu.dot_dimension_numbers<[1], [0], [0], [1], [0, 0, 1, 1], [], []>} : vector<59x169xf32>, vector<169x85xf32>, vector<59x85xf32> -> vector<59x85xf32>
      %125 = vector.extract_strided_slice %124 {offsets = [0, 0], sizes = [58, 84], strides = [1, 1]} : vector<59x85xf32> to vector<58x84xf32>
      %126 = arith.index_cast %arg13 : i32 to index
      %c0_91 = arith.constant 0 : index
      %c0_92 = arith.constant 0 : index
      %c0_93 = arith.constant 0 : index
      %127 = vector.load %arg12[%126, %c0_91, %c0_92, %c0_93] : memref<8x4x58x84xf32, #tpu.memory_space<vmem>>, vector<1x1x58x84xf32>
      %128 = vector.shape_cast %127 : vector<1x1x58x84xf32> to vector<58x84xf32>
      %129 = vector.shape_cast %125 : vector<58x84xf32> to vector<1x1x58x84xf32>
      tpu.vector_store %arg12[%126, %c0_91, %c0_92, %c0_93], %129 {strides = array<i32>} : memref<8x4x58x84xf32, #tpu.memory_space<vmem>>, vector<1x1x58x84xf32>,
      %130 = vector.extract_strided_slice %124 {offsets = [0, 1], sizes = [58, 84], strides = [1, 1]} : vector<59x85xf32> to vector<58x84xf32>
      %131 = arith.index_cast %arg13 : i32 to index
      %c1_94 = arith.constant 1 : index
      %c0_95 = arith.constant 0 : index
      %c0_96 = arith.constant 0 : index
      %132 = vector.load %arg12[%131, %c1_94, %c0_95, %c0_96] : memref<8x4x58x84xf32, #tpu.memory_space<vmem>>, vector<1x1x58x84xf32>
      %133 = vector.shape_cast %132 : vector<1x1x58x84xf32> to vector<58x84xf32>
      %134 = vector.shape_cast %130 : vector<58x84xf32> to vector<1x1x58x84xf32>
      tpu.vector_store %arg12[%131, %c1_94, %c0_95, %c0_96], %134 {strides = array<i32>} : memref<8x4x58x84xf32, #tpu.memory_space<vmem>>, vector<1x1x58x84xf32>,
      %135 = vector.extract_strided_slice %124 {offsets = [1, 0], sizes = [58, 84], strides = [1, 1]} : vector<59x85xf32> to vector<58x84xf32>
      %136 = arith.index_cast %arg13 : i32 to index
      %c2_97 = arith.constant 2 : index
      %c0_98 = arith.constant 0 : index
      %c0_99 = arith.constant 0 : index
      %137 = vector.load %arg12[%136, %c2_97, %c0_98, %c0_99] : memref<8x4x58x84xf32, #tpu.memory_space<vmem>>, vector<1x1x58x84xf32>
      %138 = vector.shape_cast %137 : vector<1x1x58x84xf32> to vector<58x84xf32>
      %139 = vector.shape_cast %135 : vector<58x84xf32> to vector<1x1x58x84xf32>
      tpu.vector_store %arg12[%136, %c2_97, %c0_98, %c0_99], %139 {strides = array<i32>} : memref<8x4x58x84xf32, #tpu.memory_space<vmem>>, vector<1x1x58x84xf32>,
      %140 = vector.extract_strided_slice %124 {offsets = [1, 1], sizes = [58, 84], strides = [1, 1]} : vector<59x85xf32> to vector<58x84xf32>
      %141 = arith.index_cast %arg13 : i32 to index
      %c3_100 = arith.constant 3 : index
      %c0_101 = arith.constant 0 : index
      %c0_102 = arith.constant 0 : index
      %142 = vector.load %arg12[%141, %c3_100, %c0_101, %c0_102] : memref<8x4x58x84xf32, #tpu.memory_space<vmem>>, vector<1x1x58x84xf32>
      %143 = vector.shape_cast %142 : vector<1x1x58x84xf32> to vector<58x84xf32>
      %144 = vector.shape_cast %140 : vector<58x84xf32> to vector<1x1x58x84xf32>
      tpu.vector_store %arg12[%141, %c3_100, %c0_101, %c0_102], %144 {strides = array<i32>} : memref<8x4x58x84xf32, #tpu.memory_space<vmem>>, vector<1x1x58x84xf32>,
    }
    %c8_i32_45 = arith.constant 8 : i32
    %c0_i32_46 = arith.constant 0 : i32
    %c4_i32 = arith.constant 4 : i32
    %46 = arith.addi %c0_i32_46, %c4_i32 : i32
    %c1_i32_47 = arith.constant 1 : i32
    scf.for %arg13 = %c0_i32_46 to %46 step %c1_i32_47  : i32 {
      %47 = arith.index_cast %arg13 : i32 to index
      %c0_49 = arith.constant 0 : index
      %48 = memref.load %arg8[%47, %c0_49] : memref<4x32xf32, #tpu.memory_space<smem>>
      %c0_50 = arith.constant 0 : index
      %c0_51 = arith.constant 0 : index
      %c0_52 = arith.constant 0 : index
      %c0_53 = arith.constant 0 : index
      %49 = vector.load %arg12[%c0_50, %c0_51, %c0_52, %c0_53] : memref<8x4x58x84xf32, #tpu.memory_space<vmem>>, vector<1x1x58x84xf32>
      %50 = vector.shape_cast %49 : vector<1x1x58x84xf32> to vector<58x84xf32>
      %51 = vector.broadcast %48 : f32 to vector<58x84xf32>
      %52 = arith.mulf %51, %50 : vector<58x84xf32>
      %53 = arith.index_cast %arg13 : i32 to index
      %c1_54 = arith.constant 1 : index
      %54 = memref.load %arg8[%53, %c1_54] : memref<4x32xf32, #tpu.memory_space<smem>>
      %c0_55 = arith.constant 0 : index
      %c1_56 = arith.constant 1 : index
      %c0_57 = arith.constant 0 : index
      %c0_58 = arith.constant 0 : index
      %55 = vector.load %arg12[%c0_55, %c1_56, %c0_57, %c0_58] : memref<8x4x58x84xf32, #tpu.memory_space<vmem>>, vector<1x1x58x84xf32>
      %56 = vector.shape_cast %55 : vector<1x1x58x84xf32> to vector<58x84xf32>
      %57 = vector.broadcast %54 : f32 to vector<58x84xf32>
      %58 = arith.mulf %57, %56 : vector<58x84xf32>
      %59 = arith.addf %52, %58 : vector<58x84xf32>
      %60 = arith.index_cast %arg13 : i32 to index
      %c2_59 = arith.constant 2 : index
      %61 = memref.load %arg8[%60, %c2_59] : memref<4x32xf32, #tpu.memory_space<smem>>
      %c0_60 = arith.constant 0 : index
      %c2_61 = arith.constant 2 : index
      %c0_62 = arith.constant 0 : index
      %c0_63 = arith.constant 0 : index
      %62 = vector.load %arg12[%c0_60, %c2_61, %c0_62, %c0_63] : memref<8x4x58x84xf32, #tpu.memory_space<vmem>>, vector<1x1x58x84xf32>
      %63 = vector.shape_cast %62 : vector<1x1x58x84xf32> to vector<58x84xf32>
      %64 = vector.broadcast %61 : f32 to vector<58x84xf32>
      %65 = arith.mulf %64, %63 : vector<58x84xf32>
      %66 = arith.addf %59, %65 : vector<58x84xf32>
      %67 = arith.index_cast %arg13 : i32 to index
      %c3_64 = arith.constant 3 : index
      %68 = memref.load %arg8[%67, %c3_64] : memref<4x32xf32, #tpu.memory_space<smem>>
      %c0_65 = arith.constant 0 : index
      %c3_66 = arith.constant 3 : index
      %c0_67 = arith.constant 0 : index
      %c0_68 = arith.constant 0 : index
      %69 = vector.load %arg12[%c0_65, %c3_66, %c0_67, %c0_68] : memref<8x4x58x84xf32, #tpu.memory_space<vmem>>, vector<1x1x58x84xf32>
      %70 = vector.shape_cast %69 : vector<1x1x58x84xf32> to vector<58x84xf32>
      %71 = vector.broadcast %68 : f32 to vector<58x84xf32>
      %72 = arith.mulf %71, %70 : vector<58x84xf32>
      %73 = arith.addf %66, %72 : vector<58x84xf32>
      %74 = arith.index_cast %arg13 : i32 to index
      %c4_69 = arith.constant 4 : index
      %75 = memref.load %arg8[%74, %c4_69] : memref<4x32xf32, #tpu.memory_space<smem>>
      %c1_70 = arith.constant 1 : index
      %c0_71 = arith.constant 0 : index
      %c0_72 = arith.constant 0 : index
      %c0_73 = arith.constant 0 : index
      %76 = vector.load %arg12[%c1_70, %c0_71, %c0_72, %c0_73] : memref<8x4x58x84xf32, #tpu.memory_space<vmem>>, vector<1x1x58x84xf32>
      %77 = vector.shape_cast %76 : vector<1x1x58x84xf32> to vector<58x84xf32>
      %78 = vector.broadcast %75 : f32 to vector<58x84xf32>
      %79 = arith.mulf %78, %77 : vector<58x84xf32>
      %80 = arith.addf %73, %79 : vector<58x84xf32>
      %81 = arith.index_cast %arg13 : i32 to index
      %c5_74 = arith.constant 5 : index
      %82 = memref.load %arg8[%81, %c5_74] : memref<4x32xf32, #tpu.memory_space<smem>>
      %c1_75 = arith.constant 1 : index
      %c1_76 = arith.constant 1 : index
      %c0_77 = arith.constant 0 : index
      %c0_78 = arith.constant 0 : index
      %83 = vector.load %arg12[%c1_75, %c1_76, %c0_77, %c0_78] : memref<8x4x58x84xf32, #tpu.memory_space<vmem>>, vector<1x1x58x84xf32>
      %84 = vector.shape_cast %83 : vector<1x1x58x84xf32> to vector<58x84xf32>
      %85 = vector.broadcast %82 : f32 to vector<58x84xf32>
      %86 = arith.mulf %85, %84 : vector<58x84xf32>
      %87 = arith.addf %80, %86 : vector<58x84xf32>
      %88 = arith.index_cast %arg13 : i32 to index
      %c6_79 = arith.constant 6 : index
      %89 = memref.load %arg8[%88, %c6_79] : memref<4x32xf32, #tpu.memory_space<smem>>
      %c1_80 = arith.constant 1 : index
      %c2_81 = arith.constant 2 : index
      %c0_82 = arith.constant 0 : index
      %c0_83 = arith.constant 0 : index
      %90 = vector.load %arg12[%c1_80, %c2_81, %c0_82, %c0_83] : memref<8x4x58x84xf32, #tpu.memory_space<vmem>>, vector<1x1x58x84xf32>
      %91 = vector.shape_cast %90 : vector<1x1x58x84xf32> to vector<58x84xf32>
      %92 = vector.broadcast %89 : f32 to vector<58x84xf32>
      %93 = arith.mulf %92, %91 : vector<58x84xf32>
      %94 = arith.addf %87, %93 : vector<58x84xf32>
      %95 = arith.index_cast %arg13 : i32 to index
      %c7_84 = arith.constant 7 : index
      %96 = memref.load %arg8[%95, %c7_84] : memref<4x32xf32, #tpu.memory_space<smem>>
      %c1_85 = arith.constant 1 : index
      %c3_86 = arith.constant 3 : index
      %c0_87 = arith.constant 0 : index
      %c0_88 = arith.constant 0 : index
      %97 = vector.load %arg12[%c1_85, %c3_86, %c0_87, %c0_88] : memref<8x4x58x84xf32, #tpu.memory_space<vmem>>, vector<1x1x58x84xf32>
      %98 = vector.shape_cast %97 : vector<1x1x58x84xf32> to vector<58x84xf32>
      %99 = vector.broadcast %96 : f32 to vector<58x84xf32>
      %100 = arith.mulf %99, %98 : vector<58x84xf32>
      %101 = arith.addf %94, %100 : vector<58x84xf32>
      %102 = arith.index_cast %arg13 : i32 to index
      %c8_89 = arith.constant 8 : index
      %103 = memref.load %arg8[%102, %c8_89] : memref<4x32xf32, #tpu.memory_space<smem>>
      %c2_90 = arith.constant 2 : index
      %c0_91 = arith.constant 0 : index
      %c0_92 = arith.constant 0 : index
      %c0_93 = arith.constant 0 : index
      %104 = vector.load %arg12[%c2_90, %c0_91, %c0_92, %c0_93] : memref<8x4x58x84xf32, #tpu.memory_space<vmem>>, vector<1x1x58x84xf32>
      %105 = vector.shape_cast %104 : vector<1x1x58x84xf32> to vector<58x84xf32>
      %106 = vector.broadcast %103 : f32 to vector<58x84xf32>
      %107 = arith.mulf %106, %105 : vector<58x84xf32>
      %108 = arith.addf %101, %107 : vector<58x84xf32>
      %109 = arith.index_cast %arg13 : i32 to index
      %c9 = arith.constant 9 : index
      %110 = memref.load %arg8[%109, %c9] : memref<4x32xf32, #tpu.memory_space<smem>>
      %c2_94 = arith.constant 2 : index
      %c1_95 = arith.constant 1 : index
      %c0_96 = arith.constant 0 : index
      %c0_97 = arith.constant 0 : index
      %111 = vector.load %arg12[%c2_94, %c1_95, %c0_96, %c0_97] : memref<8x4x58x84xf32, #tpu.memory_space<vmem>>, vector<1x1x58x84xf32>
      %112 = vector.shape_cast %111 : vector<1x1x58x84xf32> to vector<58x84xf32>
      %113 = vector.broadcast %110 : f32 to vector<58x84xf32>
      %114 = arith.mulf %113, %112 : vector<58x84xf32>
      %115 = arith.addf %108, %114 : vector<58x84xf32>
      %116 = arith.index_cast %arg13 : i32 to index
      %c10 = arith.constant 10 : index
      %117 = memref.load %arg8[%116, %c10] : memref<4x32xf32, #tpu.memory_space<smem>>
      %c2_98 = arith.constant 2 : index
      %c2_99 = arith.constant 2 : index
      %c0_100 = arith.constant 0 : index
      %c0_101 = arith.constant 0 : index
      %118 = vector.load %arg12[%c2_98, %c2_99, %c0_100, %c0_101] : memref<8x4x58x84xf32, #tpu.memory_space<vmem>>, vector<1x1x58x84xf32>
      %119 = vector.shape_cast %118 : vector<1x1x58x84xf32> to vector<58x84xf32>
      %120 = vector.broadcast %117 : f32 to vector<58x84xf32>
      %121 = arith.mulf %120, %119 : vector<58x84xf32>
      %122 = arith.addf %115, %121 : vector<58x84xf32>
      %123 = arith.index_cast %arg13 : i32 to index
      %c11 = arith.constant 11 : index
      %124 = memref.load %arg8[%123, %c11] : memref<4x32xf32, #tpu.memory_space<smem>>
      %c2_102 = arith.constant 2 : index
      %c3_103 = arith.constant 3 : index
      %c0_104 = arith.constant 0 : index
      %c0_105 = arith.constant 0 : index
      %125 = vector.load %arg12[%c2_102, %c3_103, %c0_104, %c0_105] : memref<8x4x58x84xf32, #tpu.memory_space<vmem>>, vector<1x1x58x84xf32>
      %126 = vector.shape_cast %125 : vector<1x1x58x84xf32> to vector<58x84xf32>
      %127 = vector.broadcast %124 : f32 to vector<58x84xf32>
      %128 = arith.mulf %127, %126 : vector<58x84xf32>
      %129 = arith.addf %122, %128 : vector<58x84xf32>
      %130 = arith.index_cast %arg13 : i32 to index
      %c12 = arith.constant 12 : index
      %131 = memref.load %arg8[%130, %c12] : memref<4x32xf32, #tpu.memory_space<smem>>
      %c3_106 = arith.constant 3 : index
      %c0_107 = arith.constant 0 : index
      %c0_108 = arith.constant 0 : index
      %c0_109 = arith.constant 0 : index
      %132 = vector.load %arg12[%c3_106, %c0_107, %c0_108, %c0_109] : memref<8x4x58x84xf32, #tpu.memory_space<vmem>>, vector<1x1x58x84xf32>
      %133 = vector.shape_cast %132 : vector<1x1x58x84xf32> to vector<58x84xf32>
      %134 = vector.broadcast %131 : f32 to vector<58x84xf32>
      %135 = arith.mulf %134, %133 : vector<58x84xf32>
      %136 = arith.addf %129, %135 : vector<58x84xf32>
      %137 = arith.index_cast %arg13 : i32 to index
      %c13 = arith.constant 13 : index
      %138 = memref.load %arg8[%137, %c13] : memref<4x32xf32, #tpu.memory_space<smem>>
      %c3_110 = arith.constant 3 : index
      %c1_111 = arith.constant 1 : index
      %c0_112 = arith.constant 0 : index
      %c0_113 = arith.constant 0 : index
      %139 = vector.load %arg12[%c3_110, %c1_111, %c0_112, %c0_113] : memref<8x4x58x84xf32, #tpu.memory_space<vmem>>, vector<1x1x58x84xf32>
      %140 = vector.shape_cast %139 : vector<1x1x58x84xf32> to vector<58x84xf32>
      %141 = vector.broadcast %138 : f32 to vector<58x84xf32>
      %142 = arith.mulf %141, %140 : vector<58x84xf32>
      %143 = arith.addf %136, %142 : vector<58x84xf32>
      %144 = arith.index_cast %arg13 : i32 to index
      %c14 = arith.constant 14 : index
      %145 = memref.load %arg8[%144, %c14] : memref<4x32xf32, #tpu.memory_space<smem>>
      %c3_114 = arith.constant 3 : index
      %c2_115 = arith.constant 2 : index
      %c0_116 = arith.constant 0 : index
      %c0_117 = arith.constant 0 : index
      %146 = vector.load %arg12[%c3_114, %c2_115, %c0_116, %c0_117] : memref<8x4x58x84xf32, #tpu.memory_space<vmem>>, vector<1x1x58x84xf32>
      %147 = vector.shape_cast %146 : vector<1x1x58x84xf32> to vector<58x84xf32>
      %148 = vector.broadcast %145 : f32 to vector<58x84xf32>
      %149 = arith.mulf %148, %147 : vector<58x84xf32>
      %150 = arith.addf %143, %149 : vector<58x84xf32>
      %151 = arith.index_cast %arg13 : i32 to index
      %c15 = arith.constant 15 : index
      %152 = memref.load %arg8[%151, %c15] : memref<4x32xf32, #tpu.memory_space<smem>>
      %c3_118 = arith.constant 3 : index
      %c3_119 = arith.constant 3 : index
      %c0_120 = arith.constant 0 : index
      %c0_121 = arith.constant 0 : index
      %153 = vector.load %arg12[%c3_118, %c3_119, %c0_120, %c0_121] : memref<8x4x58x84xf32, #tpu.memory_space<vmem>>, vector<1x1x58x84xf32>
      %154 = vector.shape_cast %153 : vector<1x1x58x84xf32> to vector<58x84xf32>
      %155 = vector.broadcast %152 : f32 to vector<58x84xf32>
      %156 = arith.mulf %155, %154 : vector<58x84xf32>
      %157 = arith.addf %150, %156 : vector<58x84xf32>
      %158 = arith.index_cast %arg13 : i32 to index
      %c16 = arith.constant 16 : index
      %159 = memref.load %arg8[%158, %c16] : memref<4x32xf32, #tpu.memory_space<smem>>
      %c4_122 = arith.constant 4 : index
      %c0_123 = arith.constant 0 : index
      %c0_124 = arith.constant 0 : index
      %c0_125 = arith.constant 0 : index
      %160 = vector.load %arg12[%c4_122, %c0_123, %c0_124, %c0_125] : memref<8x4x58x84xf32, #tpu.memory_space<vmem>>, vector<1x1x58x84xf32>
      %161 = vector.shape_cast %160 : vector<1x1x58x84xf32> to vector<58x84xf32>
      %162 = vector.broadcast %159 : f32 to vector<58x84xf32>
      %163 = arith.mulf %162, %161 : vector<58x84xf32>
      %164 = arith.addf %157, %163 : vector<58x84xf32>
      %165 = arith.index_cast %arg13 : i32 to index
      %c17 = arith.constant 17 : index
      %166 = memref.load %arg8[%165, %c17] : memref<4x32xf32, #tpu.memory_space<smem>>
      %c4_126 = arith.constant 4 : index
      %c1_127 = arith.constant 1 : index
      %c0_128 = arith.constant 0 : index
      %c0_129 = arith.constant 0 : index
      %167 = vector.load %arg12[%c4_126, %c1_127, %c0_128, %c0_129] : memref<8x4x58x84xf32, #tpu.memory_space<vmem>>, vector<1x1x58x84xf32>
      %168 = vector.shape_cast %167 : vector<1x1x58x84xf32> to vector<58x84xf32>
      %169 = vector.broadcast %166 : f32 to vector<58x84xf32>
      %170 = arith.mulf %169, %168 : vector<58x84xf32>
      %171 = arith.addf %164, %170 : vector<58x84xf32>
      %172 = arith.index_cast %arg13 : i32 to index
      %c18 = arith.constant 18 : index
      %173 = memref.load %arg8[%172, %c18] : memref<4x32xf32, #tpu.memory_space<smem>>
      %c4_130 = arith.constant 4 : index
      %c2_131 = arith.constant 2 : index
      %c0_132 = arith.constant 0 : index
      %c0_133 = arith.constant 0 : index
      %174 = vector.load %arg12[%c4_130, %c2_131, %c0_132, %c0_133] : memref<8x4x58x84xf32, #tpu.memory_space<vmem>>, vector<1x1x58x84xf32>
      %175 = vector.shape_cast %174 : vector<1x1x58x84xf32> to vector<58x84xf32>
      %176 = vector.broadcast %173 : f32 to vector<58x84xf32>
      %177 = arith.mulf %176, %175 : vector<58x84xf32>
      %178 = arith.addf %171, %177 : vector<58x84xf32>
      %179 = arith.index_cast %arg13 : i32 to index
      %c19 = arith.constant 19 : index
      %180 = memref.load %arg8[%179, %c19] : memref<4x32xf32, #tpu.memory_space<smem>>
      %c4_134 = arith.constant 4 : index
      %c3_135 = arith.constant 3 : index
      %c0_136 = arith.constant 0 : index
      %c0_137 = arith.constant 0 : index
      %181 = vector.load %arg12[%c4_134, %c3_135, %c0_136, %c0_137] : memref<8x4x58x84xf32, #tpu.memory_space<vmem>>, vector<1x1x58x84xf32>
      %182 = vector.shape_cast %181 : vector<1x1x58x84xf32> to vector<58x84xf32>
      %183 = vector.broadcast %180 : f32 to vector<58x84xf32>
      %184 = arith.mulf %183, %182 : vector<58x84xf32>
      %185 = arith.addf %178, %184 : vector<58x84xf32>
      %186 = arith.index_cast %arg13 : i32 to index
      %c20 = arith.constant 20 : index
      %187 = memref.load %arg8[%186, %c20] : memref<4x32xf32, #tpu.memory_space<smem>>
      %c5_138 = arith.constant 5 : index
      %c0_139 = arith.constant 0 : index
      %c0_140 = arith.constant 0 : index
      %c0_141 = arith.constant 0 : index
      %188 = vector.load %arg12[%c5_138, %c0_139, %c0_140, %c0_141] : memref<8x4x58x84xf32, #tpu.memory_space<vmem>>, vector<1x1x58x84xf32>
      %189 = vector.shape_cast %188 : vector<1x1x58x84xf32> to vector<58x84xf32>
      %190 = vector.broadcast %187 : f32 to vector<58x84xf32>
      %191 = arith.mulf %190, %189 : vector<58x84xf32>
      %192 = arith.addf %185, %191 : vector<58x84xf32>
      %193 = arith.index_cast %arg13 : i32 to index
      %c21 = arith.constant 21 : index
      %194 = memref.load %arg8[%193, %c21] : memref<4x32xf32, #tpu.memory_space<smem>>
      %c5_142 = arith.constant 5 : index
      %c1_143 = arith.constant 1 : index
      %c0_144 = arith.constant 0 : index
      %c0_145 = arith.constant 0 : index
      %195 = vector.load %arg12[%c5_142, %c1_143, %c0_144, %c0_145] : memref<8x4x58x84xf32, #tpu.memory_space<vmem>>, vector<1x1x58x84xf32>
      %196 = vector.shape_cast %195 : vector<1x1x58x84xf32> to vector<58x84xf32>
      %197 = vector.broadcast %194 : f32 to vector<58x84xf32>
      %198 = arith.mulf %197, %196 : vector<58x84xf32>
      %199 = arith.addf %192, %198 : vector<58x84xf32>
      %200 = arith.index_cast %arg13 : i32 to index
      %c22 = arith.constant 22 : index
      %201 = memref.load %arg8[%200, %c22] : memref<4x32xf32, #tpu.memory_space<smem>>
      %c5_146 = arith.constant 5 : index
      %c2_147 = arith.constant 2 : index
      %c0_148 = arith.constant 0 : index
      %c0_149 = arith.constant 0 : index
      %202 = vector.load %arg12[%c5_146, %c2_147, %c0_148, %c0_149] : memref<8x4x58x84xf32, #tpu.memory_space<vmem>>, vector<1x1x58x84xf32>
      %203 = vector.shape_cast %202 : vector<1x1x58x84xf32> to vector<58x84xf32>
      %204 = vector.broadcast %201 : f32 to vector<58x84xf32>
      %205 = arith.mulf %204, %203 : vector<58x84xf32>
      %206 = arith.addf %199, %205 : vector<58x84xf32>
      %207 = arith.index_cast %arg13 : i32 to index
      %c23 = arith.constant 23 : index
      %208 = memref.load %arg8[%207, %c23] : memref<4x32xf32, #tpu.memory_space<smem>>
      %c5_150 = arith.constant 5 : index
      %c3_151 = arith.constant 3 : index
      %c0_152 = arith.constant 0 : index
      %c0_153 = arith.constant 0 : index
      %209 = vector.load %arg12[%c5_150, %c3_151, %c0_152, %c0_153] : memref<8x4x58x84xf32, #tpu.memory_space<vmem>>, vector<1x1x58x84xf32>
      %210 = vector.shape_cast %209 : vector<1x1x58x84xf32> to vector<58x84xf32>
      %211 = vector.broadcast %208 : f32 to vector<58x84xf32>
      %212 = arith.mulf %211, %210 : vector<58x84xf32>
      %213 = arith.addf %206, %212 : vector<58x84xf32>
      %214 = arith.index_cast %arg13 : i32 to index
      %c24 = arith.constant 24 : index
      %215 = memref.load %arg8[%214, %c24] : memref<4x32xf32, #tpu.memory_space<smem>>
      %c6_154 = arith.constant 6 : index
      %c0_155 = arith.constant 0 : index
      %c0_156 = arith.constant 0 : index
      %c0_157 = arith.constant 0 : index
      %216 = vector.load %arg12[%c6_154, %c0_155, %c0_156, %c0_157] : memref<8x4x58x84xf32, #tpu.memory_space<vmem>>, vector<1x1x58x84xf32>
      %217 = vector.shape_cast %216 : vector<1x1x58x84xf32> to vector<58x84xf32>
      %218 = vector.broadcast %215 : f32 to vector<58x84xf32>
      %219 = arith.mulf %218, %217 : vector<58x84xf32>
      %220 = arith.addf %213, %219 : vector<58x84xf32>
      %221 = arith.index_cast %arg13 : i32 to index
      %c25 = arith.constant 25 : index
      %222 = memref.load %arg8[%221, %c25] : memref<4x32xf32, #tpu.memory_space<smem>>
      %c6_158 = arith.constant 6 : index
      %c1_159 = arith.constant 1 : index
      %c0_160 = arith.constant 0 : index
      %c0_161 = arith.constant 0 : index
      %223 = vector.load %arg12[%c6_158, %c1_159, %c0_160, %c0_161] : memref<8x4x58x84xf32, #tpu.memory_space<vmem>>, vector<1x1x58x84xf32>
      %224 = vector.shape_cast %223 : vector<1x1x58x84xf32> to vector<58x84xf32>
      %225 = vector.broadcast %222 : f32 to vector<58x84xf32>
      %226 = arith.mulf %225, %224 : vector<58x84xf32>
      %227 = arith.addf %220, %226 : vector<58x84xf32>
      %228 = arith.index_cast %arg13 : i32 to index
      %c26 = arith.constant 26 : index
      %229 = memref.load %arg8[%228, %c26] : memref<4x32xf32, #tpu.memory_space<smem>>
      %c6_162 = arith.constant 6 : index
      %c2_163 = arith.constant 2 : index
      %c0_164 = arith.constant 0 : index
      %c0_165 = arith.constant 0 : index
      %230 = vector.load %arg12[%c6_162, %c2_163, %c0_164, %c0_165] : memref<8x4x58x84xf32, #tpu.memory_space<vmem>>, vector<1x1x58x84xf32>
      %231 = vector.shape_cast %230 : vector<1x1x58x84xf32> to vector<58x84xf32>
      %232 = vector.broadcast %229 : f32 to vector<58x84xf32>
      %233 = arith.mulf %232, %231 : vector<58x84xf32>
      %234 = arith.addf %227, %233 : vector<58x84xf32>
      %235 = arith.index_cast %arg13 : i32 to index
      %c27 = arith.constant 27 : index
      %236 = memref.load %arg8[%235, %c27] : memref<4x32xf32, #tpu.memory_space<smem>>
      %c6_166 = arith.constant 6 : index
      %c3_167 = arith.constant 3 : index
      %c0_168 = arith.constant 0 : index
      %c0_169 = arith.constant 0 : index
      %237 = vector.load %arg12[%c6_166, %c3_167, %c0_168, %c0_169] : memref<8x4x58x84xf32, #tpu.memory_space<vmem>>, vector<1x1x58x84xf32>
      %238 = vector.shape_cast %237 : vector<1x1x58x84xf32> to vector<58x84xf32>
      %239 = vector.broadcast %236 : f32 to vector<58x84xf32>
      %240 = arith.mulf %239, %238 : vector<58x84xf32>
      %241 = arith.addf %234, %240 : vector<58x84xf32>
      %242 = arith.index_cast %arg13 : i32 to index
      %c28 = arith.constant 28 : index
      %243 = memref.load %arg8[%242, %c28] : memref<4x32xf32, #tpu.memory_space<smem>>
      %c7_170 = arith.constant 7 : index
      %c0_171 = arith.constant 0 : index
      %c0_172 = arith.constant 0 : index
      %c0_173 = arith.constant 0 : index
      %244 = vector.load %arg12[%c7_170, %c0_171, %c0_172, %c0_173] : memref<8x4x58x84xf32, #tpu.memory_space<vmem>>, vector<1x1x58x84xf32>
      %245 = vector.shape_cast %244 : vector<1x1x58x84xf32> to vector<58x84xf32>
      %246 = vector.broadcast %243 : f32 to vector<58x84xf32>
      %247 = arith.mulf %246, %245 : vector<58x84xf32>
      %248 = arith.addf %241, %247 : vector<58x84xf32>
      %249 = arith.index_cast %arg13 : i32 to index
      %c29 = arith.constant 29 : index
      %250 = memref.load %arg8[%249, %c29] : memref<4x32xf32, #tpu.memory_space<smem>>
      %c7_174 = arith.constant 7 : index
      %c1_175 = arith.constant 1 : index
      %c0_176 = arith.constant 0 : index
      %c0_177 = arith.constant 0 : index
      %251 = vector.load %arg12[%c7_174, %c1_175, %c0_176, %c0_177] : memref<8x4x58x84xf32, #tpu.memory_space<vmem>>, vector<1x1x58x84xf32>
      %252 = vector.shape_cast %251 : vector<1x1x58x84xf32> to vector<58x84xf32>
      %253 = vector.broadcast %250 : f32 to vector<58x84xf32>
      %254 = arith.mulf %253, %252 : vector<58x84xf32>
      %255 = arith.addf %248, %254 : vector<58x84xf32>
      %256 = arith.index_cast %arg13 : i32 to index
      %c30 = arith.constant 30 : index
      %257 = memref.load %arg8[%256, %c30] : memref<4x32xf32, #tpu.memory_space<smem>>
      %c7_178 = arith.constant 7 : index
      %c2_179 = arith.constant 2 : index
      %c0_180 = arith.constant 0 : index
      %c0_181 = arith.constant 0 : index
      %258 = vector.load %arg12[%c7_178, %c2_179, %c0_180, %c0_181] : memref<8x4x58x84xf32, #tpu.memory_space<vmem>>, vector<1x1x58x84xf32>
      %259 = vector.shape_cast %258 : vector<1x1x58x84xf32> to vector<58x84xf32>
      %260 = vector.broadcast %257 : f32 to vector<58x84xf32>
      %261 = arith.mulf %260, %259 : vector<58x84xf32>
      %262 = arith.addf %255, %261 : vector<58x84xf32>
      %263 = arith.index_cast %arg13 : i32 to index
      %c31 = arith.constant 31 : index
      %264 = memref.load %arg8[%263, %c31] : memref<4x32xf32, #tpu.memory_space<smem>>
      %c7_182 = arith.constant 7 : index
      %c3_183 = arith.constant 3 : index
      %c0_184 = arith.constant 0 : index
      %c0_185 = arith.constant 0 : index
      %265 = vector.load %arg12[%c7_182, %c3_183, %c0_184, %c0_185] : memref<8x4x58x84xf32, #tpu.memory_space<vmem>>, vector<1x1x58x84xf32>
      %266 = vector.shape_cast %265 : vector<1x1x58x84xf32> to vector<58x84xf32>
      %267 = vector.broadcast %264 : f32 to vector<58x84xf32>
      %268 = arith.mulf %267, %266 : vector<58x84xf32>
      %269 = arith.addf %262, %268 : vector<58x84xf32>
      %270 = arith.index_cast %arg13 : i32 to index
      %271 = memref.load %arg9[%270] : memref<4xf32, #tpu.memory_space<smem>>
      %272 = vector.broadcast %271 : f32 to vector<58x84xf32>
      %273 = arith.addf %269, %272 : vector<58x84xf32>
      %cst = arith.constant 0.000000e+00 : f32
      %274 = vector.broadcast %cst : f32 to vector<58x84xf32>
      %275 = arith.maximumf %273, %274 : vector<58x84xf32>
      %276 = vector.extract_strided_slice %275 {offsets = [0, 0], sizes = [57, 84], strides = [1, 1]} : vector<58x84xf32> to vector<57x84xf32>
      %277 = vector.extract_strided_slice %275 {offsets = [1, 0], sizes = [57, 84], strides = [1, 1]} : vector<58x84xf32> to vector<57x84xf32>
      %278 = arith.maximumf %276, %277 : vector<57x84xf32>
      %c0_186 = arith.constant 0 : index
      %c0_187 = arith.constant 0 : index
      %279 = vector.load %arg4[%c0_186, %c0_187] : memref<29x57xf32, #tpu.memory_space<vmem>>, vector<29x57xf32>
      %cst_188 = arith.constant dense<0.000000e+00> : vector<29x84xf32>
      %280 = tpu.matmul %279, %278, %cst_188 {dimension_numbers = #tpu.dot_dimension_numbers<[1], [0], [0], [1], [0, 0, 1, 1], [], []>} : vector<29x57xf32>, vector<57x84xf32>, vector<29x84xf32> -> vector<29x84xf32>
      %281 = vector.extract_strided_slice %280 {offsets = [0, 0], sizes = [29, 83], strides = [1, 1]} : vector<29x84xf32> to vector<29x83xf32>
      %282 = vector.extract_strided_slice %280 {offsets = [0, 1], sizes = [29, 83], strides = [1, 1]} : vector<29x84xf32> to vector<29x83xf32>
      %283 = arith.maximumf %281, %282 : vector<29x83xf32>
      %c0_189 = arith.constant 0 : index
      %c0_190 = arith.constant 0 : index
      %284 = vector.load %arg5[%c0_189, %c0_190] : memref<83x42xf32, #tpu.memory_space<vmem>>, vector<83x42xf32>
      %cst_191 = arith.constant dense<0.000000e+00> : vector<29x42xf32>
      %285 = tpu.matmul %283, %284, %cst_191 {dimension_numbers = #tpu.dot_dimension_numbers<[1], [0], [0], [1], [0, 0, 1, 1], [], []>} : vector<29x83xf32>, vector<83x42xf32>, vector<29x42xf32> -> vector<29x42xf32>
      %c0_192 = arith.constant 0 : index
      %286 = arith.index_cast %arg13 : i32 to index
      %c0_193 = arith.constant 0 : index
      %c0_194 = arith.constant 0 : index
      %287 = vector.load %arg10[%c0_192, %286, %c0_193, %c0_194] : memref<1x4x29x42xf32, #tpu.memory_space<vmem>>, vector<1x1x29x42xf32>
      %288 = vector.shape_cast %287 : vector<1x1x29x42xf32> to vector<29x42xf32>
      %289 = vector.shape_cast %285 : vector<29x42xf32> to vector<1x1x29x42xf32>
      tpu.vector_store %arg10[%c0_192, %286, %c0_193, %c0_194], %289 {strides = array<i32>} : memref<1x4x29x42xf32, #tpu.memory_space<vmem>>, vector<1x1x29x42xf32>,
    }
    %c4_i32_48 = arith.constant 4 : i32
    return
  }
  func.func @transform_0(%arg0: i32) -> (i32, i32, i32) {
    %c0_i32 = arith.constant 0 : i32
    %c0_i32_0 = arith.constant 0 : i32
    %c0_i32_1 = arith.constant 0 : i32
    return %arg0, %c0_i32, %c0_i32_0 : i32, i32, i32
  }
  func.func @transform_1(%arg0: i32) -> (i32, i32) {
    %c0_i32 = arith.constant 0 : i32
    %c0_i32_0 = arith.constant 0 : i32
    %c0_i32_1 = arith.constant 0 : i32
    return %c0_i32, %c0_i32_0 : i32, i32
  }
  func.func @transform_2(%arg0: i32) -> (i32, i32) {
    %c0_i32 = arith.constant 0 : i32
    %c0_i32_0 = arith.constant 0 : i32
    %c0_i32_1 = arith.constant 0 : i32
    return %c0_i32, %c0_i32_0 : i32, i32
  }
  func.func @transform_3(%arg0: i32) -> (i32, i32) {
    %c0_i32 = arith.constant 0 : i32
    %c0_i32_0 = arith.constant 0 : i32
    %c0_i32_1 = arith.constant 0 : i32
    return %c0_i32, %c0_i32_0 : i32, i32
  }
  func.func @transform_4(%arg0: i32) -> (i32, i32) {
    %c0_i32 = arith.constant 0 : i32
    %c0_i32_0 = arith.constant 0 : i32
    %c0_i32_1 = arith.constant 0 : i32
    return %c0_i32, %c0_i32_0 : i32, i32
  }
  func.func @transform_5(%arg0: i32) -> (i32, i32) {
    %c0_i32 = arith.constant 0 : i32
    %c0_i32_0 = arith.constant 0 : i32
    %c0_i32_1 = arith.constant 0 : i32
    return %c0_i32, %c0_i32_0 : i32, i32
  }
  func.func @transform_6(%arg0: i32) -> i32 {
    %c0_i32 = arith.constant 0 : i32
    %c0_i32_0 = arith.constant 0 : i32
    return %c0_i32 : i32
  }
  func.func @transform_7(%arg0: i32) -> (i32, i32) {
    %c0_i32 = arith.constant 0 : i32
    %c0_i32_0 = arith.constant 0 : i32
    %c0_i32_1 = arith.constant 0 : i32
    return %c0_i32, %c0_i32_0 : i32, i32
  }
  func.func @transform_8(%arg0: i32) -> i32 {
    %c0_i32 = arith.constant 0 : i32
    %c0_i32_0 = arith.constant 0 : i32
    return %c0_i32 : i32
  }
  func.func @transform_9(%arg0: i32) -> (i32, i32, i32, i32) {
    %c0_i32 = arith.constant 0 : i32
    %c0_i32_0 = arith.constant 0 : i32
    %c0_i32_1 = arith.constant 0 : i32
    %c0_i32_2 = arith.constant 0 : i32
    return %arg0, %c0_i32, %c0_i32_0, %c0_i32_1 : i32, i32, i32, i32
  }
}

module attributes {stable_mosaic.version = 11 : i64} {
  func.func @mlp_kernel(%arg0: i32, %arg1: i32, %arg2: memref<2x4872xf32, #tpu.memory_space<vmem>>, %arg3: memref<4872x128xbf16, #tpu.memory_space<vmem>>, %arg4: memref<1x128xf32, #tpu.memory_space<vmem>>, %arg5: memref<128x3072xbf16, #tpu.memory_space<vmem>>, %arg6: memref<1x3072xf32, #tpu.memory_space<vmem>>, %arg7: memref<2x3072xf32, #tpu.memory_space<vmem>>, %arg8: memref<2x128xf32, #tpu.memory_space<vmem>>) attributes {dimension_semantics = [#tpu.dimension_semantics<parallel>, #tpu.dimension_semantics<arbitrary>], iteration_bounds = array<i64: 1, 2>, scalar_prefetch = 0 : i64, scratch_operands = 1 : i64, tpu.core_type = #tpu.core_type<tc>, window_params = [{transform_indices = @transform_0, window_bounds = array<i64: 2, 4872>}, {pipeline_mode = #tpu.pipeline_mode<synchronous>, transform_indices = @transform_1, window_bounds = array<i64: 4872, 128>}, {pipeline_mode = #tpu.pipeline_mode<synchronous>, transform_indices = @transform_2, window_bounds = array<i64: 1, 128>}, {transform_indices = @transform_3, window_bounds = array<i64: 128, 3072>}, {transform_indices = @transform_4, window_bounds = array<i64: 1, 3072>}, {transform_indices = @transform_5, window_bounds = array<i64: 2, 3072>}]} {
    %c0_i32 = arith.constant 0 : i32
    %0 = arith.cmpi eq, %arg1, %c0_i32 : i32
    %1 = arith.extui %0 : i1 to i32
    %c0_i32_0 = arith.constant 0 : i32
    %2 = arith.cmpi ne, %1, %c0_i32_0 : i32
    scf.if %2 {
      %c0_9 = arith.constant 0 : index
      %c0_10 = arith.constant 0 : index
      %13 = vector.load %arg2[%c0_9, %c0_10] : memref<2x4872xf32, #tpu.memory_space<vmem>>, vector<2x4872xf32>
      %14 = arith.truncf %13 : vector<2x4872xf32> to vector<2x4872xbf16>
      %c0_11 = arith.constant 0 : index
      %c0_12 = arith.constant 0 : index
      %15 = vector.load %arg3[%c0_11, %c0_12] : memref<4872x128xbf16, #tpu.memory_space<vmem>>, vector<4872x128xbf16>
      %cst_13 = arith.constant dense<0.000000e+00> : vector<2x128xf32>
      %16 = tpu.matmul %14, %15, %cst_13 {dimension_numbers = #tpu.dot_dimension_numbers<[1], [0], [0], [1], [0, 0, 1, 1], [], []>} : vector<2x4872xbf16>, vector<4872x128xbf16>, vector<2x128xf32> -> vector<2x128xf32>
      %c0_14 = arith.constant 0 : index
      %c0_15 = arith.constant 0 : index
      %17 = vector.load %arg4[%c0_14, %c0_15] : memref<1x128xf32, #tpu.memory_space<vmem>>, vector<1x128xf32>
      %18 = vector.broadcast %17 : vector<1x128xf32> to vector<2x128xf32>
      %19 = arith.addf %16, %18 : vector<2x128xf32>
      %cst_16 = arith.constant 0.000000e+00 : f32
      %20 = vector.broadcast %cst_16 : f32 to vector<2x128xf32>
      %21 = arith.maximumf %19, %20 : vector<2x128xf32>
      %c0_17 = arith.constant 0 : index
      %c0_18 = arith.constant 0 : index
      %22 = vector.load %arg8[%c0_17, %c0_18] : memref<2x128xf32, #tpu.memory_space<vmem>>, vector<2x128xf32>
      tpu.vector_store %arg8[%c0_17, %c0_18], %21 {strides = array<i32>} : memref<2x128xf32, #tpu.memory_space<vmem>>, vector<2x128xf32>,
    } else {
    }
    %c0 = arith.constant 0 : index
    %c0_1 = arith.constant 0 : index
    %3 = vector.load %arg8[%c0, %c0_1] : memref<2x128xf32, #tpu.memory_space<vmem>>, vector<2x128xf32>
    %4 = arith.truncf %3 : vector<2x128xf32> to vector<2x128xbf16>
    %c0_2 = arith.constant 0 : index
    %c0_3 = arith.constant 0 : index
    %5 = vector.load %arg5[%c0_2, %c0_3] : memref<128x3072xbf16, #tpu.memory_space<vmem>>, vector<128x3072xbf16>
    %cst = arith.constant dense<0.000000e+00> : vector<2x3072xf32>
    %6 = tpu.matmul %4, %5, %cst {dimension_numbers = #tpu.dot_dimension_numbers<[1], [0], [0], [1], [0, 0, 1, 1], [], []>} : vector<2x128xbf16>, vector<128x3072xbf16>, vector<2x3072xf32> -> vector<2x3072xf32>
    %c0_4 = arith.constant 0 : index
    %c0_5 = arith.constant 0 : index
    %7 = vector.load %arg6[%c0_4, %c0_5] : memref<1x3072xf32, #tpu.memory_space<vmem>>, vector<1x3072xf32>
    %8 = vector.broadcast %7 : vector<1x3072xf32> to vector<2x3072xf32>
    %9 = arith.addf %6, %8 : vector<2x3072xf32>
    %cst_6 = arith.constant 0.000000e+00 : f32
    %10 = vector.broadcast %cst_6 : f32 to vector<2x3072xf32>
    %11 = arith.maximumf %9, %10 : vector<2x3072xf32>
    %c0_7 = arith.constant 0 : index
    %c0_8 = arith.constant 0 : index
    %12 = vector.load %arg7[%c0_7, %c0_8] : memref<2x3072xf32, #tpu.memory_space<vmem>>, vector<2x3072xf32>
    tpu.vector_store %arg7[%c0_7, %c0_8], %11 {strides = array<i32>} : memref<2x3072xf32, #tpu.memory_space<vmem>>, vector<2x3072xf32>,
    return
  }
  func.func @transform_0(%arg0: i32, %arg1: i32) -> (i32, i32) {
    %c0_i32 = arith.constant 0 : i32
    %c0_i32_0 = arith.constant 0 : i32
    return %arg0, %c0_i32 : i32, i32
  }
  func.func @transform_1(%arg0: i32, %arg1: i32) -> (i32, i32) {
    %c0_i32 = arith.constant 0 : i32
    %c0_i32_0 = arith.constant 0 : i32
    %c0_i32_1 = arith.constant 0 : i32
    return %c0_i32, %c0_i32_0 : i32, i32
  }
  func.func @transform_2(%arg0: i32, %arg1: i32) -> (i32, i32) {
    %c0_i32 = arith.constant 0 : i32
    %c0_i32_0 = arith.constant 0 : i32
    %c0_i32_1 = arith.constant 0 : i32
    return %c0_i32, %c0_i32_0 : i32, i32
  }
  func.func @transform_3(%arg0: i32, %arg1: i32) -> (i32, i32) {
    %c0_i32 = arith.constant 0 : i32
    %c0_i32_0 = arith.constant 0 : i32
    return %c0_i32, %arg1 : i32, i32
  }
  func.func @transform_4(%arg0: i32, %arg1: i32) -> (i32, i32) {
    %c0_i32 = arith.constant 0 : i32
    %c0_i32_0 = arith.constant 0 : i32
    return %c0_i32, %arg1 : i32, i32
  }
  func.func @transform_5(%arg0: i32, %arg1: i32) -> (i32, i32) {
    %c0_i32 = arith.constant 0 : i32
    return %arg0, %arg1 : i32, i32
  }
}

</mosaic_0001>

<llo_original>
// kernel: model_forward.3
$region0: #{model_forward.3}
  #allocation0 [shape = 'u32[]', space=smem, size = 0x4, offset = 0x4, fixed_abs, tag = 'smem constant byte address 0x4 - core index']
  #allocation1 [shape = 'u32[72,128]{1,0:T(1,128)}', space=vmem, size = 0x9000, scoped, tag = 'internal scratch']
  #allocation2 [shape = 'f32[2,128]{1,0:T(2,128)}', space=vmem, size = 0x400, scoped, tag = 'scratch operand']
  %s0 = inlined_call_operand.vmem [shape: f32[2,4872], index: 0, kind: input, shape index: {}]
  %s1 = inlined_call_operand.hbm [shape: bf16[4872,128], index: 1, kind: input, shape index: {}]
  %s2 = inlined_call_operand.hbm [shape: f32[1,128], index: 2, kind: input, shape index: {}]
  %s3 = inlined_call_operand.hbm [shape: bf16[128,6144], index: 3, kind: input, shape index: {}]
  %s4 = inlined_call_operand.hbm [shape: f32[1,6144], index: 4, kind: input, shape index: {}]
  %s5 = inlined_call_operand.vmem [shape: f32[2,6144], index: 5, kind: output, shape index: {}]
  %s6 = sld [smem:[#allocation0]]
  $region73: #{model_forward.3} parent=0
    _
  %s8 = ssub.s32 1, %s6
  %s9 = scalar_select 0, %s8, %s6
  $region1: #{model_forward.3} parent=0
    #allocation3 [shape = 'u8[1247232]{0}', space=vmem, size = 0x130800, scoped, tag = 'input window, operand 1, single buffered']
    #allocation4 [shape = 's32[2]{0}', space=sflag, size = 0x8, scoped, tag = 'scoped memory for model_forward.3']
    #allocation5 [shape = 'u8[512]{0}', space=vmem, size = 0x400, scoped, tag = 'input window, operand 2, single buffered']
    #allocation6 [shape = 's32[1]{0}', space=sflag, size = 0x4, scoped, tag = 'scoped memory for model_forward.3']
    #allocation7 [shape = 'u8[1572864]{0}', space=vmem, size = 0x180000, scoped, tag = 'input window, operand 3']
    #allocation8 [shape = 'u8[24576]{0}', space=vmem, size = 0x6000, scoped, tag = 'input window, operand 4']
    %10 = vsyncpa [#allocation4], 0
    %11 = vsyncpa [#allocation6], 0
    loop: start=0, step=1, limit=4
    $region2: #{model_forward.3} parent=1 // loop_pre_header
      _
    $region3: #{model_forward.3} parent=1 // loop_header
      %s13 = sphi 0, %s17
      %p14 = scmp.ge.s32.totalorder %s13, 4
      %s20 = sphi 0, %s32
      %s21 = sphi 0, %s28
      %s22 = sphi 0, %s20
      %s23 = sphi 0, %s21
      %s24 = sphi 0, %s22
      %s25 = sphi 0, %s23
      %s35 = sphi 0, %s37
      %s38 = sphi 0, %s35
      %s39 = sphi 0, %s38
      %s55 = sphi 0, %s39
      %s59 = sphi 0, %s59
      %s61 = sphi 0, %s59
      %s62 = sphi 0, %s61
      %s76 = sphi 0, %s62
      %s80 = sphi 0, %s80
      %s82 = sphi 0, %s80
      %s83 = sphi 0, %s82
      %s97 = sphi 0, %s83
      %s103 = sphi 0, %s105
      %s106 = sphi 0, %s103
      %s107 = sphi 0, %s106
      %s123 = sphi 0, %s107
      %s129 = sphi 0, %s131
      %s132 = sphi 0, %s129
      %s133 = sphi 0, %s132
      %s149 = sphi 0, %s133
      %s157 = sphi 0, %s159
      %s160 = sphi 0, %s157
      %s161 = sphi 0, %s160
      %s177 = sphi 0, %s161
    $region4: #{model_forward.3} parent=1 // loop_header_branch
      %16 = sbr.rel (%p14) target = $region8
    $region5: #{model_forward.3} parent=1 // loop_body
      %s18 = ssub.s32 %s13, 1
      %s19 = ssub.s32 %s13, 2
      %s26 = sadd.s32 1, %s21
      %p27 = scmp.ge.s32.totalorder %s26, 2
      %s28 = scalar_select %p27, 0, %s26
      %s29 = sadd.s32 1, %s20
      %s30 = scalar_select %p27, %s29, %s20
      %p31 = scmp.ge.s32.totalorder %s30, 1
      %s32 = scalar_select %p31, 0, %s30
      %s33 = ssub.s32 %s20, %s32
      %p34 = scmp.eq.s32.totalorder %s33, 0
      %s36 = sadd.s32 %s35, 1
      %s37 = scalar_select %p34, %s35, %s36
      %p40 = pneg %p34
      %p41 = scmp.eq.s32.totalorder %s13, 1
      %p42 = por %p40, %p41
      %p43 = scmp.ne.s32.totalorder %s35, %s38
      %p44 = scmp.eq.s32.totalorder %s13, 0
      %p45 = por %p43, %p44
      %p46 = scmp.ne.s32.totalorder %s35, %s38
      %p47 = scmp.eq.s32.totalorder %s18, 1
      %p48 = por %p46, %p47
      %p49 = scmp.ne.s32.totalorder %s38, %s39
      %p50 = scmp.eq.s32.totalorder %s18, 0
      %p51 = por %p49, %p50
      %p52 = scmp.ne.s32.totalorder %s38, %s39
      %p53 = scmp.eq.s32.totalorder %s19, 1
      %p54 = por %p52, %p53
      %p56 = scmp.ne.s32.totalorder %s39, %s55
      %p57 = scmp.eq.s32.totalorder %s19, 0
      %p58 = por %p56, %p57
      %s60 = sadd.s32 %s59, 1
      %p63 = scmp.eq.s32.totalorder %s13, 1
      %p64 = scmp.ne.s32.totalorder %s59, %s61
      %p65 = scmp.eq.s32.totalorder %s13, 0
      %p66 = por %p64, %p65
      %p67 = scmp.ne.s32.totalorder %s59, %s61
      %p68 = scmp.eq.s32.totalorder %s18, 1
      %p69 = por %p67, %p68
      %p70 = scmp.ne.s32.totalorder %s61, %s62
      %p71 = scmp.eq.s32.totalorder %s18, 0
      %p72 = por %p70, %p71
      %p73 = scmp.ne.s32.totalorder %s61, %s62
      %p74 = scmp.eq.s32.totalorder %s19, 1
      %p75 = por %p73, %p74
      %p77 = scmp.ne.s32.totalorder %s62, %s76
      %p78 = scmp.eq.s32.totalorder %s19, 0
      %p79 = por %p77, %p78
      %s81 = sadd.s32 %s80, 1
      %p84 = scmp.eq.s32.totalorder %s13, 1
      %p85 = scmp.ne.s32.totalorder %s80, %s82
      %p86 = scmp.eq.s32.totalorder %s13, 0
      %p87 = por %p85, %p86
      %p88 = scmp.ne.s32.totalorder %s80, %s82
      %p89 = scmp.eq.s32.totalorder %s18, 1
      %p90 = por %p88, %p89
      %p91 = scmp.ne.s32.totalorder %s82, %s83
      %p92 = scmp.eq.s32.totalorder %s18, 0
      %p93 = por %p91, %p92
      %p94 = scmp.ne.s32.totalorder %s82, %s83
      %p95 = scmp.eq.s32.totalorder %s19, 1
      %p96 = por %p94, %p95
      %p98 = scmp.ne.s32.totalorder %s83, %s97
      %p99 = scmp.eq.s32.totalorder %s19, 0
      %p100 = por %p98, %p99
      %s101 = ssub.s32 %s21, %s28
      %p102 = scmp.eq.s32.totalorder %s101, 0
      %s104 = sadd.s32 %s103, 1
      %s105 = scalar_select %p102, %s103, %s104
      %p108 = pneg %p102
      %p109 = scmp.eq.s32.totalorder %s13, 1
      %p110 = por %p108, %p109
      %p111 = scmp.ne.s32.totalorder %s103, %s106
      %p112 = scmp.eq.s32.totalorder %s13, 0
      %p113 = por %p111, %p112
      %p114 = scmp.ne.s32.totalorder %s103, %s106
      %p115 = scmp.eq.s32.totalorder %s18, 1
      %p116 = por %p114, %p115
      %p117 = scmp.ne.s32.totalorder %s106, %s107
      %p118 = scmp.eq.s32.totalorder %s18, 0
      %p119 = por %p117, %p118
      %p120 = scmp.ne.s32.totalorder %s106, %s107
      %p121 = scmp.eq.s32.totalorder %s19, 1
      %p122 = por %p120, %p121
      %p124 = scmp.ne.s32.totalorder %s107, %s123
      %p125 = scmp.eq.s32.totalorder %s19, 0
      %p126 = por %p124, %p125
      %s127 = ssub.s32 %s21, %s28
      %p128 = scmp.eq.s32.totalorder %s127, 0
      %s130 = sadd.s32 %s129, 1
      %s131 = scalar_select %p128, %s129, %s130
      %p134 = pneg %p128
      %p135 = scmp.eq.s32.totalorder %s13, 1
      %p136 = por %p134, %p135
      %p137 = scmp.ne.s32.totalorder %s129, %s132
      %p138 = scmp.eq.s32.totalorder %s13, 0
      %p139 = por %p137, %p138
      %p140 = scmp.ne.s32.totalorder %s129, %s132
      %p141 = scmp.eq.s32.totalorder %s18, 1
      %p142 = por %p140, %p141
      %p143 = scmp.ne.s32.totalorder %s132, %s133
      %p144 = scmp.eq.s32.totalorder %s18, 0
      %p145 = por %p143, %p144
      %p146 = scmp.ne.s32.totalorder %s132, %s133
      %p147 = scmp.eq.s32.totalorder %s19, 1
      %p148 = por %p146, %p147
      %p150 = scmp.ne.s32.totalorder %s133, %s149
      %p151 = scmp.eq.s32.totalorder %s19, 0
      %p152 = por %p150, %p151
      %s153 = ssub.s32 %s20, %s32
      %s154 = ssub.s32 %s21, %s28
      %s155 = sor.u32 %s153, %s154
      %p156 = scmp.eq.s32.totalorder %s155, 0
      %s158 = sadd.s32 %s157, 1
      %s159 = scalar_select %p156, %s157, %s158
      %p162 = pneg %p156
      %p163 = scmp.eq.s32.totalorder %s13, 1
      %p164 = por %p162, %p163
      %p165 = scmp.ne.s32.totalorder %s157, %s160
      %p166 = scmp.eq.s32.totalorder %s13, 0
      %p167 = por %p165, %p166
      %p168 = scmp.ne.s32.totalorder %s157, %s160
      %p169 = scmp.eq.s32.totalorder %s18, 1
      %p170 = por %p168, %p169
      %p171 = scmp.ne.s32.totalorder %s160, %s161
      %p172 = scmp.eq.s32.totalorder %s18, 0
      %p173 = por %p171, %p172
      %p174 = scmp.ne.s32.totalorder %s160, %s161
      %p175 = scmp.eq.s32.totalorder %s19, 1
      %p176 = por %p174, %p175
      %p178 = scmp.ne.s32.totalorder %s161, %s177
      %p179 = scmp.eq.s32.totalorder %s19, 0
      %p180 = por %p178, %p179
      %p181 = scmp.le.s32.totalorder 1, %s13
      %p182 = scmp.lt.s32.totalorder %s13, 3
      %p183 = pnand %p181, %p182
      %p184 = pneg %p183
      // Predicated region
      $region9: #{model_forward.3} parent=5 // pred_check
        _
      $region10: #{model_forward.3} parent=5 // pred_check_branch
        %186 = sbr.rel (%p183) target = $region12
      $region11: #{model_forward.3} parent=5 // pred_region
        %s187 = ssub.s32 %s13, 1
        // Predicated region
        $region13: #{model_forward.3} parent=11 // pred_check
          %p188 = pneg %p51
        $region14: #{model_forward.3} parent=11 // pred_check_branch
          %190 = sbr.rel (%p188) target = $region16
        $region15: #{model_forward.3} parent=11 // pred_region
          %p191 = scmp.lt.s32.totalorder %s22, 0
          %s192 = scalar_select %p191, %s22, 0
          %s193 = smul.addr %s192, 39
          %s194 = smul.addr %s193, 2
          %s195 = scalar_lea.vmem %s0, %s194
        $region16: #{model_forward.3} parent=11 // pred_fallthru
          _
        // Predicated region
        $region17: #{model_forward.3} parent=11 // pred_check
          %p196 = pneg %p72
        $region18: #{model_forward.3} parent=11 // pred_check_branch
          %198 = sbr.rel (%p196) target = $region20
        $region19: #{model_forward.3} parent=11 // pred_region
          %200 = vsyncadd [#allocation4], 0
          %s201 = sshll.u32 %s1, 4
          %s202 = int_to_ptr.hbm [resolvable:$true] %s201
          %s203 = sshll.u32 [#allocation3], 4
          %s204 = int_to_ptr.vmem [resolvable:$true] %s203
          %209 = dma.hbm_to_vmem [thread:$0]  %s202, 38976, %s204, [#allocation4], 64, 64, 4
        $region20: #{model_forward.3} parent=11 // pred_fallthru
          _
        // Predicated region
        $region21: #{model_forward.3} parent=11 // pred_check
          %p210 = pneg %p93
        $region22: #{model_forward.3} parent=11 // pred_check_branch
          %212 = sbr.rel (%p210) target = $region24
        $region23: #{model_forward.3} parent=11 // pred_region
          %214 = vsyncadd [#allocation6], 0
          %s216 = sshll.u32 %s2, 4
          %s217 = int_to_ptr.hbm [resolvable:$true] %s216
          %s218 = sshll.u32 [#allocation5], 4
          %s219 = int_to_ptr.vmem [resolvable:$true] %s218
          %221 = dma.hbm_to_vmem [thread:$0]  %s217, 16, %s219, [#allocation6]
        $region24: #{model_forward.3} parent=11 // pred_fallthru
          _
      $region12: #{model_forward.3} parent=5 // pred_fallthru
        _
      %p222 = scmp.lt.s32.totalorder %s13, 2
      // Predicated region
      $region25: #{model_forward.3} parent=5 // pred_check
        %p223 = pneg %p222
      $region26: #{model_forward.3} parent=5 // pred_check_branch
        %225 = sbr.rel (%p223) target = $region28
      $region27: #{model_forward.3} parent=5 // pred_region
        // Predicated region
        $region29: #{model_forward.3} parent=27 // pred_check
          %p226 = pneg %p113
        $region30: #{model_forward.3} parent=27 // pred_check_branch
          %228 = sbr.rel (%p226) target = $region32
        $region31: #{model_forward.3} parent=27 // pred_region
          %s229 = sand.u32 %s13, 1
          %s230 = scalar_lea.sflag [#allocation4], %s229
          %s231 = sand.u32 %s103, 1
          %s232 = smul.addr %s231, 1536
          %s233 = scalar_lea.vmem [#allocation7], %s232
          %s234 = smul.u32 24, %s21
          %236 = vsyncadd %s230, 0
          %s237 = smul.addr %s234, 4
          %s238 = scalar_lea.hbm %s3, %s237
          %s239 = sshll.u32 %s238, 4
          %s240 = int_to_ptr.hbm [resolvable:$true] %s239
          %s241 = sshll.u32 %s233, 4
          %s242 = int_to_ptr.vmem [resolvable:$true] %s241
          %247 = dma.hbm_to_vmem [thread:$0]  %s240, 24576, %s242, %s230, 3072, 1536, 96
        $region32: #{model_forward.3} parent=27 // pred_fallthru
          _
        // Predicated region
        $region33: #{model_forward.3} parent=27 // pred_check
          %p248 = pneg %p139
        $region34: #{model_forward.3} parent=27 // pred_check_branch
          %250 = sbr.rel (%p248) target = $region36
        $region35: #{model_forward.3} parent=27 // pred_region
          %s251 = sand.u32 %s13, 1
          %s252 = scalar_lea.sflag [#allocation4], %s251
          %s253 = sand.u32 %s129, 1
          %s254 = smul.addr %s253, 24
          %s255 = scalar_lea.vmem [#allocation8], %s254
          %s256 = smul.u32 24, %s21
          %258 = vsyncadd %s252, 0
          %s259 = scalar_lea.hbm %s4, %s256
          %s261 = sshll.u32 %s259, 4
          %s262 = int_to_ptr.hbm [resolvable:$true] %s261
          %s263 = sshll.u32 %s255, 4
          %s264 = int_to_ptr.vmem [resolvable:$true] %s263
          %266 = dma.hbm_to_vmem [thread:$0]  %s262, 384, %s264, %s252
        $region36: #{model_forward.3} parent=27 // pred_fallthru
          _
      $region28: #{model_forward.3} parent=5 // pred_fallthru
        _
      %p267 = scmp.le.s32.totalorder 1, %s13
      %p268 = scmp.lt.s32.totalorder %s13, 3
      %p269 = pnand %p267, %p268
      %p270 = pneg %p269
      // Predicated region
      $region37: #{model_forward.3} parent=5 // pred_check
        _
      $region38: #{model_forward.3} parent=5 // pred_check_branch
        %272 = sbr.rel (%p269) target = $region40
      $region39: #{model_forward.3} parent=5 // pred_region
        %s273 = ssub.s32 %s13, 1
        // Predicated region
        $region41: #{model_forward.3} parent=39 // pred_check
          %p274 = pneg %p72
        $region42: #{model_forward.3} parent=39 // pred_check_branch
          %276 = sbr.rel (%p274) target = $region44
        $region43: #{model_forward.3} parent=39 // pred_region
          %278 = dma.done [#allocation4], 38976
        $region44: #{model_forward.3} parent=39 // pred_fallthru
          _
        // Predicated region
        $region45: #{model_forward.3} parent=39 // pred_check
          %p279 = pneg %p93
        $region46: #{model_forward.3} parent=39 // pred_check_branch
          %281 = sbr.rel (%p279) target = $region48
        $region47: #{model_forward.3} parent=39 // pred_region
          %283 = dma.done [#allocation6], 16
        $region48: #{model_forward.3} parent=39 // pred_fallthru
          _
        %s284 = sand.u32 %s18, 1
        %s285 = scalar_lea.sflag [#allocation4], %s284
        %s286 = sand.u32 %s106, 1
        %s287 = smul.addr %s286, 1536
        %s288 = scalar_lea.vmem [#allocation7], %s287
        // Predicated region
        $region49: #{model_forward.3} parent=39 // pred_check
          %p289 = pneg %p119
        $region50: #{model_forward.3} parent=39 // pred_check_branch
          %291 = sbr.rel (%p289) target = $region52
        $region51: #{model_forward.3} parent=39 // pred_region
          %293 = dma.done %s285, 24576
        $region52: #{model_forward.3} parent=39 // pred_fallthru
          _
        %s294 = sand.u32 %s18, 1
        %s295 = scalar_lea.sflag [#allocation4], %s294
        %s296 = sand.u32 %s132, 1
        %s297 = smul.addr %s296, 24
        %s298 = scalar_lea.vmem [#allocation8], %s297
        // Predicated region
        $region53: #{model_forward.3} parent=39 // pred_check
          %p299 = pneg %p145
        $region54: #{model_forward.3} parent=39 // pred_check_branch
          %301 = sbr.rel (%p299) target = $region56
        $region55: #{model_forward.3} parent=39 // pred_region
          %303 = dma.done %s295, 384
        $region56: #{model_forward.3} parent=39 // pred_fallthru
          _
        %p304 = scmp.lt.s32.totalorder %s22, 0
        %s305 = scalar_select %p304, %s22, 0
        %s306 = smul.addr %s305, 39
        %s307 = smul.addr %s306, 2
        %s308 = scalar_lea.vmem %s0, %s307
        %p309 = pneg %p51
        %p310 = pneg %p48
        %p311 = pneg %p72
        %p312 = pneg %p69
        %p313 = pneg %p93
        %p314 = pneg %p90
        %s315 = sand.u32 %s18, 1
        %s316 = scalar_lea.sflag [#allocation4], %s315
        %s317 = sand.u32 %s106, 1
        %s318 = smul.addr %s317, 1536
        %s319 = scalar_lea.vmem [#allocation7], %s318
        %p320 = pneg %p119
        %p321 = pneg %p116
        %s322 = sand.u32 %s18, 1
        %s323 = scalar_lea.sflag [#allocation4], %s322
        %s324 = sand.u32 %s132, 1
        %s325 = smul.addr %s324, 24
        %s326 = scalar_lea.vmem [#allocation8], %s325
        %p327 = pneg %p145
        %p328 = pneg %p142
        %p329 = pneg %p173
        %p330 = pneg %p170
        %s331 = smul.u32 24, %s23
        %p332 = scmp.lt.s32.totalorder %s22, 0
        %s333 = scalar_select %p332, %s22, 0
        %p334 = scmp.lt.s32.totalorder %s331, 47
        %s335 = scalar_select %p334, %s331, 47
        %s336 = smul.addr %s333, 48
        %s337 = sadd.s32 %s335, %s336
        %s338 = smul.addr %s337, 2
        %s339 = scalar_lea.vmem %s5, %s338
        %p340 = scmp.lt.s32.totalorder %s22, 0
        %s341 = scalar_select %p340, %s22, 0
        %s342 = smul.addr %s341, 39
        %s343 = smul.addr %s342, 2
        %s344 = scalar_lea.vmem %s0, %s343
        %s345 = smul.u32 24, %s23
        %s346 = smul.u32 24, %s23
        %s347 = smul.u32 24, %s23
        %p348 = scmp.lt.s32.totalorder %s22, 0
        %s349 = scalar_select %p348, %s22, 0
        %p350 = scmp.lt.s32.totalorder %s347, 47
        %s351 = scalar_select %p350, %s347, 47
        %s352 = smul.addr %s349, 48
        %s353 = sadd.s32 %s351, %s352
        %s354 = smul.addr %s353, 2
        %s355 = scalar_lea.vmem %s5, %s354
        %s356 = smul.u32 24, %s23
        %p358 = scmp.eq.s32.totalorder %s23, 0
        // Predicated region
        $region57: #{model_forward.3} parent=39 // pred_check
          %p359 = pneg %p358
        $region58: #{model_forward.3} parent=39 // pred_check_branch
          %361 = sbr.rel (%p359) target = $region60
        $region59: #{model_forward.3} parent=39 // pred_region
          %v362 = vld [vmem:[%s344] sm:$0xff]
          %v363 = vld [vmem:[%s344 + $0x8] sm:$0xff]
          %v364 = vld [vmem:[%s344 + $0x10] sm:$0xff]
          %v365 = vld [vmem:[%s344 + $0x18] sm:$0xff]
          %v366 = vld [vmem:[%s344 + $0x20] sm:$0xff]
          %v367 = vld [vmem:[%s344 + $0x28] sm:$0xff]
          %v368 = vld [vmem:[%s344 + $0x30] sm:$0xff]
          %v369 = vld [vmem:[%s344 + $0x38] sm:$0xff]
          %v370 = vld [vmem:[%s344 + $0x40] sm:$0xff]
          %v371 = vld [vmem:[%s344 + $0x48] sm:$0x3f]
          %382 = vst [vmem:[#allocation1] ss:$4 sm:$0xff] %v362
          %s383 = scalar_lea.vmem [#allocation1], 32
          %384 = vst [vmem:[%s383] ss:$4 sm:$0xff] %v363
          %v385 = vld.sshfl [vmem:[#allocation1] sm:$0xff pattern:$0x73625140]
          %v386 = vld.sshfl [vmem:[#allocation1 + $0x8] sm:$0xff pattern:$0x73625140]
          %v387 = vld.sshfl [vmem:[#allocation1 + $0x10] sm:$0xff pattern:$0x73625140]
          %v388 = vld.sshfl [vmem:[#allocation1 + $0x18] sm:$0xff pattern:$0x73625140]
          %v389 = vld.sshfl [vmem:[#allocation1 + $0x20] sm:$0xff pattern:$0x73625140]
          %v390 = vld.sshfl [vmem:[#allocation1 + $0x28] sm:$0xff pattern:$0x73625140]
          %v391 = vld.sshfl [vmem:[#allocation1 + $0x30] sm:$0xff pattern:$0x73625140]
          %v392 = vld.sshfl [vmem:[#allocation1 + $0x38] sm:$0xff pattern:$0x73625140]
          %393 = vst [vmem:[#allocation1] ss:$4 sm:$0xff] %v364
          %394 = vst [vmem:[%s383] ss:$4 sm:$0xff] %v365
          %v395 = vld.sshfl [vmem:[#allocation1] sm:$0xff pattern:$0x73625140]
          %v396 = vld.sshfl [vmem:[#allocation1 + $0x8] sm:$0xff pattern:$0x73625140]
          %v397 = vld.sshfl [vmem:[#allocation1 + $0x10] sm:$0xff pattern:$0x73625140]
          %v398 = vld.sshfl [vmem:[#allocation1 + $0x18] sm:$0xff pattern:$0x73625140]
          %v399 = vld.sshfl [vmem:[#allocation1 + $0x20] sm:$0xff pattern:$0x73625140]
          %v400 = vld.sshfl [vmem:[#allocation1 + $0x28] sm:$0xff pattern:$0x73625140]
          %v401 = vld.sshfl [vmem:[#allocation1 + $0x30] sm:$0xff pattern:$0x73625140]
          %v402 = vld.sshfl [vmem:[#allocation1 + $0x38] sm:$0xff pattern:$0x73625140]
          %403 = vst [vmem:[#allocation1] ss:$4 sm:$0xff] %v366
          %404 = vst [vmem:[%s383] ss:$4 sm:$0xff] %v367
          %v405 = vld.sshfl [vmem:[#allocation1] sm:$0xff pattern:$0x73625140]
          %v406 = vld.sshfl [vmem:[#allocation1 + $0x8] sm:$0xff pattern:$0x73625140]
          %v407 = vld.sshfl [vmem:[#allocation1 + $0x10] sm:$0xff pattern:$0x73625140]
          %v408 = vld.sshfl [vmem:[#allocation1 + $0x18] sm:$0xff pattern:$0x73625140]
          %v409 = vld.sshfl [vmem:[#allocation1 + $0x20] sm:$0xff pattern:$0x73625140]
          %v410 = vld.sshfl [vmem:[#allocation1 + $0x28] sm:$0xff pattern:$0x73625140]
          %v411 = vld.sshfl [vmem:[#allocation1 + $0x30] sm:$0xff pattern:$0x73625140]
          %v412 = vld.sshfl [vmem:[#allocation1 + $0x38] sm:$0xff pattern:$0x73625140]
          %413 = vst [vmem:[#allocation1] ss:$4 sm:$0xff] %v368
          %414 = vst [vmem:[%s383] ss:$4 sm:$0xff] %v369
          %v415 = vld.sshfl [vmem:[#allocation1] sm:$0xff pattern:$0x73625140]
          %v416 = vld.sshfl [vmem:[#allocation1 + $0x8] sm:$0xff pattern:$0x73625140]
          %v417 = vld.sshfl [vmem:[#allocation1 + $0x10] sm:$0xff pattern:$0x73625140]
          %v418 = vld.sshfl [vmem:[#allocation1 + $0x18] sm:$0xff pattern:$0x73625140]
          %v419 = vld.sshfl [vmem:[#allocation1 + $0x20] sm:$0xff pattern:$0x73625140]
          %v420 = vld.sshfl [vmem:[#allocation1 + $0x28] sm:$0xff pattern:$0x73625140]
          %v421 = vld.sshfl [vmem:[#allocation1 + $0x30] sm:$0xff pattern:$0x73625140]
          %v422 = vld.sshfl [vmem:[#allocation1 + $0x38] sm:$0xff pattern:$0x73625140]
          %423 = vst [vmem:[#allocation1] ss:$4 sm:$0xff] %v370
          %424 = vst [vmem:[%s383] ss:$4 sm:$0xff] %v371
          %v425 = vld.sshfl [vmem:[#allocation1] sm:$0xff pattern:$0x73625140]
          %v426 = vld.sshfl [vmem:[#allocation1 + $0x8] sm:$0xff pattern:$0x73625140]
          %v427 = vld.sshfl [vmem:[#allocation1 + $0x10] sm:$0xff pattern:$0x73625140]
          %v428 = vld.sshfl [vmem:[#allocation1 + $0x18] sm:$0xff pattern:$0x73625140]
          %v429 = vld.sshfl [vmem:[#allocation1 + $0x20] sm:$0xff pattern:$0x73625140]
          %v430 = vld.sshfl [vmem:[#allocation1 + $0x28] sm:$0xff pattern:$0x73625140]
          %v431 = vld.sshfl [vmem:[#allocation1 + $0x30] sm:$0xff pattern:$0x73625140]
          %v471 = vpack.c.bf16 %v385, %v385
          %v472 = vpack.c.bf16 %v386, %v386
          %v473 = vpack.c.bf16 %v387, %v387
          %v474 = vpack.c.bf16 %v388, %v388
          %v475 = vpack.c.bf16 %v389, %v389
          %v476 = vpack.c.bf16 %v390, %v390
          %v477 = vpack.c.bf16 %v391, %v391
          %v478 = vpack.c.bf16 %v392, %v392
          %v479 = vpack.c.bf16 %v395, %v395
          %v480 = vpack.c.bf16 %v396, %v396
          %v481 = vpack.c.bf16 %v397, %v397
          %v482 = vpack.c.bf16 %v398, %v398
          %v483 = vpack.c.bf16 %v399, %v399
          %v484 = vpack.c.bf16 %v400, %v400
          %v485 = vpack.c.bf16 %v401, %v401
          %v486 = vpack.c.bf16 %v402, %v402
          %v487 = vpack.c.bf16 %v405, %v405
          %v488 = vpack.c.bf16 %v406, %v406
          %v489 = vpack.c.bf16 %v407, %v407
          %v490 = vpack.c.bf16 %v408, %v408
          %v491 = vpack.c.bf16 %v409, %v409
          %v492 = vpack.c.bf16 %v410, %v410
          %v493 = vpack.c.bf16 %v411, %v411
          %v494 = vpack.c.bf16 %v412, %v412
          %v495 = vpack.c.bf16 %v415, %v415
          %v496 = vpack.c.bf16 %v416, %v416
          %v497 = vpack.c.bf16 %v417, %v417
          %v498 = vpack.c.bf16 %v418, %v418
          %v499 = vpack.c.bf16 %v419, %v419
          %v500 = vpack.c.bf16 %v420, %v420
          %v501 = vpack.c.bf16 %v421, %v421
          %v502 = vpack.c.bf16 %v422, %v422
          %v503 = vpack.c.bf16 %v425, %v425
          %v504 = vpack.c.bf16 %v426, %v426
          %v505 = vpack.c.bf16 %v427, %v427
          %v506 = vpack.c.bf16 %v428, %v428
          %v507 = vpack.c.bf16 %v429, %v429
          %v508 = vpack.c.bf16 %v430, %v430
          %v509 = vpack.c.bf16 %v431, %v431
          %v510 = vld [vmem:[#allocation3] sm:$0xf]
          %v511 = vld [vmem:[#allocation3 + $0x4] sm:$0xf]
          %v512 = vld [vmem:[#allocation3 + $0x8] sm:$0xf]
          %v513 = vld [vmem:[#allocation3 + $0xc] sm:$0xf]
          %v514 = vld [vmem:[#allocation3 + $0x10] sm:$0xf]
          %v515 = vld [vmem:[#allocation3 + $0x14] sm:$0xf]
          %v516 = vld [vmem:[#allocation3 + $0x18] sm:$0xf]
          %v517 = vld [vmem:[#allocation3 + $0x1c] sm:$0xf]
          %v518 = vld [vmem:[#allocation3 + $0x20] sm:$0xf]
          %v519 = vld [vmem:[#allocation3 + $0x24] sm:$0xf]
          %v520 = vld [vmem:[#allocation3 + $0x28] sm:$0xf]
          %v521 = vld [vmem:[#allocation3 + $0x2c] sm:$0xf]
          %v522 = vld [vmem:[#allocation3 + $0x30] sm:$0xf]
          %v523 = vld [vmem:[#allocation3 + $0x34] sm:$0xf]
          %v524 = vld [vmem:[#allocation3 + $0x38] sm:$0xf]
          %v525 = vld [vmem:[#allocation3 + $0x3c] sm:$0xf]
          %v526 = vld [vmem:[#allocation3 + $0x40] sm:$0xf]
          %v527 = vld [vmem:[#allocation3 + $0x44] sm:$0xf]
          %v528 = vld [vmem:[#allocation3 + $0x48] sm:$0xf]
          %v529 = vld [vmem:[#allocation3 + $0x4c] sm:$0xf]
          %v530 = vld [vmem:[#allocation3 + $0x50] sm:$0xf]
          %v531 = vld [vmem:[#allocation3 + $0x54] sm:$0xf]
          %v532 = vld [vmem:[#allocation3 + $0x58] sm:$0xf]
          %v533 = vld [vmem:[#allocation3 + $0x5c] sm:$0xf]
          %v534 = vld [vmem:[#allocation3 + $0x60] sm:$0xf]
          %v535 = vld [vmem:[#allocation3 + $0x64] sm:$0xf]
          %v536 = vld [vmem:[#allocation3 + $0x68] sm:$0xf]
          %v537 = vld [vmem:[#allocation3 + $0x6c] sm:$0xf]
          %v538 = vld [vmem:[#allocation3 + $0x70] sm:$0xf]
          %v539 = vld [vmem:[#allocation3 + $0x74] sm:$0xf]
          %v540 = vld [vmem:[#allocation3 + $0x78] sm:$0xf]
          %v541 = vld [vmem:[#allocation3 + $0x7c] sm:$0xf]
          %v542 = vld [vmem:[#allocation3 + $0x80] sm:$0xf]
          %v543 = vld [vmem:[#allocation3 + $0x84] sm:$0xf]
          %v544 = vld [vmem:[#allocation3 + $0x88] sm:$0xf]
          %v545 = vld [vmem:[#allocation3 + $0x8c] sm:$0xf]
          %v546 = vld [vmem:[#allocation3 + $0x90] sm:$0xf]
          %v547 = vld [vmem:[#allocation3 + $0x94] sm:$0xf]
          %v548 = vld [vmem:[#allocation3 + $0x98] sm:$0xf]
          %v549 = vld [vmem:[#allocation3 + $0x9c] sm:$0xf]
          %v550 = vld [vmem:[#allocation3 + $0xa0] sm:$0xf]
          %v551 = vld [vmem:[#allocation3 + $0xa4] sm:$0xf]
          %v552 = vld [vmem:[#allocation3 + $0xa8] sm:$0xf]
          %v553 = vld [vmem:[#allocation3 + $0xac] sm:$0xf]
          %v554 = vld [vmem:[#allocation3 + $0xb0] sm:$0xf]
          %v555 = vld [vmem:[#allocation3 + $0xb4] sm:$0xf]
          %v556 = vld [vmem:[#allocation3 + $0xb8] sm:$0xf]
          %v557 = vld [vmem:[#allocation3 + $0xbc] sm:$0xf]
          %v558 = vld [vmem:[#allocation3 + $0xc0] sm:$0xf]
          %v559 = vld [vmem:[#allocation3 + $0xc4] sm:$0xf]
          %v560 = vld [vmem:[#allocation3 + $0xc8] sm:$0xf]
          %v561 = vld [vmem:[#allocation3 + $0xcc] sm:$0xf]
          %v562 = vld [vmem:[#allocation3 + $0xd0] sm:$0xf]
          %v563 = vld [vmem:[#allocation3 + $0xd4] sm:$0xf]
          %v564 = vld [vmem:[#allocation3 + $0xd8] sm:$0xf]
          %v565 = vld [vmem:[#allocation3 + $0xdc] sm:$0xf]
          %v566 = vld [vmem:[#allocation3 + $0xe0] sm:$0xf]
          %v567 = vld [vmem:[#allocation3 + $0xe4] sm:$0xf]
          %v568 = vld [vmem:[#allocation3 + $0xe8] sm:$0xf]
          %v569 = vld [vmem:[#allocation3 + $0xec] sm:$0xf]
          %v570 = vld [vmem:[#allocation3 + $0xf0] sm:$0xf]
          %v571 = vld [vmem:[#allocation3 + $0xf4] sm:$0xf]
          %v572 = vld [vmem:[#allocation3 + $0xf8] sm:$0xf]
          %v573 = vld [vmem:[#allocation3 + $0xfc] sm:$0xf]
          %v574 = vld [vmem:[#allocation3 + $0x100] sm:$0xf]
          %v575 = vld [vmem:[#allocation3 + $0x104] sm:$0xf]
          %v576 = vld [vmem:[#allocation3 + $0x108] sm:$0xf]
          %v577 = vld [vmem:[#allocation3 + $0x10c] sm:$0xf]
          %v578 = vld [vmem:[#allocation3 + $0x110] sm:$0xf]
          %v579 = vld [vmem:[#allocation3 + $0x114] sm:$0xf]
          %v580 = vld [vmem:[#allocation3 + $0x118] sm:$0xf]
          %v581 = vld [vmem:[#allocation3 + $0x11c] sm:$0xf]
          %v582 = vld [vmem:[#allocation3 + $0x120] sm:$0xf]
          %v583 = vld [vmem:[#allocation3 + $0x124] sm:$0xf]
          %v584 = vld [vmem:[#allocation3 + $0x128] sm:$0xf]
          %v585 = vld [vmem:[#allocation3 + $0x12c] sm:$0xf]
          %v586 = vld [vmem:[#allocation3 + $0x130] sm:$0xf]
          %v587 = vld [vmem:[#allocation3 + $0x134] sm:$0xf]
          %v588 = vld [vmem:[#allocation3 + $0x138] sm:$0xf]
          %v589 = vld [vmem:[#allocation3 + $0x13c] sm:$0xf]
          %v590 = vld [vmem:[#allocation3 + $0x140] sm:$0xf]
          %v591 = vld [vmem:[#allocation3 + $0x144] sm:$0xf]
          %v592 = vld [vmem:[#allocation3 + $0x148] sm:$0xf]
          %v593 = vld [vmem:[#allocation3 + $0x14c] sm:$0xf]
          %v594 = vld [vmem:[#allocation3 + $0x150] sm:$0xf]
          %v595 = vld [vmem:[#allocation3 + $0x154] sm:$0xf]
          %v596 = vld [vmem:[#allocation3 + $0x158] sm:$0xf]
          %v597 = vld [vmem:[#allocation3 + $0x15c] sm:$0xf]
          %v598 = vld [vmem:[#allocation3 + $0x160] sm:$0xf]
          %v599 = vld [vmem:[#allocation3 + $0x164] sm:$0xf]
          %v600 = vld [vmem:[#allocation3 + $0x168] sm:$0xf]
          %v601 = vld [vmem:[#allocation3 + $0x16c] sm:$0xf]
          %v602 = vld [vmem:[#allocation3 + $0x170] sm:$0xf]
          %v603 = vld [vmem:[#allocation3 + $0x174] sm:$0xf]
          %v604 = vld [vmem:[#allocation3 + $0x178] sm:$0xf]
          %v605 = vld [vmem:[#allocation3 + $0x17c] sm:$0xf]
          %v606 = vld [vmem:[#allocation3 + $0x180] sm:$0xf]
          %v607 = vld [vmem:[#allocation3 + $0x184] sm:$0xf]
          %v608 = vld [vmem:[#allocation3 + $0x188] sm:$0xf]
          %v609 = vld [vmem:[#allocation3 + $0x18c] sm:$0xf]
          %v610 = vld [vmem:[#allocation3 + $0x190] sm:$0xf]
          %v611 = vld [vmem:[#allocation3 + $0x194] sm:$0xf]
          %v612 = vld [vmem:[#allocation3 + $0x198] sm:$0xf]
          %v613 = vld [vmem:[#allocation3 + $0x19c] sm:$0xf]
          %v614 = vld [vmem:[#allocation3 + $0x1a0] sm:$0xf]
          %v615 = vld [vmem:[#allocation3 + $0x1a4] sm:$0xf]
          %v616 = vld [vmem:[#allocation3 + $0x1a8] sm:$0xf]
          %v617 = vld [vmem:[#allocation3 + $0x1ac] sm:$0xf]
          %v618 = vld [vmem:[#allocation3 + $0x1b0] sm:$0xf]
          %v619 = vld [vmem:[#allocation3 + $0x1b4] sm:$0xf]
          %v620 = vld [vmem:[#allocation3 + $0x1b8] sm:$0xf]
          %v621 = vld [vmem:[#allocation3 + $0x1bc] sm:$0xf]
          %v622 = vld [vmem:[#allocation3 + $0x1c0] sm:$0xf]
          %v623 = vld [vmem:[#allocation3 + $0x1c4] sm:$0xf]
          %v624 = vld [vmem:[#allocation3 + $0x1c8] sm:$0xf]
          %v625 = vld [vmem:[#allocation3 + $0x1cc] sm:$0xf]
          %v626 = vld [vmem:[#allocation3 + $0x1d0] sm:$0xf]
          %v627 = vld [vmem:[#allocation3 + $0x1d4] sm:$0xf]
          %v628 = vld [vmem:[#allocation3 + $0x1d8] sm:$0xf]
          %v629 = vld [vmem:[#allocation3 + $0x1dc] sm:$0xf]
          %v630 = vld [vmem:[#allocation3 + $0x1e0] sm:$0xf]
          %v631 = vld [vmem:[#allocation3 + $0x1e4] sm:$0xf]
          %v632 = vld [vmem:[#allocation3 + $0x1e8] sm:$0xf]
          %v633 = vld [vmem:[#allocation3 + $0x1ec] sm:$0xf]
          %v634 = vld [vmem:[#allocation3 + $0x1f0] sm:$0xf]
          %v635 = vld [vmem:[#allocation3 + $0x1f4] sm:$0xf]
          %v636 = vld [vmem:[#allocation3 + $0x1f8] sm:$0xf]
          %v637 = vld [vmem:[#allocation3 + $0x1fc] sm:$0xf]
          %v638 = vld [vmem:[#allocation3 + $0x200] sm:$0xf]
          %v639 = vld [vmem:[#allocation3 + $0x204] sm:$0xf]
          %v640 = vld [vmem:[#allocation3 + $0x208] sm:$0xf]
          %v641 = vld [vmem:[#allocation3 + $0x20c] sm:$0xf]
          %v642 = vld [vmem:[#allocation3 + $0x210] sm:$0xf]
          %v643 = vld [vmem:[#allocation3 + $0x214] sm:$0xf]
          %v644 = vld [vmem:[#allocation3 + $0x218] sm:$0xf]
          %v645 = vld [vmem:[#allocation3 + $0x21c] sm:$0xf]
          %v646 = vld [vmem:[#allocation3 + $0x220] sm:$0xf]
          %v647 = vld [vmem:[#allocation3 + $0x224] sm:$0xf]
          %v648 = vld [vmem:[#allocation3 + $0x228] sm:$0xf]
          %v649 = vld [vmem:[#allocation3 + $0x22c] sm:$0xf]
          %v650 = vld [vmem:[#allocation3 + $0x230] sm:$0xf]
          %v651 = vld [vmem:[#allocation3 + $0x234] sm:$0xf]
          %v652 = vld [vmem:[#allocation3 + $0x238] sm:$0xf]
          %v653 = vld [vmem:[#allocation3 + $0x23c] sm:$0xf]
          %v654 = vld [vmem:[#allocation3 + $0x240] sm:$0xf]
          %v655 = vld [vmem:[#allocation3 + $0x244] sm:$0xf]
          %v656 = vld [vmem:[#allocation3 + $0x248] sm:$0xf]
          %v657 = vld [vmem:[#allocation3 + $0x24c] sm:$0xf]
          %v658 = vld [vmem:[#allocation3 + $0x250] sm:$0xf]
          %v659 = vld [vmem:[#allocation3 + $0x254] sm:$0xf]
          %v660 = vld [vmem:[#allocation3 + $0x258] sm:$0xf]
          %v661 = vld [vmem:[#allocation3 + $0x25c] sm:$0xf]
          %v662 = vld [vmem:[#allocation3 + $0x260] sm:$0xf]
          %v663 = vld [vmem:[#allocation3 + $0x264] sm:$0xf]
          %v664 = vld [vmem:[#allocation3 + $0x268] sm:$0xf]
          %v665 = vld [vmem:[#allocation3 + $0x26c] sm:$0xf]
          %v666 = vld [vmem:[#allocation3 + $0x270] sm:$0xf]
          %v667 = vld [vmem:[#allocation3 + $0x274] sm:$0xf]
          %v668 = vld [vmem:[#allocation3 + $0x278] sm:$0xf]
          %v669 = vld [vmem:[#allocation3 + $0x27c] sm:$0xf]
          %v670 = vld [vmem:[#allocation3 + $0x280] sm:$0xf]
          %v671 = vld [vmem:[#allocation3 + $0x284] sm:$0xf]
          %v672 = vld [vmem:[#allocation3 + $0x288] sm:$0xf]
          %v673 = vld [vmem:[#allocation3 + $0x28c] sm:$0xf]
          %v674 = vld [vmem:[#allocation3 + $0x290] sm:$0xf]
          %v675 = vld [vmem:[#allocation3 + $0x294] sm:$0xf]
          %v676 = vld [vmem:[#allocation3 + $0x298] sm:$0xf]
          %v677 = vld [vmem:[#allocation3 + $0x29c] sm:$0xf]
          %v678 = vld [vmem:[#allocation3 + $0x2a0] sm:$0xf]
          %v679 = vld [vmem:[#allocation3 + $0x2a4] sm:$0xf]
          %v680 = vld [vmem:[#allocation3 + $0x2a8] sm:$0xf]
          %v681 = vld [vmem:[#allocation3 + $0x2ac] sm:$0xf]
          %v682 = vld [vmem:[#allocation3 + $0x2b0] sm:$0xf]
          %v683 = vld [vmem:[#allocation3 + $0x2b4] sm:$0xf]
          %v684 = vld [vmem:[#allocation3 + $0x2b8] sm:$0xf]
          %v685 = vld [vmem:[#allocation3 + $0x2bc] sm:$0xf]
          %v686 = vld [vmem:[#allocation3 + $0x2c0] sm:$0xf]
          %v687 = vld [vmem:[#allocation3 + $0x2c4] sm:$0xf]
          %v688 = vld [vmem:[#allocation3 + $0x2c8] sm:$0xf]
          %v689 = vld [vmem:[#allocation3 + $0x2cc] sm:$0xf]
          %v690 = vld [vmem:[#allocation3 + $0x2d0] sm:$0xf]
          %v691 = vld [vmem:[#allocation3 + $0x2d4] sm:$0xf]
          %v692 = vld [vmem:[#allocation3 + $0x2d8] sm:$0xf]
          %v693 = vld [vmem:[#allocation3 + $0x2dc] sm:$0xf]
          %v694 = vld [vmem:[#allocation3 + $0x2e0] sm:$0xf]
          %v695 = vld [vmem:[#allocation3 + $0x2e4] sm:$0xf]
          %v696 = vld [vmem:[#allocation3 + $0x2e8] sm:$0xf]
          %v697 = vld [vmem:[#allocation3 + $0x2ec] sm:$0xf]
          %v698 = vld [vmem:[#allocation3 + $0x2f0] sm:$0xf]
          %v699 = vld [vmem:[#allocation3 + $0x2f4] sm:$0xf]
          %v700 = vld [vmem:[#allocation3 + $0x2f8] sm:$0xf]
          %v701 = vld [vmem:[#allocation3 + $0x2fc] sm:$0xf]
          %v702 = vld [vmem:[#allocation3 + $0x300] sm:$0xf]
          %v703 = vld [vmem:[#allocation3 + $0x304] sm:$0xf]
          %v704 = vld [vmem:[#allocation3 + $0x308] sm:$0xf]
          %v705 = vld [vmem:[#allocation3 + $0x30c] sm:$0xf]
          %v706 = vld [vmem:[#allocation3 + $0x310] sm:$0xf]
          %v707 = vld [vmem:[#allocation3 + $0x314] sm:$0xf]
          %v708 = vld [vmem:[#allocation3 + $0x318] sm:$0xf]
          %v709 = vld [vmem:[#allocation3 + $0x31c] sm:$0xf]
          %v710 = vld [vmem:[#allocation3 + $0x320] sm:$0xf]
          %v711 = vld [vmem:[#allocation3 + $0x324] sm:$0xf]
          %v712 = vld [vmem:[#allocation3 + $0x328] sm:$0xf]
          %v713 = vld [vmem:[#allocation3 + $0x32c] sm:$0xf]
          %v714 = vld [vmem:[#allocation3 + $0x330] sm:$0xf]
          %v715 = vld [vmem:[#allocation3 + $0x334] sm:$0xf]
          %v716 = vld [vmem:[#allocation3 + $0x338] sm:$0xf]
          %v717 = vld [vmem:[#allocation3 + $0x33c] sm:$0xf]
          %v718 = vld [vmem:[#allocation3 + $0x340] sm:$0xf]
          %v719 = vld [vmem:[#allocation3 + $0x344] sm:$0xf]
          %v720 = vld [vmem:[#allocation3 + $0x348] sm:$0xf]
          %v721 = vld [vmem:[#allocation3 + $0x34c] sm:$0xf]
          %v722 = vld [vmem:[#allocation3 + $0x350] sm:$0xf]
          %v723 = vld [vmem:[#allocation3 + $0x354] sm:$0xf]
          %v724 = vld [vmem:[#allocation3 + $0x358] sm:$0xf]
          %v725 = vld [vmem:[#allocation3 + $0x35c] sm:$0xf]
          %v726 = vld [vmem:[#allocation3 + $0x360] sm:$0xf]
          %v727 = vld [vmem:[#allocation3 + $0x364] sm:$0xf]
          %v728 = vld [vmem:[#allocation3 + $0x368] sm:$0xf]
          %v729 = vld [vmem:[#allocation3 + $0x36c] sm:$0xf]
          %v730 = vld [vmem:[#allocation3 + $0x370] sm:$0xf]
          %v731 = vld [vmem:[#allocation3 + $0x374] sm:$0xf]
          %v732 = vld [vmem:[#allocation3 + $0x378] sm:$0xf]
          %v733 = vld [vmem:[#allocation3 + $0x37c] sm:$0xf]
          %v734 = vld [vmem:[#allocation3 + $0x380] sm:$0xf]
          %v735 = vld [vmem:[#allocation3 + $0x384] sm:$0xf]
          %v736 = vld [vmem:[#allocation3 + $0x388] sm:$0xf]
          %v737 = vld [vmem:[#allocation3 + $0x38c] sm:$0xf]
          %v738 = vld [vmem:[#allocation3 + $0x390] sm:$0xf]
          %v739 = vld [vmem:[#allocation3 + $0x394] sm:$0xf]
          %v740 = vld [vmem:[#allocation3 + $0x398] sm:$0xf]
          %v741 = vld [vmem:[#allocation3 + $0x39c] sm:$0xf]
          %v742 = vld [vmem:[#allocation3 + $0x3a0] sm:$0xf]
          %v743 = vld [vmem:[#allocation3 + $0x3a4] sm:$0xf]
          %v744 = vld [vmem:[#allocation3 + $0x3a8] sm:$0xf]
          %v745 = vld [vmem:[#allocation3 + $0x3ac] sm:$0xf]
          %v746 = vld [vmem:[#allocation3 + $0x3b0] sm:$0xf]
          %v747 = vld [vmem:[#allocation3 + $0x3b4] sm:$0xf]
          %v748 = vld [vmem:[#allocation3 + $0x3b8] sm:$0xf]
          %v749 = vld [vmem:[#allocation3 + $0x3bc] sm:$0xf]
          %v750 = vld [vmem:[#allocation3 + $0x3c0] sm:$0xf]
          %v751 = vld [vmem:[#allocation3 + $0x3c4] sm:$0xf]
          %v752 = vld [vmem:[#allocation3 + $0x3c8] sm:$0xf]
          %v753 = vld [vmem:[#allocation3 + $0x3cc] sm:$0xf]
          %v754 = vld [vmem:[#allocation3 + $0x3d0] sm:$0xf]
          %v755 = vld [vmem:[#allocation3 + $0x3d4] sm:$0xf]
          %v756 = vld [vmem:[#allocation3 + $0x3d8] sm:$0xf]
          %v757 = vld [vmem:[#allocation3 + $0x3dc] sm:$0xf]
          %v758 = vld [vmem:[#allocation3 + $0x3e0] sm:$0xf]
          %v759 = vld [vmem:[#allocation3 + $0x3e4] sm:$0xf]
          %v760 = vld [vmem:[#allocation3 + $0x3e8] sm:$0xf]
          %v761 = vld [vmem:[#allocation3 + $0x3ec] sm:$0xf]
          %v762 = vld [vmem:[#allocation3 + $0x3f0] sm:$0xf]
          %v763 = vld [vmem:[#allocation3 + $0x3f4] sm:$0xf]
          %v764 = vld [vmem:[#allocation3 + $0x3f8] sm:$0xf]
          %v765 = vld [vmem:[#allocation3 + $0x3fc] sm:$0xf]
          %v766 = vld [vmem:[#allocation3 + $0x400] sm:$0xf]
          %v767 = vld [vmem:[#allocation3 + $0x404] sm:$0xf]
          %v768 = vld [vmem:[#allocation3 + $0x408] sm:$0xf]
          %v769 = vld [vmem:[#allocation3 + $0x40c] sm:$0xf]
          %v770 = vld [vmem:[#allocation3 + $0x410] sm:$0xf]
          %v771 = vld [vmem:[#allocation3 + $0x414] sm:$0xf]
          %v772 = vld [vmem:[#allocation3 + $0x418] sm:$0xf]
          %v773 = vld [vmem:[#allocation3 + $0x41c] sm:$0xf]
          %v774 = vld [vmem:[#allocation3 + $0x420] sm:$0xf]
          %v775 = vld [vmem:[#allocation3 + $0x424] sm:$0xf]
          %v776 = vld [vmem:[#allocation3 + $0x428] sm:$0xf]
          %v777 = vld [vmem:[#allocation3 + $0x42c] sm:$0xf]
          %v778 = vld [vmem:[#allocation3 + $0x430] sm:$0xf]
          %v779 = vld [vmem:[#allocation3 + $0x434] sm:$0xf]
          %v780 = vld [vmem:[#allocation3 + $0x438] sm:$0xf]
          %v781 = vld [vmem:[#allocation3 + $0x43c] sm:$0xf]
          %v782 = vld [vmem:[#allocation3 + $0x440] sm:$0xf]
          %v783 = vld [vmem:[#allocation3 + $0x444] sm:$0xf]
          %v784 = vld [vmem:[#allocation3 + $0x448] sm:$0xf]
          %v785 = vld [vmem:[#allocation3 + $0x44c] sm:$0xf]
          %v786 = vld [vmem:[#allocation3 + $0x450] sm:$0xf]
          %v787 = vld [vmem:[#allocation3 + $0x454] sm:$0xf]
          %v788 = vld [vmem:[#allocation3 + $0x458] sm:$0xf]
          %v789 = vld [vmem:[#allocation3 + $0x45c] sm:$0xf]
          %v790 = vld [vmem:[#allocation3 + $0x460] sm:$0xf]
          %v791 = vld [vmem:[#allocation3 + $0x464] sm:$0xf]
          %v792 = vld [vmem:[#allocation3 + $0x468] sm:$0xf]
          %v793 = vld [vmem:[#allocation3 + $0x46c] sm:$0xf]
          %v794 = vld [vmem:[#allocation3 + $0x470] sm:$0xf]
          %v795 = vld [vmem:[#allocation3 + $0x474] sm:$0xf]
          %v796 = vld [vmem:[#allocation3 + $0x478] sm:$0xf]
          %v797 = vld [vmem:[#allocation3 + $0x47c] sm:$0xf]
          %v798 = vld [vmem:[#allocation3 + $0x480] sm:$0xf]
          %v799 = vld [vmem:[#allocation3 + $0x484] sm:$0xf]
          %v800 = vld [vmem:[#allocation3 + $0x488] sm:$0xf]
          %v801 = vld [vmem:[#allocation3 + $0x48c] sm:$0xf]
          %v802 = vld [vmem:[#allocation3 + $0x490] sm:$0xf]
          %v803 = vld [vmem:[#allocation3 + $0x494] sm:$0xf]
          %v804 = vld [vmem:[#allocation3 + $0x498] sm:$0xf]
          %v805 = vld [vmem:[#allocation3 + $0x49c] sm:$0xf]
          %v806 = vld [vmem:[#allocation3 + $0x4a0] sm:$0xf]
          %v807 = vld [vmem:[#allocation3 + $0x4a4] sm:$0xf]
          %v808 = vld [vmem:[#allocation3 + $0x4a8] sm:$0xf]
          %v809 = vld [vmem:[#allocation3 + $0x4ac] sm:$0xf]
          %v810 = vld [vmem:[#allocation3 + $0x4b0] sm:$0xf]
          %v811 = vld [vmem:[#allocation3 + $0x4b4] sm:$0xf]
          %v812 = vld [vmem:[#allocation3 + $0x4b8] sm:$0xf]
          %v813 = vld [vmem:[#allocation3 + $0x4bc] sm:$0xf]
          %v814 = vld [vmem:[#allocation3 + $0x4c0] sm:$0xf]
          %v815 = vld [vmem:[#allocation3 + $0x4c4] sm:$0xf]
          %v816 = vld [vmem:[#allocation3 + $0x4c8] sm:$0xf]
          %v817 = vld [vmem:[#allocation3 + $0x4cc] sm:$0xf]
          %v818 = vld [vmem:[#allocation3 + $0x4d0] sm:$0xf]
          %v819 = vld [vmem:[#allocation3 + $0x4d4] sm:$0xf]
          %v820 = vld [vmem:[#allocation3 + $0x4d8] sm:$0xf]
          %v821 = vld [vmem:[#allocation3 + $0x4dc] sm:$0xf]
          %v822 = vld [vmem:[#allocation3 + $0x4e0] sm:$0xf]
          %v823 = vld [vmem:[#allocation3 + $0x4e4] sm:$0xf]
          %v824 = vld [vmem:[#allocation3 + $0x4e8] sm:$0xf]
          %v825 = vld [vmem:[#allocation3 + $0x4ec] sm:$0xf]
          %v826 = vld [vmem:[#allocation3 + $0x4f0] sm:$0xf]
          %v827 = vld [vmem:[#allocation3 + $0x4f4] sm:$0xf]
          %v828 = vld [vmem:[#allocation3 + $0x4f8] sm:$0xf]
          %v829 = vld [vmem:[#allocation3 + $0x4fc] sm:$0xf]
          %v830 = vld [vmem:[#allocation3 + $0x500] sm:$0xf]
          %v831 = vld [vmem:[#allocation3 + $0x504] sm:$0xf]
          %v832 = vld [vmem:[#allocation3 + $0x508] sm:$0xf]
          %v833 = vld [vmem:[#allocation3 + $0x50c] sm:$0xf]
          %v834 = vld [vmem:[#allocation3 + $0x510] sm:$0xf]
          %v835 = vld [vmem:[#allocation3 + $0x514] sm:$0xf]
          %v836 = vld [vmem:[#allocation3 + $0x518] sm:$0xf]
          %v837 = vld [vmem:[#allocation3 + $0x51c] sm:$0xf]
          %v838 = vld [vmem:[#allocation3 + $0x520] sm:$0xf]
          %v839 = vld [vmem:[#allocation3 + $0x524] sm:$0xf]
          %v840 = vld [vmem:[#allocation3 + $0x528] sm:$0xf]
          %v841 = vld [vmem:[#allocation3 + $0x52c] sm:$0xf]
          %v842 = vld [vmem:[#allocation3 + $0x530] sm:$0xf]
          %v843 = vld [vmem:[#allocation3 + $0x534] sm:$0xf]
          %v844 = vld [vmem:[#allocation3 + $0x538] sm:$0xf]
          %v845 = vld [vmem:[#allocation3 + $0x53c] sm:$0xf]
          %v846 = vld [vmem:[#allocation3 + $0x540] sm:$0xf]
          %v847 = vld [vmem:[#allocation3 + $0x544] sm:$0xf]
          %v848 = vld [vmem:[#allocation3 + $0x548] sm:$0xf]
          %v849 = vld [vmem:[#allocation3 + $0x54c] sm:$0xf]
          %v850 = vld [vmem:[#allocation3 + $0x550] sm:$0xf]
          %v851 = vld [vmem:[#allocation3 + $0x554] sm:$0xf]
          %v852 = vld [vmem:[#allocation3 + $0x558] sm:$0xf]
          %v853 = vld [vmem:[#allocation3 + $0x55c] sm:$0xf]
          %v854 = vld [vmem:[#allocation3 + $0x560] sm:$0xf]
          %v855 = vld [vmem:[#allocation3 + $0x564] sm:$0xf]
          %v856 = vld [vmem:[#allocation3 + $0x568] sm:$0xf]
          %v857 = vld [vmem:[#allocation3 + $0x56c] sm:$0xf]
          %v858 = vld [vmem:[#allocation3 + $0x570] sm:$0xf]
          %v859 = vld [vmem:[#allocation3 + $0x574] sm:$0xf]
          %v860 = vld [vmem:[#allocation3 + $0x578] sm:$0xf]
          %v861 = vld [vmem:[#allocation3 + $0x57c] sm:$0xf]
          %v862 = vld [vmem:[#allocation3 + $0x580] sm:$0xf]
          %v863 = vld [vmem:[#allocation3 + $0x584] sm:$0xf]
          %v864 = vld [vmem:[#allocation3 + $0x588] sm:$0xf]
          %v865 = vld [vmem:[#allocation3 + $0x58c] sm:$0xf]
          %v866 = vld [vmem:[#allocation3 + $0x590] sm:$0xf]
          %v867 = vld [vmem:[#allocation3 + $0x594] sm:$0xf]
          %v868 = vld [vmem:[#allocation3 + $0x598] sm:$0xf]
          %v869 = vld [vmem:[#allocation3 + $0x59c] sm:$0xf]
          %v870 = vld [vmem:[#allocation3 + $0x5a0] sm:$0xf]
          %v871 = vld [vmem:[#allocation3 + $0x5a4] sm:$0xf]
          %v872 = vld [vmem:[#allocation3 + $0x5a8] sm:$0xf]
          %v873 = vld [vmem:[#allocation3 + $0x5ac] sm:$0xf]
          %v874 = vld [vmem:[#allocation3 + $0x5b0] sm:$0xf]
          %v875 = vld [vmem:[#allocation3 + $0x5b4] sm:$0xf]
          %v876 = vld [vmem:[#allocation3 + $0x5b8] sm:$0xf]
          %v877 = vld [vmem:[#allocation3 + $0x5bc] sm:$0xf]
          %v878 = vld [vmem:[#allocation3 + $0x5c0] sm:$0xf]
          %v879 = vld [vmem:[#allocation3 + $0x5c4] sm:$0xf]
          %v880 = vld [vmem:[#allocation3 + $0x5c8] sm:$0xf]
          %v881 = vld [vmem:[#allocation3 + $0x5cc] sm:$0xf]
          %v882 = vld [vmem:[#allocation3 + $0x5d0] sm:$0xf]
          %v883 = vld [vmem:[#allocation3 + $0x5d4] sm:$0xf]
          %v884 = vld [vmem:[#allocation3 + $0x5d8] sm:$0xf]
          %v885 = vld [vmem:[#allocation3 + $0x5dc] sm:$0xf]
          %v886 = vld [vmem:[#allocation3 + $0x5e0] sm:$0xf]
          %v887 = vld [vmem:[#allocation3 + $0x5e4] sm:$0xf]
          %v888 = vld [vmem:[#allocation3 + $0x5e8] sm:$0xf]
          %v889 = vld [vmem:[#allocation3 + $0x5ec] sm:$0xf]
          %v890 = vld [vmem:[#allocation3 + $0x5f0] sm:$0xf]
          %v891 = vld [vmem:[#allocation3 + $0x5f4] sm:$0xf]
          %v892 = vld [vmem:[#allocation3 + $0x5f8] sm:$0xf]
          %v893 = vld [vmem:[#allocation3 + $0x5fc] sm:$0xf]
          %v894 = vld [vmem:[#allocation3 + $0x600] sm:$0xf]
          %v895 = vld [vmem:[#allocation3 + $0x604] sm:$0xf]
          %v896 = vld [vmem:[#allocation3 + $0x608] sm:$0xf]
          %v897 = vld [vmem:[#allocation3 + $0x60c] sm:$0xf]
          %v898 = vld [vmem:[#allocation3 + $0x610] sm:$0xf]
          %v899 = vld [vmem:[#allocation3 + $0x614] sm:$0xf]
          %v900 = vld [vmem:[#allocation3 + $0x618] sm:$0xf]
          %v901 = vld [vmem:[#allocation3 + $0x61c] sm:$0xf]
          %v902 = vld [vmem:[#allocation3 + $0x620] sm:$0xf]
          %v903 = vld [vmem:[#allocation3 + $0x624] sm:$0xf]
          %v904 = vld [vmem:[#allocation3 + $0x628] sm:$0xf]
          %v905 = vld [vmem:[#allocation3 + $0x62c] sm:$0xf]
          %v906 = vld [vmem:[#allocation3 + $0x630] sm:$0xf]
          %v907 = vld [vmem:[#allocation3 + $0x634] sm:$0xf]
          %v908 = vld [vmem:[#allocation3 + $0x638] sm:$0xf]
          %v909 = vld [vmem:[#allocation3 + $0x63c] sm:$0xf]
          %v910 = vld [vmem:[#allocation3 + $0x640] sm:$0xf]
          %v911 = vld [vmem:[#allocation3 + $0x644] sm:$0xf]
          %v912 = vld [vmem:[#allocation3 + $0x648] sm:$0xf]
          %v913 = vld [vmem:[#allocation3 + $0x64c] sm:$0xf]
          %v914 = vld [vmem:[#allocation3 + $0x650] sm:$0xf]
          %v915 = vld [vmem:[#allocation3 + $0x654] sm:$0xf]
          %v916 = vld [vmem:[#allocation3 + $0x658] sm:$0xf]
          %v917 = vld [vmem:[#allocation3 + $0x65c] sm:$0xf]
          %v918 = vld [vmem:[#allocation3 + $0x660] sm:$0xf]
          %v919 = vld [vmem:[#allocation3 + $0x664] sm:$0xf]
          %v920 = vld [vmem:[#allocation3 + $0x668] sm:$0xf]
          %v921 = vld [vmem:[#allocation3 + $0x66c] sm:$0xf]
          %v922 = vld [vmem:[#allocation3 + $0x670] sm:$0xf]
          %v923 = vld [vmem:[#allocation3 + $0x674] sm:$0xf]
          %v924 = vld [vmem:[#allocation3 + $0x678] sm:$0xf]
          %v925 = vld [vmem:[#allocation3 + $0x67c] sm:$0xf]
          %v926 = vld [vmem:[#allocation3 + $0x680] sm:$0xf]
          %v927 = vld [vmem:[#allocation3 + $0x684] sm:$0xf]
          %v928 = vld [vmem:[#allocation3 + $0x688] sm:$0xf]
          %v929 = vld [vmem:[#allocation3 + $0x68c] sm:$0xf]
          %v930 = vld [vmem:[#allocation3 + $0x690] sm:$0xf]
          %v931 = vld [vmem:[#allocation3 + $0x694] sm:$0xf]
          %v932 = vld [vmem:[#allocation3 + $0x698] sm:$0xf]
          %v933 = vld [vmem:[#allocation3 + $0x69c] sm:$0xf]
          %v934 = vld [vmem:[#allocation3 + $0x6a0] sm:$0xf]
          %v935 = vld [vmem:[#allocation3 + $0x6a4] sm:$0xf]
          %v936 = vld [vmem:[#allocation3 + $0x6a8] sm:$0xf]
          %v937 = vld [vmem:[#allocation3 + $0x6ac] sm:$0xf]
          %v938 = vld [vmem:[#allocation3 + $0x6b0] sm:$0xf]
          %v939 = vld [vmem:[#allocation3 + $0x6b4] sm:$0xf]
          %v940 = vld [vmem:[#allocation3 + $0x6b8] sm:$0xf]
          %v941 = vld [vmem:[#allocation3 + $0x6bc] sm:$0xf]
          %v942 = vld [vmem:[#allocation3 + $0x6c0] sm:$0xf]
          %v943 = vld [vmem:[#allocation3 + $0x6c4] sm:$0xf]
          %v944 = vld [vmem:[#allocation3 + $0x6c8] sm:$0xf]
          %v945 = vld [vmem:[#allocation3 + $0x6cc] sm:$0xf]
          %v946 = vld [vmem:[#allocation3 + $0x6d0] sm:$0xf]
          %v947 = vld [vmem:[#allocation3 + $0x6d4] sm:$0xf]
          %v948 = vld [vmem:[#allocation3 + $0x6d8] sm:$0xf]
          %v949 = vld [vmem:[#allocation3 + $0x6dc] sm:$0xf]
          %v950 = vld [vmem:[#allocation3 + $0x6e0] sm:$0xf]
          %v951 = vld [vmem:[#allocation3 + $0x6e4] sm:$0xf]
          %v952 = vld [vmem:[#allocation3 + $0x6e8] sm:$0xf]
          %v953 = vld [vmem:[#allocation3 + $0x6ec] sm:$0xf]
          %v954 = vld [vmem:[#allocation3 + $0x6f0] sm:$0xf]
          %v955 = vld [vmem:[#allocation3 + $0x6f4] sm:$0xf]
          %v956 = vld [vmem:[#allocation3 + $0x6f8] sm:$0xf]
          %v957 = vld [vmem:[#allocation3 + $0x6fc] sm:$0xf]
          %v958 = vld [vmem:[#allocation3 + $0x700] sm:$0xf]
          %v959 = vld [vmem:[#allocation3 + $0x704] sm:$0xf]
          %v960 = vld [vmem:[#allocation3 + $0x708] sm:$0xf]
          %v961 = vld [vmem:[#allocation3 + $0x70c] sm:$0xf]
          %v962 = vld [vmem:[#allocation3 + $0x710] sm:$0xf]
          %v963 = vld [vmem:[#allocation3 + $0x714] sm:$0xf]
          %v964 = vld [vmem:[#allocation3 + $0x718] sm:$0xf]
          %v965 = vld [vmem:[#allocation3 + $0x71c] sm:$0xf]
          %v966 = vld [vmem:[#allocation3 + $0x720] sm:$0xf]
          %v967 = vld [vmem:[#allocation3 + $0x724] sm:$0xf]
          %v968 = vld [vmem:[#allocation3 + $0x728] sm:$0xf]
          %v969 = vld [vmem:[#allocation3 + $0x72c] sm:$0xf]
          %v970 = vld [vmem:[#allocation3 + $0x730] sm:$0xf]
          %v971 = vld [vmem:[#allocation3 + $0x734] sm:$0xf]
          %v972 = vld [vmem:[#allocation3 + $0x738] sm:$0xf]
          %v973 = vld [vmem:[#allocation3 + $0x73c] sm:$0xf]
          %v974 = vld [vmem:[#allocation3 + $0x740] sm:$0xf]
          %v975 = vld [vmem:[#allocation3 + $0x744] sm:$0xf]
          %v976 = vld [vmem:[#allocation3 + $0x748] sm:$0xf]
          %v977 = vld [vmem:[#allocation3 + $0x74c] sm:$0xf]
          %v978 = vld [vmem:[#allocation3 + $0x750] sm:$0xf]
          %v979 = vld [vmem:[#allocation3 + $0x754] sm:$0xf]
          %v980 = vld [vmem:[#allocation3 + $0x758] sm:$0xf]
          %v981 = vld [vmem:[#allocation3 + $0x75c] sm:$0xf]
          %v982 = vld [vmem:[#allocation3 + $0x760] sm:$0xf]
          %v983 = vld [vmem:[#allocation3 + $0x764] sm:$0xf]
          %v984 = vld [vmem:[#allocation3 + $0x768] sm:$0xf]
          %v985 = vld [vmem:[#allocation3 + $0x76c] sm:$0xf]
          %v986 = vld [vmem:[#allocation3 + $0x770] sm:$0xf]
          %v987 = vld [vmem:[#allocation3 + $0x774] sm:$0xf]
          %v988 = vld [vmem:[#allocation3 + $0x778] sm:$0xf]
          %v989 = vld [vmem:[#allocation3 + $0x77c] sm:$0xf]
          %v990 = vld [vmem:[#allocation3 + $0x780] sm:$0xf]
          %v991 = vld [vmem:[#allocation3 + $0x784] sm:$0xf]
          %v992 = vld [vmem:[#allocation3 + $0x788] sm:$0xf]
          %v993 = vld [vmem:[#allocation3 + $0x78c] sm:$0xf]
          %v994 = vld [vmem:[#allocation3 + $0x790] sm:$0xf]
          %v995 = vld [vmem:[#allocation3 + $0x794] sm:$0xf]
          %v996 = vld [vmem:[#allocation3 + $0x798] sm:$0xf]
          %v997 = vld [vmem:[#allocation3 + $0x79c] sm:$0xf]
          %v998 = vld [vmem:[#allocation3 + $0x7a0] sm:$0xf]
          %v999 = vld [vmem:[#allocation3 + $0x7a4] sm:$0xf]
          %v1000 = vld [vmem:[#allocation3 + $0x7a8] sm:$0xf]
          %v1001 = vld [vmem:[#allocation3 + $0x7ac] sm:$0xf]
          %v1002 = vld [vmem:[#allocation3 + $0x7b0] sm:$0xf]
          %v1003 = vld [vmem:[#allocation3 + $0x7b4] sm:$0xf]
          %v1004 = vld [vmem:[#allocation3 + $0x7b8] sm:$0xf]
          %v1005 = vld [vmem:[#allocation3 + $0x7bc] sm:$0xf]
          %v1006 = vld [vmem:[#allocation3 + $0x7c0] sm:$0xf]
          %v1007 = vld [vmem:[#allocation3 + $0x7c4] sm:$0xf]
          %v1008 = vld [vmem:[#allocation3 + $0x7c8] sm:$0xf]
          %v1009 = vld [vmem:[#allocation3 + $0x7cc] sm:$0xf]
          %v1010 = vld [vmem:[#allocation3 + $0x7d0] sm:$0xf]
          %v1011 = vld [vmem:[#allocation3 + $0x7d4] sm:$0xf]
          %v1012 = vld [vmem:[#allocation3 + $0x7d8] sm:$0xf]
          %v1013 = vld [vmem:[#allocation3 + $0x7dc] sm:$0xf]
          %v1014 = vld [vmem:[#allocation3 + $0x7e0] sm:$0xf]
          %v1015 = vld [vmem:[#allocation3 + $0x7e4] sm:$0xf]
          %v1016 = vld [vmem:[#allocation3 + $0x7e8] sm:$0xf]
          %v1017 = vld [vmem:[#allocation3 + $0x7ec] sm:$0xf]
          %v1018 = vld [vmem:[#allocation3 + $0x7f0] sm:$0xf]
          %v1019 = vld [vmem:[#allocation3 + $0x7f4] sm:$0xf]
          %v1020 = vld [vmem:[#allocation3 + $0x7f8] sm:$0xf]
          %v1021 = vld [vmem:[#allocation3 + $0x7fc] sm:$0xf]
          %v1022 = vld [vmem:[#allocation3 + $0x800] sm:$0xf]
          %v1023 = vld [vmem:[#allocation3 + $0x804] sm:$0xf]
          %v1024 = vld [vmem:[#allocation3 + $0x808] sm:$0xf]
          %v1025 = vld [vmem:[#allocation3 + $0x80c] sm:$0xf]
          %v1026 = vld [vmem:[#allocation3 + $0x810] sm:$0xf]
          %v1027 = vld [vmem:[#allocation3 + $0x814] sm:$0xf]
          %v1028 = vld [vmem:[#allocation3 + $0x818] sm:$0xf]
          %v1029 = vld [vmem:[#allocation3 + $0x81c] sm:$0xf]
          %v1030 = vld [vmem:[#allocation3 + $0x820] sm:$0xf]
          %v1031 = vld [vmem:[#allocation3 + $0x824] sm:$0xf]
          %v1032 = vld [vmem:[#allocation3 + $0x828] sm:$0xf]
          %v1033 = vld [vmem:[#allocation3 + $0x82c] sm:$0xf]
          %v1034 = vld [vmem:[#allocation3 + $0x830] sm:$0xf]
          %v1035 = vld [vmem:[#allocation3 + $0x834] sm:$0xf]
          %v1036 = vld [vmem:[#allocation3 + $0x838] sm:$0xf]
          %v1037 = vld [vmem:[#allocation3 + $0x83c] sm:$0xf]
          %v1038 = vld [vmem:[#allocation3 + $0x840] sm:$0xf]
          %v1039 = vld [vmem:[#allocation3 + $0x844] sm:$0xf]
          %v1040 = vld [vmem:[#allocation3 + $0x848] sm:$0xf]
          %v1041 = vld [vmem:[#allocation3 + $0x84c] sm:$0xf]
          %v1042 = vld [vmem:[#allocation3 + $0x850] sm:$0xf]
          %v1043 = vld [vmem:[#allocation3 + $0x854] sm:$0xf]
          %v1044 = vld [vmem:[#allocation3 + $0x858] sm:$0xf]
          %v1045 = vld [vmem:[#allocation3 + $0x85c] sm:$0xf]
          %v1046 = vld [vmem:[#allocation3 + $0x860] sm:$0xf]
          %v1047 = vld [vmem:[#allocation3 + $0x864] sm:$0xf]
          %v1048 = vld [vmem:[#allocation3 + $0x868] sm:$0xf]
          %v1049 = vld [vmem:[#allocation3 + $0x86c] sm:$0xf]
          %v1050 = vld [vmem:[#allocation3 + $0x870] sm:$0xf]
          %v1051 = vld [vmem:[#allocation3 + $0x874] sm:$0xf]
          %v1052 = vld [vmem:[#allocation3 + $0x878] sm:$0xf]
          %v1053 = vld [vmem:[#allocation3 + $0x87c] sm:$0xf]
          %v1054 = vld [vmem:[#allocation3 + $0x880] sm:$0xf]
          %v1055 = vld [vmem:[#allocation3 + $0x884] sm:$0xf]
          %v1056 = vld [vmem:[#allocation3 + $0x888] sm:$0xf]
          %v1057 = vld [vmem:[#allocation3 + $0x88c] sm:$0xf]
          %v1058 = vld [vmem:[#allocation3 + $0x890] sm:$0xf]
          %v1059 = vld [vmem:[#allocation3 + $0x894] sm:$0xf]
          %v1060 = vld [vmem:[#allocation3 + $0x898] sm:$0xf]
          %v1061 = vld [vmem:[#allocation3 + $0x89c] sm:$0xf]
          %v1062 = vld [vmem:[#allocation3 + $0x8a0] sm:$0xf]
          %v1063 = vld [vmem:[#allocation3 + $0x8a4] sm:$0xf]
          %v1064 = vld [vmem:[#allocation3 + $0x8a8] sm:$0xf]
          %v1065 = vld [vmem:[#allocation3 + $0x8ac] sm:$0xf]
          %v1066 = vld [vmem:[#allocation3 + $0x8b0] sm:$0xf]
          %v1067 = vld [vmem:[#allocation3 + $0x8b4] sm:$0xf]
          %v1068 = vld [vmem:[#allocation3 + $0x8b8] sm:$0xf]
          %v1069 = vld [vmem:[#allocation3 + $0x8bc] sm:$0xf]
          %v1070 = vld [vmem:[#allocation3 + $0x8c0] sm:$0xf]
          %v1071 = vld [vmem:[#allocation3 + $0x8c4] sm:$0xf]
          %v1072 = vld [vmem:[#allocation3 + $0x8c8] sm:$0xf]
          %v1073 = vld [vmem:[#allocation3 + $0x8cc] sm:$0xf]
          %v1074 = vld [vmem:[#allocation3 + $0x8d0] sm:$0xf]
          %v1075 = vld [vmem:[#allocation3 + $0x8d4] sm:$0xf]
          %v1076 = vld [vmem:[#allocation3 + $0x8d8] sm:$0xf]
          %v1077 = vld [vmem:[#allocation3 + $0x8dc] sm:$0xf]
          %v1078 = vld [vmem:[#allocation3 + $0x8e0] sm:$0xf]
          %v1079 = vld [vmem:[#allocation3 + $0x8e4] sm:$0xf]
          %v1080 = vld [vmem:[#allocation3 + $0x8e8] sm:$0xf]
          %v1081 = vld [vmem:[#allocation3 + $0x8ec] sm:$0xf]
          %v1082 = vld [vmem:[#allocation3 + $0x8f0] sm:$0xf]
          %v1083 = vld [vmem:[#allocation3 + $0x8f4] sm:$0xf]
          %v1084 = vld [vmem:[#allocation3 + $0x8f8] sm:$0xf]
          %v1085 = vld [vmem:[#allocation3 + $0x8fc] sm:$0xf]
          %v1086 = vld [vmem:[#allocation3 + $0x900] sm:$0xf]
          %v1087 = vld [vmem:[#allocation3 + $0x904] sm:$0xf]
          %v1088 = vld [vmem:[#allocation3 + $0x908] sm:$0xf]
          %v1089 = vld [vmem:[#allocation3 + $0x90c] sm:$0xf]
          %v1090 = vld [vmem:[#allocation3 + $0x910] sm:$0xf]
          %v1091 = vld [vmem:[#allocation3 + $0x914] sm:$0xf]
          %v1092 = vld [vmem:[#allocation3 + $0x918] sm:$0xf]
          %v1093 = vld [vmem:[#allocation3 + $0x91c] sm:$0xf]
          %v1094 = vld [vmem:[#allocation3 + $0x920] sm:$0xf]
          %v1095 = vld [vmem:[#allocation3 + $0x924] sm:$0xf]
          %v1096 = vld [vmem:[#allocation3 + $0x928] sm:$0xf]
          %v1097 = vld [vmem:[#allocation3 + $0x92c] sm:$0xf]
          %v1098 = vld [vmem:[#allocation3 + $0x930] sm:$0xf]
          %v1099 = vld [vmem:[#allocation3 + $0x934] sm:$0xf]
          %v1100 = vld [vmem:[#allocation3 + $0x938] sm:$0xf]
          %v1101 = vld [vmem:[#allocation3 + $0x93c] sm:$0xf]
          %v1102 = vld [vmem:[#allocation3 + $0x940] sm:$0xf]
          %v1103 = vld [vmem:[#allocation3 + $0x944] sm:$0xf]
          %v1104 = vld [vmem:[#allocation3 + $0x948] sm:$0xf]
          %v1105 = vld [vmem:[#allocation3 + $0x94c] sm:$0xf]
          %v1106 = vld [vmem:[#allocation3 + $0x950] sm:$0xf]
          %v1107 = vld [vmem:[#allocation3 + $0x954] sm:$0xf]
          %v1108 = vld [vmem:[#allocation3 + $0x958] sm:$0xf]
          %v1109 = vld [vmem:[#allocation3 + $0x95c] sm:$0xf]
          %v1110 = vld [vmem:[#allocation3 + $0x960] sm:$0xf]
          %v1111 = vld [vmem:[#allocation3 + $0x964] sm:$0xf]
          %v1112 = vld [vmem:[#allocation3 + $0x968] sm:$0xf]
          %v1113 = vld [vmem:[#allocation3 + $0x96c] sm:$0xf]
          %v1114 = vld [vmem:[#allocation3 + $0x970] sm:$0xf]
          %v1115 = vld [vmem:[#allocation3 + $0x974] sm:$0xf]
          %v1116 = vld [vmem:[#allocation3 + $0x978] sm:$0xf]
          %v1117 = vld [vmem:[#allocation3 + $0x97c] sm:$0xf]
          %v1118 = vld [vmem:[#allocation3 + $0x980] sm:$0xf]
          %v1119 = vld [vmem:[#allocation5] sm:$0x1]
          %v1121 = vperm.slane %v1119, 0
          %v1732 = vunpack.c.l.b16 %v510
          %v1733 = vunpack.c.l.b16 %v511
          %v1734 = vunpack.c.l.b16 %v512
          %v1735 = vunpack.c.l.b16 %v513
          %v1736 = vunpack.c.l.b16 %v514
          %v1737 = vunpack.c.l.b16 %v515
          %v1738 = vunpack.c.l.b16 %v516
          %v1739 = vunpack.c.l.b16 %v517
          %v1740 = vunpack.c.l.b16 %v518
          %v1741 = vunpack.c.l.b16 %v519
          %v1742 = vunpack.c.l.b16 %v520
          %v1743 = vunpack.c.l.b16 %v521
          %v1744 = vunpack.c.l.b16 %v522
          %v1745 = vunpack.c.l.b16 %v523
          %v1746 = vunpack.c.l.b16 %v524
          %v1747 = vunpack.c.l.b16 %v525
          %v1748 = vunpack.c.l.b16 %v526
          %v1749 = vunpack.c.l.b16 %v527
          %v1750 = vunpack.c.l.b16 %v528
          %v1751 = vunpack.c.l.b16 %v529
          %v1752 = vunpack.c.l.b16 %v530
          %v1753 = vunpack.c.l.b16 %v531
          %v1754 = vunpack.c.l.b16 %v532
          %v1755 = vunpack.c.l.b16 %v533
          %v1756 = vunpack.c.l.b16 %v534
          %v1757 = vunpack.c.l.b16 %v535
          %v1758 = vunpack.c.l.b16 %v536
          %v1759 = vunpack.c.l.b16 %v537
          %v1760 = vunpack.c.l.b16 %v538
          %v1761 = vunpack.c.l.b16 %v539
          %v1762 = vunpack.c.l.b16 %v540
          %v1763 = vunpack.c.l.b16 %v541
          %v1764 = vunpack.c.l.b16 %v542
          %v1765 = vunpack.c.l.b16 %v543
          %v1766 = vunpack.c.l.b16 %v544
          %v1767 = vunpack.c.l.b16 %v545
          %v1768 = vunpack.c.l.b16 %v546
          %v1769 = vunpack.c.l.b16 %v547
          %v1770 = vunpack.c.l.b16 %v548
          %v1771 = vunpack.c.l.b16 %v549
          %v1772 = vunpack.c.l.b16 %v550
          %v1773 = vunpack.c.l.b16 %v551
          %v1774 = vunpack.c.l.b16 %v552
          %v1775 = vunpack.c.l.b16 %v553
          %v1776 = vunpack.c.l.b16 %v554
          %v1777 = vunpack.c.l.b16 %v555
          %v1778 = vunpack.c.l.b16 %v556
          %v1779 = vunpack.c.l.b16 %v557
          %v1780 = vunpack.c.l.b16 %v558
          %v1781 = vunpack.c.l.b16 %v559
          %v1782 = vunpack.c.l.b16 %v560
          %v1783 = vunpack.c.l.b16 %v561
          %v1784 = vunpack.c.l.b16 %v562
          %v1785 = vunpack.c.l.b16 %v563
          %v1786 = vunpack.c.l.b16 %v564
          %v1787 = vunpack.c.l.b16 %v565
          %v1788 = vunpack.c.l.b16 %v566
          %v1789 = vunpack.c.l.b16 %v567
          %v1790 = vunpack.c.l.b16 %v568
          %v1791 = vunpack.c.l.b16 %v569
          %v1792 = vunpack.c.l.b16 %v570
          %v1793 = vunpack.c.l.b16 %v571
          %v1794 = vunpack.c.l.b16 %v572
          %v1795 = vunpack.c.l.b16 %v573
          %v1796 = vunpack.c.l.b16 %v574
          %v1797 = vunpack.c.l.b16 %v575
          %v1798 = vunpack.c.l.b16 %v576
          %v1799 = vunpack.c.l.b16 %v577
          %v1800 = vunpack.c.l.b16 %v578
          %v1801 = vunpack.c.l.b16 %v579
          %v1802 = vunpack.c.l.b16 %v580
          %v1803 = vunpack.c.l.b16 %v581
          %v1804 = vunpack.c.l.b16 %v582
          %v1805 = vunpack.c.l.b16 %v583
          %v1806 = vunpack.c.l.b16 %v584
          %v1807 = vunpack.c.l.b16 %v585
          %v1808 = vunpack.c.l.b16 %v586
          %v1809 = vunpack.c.l.b16 %v587
          %v1810 = vunpack.c.l.b16 %v588
          %v1811 = vunpack.c.l.b16 %v589
          %v1812 = vunpack.c.l.b16 %v590
          %v1813 = vunpack.c.l.b16 %v591
          %v1814 = vunpack.c.l.b16 %v592
          %v1815 = vunpack.c.l.b16 %v593
          %v1816 = vunpack.c.l.b16 %v594
          %v1817 = vunpack.c.l.b16 %v595
          %v1818 = vunpack.c.l.b16 %v596
          %v1819 = vunpack.c.l.b16 %v597
          %v1820 = vunpack.c.l.b16 %v598
          %v1821 = vunpack.c.l.b16 %v599
          %v1822 = vunpack.c.l.b16 %v600
          %v1823 = vunpack.c.l.b16 %v601
          %v1824 = vunpack.c.l.b16 %v602
          %v1825 = vunpack.c.l.b16 %v603
          %v1826 = vunpack.c.l.b16 %v604
          %v1827 = vunpack.c.l.b16 %v605
          %v1828 = vunpack.c.l.b16 %v606
          %v1829 = vunpack.c.l.b16 %v607
          %v1830 = vunpack.c.l.b16 %v608
          %v1831 = vunpack.c.l.b16 %v609
          %v1832 = vunpack.c.l.b16 %v610
          %v1833 = vunpack.c.l.b16 %v611
          %v1834 = vunpack.c.l.b16 %v612
          %v1835 = vunpack.c.l.b16 %v613
          %v1836 = vunpack.c.l.b16 %v614
          %v1837 = vunpack.c.l.b16 %v615
          %v1838 = vunpack.c.l.b16 %v616
          %v1839 = vunpack.c.l.b16 %v617
          %v1840 = vunpack.c.l.b16 %v618
          %v1841 = vunpack.c.l.b16 %v619
          %v1842 = vunpack.c.l.b16 %v620
          %v1843 = vunpack.c.l.b16 %v621
          %v1844 = vunpack.c.l.b16 %v622
          %v1845 = vunpack.c.l.b16 %v623
          %v1846 = vunpack.c.l.b16 %v624
          %v1847 = vunpack.c.l.b16 %v625
          %v1848 = vunpack.c.l.b16 %v626
          %v1849 = vunpack.c.l.b16 %v627
          %v1850 = vunpack.c.l.b16 %v628
          %v1851 = vunpack.c.l.b16 %v629
          %v1852 = vunpack.c.l.b16 %v630
          %v1853 = vunpack.c.l.b16 %v631
          %v1854 = vunpack.c.l.b16 %v632
          %v1855 = vunpack.c.l.b16 %v633
          %v1856 = vunpack.c.l.b16 %v634
          %v1857 = vunpack.c.l.b16 %v635
          %v1858 = vunpack.c.l.b16 %v636
          %v1859 = vunpack.c.l.b16 %v637
          %v1860 = vunpack.c.l.b16 %v638
          %v1861 = vunpack.c.l.b16 %v639
          %v1862 = vunpack.c.l.b16 %v640
          %v1863 = vunpack.c.l.b16 %v641
          %v1864 = vunpack.c.l.b16 %v642
          %v1865 = vunpack.c.l.b16 %v643
          %v1866 = vunpack.c.l.b16 %v644
          %v1867 = vunpack.c.l.b16 %v645
          %v1868 = vunpack.c.l.b16 %v646
          %v1869 = vunpack.c.l.b16 %v647
          %v1870 = vunpack.c.l.b16 %v648
          %v1871 = vunpack.c.l.b16 %v649
          %v1872 = vunpack.c.l.b16 %v650
          %v1873 = vunpack.c.l.b16 %v651
          %v1874 = vunpack.c.l.b16 %v652
          %v1875 = vunpack.c.l.b16 %v653
          %v1876 = vunpack.c.l.b16 %v654
          %v1877 = vunpack.c.l.b16 %v655
          %v1878 = vunpack.c.l.b16 %v656
          %v1879 = vunpack.c.l.b16 %v657
          %v1880 = vunpack.c.l.b16 %v658
          %v1881 = vunpack.c.l.b16 %v659
          %v1882 = vunpack.c.l.b16 %v660
          %v1883 = vunpack.c.l.b16 %v661
          %v1884 = vunpack.c.l.b16 %v662
          %v1885 = vunpack.c.l.b16 %v663
          %v1886 = vunpack.c.l.b16 %v664
          %v1887 = vunpack.c.l.b16 %v665
          %v1888 = vunpack.c.l.b16 %v666
          %v1889 = vunpack.c.l.b16 %v667
          %v1890 = vunpack.c.l.b16 %v668
          %v1891 = vunpack.c.l.b16 %v669
          %v1892 = vunpack.c.l.b16 %v670
          %v1893 = vunpack.c.l.b16 %v671
          %v1894 = vunpack.c.l.b16 %v672
          %v1895 = vunpack.c.l.b16 %v673
          %v1896 = vunpack.c.l.b16 %v674
          %v1897 = vunpack.c.l.b16 %v675
          %v1898 = vunpack.c.l.b16 %v676
          %v1899 = vunpack.c.l.b16 %v677
          %v1900 = vunpack.c.l.b16 %v678
          %v1901 = vunpack.c.l.b16 %v679
          %v1902 = vunpack.c.l.b16 %v680
          %v1903 = vunpack.c.l.b16 %v681
          %v1904 = vunpack.c.l.b16 %v682
          %v1905 = vunpack.c.l.b16 %v683
          %v1906 = vunpack.c.l.b16 %v684
          %v1907 = vunpack.c.l.b16 %v685
          %v1908 = vunpack.c.l.b16 %v686
          %v1909 = vunpack.c.l.b16 %v687
          %v1910 = vunpack.c.l.b16 %v688
          %v1911 = vunpack.c.l.b16 %v689
          %v1912 = vunpack.c.l.b16 %v690
          %v1913 = vunpack.c.l.b16 %v691
          %v1914 = vunpack.c.l.b16 %v692
          %v1915 = vunpack.c.l.b16 %v693
          %v1916 = vunpack.c.l.b16 %v694
          %v1917 = vunpack.c.l.b16 %v695
          %v1918 = vunpack.c.l.b16 %v696
          %v1919 = vunpack.c.l.b16 %v697
          %v1920 = vunpack.c.l.b16 %v698
          %v1921 = vunpack.c.l.b16 %v699
          %v1922 = vunpack.c.l.b16 %v700
          %v1923 = vunpack.c.l.b16 %v701
          %v1924 = vunpack.c.l.b16 %v702
          %v1925 = vunpack.c.l.b16 %v703
          %v1926 = vunpack.c.l.b16 %v704
          %v1927 = vunpack.c.l.b16 %v705
          %v1928 = vunpack.c.l.b16 %v706
          %v1929 = vunpack.c.l.b16 %v707
          %v1930 = vunpack.c.l.b16 %v708
          %v1931 = vunpack.c.l.b16 %v709
          %v1932 = vunpack.c.l.b16 %v710
          %v1933 = vunpack.c.l.b16 %v711
          %v1934 = vunpack.c.l.b16 %v712
          %v1935 = vunpack.c.l.b16 %v713
          %v1936 = vunpack.c.l.b16 %v714
          %v1937 = vunpack.c.l.b16 %v715
          %v1938 = vunpack.c.l.b16 %v716
          %v1939 = vunpack.c.l.b16 %v717
          %v1940 = vunpack.c.l.b16 %v718
          %v1941 = vunpack.c.l.b16 %v719
          %v1942 = vunpack.c.l.b16 %v720
          %v1943 = vunpack.c.l.b16 %v721
          %v1944 = vunpack.c.l.b16 %v722
          %v1945 = vunpack.c.l.b16 %v723
          %v1946 = vunpack.c.l.b16 %v724
          %v1947 = vunpack.c.l.b16 %v725
          %v1948 = vunpack.c.l.b16 %v726
          %v1949 = vunpack.c.l.b16 %v727
          %v1950 = vunpack.c.l.b16 %v728
          %v1951 = vunpack.c.l.b16 %v729
          %v1952 = vunpack.c.l.b16 %v730
          %v1953 = vunpack.c.l.b16 %v731
          %v1954 = vunpack.c.l.b16 %v732
          %v1955 = vunpack.c.l.b16 %v733
          %v1956 = vunpack.c.l.b16 %v734
          %v1957 = vunpack.c.l.b16 %v735
          %v1958 = vunpack.c.l.b16 %v736
          %v1959 = vunpack.c.l.b16 %v737
          %v1960 = vunpack.c.l.b16 %v738
          %v1961 = vunpack.c.l.b16 %v739
          %v1962 = vunpack.c.l.b16 %v740
          %v1963 = vunpack.c.l.b16 %v741
          %v1964 = vunpack.c.l.b16 %v742
          %v1965 = vunpack.c.l.b16 %v743
          %v1966 = vunpack.c.l.b16 %v744
          %v1967 = vunpack.c.l.b16 %v745
          %v1968 = vunpack.c.l.b16 %v746
          %v1969 = vunpack.c.l.b16 %v747
          %v1970 = vunpack.c.l.b16 %v748
          %v1971 = vunpack.c.l.b16 %v749
          %v1972 = vunpack.c.l.b16 %v750
          %v1973 = vunpack.c.l.b16 %v751
          %v1974 = vunpack.c.l.b16 %v752
          %v1975 = vunpack.c.l.b16 %v753
          %v1976 = vunpack.c.l.b16 %v754
          %v1977 = vunpack.c.l.b16 %v755
          %v1978 = vunpack.c.l.b16 %v756
          %v1979 = vunpack.c.l.b16 %v757
          %v1980 = vunpack.c.l.b16 %v758
          %v1981 = vunpack.c.l.b16 %v759
          %v1982 = vunpack.c.l.b16 %v760
          %v1983 = vunpack.c.l.b16 %v761
          %v1984 = vunpack.c.l.b16 %v762
          %v1985 = vunpack.c.l.b16 %v763
          %v1986 = vunpack.c.l.b16 %v764
          %v1987 = vunpack.c.l.b16 %v765
          %v1988 = vunpack.c.l.b16 %v766
          %v1989 = vunpack.c.l.b16 %v767
          %v1990 = vunpack.c.l.b16 %v768
          %v1991 = vunpack.c.l.b16 %v769
          %v1992 = vunpack.c.l.b16 %v770
          %v1993 = vunpack.c.l.b16 %v771
          %v1994 = vunpack.c.l.b16 %v772
          %v1995 = vunpack.c.l.b16 %v773
          %v1996 = vunpack.c.l.b16 %v774
          %v1997 = vunpack.c.l.b16 %v775
          %v1998 = vunpack.c.l.b16 %v776
          %v1999 = vunpack.c.l.b16 %v777
          %v2000 = vunpack.c.l.b16 %v778
          %v2001 = vunpack.c.l.b16 %v779
          %v2002 = vunpack.c.l.b16 %v780
          %v2003 = vunpack.c.l.b16 %v781
          %v2004 = vunpack.c.l.b16 %v782
          %v2005 = vunpack.c.l.b16 %v783
          %v2006 = vunpack.c.l.b16 %v784
          %v2007 = vunpack.c.l.b16 %v785
          %v2008 = vunpack.c.l.b16 %v786
          %v2009 = vunpack.c.l.b16 %v787
          %v2010 = vunpack.c.l.b16 %v788
          %v2011 = vunpack.c.l.b16 %v789
          %v2012 = vunpack.c.l.b16 %v790
          %v2013 = vunpack.c.l.b16 %v791
          %v2014 = vunpack.c.l.b16 %v792
          %v2015 = vunpack.c.l.b16 %v793
          %v2016 = vunpack.c.l.b16 %v794
          %v2017 = vunpack.c.l.b16 %v795
          %v2018 = vunpack.c.l.b16 %v796
          %v2019 = vunpack.c.l.b16 %v797
          %v2020 = vunpack.c.l.b16 %v798
          %v2021 = vunpack.c.l.b16 %v799
          %v2022 = vunpack.c.l.b16 %v800
          %v2023 = vunpack.c.l.b16 %v801
          %v2024 = vunpack.c.l.b16 %v802
          %v2025 = vunpack.c.l.b16 %v803
          %v2026 = vunpack.c.l.b16 %v804
          %v2027 = vunpack.c.l.b16 %v805
          %v2028 = vunpack.c.l.b16 %v806
          %v2029 = vunpack.c.l.b16 %v807
          %v2030 = vunpack.c.l.b16 %v808
          %v2031 = vunpack.c.l.b16 %v809
          %v2032 = vunpack.c.l.b16 %v810
          %v2033 = vunpack.c.l.b16 %v811
          %v2034 = vunpack.c.l.b16 %v812
          %v2035 = vunpack.c.l.b16 %v813
          %v2036 = vunpack.c.l.b16 %v814
          %v2037 = vunpack.c.l.b16 %v815
          %v2038 = vunpack.c.l.b16 %v816
          %v2039 = vunpack.c.l.b16 %v817
          %v2040 = vunpack.c.l.b16 %v818
          %v2041 = vunpack.c.l.b16 %v819
          %v2042 = vunpack.c.l.b16 %v820
          %v2043 = vunpack.c.l.b16 %v821
          %v2044 = vunpack.c.l.b16 %v822
          %v2045 = vunpack.c.l.b16 %v823
          %v2046 = vunpack.c.l.b16 %v824
          %v2047 = vunpack.c.l.b16 %v825
          %v2048 = vunpack.c.l.b16 %v826
          %v2049 = vunpack.c.l.b16 %v827
          %v2050 = vunpack.c.l.b16 %v828
          %v2051 = vunpack.c.l.b16 %v829
          %v2052 = vunpack.c.l.b16 %v830
          %v2053 = vunpack.c.l.b16 %v831
          %v2054 = vunpack.c.l.b16 %v832
          %v2055 = vunpack.c.l.b16 %v833
          %v2056 = vunpack.c.l.b16 %v834
          %v2057 = vunpack.c.l.b16 %v835
          %v2058 = vunpack.c.l.b16 %v836
          %v2059 = vunpack.c.l.b16 %v837
          %v2060 = vunpack.c.l.b16 %v838
          %v2061 = vunpack.c.l.b16 %v839
          %v2062 = vunpack.c.l.b16 %v840
          %v2063 = vunpack.c.l.b16 %v841
          %v2064 = vunpack.c.l.b16 %v842
          %v2065 = vunpack.c.l.b16 %v843
          %v2066 = vunpack.c.l.b16 %v844
          %v2067 = vunpack.c.l.b16 %v845
          %v2068 = vunpack.c.l.b16 %v846
          %v2069 = vunpack.c.l.b16 %v847
          %v2070 = vunpack.c.l.b16 %v848
          %v2071 = vunpack.c.l.b16 %v849
          %v2072 = vunpack.c.l.b16 %v850
          %v2073 = vunpack.c.l.b16 %v851
          %v2074 = vunpack.c.l.b16 %v852
          %v2075 = vunpack.c.l.b16 %v853
          %v2076 = vunpack.c.l.b16 %v854
          %v2077 = vunpack.c.l.b16 %v855
          %v2078 = vunpack.c.l.b16 %v856
          %v2079 = vunpack.c.l.b16 %v857
          %v2080 = vunpack.c.l.b16 %v858
          %v2081 = vunpack.c.l.b16 %v859
          %v2082 = vunpack.c.l.b16 %v860
          %v2083 = vunpack.c.l.b16 %v861
          %v2084 = vunpack.c.l.b16 %v862
          %v2085 = vunpack.c.l.b16 %v863
          %v2086 = vunpack.c.l.b16 %v864
          %v2087 = vunpack.c.l.b16 %v865
          %v2088 = vunpack.c.l.b16 %v866
          %v2089 = vunpack.c.l.b16 %v867
          %v2090 = vunpack.c.l.b16 %v868
          %v2091 = vunpack.c.l.b16 %v869
          %v2092 = vunpack.c.l.b16 %v870
          %v2093 = vunpack.c.l.b16 %v871
          %v2094 = vunpack.c.l.b16 %v872
          %v2095 = vunpack.c.l.b16 %v873
          %v2096 = vunpack.c.l.b16 %v874
          %v2097 = vunpack.c.l.b16 %v875
          %v2098 = vunpack.c.l.b16 %v876
          %v2099 = vunpack.c.l.b16 %v877
          %v2100 = vunpack.c.l.b16 %v878
          %v2101 = vunpack.c.l.b16 %v879
          %v2102 = vunpack.c.l.b16 %v880
          %v2103 = vunpack.c.l.b16 %v881
          %v2104 = vunpack.c.l.b16 %v882
          %v2105 = vunpack.c.l.b16 %v883
          %v2106 = vunpack.c.l.b16 %v884
          %v2107 = vunpack.c.l.b16 %v885
          %v2108 = vunpack.c.l.b16 %v886
          %v2109 = vunpack.c.l.b16 %v887
          %v2110 = vunpack.c.l.b16 %v888
          %v2111 = vunpack.c.l.b16 %v889
          %v2112 = vunpack.c.l.b16 %v890
          %v2113 = vunpack.c.l.b16 %v891
          %v2114 = vunpack.c.l.b16 %v892
          %v2115 = vunpack.c.l.b16 %v893
          %v2116 = vunpack.c.l.b16 %v894
          %v2117 = vunpack.c.l.b16 %v895
          %v2118 = vunpack.c.l.b16 %v896
          %v2119 = vunpack.c.l.b16 %v897
          %v2120 = vunpack.c.l.b16 %v898
          %v2121 = vunpack.c.l.b16 %v899
          %v2122 = vunpack.c.l.b16 %v900
          %v2123 = vunpack.c.l.b16 %v901
          %v2124 = vunpack.c.l.b16 %v902
          %v2125 = vunpack.c.l.b16 %v903
          %v2126 = vunpack.c.l.b16 %v904
          %v2127 = vunpack.c.l.b16 %v905
          %v2128 = vunpack.c.l.b16 %v906
          %v2129 = vunpack.c.l.b16 %v907
          %v2130 = vunpack.c.l.b16 %v908
          %v2131 = vunpack.c.l.b16 %v909
          %v2132 = vunpack.c.l.b16 %v910
          %v2133 = vunpack.c.l.b16 %v911
          %v2134 = vunpack.c.l.b16 %v912
          %v2135 = vunpack.c.l.b16 %v913
          %v2136 = vunpack.c.l.b16 %v914
          %v2137 = vunpack.c.l.b16 %v915
          %v2138 = vunpack.c.l.b16 %v916
          %v2139 = vunpack.c.l.b16 %v917
          %v2140 = vunpack.c.l.b16 %v918
          %v2141 = vunpack.c.l.b16 %v919
          %v2142 = vunpack.c.l.b16 %v920
          %v2143 = vunpack.c.l.b16 %v921
          %v2144 = vunpack.c.l.b16 %v922
          %v2145 = vunpack.c.l.b16 %v923
          %v2146 = vunpack.c.l.b16 %v924
          %v2147 = vunpack.c.l.b16 %v925
          %v2148 = vunpack.c.l.b16 %v926
          %v2149 = vunpack.c.l.b16 %v927
          %v2150 = vunpack.c.l.b16 %v928
          %v2151 = vunpack.c.l.b16 %v929
          %v2152 = vunpack.c.l.b16 %v930
          %v2153 = vunpack.c.l.b16 %v931
          %v2154 = vunpack.c.l.b16 %v932
          %v2155 = vunpack.c.l.b16 %v933
          %v2156 = vunpack.c.l.b16 %v934
          %v2157 = vunpack.c.l.b16 %v935
          %v2158 = vunpack.c.l.b16 %v936
          %v2159 = vunpack.c.l.b16 %v937
          %v2160 = vunpack.c.l.b16 %v938
          %v2161 = vunpack.c.l.b16 %v939
          %v2162 = vunpack.c.l.b16 %v940
          %v2163 = vunpack.c.l.b16 %v941
          %v2164 = vunpack.c.l.b16 %v942
          %v2165 = vunpack.c.l.b16 %v943
          %v2166 = vunpack.c.l.b16 %v944
          %v2167 = vunpack.c.l.b16 %v945
          %v2168 = vunpack.c.l.b16 %v946
          %v2169 = vunpack.c.l.b16 %v947
          %v2170 = vunpack.c.l.b16 %v948
          %v2171 = vunpack.c.l.b16 %v949
          %v2172 = vunpack.c.l.b16 %v950
          %v2173 = vunpack.c.l.b16 %v951
          %v2174 = vunpack.c.l.b16 %v952
          %v2175 = vunpack.c.l.b16 %v953
          %v2176 = vunpack.c.l.b16 %v954
          %v2177 = vunpack.c.l.b16 %v955
          %v2178 = vunpack.c.l.b16 %v956
          %v2179 = vunpack.c.l.b16 %v957
          %v2180 = vunpack.c.l.b16 %v958
          %v2181 = vunpack.c.l.b16 %v959
          %v2182 = vunpack.c.l.b16 %v960
          %v2183 = vunpack.c.l.b16 %v961
          %v2184 = vunpack.c.l.b16 %v962
          %v2185 = vunpack.c.l.b16 %v963
          %v2186 = vunpack.c.l.b16 %v964
          %v2187 = vunpack.c.l.b16 %v965
          %v2188 = vunpack.c.l.b16 %v966
          %v2189 = vunpack.c.l.b16 %v967
          %v2190 = vunpack.c.l.b16 %v968
          %v2191 = vunpack.c.l.b16 %v969
          %v2192 = vunpack.c.l.b16 %v970
          %v2193 = vunpack.c.l.b16 %v971
          %v2194 = vunpack.c.l.b16 %v972
          %v2195 = vunpack.c.l.b16 %v973
          %v2196 = vunpack.c.l.b16 %v974
          %v2197 = vunpack.c.l.b16 %v975
          %v2198 = vunpack.c.l.b16 %v976
          %v2199 = vunpack.c.l.b16 %v977
          %v2200 = vunpack.c.l.b16 %v978
          %v2201 = vunpack.c.l.b16 %v979
          %v2202 = vunpack.c.l.b16 %v980
          %v2203 = vunpack.c.l.b16 %v981
          %v2204 = vunpack.c.l.b16 %v982
          %v2205 = vunpack.c.l.b16 %v983
          %v2206 = vunpack.c.l.b16 %v984
          %v2207 = vunpack.c.l.b16 %v985
          %v2208 = vunpack.c.l.b16 %v986
          %v2209 = vunpack.c.l.b16 %v987
          %v2210 = vunpack.c.l.b16 %v988
          %v2211 = vunpack.c.l.b16 %v989
          %v2212 = vunpack.c.l.b16 %v990
          %v2213 = vunpack.c.l.b16 %v991
          %v2214 = vunpack.c.l.b16 %v992
          %v2215 = vunpack.c.l.b16 %v993
          %v2216 = vunpack.c.l.b16 %v994
          %v2217 = vunpack.c.l.b16 %v995
          %v2218 = vunpack.c.l.b16 %v996
          %v2219 = vunpack.c.l.b16 %v997
          %v2220 = vunpack.c.l.b16 %v998
          %v2221 = vunpack.c.l.b16 %v999
          %v2222 = vunpack.c.l.b16 %v1000
          %v2223 = vunpack.c.l.b16 %v1001
          %v2224 = vunpack.c.l.b16 %v1002
          %v2225 = vunpack.c.l.b16 %v1003
          %v2226 = vunpack.c.l.b16 %v1004
          %v2227 = vunpack.c.l.b16 %v1005
          %v2228 = vunpack.c.l.b16 %v1006
          %v2229 = vunpack.c.l.b16 %v1007
          %v2230 = vunpack.c.l.b16 %v1008
          %v2231 = vunpack.c.l.b16 %v1009
          %v2232 = vunpack.c.l.b16 %v1010
          %v2233 = vunpack.c.l.b16 %v1011
          %v2234 = vunpack.c.l.b16 %v1012
          %v2235 = vunpack.c.l.b16 %v1013
          %v2236 = vunpack.c.l.b16 %v1014
          %v2237 = vunpack.c.l.b16 %v1015
          %v2238 = vunpack.c.l.b16 %v1016
          %v2239 = vunpack.c.l.b16 %v1017
          %v2240 = vunpack.c.l.b16 %v1018
          %v2241 = vunpack.c.l.b16 %v1019
          %v2242 = vunpack.c.l.b16 %v1020
          %v2243 = vunpack.c.l.b16 %v1021
          %v2244 = vunpack.c.l.b16 %v1022
          %v2245 = vunpack.c.l.b16 %v1023
          %v2246 = vunpack.c.l.b16 %v1024
          %v2247 = vunpack.c.l.b16 %v1025
          %v2248 = vunpack.c.l.b16 %v1026
          %v2249 = vunpack.c.l.b16 %v1027
          %v2250 = vunpack.c.l.b16 %v1028
          %v2251 = vunpack.c.l.b16 %v1029
          %v2252 = vunpack.c.l.b16 %v1030
          %v2253 = vunpack.c.l.b16 %v1031
          %v2254 = vunpack.c.l.b16 %v1032
          %v2255 = vunpack.c.l.b16 %v1033
          %v2256 = vunpack.c.l.b16 %v1034
          %v2257 = vunpack.c.l.b16 %v1035
          %v2258 = vunpack.c.l.b16 %v1036
          %v2259 = vunpack.c.l.b16 %v1037
          %v2260 = vunpack.c.l.b16 %v1038
          %v2261 = vunpack.c.l.b16 %v1039
          %v2262 = vunpack.c.l.b16 %v1040
          %v2263 = vunpack.c.l.b16 %v1041
          %v2264 = vunpack.c.l.b16 %v1042
          %v2265 = vunpack.c.l.b16 %v1043
          %v2266 = vunpack.c.l.b16 %v1044
          %v2267 = vunpack.c.l.b16 %v1045
          %v2268 = vunpack.c.l.b16 %v1046
          %v2269 = vunpack.c.l.b16 %v1047
          %v2270 = vunpack.c.l.b16 %v1048
          %v2271 = vunpack.c.l.b16 %v1049
          %v2272 = vunpack.c.l.b16 %v1050
          %v2273 = vunpack.c.l.b16 %v1051
          %v2274 = vunpack.c.l.b16 %v1052
          %v2275 = vunpack.c.l.b16 %v1053
          %v2276 = vunpack.c.l.b16 %v1054
          %v2277 = vunpack.c.l.b16 %v1055
          %v2278 = vunpack.c.l.b16 %v1056
          %v2279 = vunpack.c.l.b16 %v1057
          %v2280 = vunpack.c.l.b16 %v1058
          %v2281 = vunpack.c.l.b16 %v1059
          %v2282 = vunpack.c.l.b16 %v1060
          %v2283 = vunpack.c.l.b16 %v1061
          %v2284 = vunpack.c.l.b16 %v1062
          %v2285 = vunpack.c.l.b16 %v1063
          %v2286 = vunpack.c.l.b16 %v1064
          %v2287 = vunpack.c.l.b16 %v1065
          %v2288 = vunpack.c.l.b16 %v1066
          %v2289 = vunpack.c.l.b16 %v1067
          %v2290 = vunpack.c.l.b16 %v1068
          %v2291 = vunpack.c.l.b16 %v1069
          %v2292 = vunpack.c.l.b16 %v1070
          %v2293 = vunpack.c.l.b16 %v1071
          %v2294 = vunpack.c.l.b16 %v1072
          %v2295 = vunpack.c.l.b16 %v1073
          %v2296 = vunpack.c.l.b16 %v1074
          %v2297 = vunpack.c.l.b16 %v1075
          %v2298 = vunpack.c.l.b16 %v1076
          %v2299 = vunpack.c.l.b16 %v1077
          %v2300 = vunpack.c.l.b16 %v1078
          %v2301 = vunpack.c.l.b16 %v1079
          %v2302 = vunpack.c.l.b16 %v1080
          %v2303 = vunpack.c.l.b16 %v1081
          %v2304 = vunpack.c.l.b16 %v1082
          %v2305 = vunpack.c.l.b16 %v1083
          %v2306 = vunpack.c.l.b16 %v1084
          %v2307 = vunpack.c.l.b16 %v1085
          %v2308 = vunpack.c.l.b16 %v1086
          %v2309 = vunpack.c.l.b16 %v1087
          %v2310 = vunpack.c.l.b16 %v1088
          %v2311 = vunpack.c.l.b16 %v1089
          %v2312 = vunpack.c.l.b16 %v1090
          %v2313 = vunpack.c.l.b16 %v1091
          %v2314 = vunpack.c.l.b16 %v1092
          %v2315 = vunpack.c.l.b16 %v1093
          %v2316 = vunpack.c.l.b16 %v1094
          %v2317 = vunpack.c.l.b16 %v1095
          %v2318 = vunpack.c.l.b16 %v1096
          %v2319 = vunpack.c.l.b16 %v1097
          %v2320 = vunpack.c.l.b16 %v1098
          %v2321 = vunpack.c.l.b16 %v1099
          %v2322 = vunpack.c.l.b16 %v1100
          %v2323 = vunpack.c.l.b16 %v1101
          %v2324 = vunpack.c.l.b16 %v1102
          %v2325 = vunpack.c.l.b16 %v1103
          %v2326 = vunpack.c.l.b16 %v1104
          %v2327 = vunpack.c.l.b16 %v1105
          %v2328 = vunpack.c.l.b16 %v1106
          %v2329 = vunpack.c.l.b16 %v1107
          %v2330 = vunpack.c.l.b16 %v1108
          %v2331 = vunpack.c.l.b16 %v1109
          %v2332 = vunpack.c.l.b16 %v1110
          %v2333 = vunpack.c.l.b16 %v1111
          %v2334 = vunpack.c.l.b16 %v1112
          %v2335 = vunpack.c.l.b16 %v1113
          %v2336 = vunpack.c.l.b16 %v1114
          %v2337 = vunpack.c.l.b16 %v1115
          %v2338 = vunpack.c.l.b16 %v1116
          %v2339 = vunpack.c.l.b16 %v1117
          %v2340 = vunpack.c.l.b16 %v1118
          %v2341 = vpack.c.b16 %v1733, %v1732
          %v2342 = vpack.c.b16 %v1735, %v1734
          %v2343 = vpack.c.b16 %v1737, %v1736
          %v2344 = vpack.c.b16 %v1739, %v1738
          %v2345 = vpack.c.b16 %v1741, %v1740
          %v2346 = vpack.c.b16 %v1743, %v1742
          %v2347 = vpack.c.b16 %v1745, %v1744
          %v2348 = vpack.c.b16 %v1747, %v1746
          %v2349 = vpack.c.b16 %v1749, %v1748
          %v2350 = vpack.c.b16 %v1751, %v1750
          %v2351 = vpack.c.b16 %v1753, %v1752
          %v2352 = vpack.c.b16 %v1755, %v1754
          %v2353 = vpack.c.b16 %v1757, %v1756
          %v2354 = vpack.c.b16 %v1759, %v1758
          %v2355 = vpack.c.b16 %v1761, %v1760
          %v2356 = vpack.c.b16 %v1763, %v1762
          %v2357 = vpack.c.b16 %v1765, %v1764
          %v2358 = vpack.c.b16 %v1767, %v1766
          %v2359 = vpack.c.b16 %v1769, %v1768
          %v2360 = vpack.c.b16 %v1771, %v1770
          %v2361 = vpack.c.b16 %v1773, %v1772
          %v2362 = vpack.c.b16 %v1775, %v1774
          %v2363 = vpack.c.b16 %v1777, %v1776
          %v2364 = vpack.c.b16 %v1779, %v1778
          %v2365 = vpack.c.b16 %v1781, %v1780
          %v2366 = vpack.c.b16 %v1783, %v1782
          %v2367 = vpack.c.b16 %v1785, %v1784
          %v2368 = vpack.c.b16 %v1787, %v1786
          %v2369 = vpack.c.b16 %v1789, %v1788
          %v2370 = vpack.c.b16 %v1791, %v1790
          %v2371 = vpack.c.b16 %v1793, %v1792
          %v2372 = vpack.c.b16 %v1795, %v1794
          %v2373 = vpack.c.b16 %v1797, %v1796
          %v2374 = vpack.c.b16 %v1799, %v1798
          %v2375 = vpack.c.b16 %v1801, %v1800
          %v2376 = vpack.c.b16 %v1803, %v1802
          %v2377 = vpack.c.b16 %v1805, %v1804
          %v2378 = vpack.c.b16 %v1807, %v1806
          %v2379 = vpack.c.b16 %v1809, %v1808
          %v2380 = vpack.c.b16 %v1811, %v1810
          %v2381 = vpack.c.b16 %v1813, %v1812
          %v2382 = vpack.c.b16 %v1815, %v1814
          %v2383 = vpack.c.b16 %v1817, %v1816
          %v2384 = vpack.c.b16 %v1819, %v1818
          %v2385 = vpack.c.b16 %v1821, %v1820
          %v2386 = vpack.c.b16 %v1823, %v1822
          %v2387 = vpack.c.b16 %v1825, %v1824
          %v2388 = vpack.c.b16 %v1827, %v1826
          %v2389 = vpack.c.b16 %v1829, %v1828
          %v2390 = vpack.c.b16 %v1831, %v1830
          %v2391 = vpack.c.b16 %v1833, %v1832
          %v2392 = vpack.c.b16 %v1835, %v1834
          %v2393 = vpack.c.b16 %v1837, %v1836
          %v2394 = vpack.c.b16 %v1839, %v1838
          %v2395 = vpack.c.b16 %v1841, %v1840
          %v2396 = vpack.c.b16 %v1843, %v1842
          %v2397 = vpack.c.b16 %v1845, %v1844
          %v2398 = vpack.c.b16 %v1847, %v1846
          %v2399 = vpack.c.b16 %v1849, %v1848
          %v2400 = vpack.c.b16 %v1851, %v1850
          %v2401 = vpack.c.b16 %v1853, %v1852
          %v2402 = vpack.c.b16 %v1855, %v1854
          %v2403 = vpack.c.b16 %v1857, %v1856
          %v2404 = vpack.c.b16 %v1859, %v1858
          %v2405 = vpack.c.b16 %v1861, %v1860
          %v2406 = vpack.c.b16 %v1863, %v1862
          %v2407 = vpack.c.b16 %v1865, %v1864
          %v2408 = vpack.c.b16 %v1867, %v1866
          %v2409 = vpack.c.b16 %v1869, %v1868
          %v2410 = vpack.c.b16 %v1871, %v1870
          %v2411 = vpack.c.b16 %v1873, %v1872
          %v2412 = vpack.c.b16 %v1875, %v1874
          %v2413 = vpack.c.b16 %v1877, %v1876
          %v2414 = vpack.c.b16 %v1879, %v1878
          %v2415 = vpack.c.b16 %v1881, %v1880
          %v2416 = vpack.c.b16 %v1883, %v1882
          %v2417 = vpack.c.b16 %v1885, %v1884
          %v2418 = vpack.c.b16 %v1887, %v1886
          %v2419 = vpack.c.b16 %v1889, %v1888
          %v2420 = vpack.c.b16 %v1891, %v1890
          %v2421 = vpack.c.b16 %v1893, %v1892
          %v2422 = vpack.c.b16 %v1895, %v1894
          %v2423 = vpack.c.b16 %v1897, %v1896
          %v2424 = vpack.c.b16 %v1899, %v1898
          %v2425 = vpack.c.b16 %v1901, %v1900
          %v2426 = vpack.c.b16 %v1903, %v1902
          %v2427 = vpack.c.b16 %v1905, %v1904
          %v2428 = vpack.c.b16 %v1907, %v1906
          %v2429 = vpack.c.b16 %v1909, %v1908
          %v2430 = vpack.c.b16 %v1911, %v1910
          %v2431 = vpack.c.b16 %v1913, %v1912
          %v2432 = vpack.c.b16 %v1915, %v1914
          %v2433 = vpack.c.b16 %v1917, %v1916
          %v2434 = vpack.c.b16 %v1919, %v1918
          %v2435 = vpack.c.b16 %v1921, %v1920
          %v2436 = vpack.c.b16 %v1923, %v1922
          %v2437 = vpack.c.b16 %v1925, %v1924
          %v2438 = vpack.c.b16 %v1927, %v1926
          %v2439 = vpack.c.b16 %v1929, %v1928
          %v2440 = vpack.c.b16 %v1931, %v1930
          %v2441 = vpack.c.b16 %v1933, %v1932
          %v2442 = vpack.c.b16 %v1935, %v1934
          %v2443 = vpack.c.b16 %v1937, %v1936
          %v2444 = vpack.c.b16 %v1939, %v1938
          %v2445 = vpack.c.b16 %v1941, %v1940
          %v2446 = vpack.c.b16 %v1943, %v1942
          %v2447 = vpack.c.b16 %v1945, %v1944
          %v2448 = vpack.c.b16 %v1947, %v1946
          %v2449 = vpack.c.b16 %v1949, %v1948
          %v2450 = vpack.c.b16 %v1951, %v1950
          %v2451 = vpack.c.b16 %v1953, %v1952
          %v2452 = vpack.c.b16 %v1955, %v1954
          %v2453 = vpack.c.b16 %v1957, %v1956
          %v2454 = vpack.c.b16 %v1959, %v1958
          %v2455 = vpack.c.b16 %v1961, %v1960
          %v2456 = vpack.c.b16 %v1963, %v1962
          %v2457 = vpack.c.b16 %v1965, %v1964
          %v2458 = vpack.c.b16 %v1967, %v1966
          %v2459 = vpack.c.b16 %v1969, %v1968
          %v2460 = vpack.c.b16 %v1971, %v1970
          %v2461 = vpack.c.b16 %v1973, %v1972
          %v2462 = vpack.c.b16 %v1975, %v1974
          %v2463 = vpack.c.b16 %v1977, %v1976
          %v2464 = vpack.c.b16 %v1979, %v1978
          %v2465 = vpack.c.b16 %v1981, %v1980
          %v2466 = vpack.c.b16 %v1983, %v1982
          %v2467 = vpack.c.b16 %v1985, %v1984
          %v2468 = vpack.c.b16 %v1987, %v1986
          %v2469 = vpack.c.b16 %v1989, %v1988
          %v2470 = vpack.c.b16 %v1991, %v1990
          %v2471 = vpack.c.b16 %v1993, %v1992
          %v2472 = vpack.c.b16 %v1995, %v1994
          %v2473 = vpack.c.b16 %v1997, %v1996
          %v2474 = vpack.c.b16 %v1999, %v1998
          %v2475 = vpack.c.b16 %v2001, %v2000
          %v2476 = vpack.c.b16 %v2003, %v2002
          %v2477 = vpack.c.b16 %v2005, %v2004
          %v2478 = vpack.c.b16 %v2007, %v2006
          %v2479 = vpack.c.b16 %v2009, %v2008
          %v2480 = vpack.c.b16 %v2011, %v2010
          %v2481 = vpack.c.b16 %v2013, %v2012
          %v2482 = vpack.c.b16 %v2015, %v2014
          %v2483 = vpack.c.b16 %v2017, %v2016
          %v2484 = vpack.c.b16 %v2019, %v2018
          %v2485 = vpack.c.b16 %v2021, %v2020
          %v2486 = vpack.c.b16 %v2023, %v2022
          %v2487 = vpack.c.b16 %v2025, %v2024
          %v2488 = vpack.c.b16 %v2027, %v2026
          %v2489 = vpack.c.b16 %v2029, %v2028
          %v2490 = vpack.c.b16 %v2031, %v2030
          %v2491 = vpack.c.b16 %v2033, %v2032
          %v2492 = vpack.c.b16 %v2035, %v2034
          %v2493 = vpack.c.b16 %v2037, %v2036
          %v2494 = vpack.c.b16 %v2039, %v2038
          %v2495 = vpack.c.b16 %v2041, %v2040
          %v2496 = vpack.c.b16 %v2043, %v2042
          %v2497 = vpack.c.b16 %v2045, %v2044
          %v2498 = vpack.c.b16 %v2047, %v2046
          %v2499 = vpack.c.b16 %v2049, %v2048
          %v2500 = vpack.c.b16 %v2051, %v2050
          %v2501 = vpack.c.b16 %v2053, %v2052
          %v2502 = vpack.c.b16 %v2055, %v2054
          %v2503 = vpack.c.b16 %v2057, %v2056
          %v2504 = vpack.c.b16 %v2059, %v2058
          %v2505 = vpack.c.b16 %v2061, %v2060
          %v2506 = vpack.c.b16 %v2063, %v2062
          %v2507 = vpack.c.b16 %v2065, %v2064
          %v2508 = vpack.c.b16 %v2067, %v2066
          %v2509 = vpack.c.b16 %v2069, %v2068
          %v2510 = vpack.c.b16 %v2071, %v2070
          %v2511 = vpack.c.b16 %v2073, %v2072
          %v2512 = vpack.c.b16 %v2075, %v2074
          %v2513 = vpack.c.b16 %v2077, %v2076
          %v2514 = vpack.c.b16 %v2079, %v2078
          %v2515 = vpack.c.b16 %v2081, %v2080
          %v2516 = vpack.c.b16 %v2083, %v2082
          %v2517 = vpack.c.b16 %v2085, %v2084
          %v2518 = vpack.c.b16 %v2087, %v2086
          %v2519 = vpack.c.b16 %v2089, %v2088
          %v2520 = vpack.c.b16 %v2091, %v2090
          %v2521 = vpack.c.b16 %v2093, %v2092
          %v2522 = vpack.c.b16 %v2095, %v2094
          %v2523 = vpack.c.b16 %v2097, %v2096
          %v2524 = vpack.c.b16 %v2099, %v2098
          %v2525 = vpack.c.b16 %v2101, %v2100
          %v2526 = vpack.c.b16 %v2103, %v2102
          %v2527 = vpack.c.b16 %v2105, %v2104
          %v2528 = vpack.c.b16 %v2107, %v2106
          %v2529 = vpack.c.b16 %v2109, %v2108
          %v2530 = vpack.c.b16 %v2111, %v2110
          %v2531 = vpack.c.b16 %v2113, %v2112
          %v2532 = vpack.c.b16 %v2115, %v2114
          %v2533 = vpack.c.b16 %v2117, %v2116
          %v2534 = vpack.c.b16 %v2119, %v2118
          %v2535 = vpack.c.b16 %v2121, %v2120
          %v2536 = vpack.c.b16 %v2123, %v2122
          %v2537 = vpack.c.b16 %v2125, %v2124
          %v2538 = vpack.c.b16 %v2127, %v2126
          %v2539 = vpack.c.b16 %v2129, %v2128
          %v2540 = vpack.c.b16 %v2131, %v2130
          %v2541 = vpack.c.b16 %v2133, %v2132
          %v2542 = vpack.c.b16 %v2135, %v2134
          %v2543 = vpack.c.b16 %v2137, %v2136
          %v2544 = vpack.c.b16 %v2139, %v2138
          %v2545 = vpack.c.b16 %v2141, %v2140
          %v2546 = vpack.c.b16 %v2143, %v2142
          %v2547 = vpack.c.b16 %v2145, %v2144
          %v2548 = vpack.c.b16 %v2147, %v2146
          %v2549 = vpack.c.b16 %v2149, %v2148
          %v2550 = vpack.c.b16 %v2151, %v2150
          %v2551 = vpack.c.b16 %v2153, %v2152
          %v2552 = vpack.c.b16 %v2155, %v2154
          %v2553 = vpack.c.b16 %v2157, %v2156
          %v2554 = vpack.c.b16 %v2159, %v2158
          %v2555 = vpack.c.b16 %v2161, %v2160
          %v2556 = vpack.c.b16 %v2163, %v2162
          %v2557 = vpack.c.b16 %v2165, %v2164
          %v2558 = vpack.c.b16 %v2167, %v2166
          %v2559 = vpack.c.b16 %v2169, %v2168
          %v2560 = vpack.c.b16 %v2171, %v2170
          %v2561 = vpack.c.b16 %v2173, %v2172
          %v2562 = vpack.c.b16 %v2175, %v2174
          %v2563 = vpack.c.b16 %v2177, %v2176
          %v2564 = vpack.c.b16 %v2179, %v2178
          %v2565 = vpack.c.b16 %v2181, %v2180
          %v2566 = vpack.c.b16 %v2183, %v2182
          %v2567 = vpack.c.b16 %v2185, %v2184
          %v2568 = vpack.c.b16 %v2187, %v2186
          %v2569 = vpack.c.b16 %v2189, %v2188
          %v2570 = vpack.c.b16 %v2191, %v2190
          %v2571 = vpack.c.b16 %v2193, %v2192
          %v2572 = vpack.c.b16 %v2195, %v2194
          %v2573 = vpack.c.b16 %v2197, %v2196
          %v2574 = vpack.c.b16 %v2199, %v2198
          %v2575 = vpack.c.b16 %v2201, %v2200
          %v2576 = vpack.c.b16 %v2203, %v2202
          %v2577 = vpack.c.b16 %v2205, %v2204
          %v2578 = vpack.c.b16 %v2207, %v2206
          %v2579 = vpack.c.b16 %v2209, %v2208
          %v2580 = vpack.c.b16 %v2211, %v2210
          %v2581 = vpack.c.b16 %v2213, %v2212
          %v2582 = vpack.c.b16 %v2215, %v2214
          %v2583 = vpack.c.b16 %v2217, %v2216
          %v2584 = vpack.c.b16 %v2219, %v2218
          %v2585 = vpack.c.b16 %v2221, %v2220
          %v2586 = vpack.c.b16 %v2223, %v2222
          %v2587 = vpack.c.b16 %v2225, %v2224
          %v2588 = vpack.c.b16 %v2227, %v2226
          %v2589 = vpack.c.b16 %v2229, %v2228
          %v2590 = vpack.c.b16 %v2231, %v2230
          %v2591 = vpack.c.b16 %v2233, %v2232
          %v2592 = vpack.c.b16 %v2235, %v2234
          %v2593 = vpack.c.b16 %v2237, %v2236
          %v2594 = vpack.c.b16 %v2239, %v2238
          %v2595 = vpack.c.b16 %v2241, %v2240
          %v2596 = vpack.c.b16 %v2243, %v2242
          %v2597 = vpack.c.b16 %v2245, %v2244
          %v2598 = vpack.c.b16 %v2247, %v2246
          %v2599 = vpack.c.b16 %v2249, %v2248
          %v2600 = vpack.c.b16 %v2251, %v2250
          %v2601 = vpack.c.b16 %v2253, %v2252
          %v2602 = vpack.c.b16 %v2255, %v2254
          %v2603 = vpack.c.b16 %v2257, %v2256
          %v2604 = vpack.c.b16 %v2259, %v2258
          %v2605 = vpack.c.b16 %v2261, %v2260
          %v2606 = vpack.c.b16 %v2263, %v2262
          %v2607 = vpack.c.b16 %v2265, %v2264
          %v2608 = vpack.c.b16 %v2267, %v2266
          %v2609 = vpack.c.b16 %v2269, %v2268
          %v2610 = vpack.c.b16 %v2271, %v2270
          %v2611 = vpack.c.b16 %v2273, %v2272
          %v2612 = vpack.c.b16 %v2275, %v2274
          %v2613 = vpack.c.b16 %v2277, %v2276
          %v2614 = vpack.c.b16 %v2279, %v2278
          %v2615 = vpack.c.b16 %v2281, %v2280
          %v2616 = vpack.c.b16 %v2283, %v2282
          %v2617 = vpack.c.b16 %v2285, %v2284
          %v2618 = vpack.c.b16 %v2287, %v2286
          %v2619 = vpack.c.b16 %v2289, %v2288
          %v2620 = vpack.c.b16 %v2291, %v2290
          %v2621 = vpack.c.b16 %v2293, %v2292
          %v2622 = vpack.c.b16 %v2295, %v2294
          %v2623 = vpack.c.b16 %v2297, %v2296
          %v2624 = vpack.c.b16 %v2299, %v2298
          %v2625 = vpack.c.b16 %v2301, %v2300
          %v2626 = vpack.c.b16 %v2303, %v2302
          %v2627 = vpack.c.b16 %v2305, %v2304
          %v2628 = vpack.c.b16 %v2307, %v2306
          %v2629 = vpack.c.b16 %v2309, %v2308
          %v2630 = vpack.c.b16 %v2311, %v2310
          %v2631 = vpack.c.b16 %v2313, %v2312
          %v2632 = vpack.c.b16 %v2315, %v2314
          %v2633 = vpack.c.b16 %v2317, %v2316
          %v2634 = vpack.c.b16 %v2319, %v2318
          %v2635 = vpack.c.b16 %v2321, %v2320
          %v2636 = vpack.c.b16 %v2323, %v2322
          %v2637 = vpack.c.b16 %v2325, %v2324
          %v2638 = vpack.c.b16 %v2327, %v2326
          %v2639 = vpack.c.b16 %v2329, %v2328
          %v2640 = vpack.c.b16 %v2331, %v2330
          %v2641 = vpack.c.b16 %v2333, %v2332
          %v2642 = vpack.c.b16 %v2335, %v2334
          %v2643 = vpack.c.b16 %v2337, %v2336
          %v2644 = vpack.c.b16 %v2339, %v2338
          %v2645 = vpack.c.b16 %v2340, %v2340
          %vm2950 = vcmask 64512
          %v2952 = vsel %vm2950, %v509, 0
          %vm2954 = vcmask 1043456
          %v2956 = vsel %vm2954, %v2645, 0
          %2958 = vmatpush.bf16.msra.mxu0 %v2348
          %2959 = vmatpush.bf16.msra.mxu0 %v2347
          %2960 = vmatpush.bf16.msra.mxu0 %v2346
          %2961 = vmatpush.bf16.msra.mxu0 %v2345
          %2962 = vmatpush.bf16.msra.mxu0 %v2344
          %2963 = vmatpush.bf16.msra.mxu0 %v2343
          %2964 = vmatpush.bf16.msra.mxu0 %v2342
          %2965 = vmatpush.bf16.msra.mxu0 %v2341
          %2966 = vmatmul.bf16.gmra.mxu0 %v471
          %v2967 = vpop.f32.mrf.mxu0
          %v2968 = vadd.f32 %v1121, %v2967
          %v2969 = vpop.f32.mrf.mxu0
          %2970 = vdwg.mxu0
          %2971 = vmatpush.bf16.msra.mxu0 %v2356
          %2972 = vmatpush.bf16.msra.mxu0 %v2355
          %2973 = vmatpush.bf16.msra.mxu0 %v2354
          %2974 = vmatpush.bf16.msra.mxu0 %v2353
          %2975 = vmatpush.bf16.msra.mxu0 %v2352
          %2976 = vmatpush.bf16.msra.mxu0 %v2351
          %2977 = vmatpush.bf16.msra.mxu0 %v2350
          %2978 = vmatpush.bf16.msra.mxu0 %v2349
          %2979 = vmatmul.bf16.gmra.mxu0 %v472
          %v2980 = vpop.f32.mrf.mxu0
          %v2981 = vadd.f32 %v2968, %v2980
          %v2982 = vpop.f32.mrf.mxu0
          %2983 = vdwg.mxu0
          %2984 = vmatpush.bf16.msra.mxu0 %v2364
          %2985 = vmatpush.bf16.msra.mxu0 %v2363
          %2986 = vmatpush.bf16.msra.mxu0 %v2362
          %2987 = vmatpush.bf16.msra.mxu0 %v2361
          %2988 = vmatpush.bf16.msra.mxu0 %v2360
          %2989 = vmatpush.bf16.msra.mxu0 %v2359
          %2990 = vmatpush.bf16.msra.mxu0 %v2358
          %2991 = vmatpush.bf16.msra.mxu0 %v2357
          %2992 = vmatmul.bf16.gmra.mxu0 %v473
          %v2993 = vpop.f32.mrf.mxu0
          %v2994 = vadd.f32 %v2981, %v2993
          %v2995 = vpop.f32.mrf.mxu0
          %2996 = vdwg.mxu0
          %2997 = vmatpush.bf16.msra.mxu0 %v2372
          %2998 = vmatpush.bf16.msra.mxu0 %v2371
          %2999 = vmatpush.bf16.msra.mxu0 %v2370
          %3000 = vmatpush.bf16.msra.mxu0 %v2369
          %3001 = vmatpush.bf16.msra.mxu0 %v2368
          %3002 = vmatpush.bf16.msra.mxu0 %v2367
          %3003 = vmatpush.bf16.msra.mxu0 %v2366
          %3004 = vmatpush.bf16.msra.mxu0 %v2365
          %3005 = vmatmul.bf16.gmra.mxu0 %v474
          %v3006 = vpop.f32.mrf.mxu0
          %v3007 = vadd.f32 %v2994, %v3006
          %v3008 = vpop.f32.mrf.mxu0
          %3009 = vdwg.mxu0
          %3010 = vmatpush.bf16.msra.mxu0 %v2380
          %3011 = vmatpush.bf16.msra.mxu0 %v2379
          %3012 = vmatpush.bf16.msra.mxu0 %v2378
          %3013 = vmatpush.bf16.msra.mxu0 %v2377
          %3014 = vmatpush.bf16.msra.mxu0 %v2376
          %3015 = vmatpush.bf16.msra.mxu0 %v2375
          %3016 = vmatpush.bf16.msra.mxu0 %v2374
          %3017 = vmatpush.bf16.msra.mxu0 %v2373
          %3018 = vmatmul.bf16.gmra.mxu0 %v475
          %v3019 = vpop.f32.mrf.mxu0
          %v3020 = vadd.f32 %v3007, %v3019
          %v3021 = vpop.f32.mrf.mxu0
          %3022 = vdwg.mxu0
          %3023 = vmatpush.bf16.msra.mxu0 %v2388
          %3024 = vmatpush.bf16.msra.mxu0 %v2387
          %3025 = vmatpush.bf16.msra.mxu0 %v2386
          %3026 = vmatpush.bf16.msra.mxu0 %v2385
          %3027 = vmatpush.bf16.msra.mxu0 %v2384
          %3028 = vmatpush.bf16.msra.mxu0 %v2383
          %3029 = vmatpush.bf16.msra.mxu0 %v2382
          %3030 = vmatpush.bf16.msra.mxu0 %v2381
          %3031 = vmatmul.bf16.gmra.mxu0 %v476
          %v3032 = vpop.f32.mrf.mxu0
          %v3033 = vadd.f32 %v3020, %v3032
          %v3034 = vpop.f32.mrf.mxu0
          %3035 = vdwg.mxu0
          %3036 = vmatpush.bf16.msra.mxu0 %v2396
          %3037 = vmatpush.bf16.msra.mxu0 %v2395
          %3038 = vmatpush.bf16.msra.mxu0 %v2394
          %3039 = vmatpush.bf16.msra.mxu0 %v2393
          %3040 = vmatpush.bf16.msra.mxu0 %v2392
          %3041 = vmatpush.bf16.msra.mxu0 %v2391
          %3042 = vmatpush.bf16.msra.mxu0 %v2390
          %3043 = vmatpush.bf16.msra.mxu0 %v2389
          %3044 = vmatmul.bf16.gmra.mxu0 %v477
          %v3045 = vpop.f32.mrf.mxu0
          %v3046 = vadd.f32 %v3033, %v3045
          %v3047 = vpop.f32.mrf.mxu0
          %3048 = vdwg.mxu0
          %3049 = vmatpush.bf16.msra.mxu0 %v2404
          %3050 = vmatpush.bf16.msra.mxu0 %v2403
          %3051 = vmatpush.bf16.msra.mxu0 %v2402
          %3052 = vmatpush.bf16.msra.mxu0 %v2401
          %3053 = vmatpush.bf16.msra.mxu0 %v2400
          %3054 = vmatpush.bf16.msra.mxu0 %v2399
          %3055 = vmatpush.bf16.msra.mxu0 %v2398
          %3056 = vmatpush.bf16.msra.mxu0 %v2397
          %3057 = vmatmul.bf16.gmra.mxu0 %v478
          %v3058 = vpop.f32.mrf.mxu0
          %v3059 = vadd.f32 %v3046, %v3058
          %v3060 = vpop.f32.mrf.mxu0
          %3061 = vdwg.mxu0
          %3062 = vmatpush.bf16.msra.mxu0 %v2412
          %3063 = vmatpush.bf16.msra.mxu0 %v2411
          %3064 = vmatpush.bf16.msra.mxu0 %v2410
          %3065 = vmatpush.bf16.msra.mxu0 %v2409
          %3066 = vmatpush.bf16.msra.mxu0 %v2408
          %3067 = vmatpush.bf16.msra.mxu0 %v2407
          %3068 = vmatpush.bf16.msra.mxu0 %v2406
          %3069 = vmatpush.bf16.msra.mxu0 %v2405
          %3070 = vmatmul.bf16.gmra.mxu0 %v479
          %v3071 = vpop.f32.mrf.mxu0
          %v3072 = vadd.f32 %v3059, %v3071
          %v3073 = vpop.f32.mrf.mxu0
          %3074 = vdwg.mxu0
          %3075 = vmatpush.bf16.msra.mxu0 %v2420
          %3076 = vmatpush.bf16.msra.mxu0 %v2419
          %3077 = vmatpush.bf16.msra.mxu0 %v2418
          %3078 = vmatpush.bf16.msra.mxu0 %v2417
          %3079 = vmatpush.bf16.msra.mxu0 %v2416
          %3080 = vmatpush.bf16.msra.mxu0 %v2415
          %3081 = vmatpush.bf16.msra.mxu0 %v2414
          %3082 = vmatpush.bf16.msra.mxu0 %v2413
          %3083 = vmatmul.bf16.gmra.mxu0 %v480
          %v3084 = vpop.f32.mrf.mxu0
          %v3085 = vadd.f32 %v3072, %v3084
          %v3086 = vpop.f32.mrf.mxu0
          %3087 = vdwg.mxu0
          %3088 = vmatpush.bf16.msra.mxu0 %v2428
          %3089 = vmatpush.bf16.msra.mxu0 %v2427
          %3090 = vmatpush.bf16.msra.mxu0 %v2426
          %3091 = vmatpush.bf16.msra.mxu0 %v2425
          %3092 = vmatpush.bf16.msra.mxu0 %v2424
          %3093 = vmatpush.bf16.msra.mxu0 %v2423
          %3094 = vmatpush.bf16.msra.mxu0 %v2422
          %3095 = vmatpush.bf16.msra.mxu0 %v2421
          %3096 = vmatmul.bf16.gmra.mxu0 %v481
          %v3097 = vpop.f32.mrf.mxu0
          %v3098 = vadd.f32 %v3085, %v3097
          %v3099 = vpop.f32.mrf.mxu0
          %3100 = vdwg.mxu0
          %3101 = vmatpush.bf16.msra.mxu0 %v2436
          %3102 = vmatpush.bf16.msra.mxu0 %v2435
          %3103 = vmatpush.bf16.msra.mxu0 %v2434
          %3104 = vmatpush.bf16.msra.mxu0 %v2433
          %3105 = vmatpush.bf16.msra.mxu0 %v2432
          %3106 = vmatpush.bf16.msra.mxu0 %v2431
          %3107 = vmatpush.bf16.msra.mxu0 %v2430
          %3108 = vmatpush.bf16.msra.mxu0 %v2429
          %3109 = vmatmul.bf16.gmra.mxu0 %v482
          %v3110 = vpop.f32.mrf.mxu0
          %v3111 = vadd.f32 %v3098, %v3110
          %v3112 = vpop.f32.mrf.mxu0
          %3113 = vdwg.mxu0
          %3114 = vmatpush.bf16.msra.mxu0 %v2444
          %3115 = vmatpush.bf16.msra.mxu0 %v2443
          %3116 = vmatpush.bf16.msra.mxu0 %v2442
          %3117 = vmatpush.bf16.msra.mxu0 %v2441
          %3118 = vmatpush.bf16.msra.mxu0 %v2440
          %3119 = vmatpush.bf16.msra.mxu0 %v2439
          %3120 = vmatpush.bf16.msra.mxu0 %v2438
          %3121 = vmatpush.bf16.msra.mxu0 %v2437
          %3122 = vmatmul.bf16.gmra.mxu0 %v483
          %v3123 = vpop.f32.mrf.mxu0
          %v3124 = vadd.f32 %v3111, %v3123
          %v3125 = vpop.f32.mrf.mxu0
          %3126 = vdwg.mxu0
          %3127 = vmatpush.bf16.msra.mxu0 %v2452
          %3128 = vmatpush.bf16.msra.mxu0 %v2451
          %3129 = vmatpush.bf16.msra.mxu0 %v2450
          %3130 = vmatpush.bf16.msra.mxu0 %v2449
          %3131 = vmatpush.bf16.msra.mxu0 %v2448
          %3132 = vmatpush.bf16.msra.mxu0 %v2447
          %3133 = vmatpush.bf16.msra.mxu0 %v2446
          %3134 = vmatpush.bf16.msra.mxu0 %v2445
          %3135 = vmatmul.bf16.gmra.mxu0 %v484
          %v3136 = vpop.f32.mrf.mxu0
          %v3137 = vadd.f32 %v3124, %v3136
          %v3138 = vpop.f32.mrf.mxu0
          %3139 = vdwg.mxu0
          %3140 = vmatpush.bf16.msra.mxu0 %v2460
          %3141 = vmatpush.bf16.msra.mxu0 %v2459
          %3142 = vmatpush.bf16.msra.mxu0 %v2458
          %3143 = vmatpush.bf16.msra.mxu0 %v2457
          %3144 = vmatpush.bf16.msra.mxu0 %v2456
          %3145 = vmatpush.bf16.msra.mxu0 %v2455
          %3146 = vmatpush.bf16.msra.mxu0 %v2454
          %3147 = vmatpush.bf16.msra.mxu0 %v2453
          %3148 = vmatmul.bf16.gmra.mxu0 %v485
          %v3149 = vpop.f32.mrf.mxu0
          %v3150 = vadd.f32 %v3137, %v3149
          %v3151 = vpop.f32.mrf.mxu0
          %3152 = vdwg.mxu0
          %3153 = vmatpush.bf16.msra.mxu0 %v2468
          %3154 = vmatpush.bf16.msra.mxu0 %v2467
          %3155 = vmatpush.bf16.msra.mxu0 %v2466
          %3156 = vmatpush.bf16.msra.mxu0 %v2465
          %3157 = vmatpush.bf16.msra.mxu0 %v2464
          %3158 = vmatpush.bf16.msra.mxu0 %v2463
          %3159 = vmatpush.bf16.msra.mxu0 %v2462
          %3160 = vmatpush.bf16.msra.mxu0 %v2461
          %3161 = vmatmul.bf16.gmra.mxu0 %v486
          %v3162 = vpop.f32.mrf.mxu0
          %v3163 = vadd.f32 %v3150, %v3162
          %v3164 = vpop.f32.mrf.mxu0
          %3165 = vdwg.mxu0
          %3166 = vmatpush.bf16.msra.mxu0 %v2476
          %3167 = vmatpush.bf16.msra.mxu0 %v2475
          %3168 = vmatpush.bf16.msra.mxu0 %v2474
          %3169 = vmatpush.bf16.msra.mxu0 %v2473
          %3170 = vmatpush.bf16.msra.mxu0 %v2472
          %3171 = vmatpush.bf16.msra.mxu0 %v2471
          %3172 = vmatpush.bf16.msra.mxu0 %v2470
          %3173 = vmatpush.bf16.msra.mxu0 %v2469
          %3174 = vmatmul.bf16.gmra.mxu0 %v487
          %v3175 = vpop.f32.mrf.mxu0
          %v3176 = vadd.f32 %v3163, %v3175
          %v3177 = vpop.f32.mrf.mxu0
          %3178 = vdwg.mxu0
          %3179 = vmatpush.bf16.msra.mxu0 %v2484
          %3180 = vmatpush.bf16.msra.mxu0 %v2483
          %3181 = vmatpush.bf16.msra.mxu0 %v2482
          %3182 = vmatpush.bf16.msra.mxu0 %v2481
          %3183 = vmatpush.bf16.msra.mxu0 %v2480
          %3184 = vmatpush.bf16.msra.mxu0 %v2479
          %3185 = vmatpush.bf16.msra.mxu0 %v2478
          %3186 = vmatpush.bf16.msra.mxu0 %v2477
          %3187 = vmatmul.bf16.gmra.mxu0 %v488
          %v3188 = vpop.f32.mrf.mxu0
          %v3189 = vadd.f32 %v3176, %v3188
          %v3190 = vpop.f32.mrf.mxu0
          %3191 = vdwg.mxu0
          %3192 = vmatpush.bf16.msra.mxu0 %v2492
          %3193 = vmatpush.bf16.msra.mxu0 %v2491
          %3194 = vmatpush.bf16.msra.mxu0 %v2490
          %3195 = vmatpush.bf16.msra.mxu0 %v2489
          %3196 = vmatpush.bf16.msra.mxu0 %v2488
          %3197 = vmatpush.bf16.msra.mxu0 %v2487
          %3198 = vmatpush.bf16.msra.mxu0 %v2486
          %3199 = vmatpush.bf16.msra.mxu0 %v2485
          %3200 = vmatmul.bf16.gmra.mxu0 %v489
          %v3201 = vpop.f32.mrf.mxu0
          %v3202 = vadd.f32 %v3189, %v3201
          %v3203 = vpop.f32.mrf.mxu0
          %3204 = vdwg.mxu0
          %3205 = vmatpush.bf16.msra.mxu0 %v2500
          %3206 = vmatpush.bf16.msra.mxu0 %v2499
          %3207 = vmatpush.bf16.msra.mxu0 %v2498
          %3208 = vmatpush.bf16.msra.mxu0 %v2497
          %3209 = vmatpush.bf16.msra.mxu0 %v2496
          %3210 = vmatpush.bf16.msra.mxu0 %v2495
          %3211 = vmatpush.bf16.msra.mxu0 %v2494
          %3212 = vmatpush.bf16.msra.mxu0 %v2493
          %3213 = vmatmul.bf16.gmra.mxu0 %v490
          %v3214 = vpop.f32.mrf.mxu0
          %v3215 = vadd.f32 %v3202, %v3214
          %v3216 = vpop.f32.mrf.mxu0
          %3217 = vdwg.mxu0
          %3218 = vmatpush.bf16.msra.mxu0 %v2508
          %3219 = vmatpush.bf16.msra.mxu0 %v2507
          %3220 = vmatpush.bf16.msra.mxu0 %v2506
          %3221 = vmatpush.bf16.msra.mxu0 %v2505
          %3222 = vmatpush.bf16.msra.mxu0 %v2504
          %3223 = vmatpush.bf16.msra.mxu0 %v2503
          %3224 = vmatpush.bf16.msra.mxu0 %v2502
          %3225 = vmatpush.bf16.msra.mxu0 %v2501
          %3226 = vmatmul.bf16.gmra.mxu0 %v491
          %v3227 = vpop.f32.mrf.mxu0
          %v3228 = vadd.f32 %v3215, %v3227
          %v3229 = vpop.f32.mrf.mxu0
          %3230 = vdwg.mxu0
          %3231 = vmatpush.bf16.msra.mxu0 %v2516
          %3232 = vmatpush.bf16.msra.mxu0 %v2515
          %3233 = vmatpush.bf16.msra.mxu0 %v2514
          %3234 = vmatpush.bf16.msra.mxu0 %v2513
          %3235 = vmatpush.bf16.msra.mxu0 %v2512
          %3236 = vmatpush.bf16.msra.mxu0 %v2511
          %3237 = vmatpush.bf16.msra.mxu0 %v2510
          %3238 = vmatpush.bf16.msra.mxu0 %v2509
          %3239 = vmatmul.bf16.gmra.mxu0 %v492
          %v3240 = vpop.f32.mrf.mxu0
          %v3241 = vadd.f32 %v3228, %v3240
          %v3242 = vpop.f32.mrf.mxu0
          %3243 = vdwg.mxu0
          %3244 = vmatpush.bf16.msra.mxu0 %v2524
          %3245 = vmatpush.bf16.msra.mxu0 %v2523
          %3246 = vmatpush.bf16.msra.mxu0 %v2522
          %3247 = vmatpush.bf16.msra.mxu0 %v2521
          %3248 = vmatpush.bf16.msra.mxu0 %v2520
          %3249 = vmatpush.bf16.msra.mxu0 %v2519
          %3250 = vmatpush.bf16.msra.mxu0 %v2518
          %3251 = vmatpush.bf16.msra.mxu0 %v2517
          %3252 = vmatmul.bf16.gmra.mxu0 %v493
          %v3253 = vpop.f32.mrf.mxu0
          %v3254 = vadd.f32 %v3241, %v3253
          %v3255 = vpop.f32.mrf.mxu0
          %3256 = vdwg.mxu0
          %3257 = vmatpush.bf16.msra.mxu0 %v2532
          %3258 = vmatpush.bf16.msra.mxu0 %v2531
          %3259 = vmatpush.bf16.msra.mxu0 %v2530
          %3260 = vmatpush.bf16.msra.mxu0 %v2529
          %3261 = vmatpush.bf16.msra.mxu0 %v2528
          %3262 = vmatpush.bf16.msra.mxu0 %v2527
          %3263 = vmatpush.bf16.msra.mxu0 %v2526
          %3264 = vmatpush.bf16.msra.mxu0 %v2525
          %3265 = vmatmul.bf16.gmra.mxu0 %v494
          %v3266 = vpop.f32.mrf.mxu0
          %v3267 = vadd.f32 %v3254, %v3266
          %v3268 = vpop.f32.mrf.mxu0
          %3269 = vdwg.mxu0
          %3270 = vmatpush.bf16.msra.mxu0 %v2540
          %3271 = vmatpush.bf16.msra.mxu0 %v2539
          %3272 = vmatpush.bf16.msra.mxu0 %v2538
          %3273 = vmatpush.bf16.msra.mxu0 %v2537
          %3274 = vmatpush.bf16.msra.mxu0 %v2536
          %3275 = vmatpush.bf16.msra.mxu0 %v2535
          %3276 = vmatpush.bf16.msra.mxu0 %v2534
          %3277 = vmatpush.bf16.msra.mxu0 %v2533
          %3278 = vmatmul.bf16.gmra.mxu0 %v495
          %v3279 = vpop.f32.mrf.mxu0
          %v3280 = vadd.f32 %v3267, %v3279
          %v3281 = vpop.f32.mrf.mxu0
          %3282 = vdwg.mxu0
          %3283 = vmatpush.bf16.msra.mxu0 %v2548
          %3284 = vmatpush.bf16.msra.mxu0 %v2547
          %3285 = vmatpush.bf16.msra.mxu0 %v2546
          %3286 = vmatpush.bf16.msra.mxu0 %v2545
          %3287 = vmatpush.bf16.msra.mxu0 %v2544
          %3288 = vmatpush.bf16.msra.mxu0 %v2543
          %3289 = vmatpush.bf16.msra.mxu0 %v2542
          %3290 = vmatpush.bf16.msra.mxu0 %v2541
          %3291 = vmatmul.bf16.gmra.mxu0 %v496
          %v3292 = vpop.f32.mrf.mxu0
          %v3293 = vadd.f32 %v3280, %v3292
          %v3294 = vpop.f32.mrf.mxu0
          %3295 = vdwg.mxu0
          %3296 = vmatpush.bf16.msra.mxu0 %v2556
          %3297 = vmatpush.bf16.msra.mxu0 %v2555
          %3298 = vmatpush.bf16.msra.mxu0 %v2554
          %3299 = vmatpush.bf16.msra.mxu0 %v2553
          %3300 = vmatpush.bf16.msra.mxu0 %v2552
          %3301 = vmatpush.bf16.msra.mxu0 %v2551
          %3302 = vmatpush.bf16.msra.mxu0 %v2550
          %3303 = vmatpush.bf16.msra.mxu0 %v2549
          %3304 = vmatmul.bf16.gmra.mxu0 %v497
          %v3305 = vpop.f32.mrf.mxu0
          %v3306 = vadd.f32 %v3293, %v3305
          %v3307 = vpop.f32.mrf.mxu0
          %3308 = vdwg.mxu0
          %3309 = vmatpush.bf16.msra.mxu0 %v2564
          %3310 = vmatpush.bf16.msra.mxu0 %v2563
          %3311 = vmatpush.bf16.msra.mxu0 %v2562
          %3312 = vmatpush.bf16.msra.mxu0 %v2561
          %3313 = vmatpush.bf16.msra.mxu0 %v2560
          %3314 = vmatpush.bf16.msra.mxu0 %v2559
          %3315 = vmatpush.bf16.msra.mxu0 %v2558
          %3316 = vmatpush.bf16.msra.mxu0 %v2557
          %3317 = vmatmul.bf16.gmra.mxu0 %v498
          %v3318 = vpop.f32.mrf.mxu0
          %v3319 = vadd.f32 %v3306, %v3318
          %v3320 = vpop.f32.mrf.mxu0
          %3321 = vdwg.mxu0
          %3322 = vmatpush.bf16.msra.mxu0 %v2572
          %3323 = vmatpush.bf16.msra.mxu0 %v2571
          %3324 = vmatpush.bf16.msra.mxu0 %v2570
          %3325 = vmatpush.bf16.msra.mxu0 %v2569
          %3326 = vmatpush.bf16.msra.mxu0 %v2568
          %3327 = vmatpush.bf16.msra.mxu0 %v2567
          %3328 = vmatpush.bf16.msra.mxu0 %v2566
          %3329 = vmatpush.bf16.msra.mxu0 %v2565
          %3330 = vmatmul.bf16.gmra.mxu0 %v499
          %v3331 = vpop.f32.mrf.mxu0
          %v3332 = vadd.f32 %v3319, %v3331
          %v3333 = vpop.f32.mrf.mxu0
          %3334 = vdwg.mxu0
          %3335 = vmatpush.bf16.msra.mxu0 %v2580
          %3336 = vmatpush.bf16.msra.mxu0 %v2579
          %3337 = vmatpush.bf16.msra.mxu0 %v2578
          %3338 = vmatpush.bf16.msra.mxu0 %v2577
          %3339 = vmatpush.bf16.msra.mxu0 %v2576
          %3340 = vmatpush.bf16.msra.mxu0 %v2575
          %3341 = vmatpush.bf16.msra.mxu0 %v2574
          %3342 = vmatpush.bf16.msra.mxu0 %v2573
          %3343 = vmatmul.bf16.gmra.mxu0 %v500
          %v3344 = vpop.f32.mrf.mxu0
          %v3345 = vadd.f32 %v3332, %v3344
          %v3346 = vpop.f32.mrf.mxu0
          %3347 = vdwg.mxu0
          %3348 = vmatpush.bf16.msra.mxu0 %v2588
          %3349 = vmatpush.bf16.msra.mxu0 %v2587
          %3350 = vmatpush.bf16.msra.mxu0 %v2586
          %3351 = vmatpush.bf16.msra.mxu0 %v2585
          %3352 = vmatpush.bf16.msra.mxu0 %v2584
          %3353 = vmatpush.bf16.msra.mxu0 %v2583
          %3354 = vmatpush.bf16.msra.mxu0 %v2582
          %3355 = vmatpush.bf16.msra.mxu0 %v2581
          %3356 = vmatmul.bf16.gmra.mxu0 %v501
          %v3357 = vpop.f32.mrf.mxu0
          %v3358 = vadd.f32 %v3345, %v3357
          %v3359 = vpop.f32.mrf.mxu0
          %3360 = vdwg.mxu0
          %3361 = vmatpush.bf16.msra.mxu0 %v2596
          %3362 = vmatpush.bf16.msra.mxu0 %v2595
          %3363 = vmatpush.bf16.msra.mxu0 %v2594
          %3364 = vmatpush.bf16.msra.mxu0 %v2593
          %3365 = vmatpush.bf16.msra.mxu0 %v2592
          %3366 = vmatpush.bf16.msra.mxu0 %v2591
          %3367 = vmatpush.bf16.msra.mxu0 %v2590
          %3368 = vmatpush.bf16.msra.mxu0 %v2589
          %3369 = vmatmul.bf16.gmra.mxu0 %v502
          %v3370 = vpop.f32.mrf.mxu0
          %v3371 = vadd.f32 %v3358, %v3370
          %v3372 = vpop.f32.mrf.mxu0
          %3373 = vdwg.mxu0
          %3374 = vmatpush.bf16.msra.mxu0 %v2604
          %3375 = vmatpush.bf16.msra.mxu0 %v2603
          %3376 = vmatpush.bf16.msra.mxu0 %v2602
          %3377 = vmatpush.bf16.msra.mxu0 %v2601
          %3378 = vmatpush.bf16.msra.mxu0 %v2600
          %3379 = vmatpush.bf16.msra.mxu0 %v2599
          %3380 = vmatpush.bf16.msra.mxu0 %v2598
          %3381 = vmatpush.bf16.msra.mxu0 %v2597
          %3382 = vmatmul.bf16.gmra.mxu0 %v503
          %v3383 = vpop.f32.mrf.mxu0
          %v3384 = vadd.f32 %v3371, %v3383
          %v3385 = vpop.f32.mrf.mxu0
          %3386 = vdwg.mxu0
          %3387 = vmatpush.bf16.msra.mxu0 %v2612
          %3388 = vmatpush.bf16.msra.mxu0 %v2611
          %3389 = vmatpush.bf16.msra.mxu0 %v2610
          %3390 = vmatpush.bf16.msra.mxu0 %v2609
          %3391 = vmatpush.bf16.msra.mxu0 %v2608
          %3392 = vmatpush.bf16.msra.mxu0 %v2607
          %3393 = vmatpush.bf16.msra.mxu0 %v2606
          %3394 = vmatpush.bf16.msra.mxu0 %v2605
          %3395 = vmatmul.bf16.gmra.mxu0 %v504
          %v3396 = vpop.f32.mrf.mxu0
          %v3397 = vadd.f32 %v3384, %v3396
          %v3398 = vpop.f32.mrf.mxu0
          %3399 = vdwg.mxu0
          %3400 = vmatpush.bf16.msra.mxu0 %v2620
          %3401 = vmatpush.bf16.msra.mxu0 %v2619
          %3402 = vmatpush.bf16.msra.mxu0 %v2618
          %3403 = vmatpush.bf16.msra.mxu0 %v2617
          %3404 = vmatpush.bf16.msra.mxu0 %v2616
          %3405 = vmatpush.bf16.msra.mxu0 %v2615
          %3406 = vmatpush.bf16.msra.mxu0 %v2614
          %3407 = vmatpush.bf16.msra.mxu0 %v2613
          %3408 = vmatmul.bf16.gmra.mxu0 %v505
          %v3409 = vpop.f32.mrf.mxu0
          %v3410 = vadd.f32 %v3397, %v3409
          %v3411 = vpop.f32.mrf.mxu0
          %3412 = vdwg.mxu0
          %3413 = vmatpush.bf16.msra.mxu0 %v2628
          %3414 = vmatpush.bf16.msra.mxu0 %v2627
          %3415 = vmatpush.bf16.msra.mxu0 %v2626
          %3416 = vmatpush.bf16.msra.mxu0 %v2625
          %3417 = vmatpush.bf16.msra.mxu0 %v2624
          %3418 = vmatpush.bf16.msra.mxu0 %v2623
          %3419 = vmatpush.bf16.msra.mxu0 %v2622
          %3420 = vmatpush.bf16.msra.mxu0 %v2621
          %3421 = vmatmul.bf16.gmra.mxu0 %v506
          %v3422 = vpop.f32.mrf.mxu0
          %v3423 = vadd.f32 %v3410, %v3422
          %v3424 = vpop.f32.mrf.mxu0
          %3425 = vdwg.mxu0
          %3426 = vmatpush.bf16.msra.mxu0 %v2636
          %3427 = vmatpush.bf16.msra.mxu0 %v2635
          %3428 = vmatpush.bf16.msra.mxu0 %v2634
          %3429 = vmatpush.bf16.msra.mxu0 %v2633
          %3430 = vmatpush.bf16.msra.mxu0 %v2632
          %3431 = vmatpush.bf16.msra.mxu0 %v2631
          %3432 = vmatpush.bf16.msra.mxu0 %v2630
          %3433 = vmatpush.bf16.msra.mxu0 %v2629
          %3434 = vmatmul.bf16.gmra.mxu0 %v507
          %v3435 = vpop.f32.mrf.mxu0
          %v3436 = vadd.f32 %v3423, %v3435
          %v3437 = vpop.f32.mrf.mxu0
          %3438 = vdwg.mxu0
          %3439 = vmatpush.bf16.msra.mxu0 %v2644
          %3440 = vmatpush.bf16.msra.mxu0 %v2643
          %3441 = vmatpush.bf16.msra.mxu0 %v2642
          %3442 = vmatpush.bf16.msra.mxu0 %v2641
          %3443 = vmatpush.bf16.msra.mxu0 %v2640
          %3444 = vmatpush.bf16.msra.mxu0 %v2639
          %3445 = vmatpush.bf16.msra.mxu0 %v2638
          %3446 = vmatpush.bf16.msra.mxu0 %v2637
          %3447 = vmatmul.bf16.gmra.mxu0 %v508
          %v3448 = vpop.f32.mrf.mxu0
          %v3449 = vadd.f32 %v3436, %v3448
          %v3450 = vpop.f32.mrf.mxu0
          %3451 = vdwg.mxu0
          %3452 = vmatpush.bf16.msra.mxu0 0
          %3453 = vmatpush.bf16.msra.mxu0 0
          %3454 = vmatpush.bf16.msra.mxu0 0
          %3455 = vmatpush.bf16.msra.mxu0 0
          %3456 = vmatpush.bf16.msra.mxu0 0
          %3457 = vmatpush.bf16.msra.mxu0 0
          %3458 = vmatpush.bf16.msra.mxu0 0
          %3459 = vmatpush.bf16.msra.mxu0 %v2956
          %3460 = vmatmul.bf16.gmra.mxu0 %v2952
          %v3461 = vpop.f32.mrf.mxu0
          %v3462 = vadd.f32 %v3449, %v3461
          %v3463 = vpop.f32.mrf.mxu0
          %3464 = vdwg.mxu0
          %v3465 = vmax.f32 %v3462, 0.0
          %3466 = vst [vmem:[#allocation2] sm:$0x3] %v3465
        $region60: #{model_forward.3} parent=39 // pred_fallthru
          _
        %v3467 = vld [vmem:[#allocation2] sm:$0x3]
        %v3468 = vpack.c.bf16 %v3467, %v3467
        %v3469 = vld [vmem:[%s288] sm:$0xff]
        %v3470 = vld [vmem:[%s288 + $0x8] sm:$0xff]
        %v3471 = vld [vmem:[%s288 + $0x10] sm:$0xff]
        %v3472 = vld [vmem:[%s288 + $0x18] sm:$0xff]
        %v3473 = vld [vmem:[%s288 + $0x20] sm:$0xff]
        %v3474 = vld [vmem:[%s288 + $0x28] sm:$0xff]
        %v3475 = vld [vmem:[%s288 + $0x30] sm:$0xff]
        %v3476 = vld [vmem:[%s288 + $0x38] sm:$0xff]
        %v3477 = vld [vmem:[%s288 + $0x40] sm:$0xff]
        %v3478 = vld [vmem:[%s288 + $0x48] sm:$0xff]
        %v3479 = vld [vmem:[%s288 + $0x50] sm:$0xff]
        %v3480 = vld [vmem:[%s288 + $0x58] sm:$0xff]
        %v3481 = vld [vmem:[%s288 + $0x60] sm:$0xff]
        %v3482 = vld [vmem:[%s288 + $0x68] sm:$0xff]
        %v3483 = vld [vmem:[%s288 + $0x70] sm:$0xff]
        %v3484 = vld [vmem:[%s288 + $0x78] sm:$0xff]
        %v3485 = vld [vmem:[%s288 + $0x80] sm:$0xff]
        %v3486 = vld [vmem:[%s288 + $0x88] sm:$0xff]
        %v3487 = vld [vmem:[%s288 + $0x90] sm:$0xff]
        %v3488 = vld [vmem:[%s288 + $0x98] sm:$0xff]
        %v3489 = vld [vmem:[%s288 + $0xa0] sm:$0xff]
        %v3490 = vld [vmem:[%s288 + $0xa8] sm:$0xff]
        %v3491 = vld [vmem:[%s288 + $0xb0] sm:$0xff]
        %v3492 = vld [vmem:[%s288 + $0xb8] sm:$0xff]
        %v3493 = vld [vmem:[%s288 + $0xc0] sm:$0xff]
        %v3494 = vld [vmem:[%s288 + $0xc8] sm:$0xff]
        %v3495 = vld [vmem:[%s288 + $0xd0] sm:$0xff]
        %v3496 = vld [vmem:[%s288 + $0xd8] sm:$0xff]
        %v3497 = vld [vmem:[%s288 + $0xe0] sm:$0xff]
        %v3498 = vld [vmem:[%s288 + $0xe8] sm:$0xff]
        %v3499 = vld [vmem:[%s288 + $0xf0] sm:$0xff]
        %v3500 = vld [vmem:[%s288 + $0xf8] sm:$0xff]
        %v3501 = vld [vmem:[%s288 + $0x100] sm:$0xff]
        %v3502 = vld [vmem:[%s288 + $0x108] sm:$0xff]
        %v3503 = vld [vmem:[%s288 + $0x110] sm:$0xff]
        %v3504 = vld [vmem:[%s288 + $0x118] sm:$0xff]
        %v3505 = vld [vmem:[%s288 + $0x120] sm:$0xff]
        %v3506 = vld [vmem:[%s288 + $0x128] sm:$0xff]
        %v3507 = vld [vmem:[%s288 + $0x130] sm:$0xff]
        %v3508 = vld [vmem:[%s288 + $0x138] sm:$0xff]
        %v3509 = vld [vmem:[%s288 + $0x140] sm:$0xff]
        %v3510 = vld [vmem:[%s288 + $0x148] sm:$0xff]
        %v3511 = vld [vmem:[%s288 + $0x150] sm:$0xff]
        %v3512 = vld [vmem:[%s288 + $0x158] sm:$0xff]
        %v3513 = vld [vmem:[%s288 + $0x160] sm:$0xff]
        %v3514 = vld [vmem:[%s288 + $0x168] sm:$0xff]
        %v3515 = vld [vmem:[%s288 + $0x170] sm:$0xff]
        %v3516 = vld [vmem:[%s288 + $0x178] sm:$0xff]
        %v3517 = vld [vmem:[%s288 + $0x180] sm:$0xff]
        %v3518 = vld [vmem:[%s288 + $0x188] sm:$0xff]
        %v3519 = vld [vmem:[%s288 + $0x190] sm:$0xff]
        %v3520 = vld [vmem:[%s288 + $0x198] sm:$0xff]
        %v3521 = vld [vmem:[%s288 + $0x1a0] sm:$0xff]
        %v3522 = vld [vmem:[%s288 + $0x1a8] sm:$0xff]
        %v3523 = vld [vmem:[%s288 + $0x1b0] sm:$0xff]
        %v3524 = vld [vmem:[%s288 + $0x1b8] sm:$0xff]
        %v3525 = vld [vmem:[%s288 + $0x1c0] sm:$0xff]
        %v3526 = vld [vmem:[%s288 + $0x1c8] sm:$0xff]
        %v3527 = vld [vmem:[%s288 + $0x1d0] sm:$0xff]
        %v3528 = vld [vmem:[%s288 + $0x1d8] sm:$0xff]
        %v3529 = vld [vmem:[%s288 + $0x1e0] sm:$0xff]
        %v3530 = vld [vmem:[%s288 + $0x1e8] sm:$0xff]
        %v3531 = vld [vmem:[%s288 + $0x1f0] sm:$0xff]
        %v3532 = vld [vmem:[%s288 + $0x1f8] sm:$0xff]
        %v3533 = vld [vmem:[%s288 + $0x200] sm:$0xff]
        %v3534 = vld [vmem:[%s288 + $0x208] sm:$0xff]
        %v3535 = vld [vmem:[%s288 + $0x210] sm:$0xff]
        %v3536 = vld [vmem:[%s288 + $0x218] sm:$0xff]
        %v3537 = vld [vmem:[%s288 + $0x220] sm:$0xff]
        %v3538 = vld [vmem:[%s288 + $0x228] sm:$0xff]
        %v3539 = vld [vmem:[%s288 + $0x230] sm:$0xff]
        %v3540 = vld [vmem:[%s288 + $0x238] sm:$0xff]
        %v3541 = vld [vmem:[%s288 + $0x240] sm:$0xff]
        %v3542 = vld [vmem:[%s288 + $0x248] sm:$0xff]
        %v3543 = vld [vmem:[%s288 + $0x250] sm:$0xff]
        %v3544 = vld [vmem:[%s288 + $0x258] sm:$0xff]
        %v3545 = vld [vmem:[%s288 + $0x260] sm:$0xff]
        %v3546 = vld [vmem:[%s288 + $0x268] sm:$0xff]
        %v3547 = vld [vmem:[%s288 + $0x270] sm:$0xff]
        %v3548 = vld [vmem:[%s288 + $0x278] sm:$0xff]
        %v3549 = vld [vmem:[%s288 + $0x280] sm:$0xff]
        %v3550 = vld [vmem:[%s288 + $0x288] sm:$0xff]
        %v3551 = vld [vmem:[%s288 + $0x290] sm:$0xff]
        %v3552 = vld [vmem:[%s288 + $0x298] sm:$0xff]
        %v3553 = vld [vmem:[%s288 + $0x2a0] sm:$0xff]
        %v3554 = vld [vmem:[%s288 + $0x2a8] sm:$0xff]
        %v3555 = vld [vmem:[%s288 + $0x2b0] sm:$0xff]
        %v3556 = vld [vmem:[%s288 + $0x2b8] sm:$0xff]
        %v3557 = vld [vmem:[%s288 + $0x2c0] sm:$0xff]
        %v3558 = vld [vmem:[%s288 + $0x2c8] sm:$0xff]
        %v3559 = vld [vmem:[%s288 + $0x2d0] sm:$0xff]
        %v3560 = vld [vmem:[%s288 + $0x2d8] sm:$0xff]
        %v3561 = vld [vmem:[%s288 + $0x2e0] sm:$0xff]
        %v3562 = vld [vmem:[%s288 + $0x2e8] sm:$0xff]
        %v3563 = vld [vmem:[%s288 + $0x2f0] sm:$0xff]
        %v3564 = vld [vmem:[%s288 + $0x2f8] sm:$0xff]
        %v3565 = vld [vmem:[%s288 + $0x300] sm:$0xff]
        %v3566 = vld [vmem:[%s288 + $0x308] sm:$0xff]
        %v3567 = vld [vmem:[%s288 + $0x310] sm:$0xff]
        %v3568 = vld [vmem:[%s288 + $0x318] sm:$0xff]
        %v3569 = vld [vmem:[%s288 + $0x320] sm:$0xff]
        %v3570 = vld [vmem:[%s288 + $0x328] sm:$0xff]
        %v3571 = vld [vmem:[%s288 + $0x330] sm:$0xff]
        %v3572 = vld [vmem:[%s288 + $0x338] sm:$0xff]
        %v3573 = vld [vmem:[%s288 + $0x340] sm:$0xff]
        %v3574 = vld [vmem:[%s288 + $0x348] sm:$0xff]
        %v3575 = vld [vmem:[%s288 + $0x350] sm:$0xff]
        %v3576 = vld [vmem:[%s288 + $0x358] sm:$0xff]
        %v3577 = vld [vmem:[%s288 + $0x360] sm:$0xff]
        %v3578 = vld [vmem:[%s288 + $0x368] sm:$0xff]
        %v3579 = vld [vmem:[%s288 + $0x370] sm:$0xff]
        %v3580 = vld [vmem:[%s288 + $0x378] sm:$0xff]
        %v3581 = vld [vmem:[%s288 + $0x380] sm:$0xff]
        %v3582 = vld [vmem:[%s288 + $0x388] sm:$0xff]
        %v3583 = vld [vmem:[%s288 + $0x390] sm:$0xff]
        %v3584 = vld [vmem:[%s288 + $0x398] sm:$0xff]
        %v3585 = vld [vmem:[%s288 + $0x3a0] sm:$0xff]
        %v3586 = vld [vmem:[%s288 + $0x3a8] sm:$0xff]
        %v3587 = vld [vmem:[%s288 + $0x3b0] sm:$0xff]
        %v3588 = vld [vmem:[%s288 + $0x3b8] sm:$0xff]
        %v3589 = vld [vmem:[%s288 + $0x3c0] sm:$0xff]
        %v3590 = vld [vmem:[%s288 + $0x3c8] sm:$0xff]
        %v3591 = vld [vmem:[%s288 + $0x3d0] sm:$0xff]
        %v3592 = vld [vmem:[%s288 + $0x3d8] sm:$0xff]
        %v3593 = vld [vmem:[%s288 + $0x3e0] sm:$0xff]
        %v3594 = vld [vmem:[%s288 + $0x3e8] sm:$0xff]
        %v3595 = vld [vmem:[%s288 + $0x3f0] sm:$0xff]
        %v3596 = vld [vmem:[%s288 + $0x3f8] sm:$0xff]
        %v3597 = vld [vmem:[%s288 + $0x400] sm:$0xff]
        %v3598 = vld [vmem:[%s288 + $0x408] sm:$0xff]
        %v3599 = vld [vmem:[%s288 + $0x410] sm:$0xff]
        %v3600 = vld [vmem:[%s288 + $0x418] sm:$0xff]
        %v3601 = vld [vmem:[%s288 + $0x420] sm:$0xff]
        %v3602 = vld [vmem:[%s288 + $0x428] sm:$0xff]
        %v3603 = vld [vmem:[%s288 + $0x430] sm:$0xff]
        %v3604 = vld [vmem:[%s288 + $0x438] sm:$0xff]
        %v3605 = vld [vmem:[%s288 + $0x440] sm:$0xff]
        %v3606 = vld [vmem:[%s288 + $0x448] sm:$0xff]
        %v3607 = vld [vmem:[%s288 + $0x450] sm:$0xff]
        %v3608 = vld [vmem:[%s288 + $0x458] sm:$0xff]
        %v3609 = vld [vmem:[%s288 + $0x460] sm:$0xff]
        %v3610 = vld [vmem:[%s288 + $0x468] sm:$0xff]
        %v3611 = vld [vmem:[%s288 + $0x470] sm:$0xff]
        %v3612 = vld [vmem:[%s288 + $0x478] sm:$0xff]
        %v3613 = vld [vmem:[%s288 + $0x480] sm:$0xff]
        %v3614 = vld [vmem:[%s288 + $0x488] sm:$0xff]
        %v3615 = vld [vmem:[%s288 + $0x490] sm:$0xff]
        %v3616 = vld [vmem:[%s288 + $0x498] sm:$0xff]
        %v3617 = vld [vmem:[%s288 + $0x4a0] sm:$0xff]
        %v3618 = vld [vmem:[%s288 + $0x4a8] sm:$0xff]
        %v3619 = vld [vmem:[%s288 + $0x4b0] sm:$0xff]
        %v3620 = vld [vmem:[%s288 + $0x4b8] sm:$0xff]
        %v3621 = vld [vmem:[%s288 + $0x4c0] sm:$0xff]
        %v3622 = vld [vmem:[%s288 + $0x4c8] sm:$0xff]
        %v3623 = vld [vmem:[%s288 + $0x4d0] sm:$0xff]
        %v3624 = vld [vmem:[%s288 + $0x4d8] sm:$0xff]
        %v3625 = vld [vmem:[%s288 + $0x4e0] sm:$0xff]
        %v3626 = vld [vmem:[%s288 + $0x4e8] sm:$0xff]
        %v3627 = vld [vmem:[%s288 + $0x4f0] sm:$0xff]
        %v3628 = vld [vmem:[%s288 + $0x4f8] sm:$0xff]
        %v3629 = vld [vmem:[%s288 + $0x500] sm:$0xff]
        %v3630 = vld [vmem:[%s288 + $0x508] sm:$0xff]
        %v3631 = vld [vmem:[%s288 + $0x510] sm:$0xff]
        %v3632 = vld [vmem:[%s288 + $0x518] sm:$0xff]
        %v3633 = vld [vmem:[%s288 + $0x520] sm:$0xff]
        %v3634 = vld [vmem:[%s288 + $0x528] sm:$0xff]
        %v3635 = vld [vmem:[%s288 + $0x530] sm:$0xff]
        %v3636 = vld [vmem:[%s288 + $0x538] sm:$0xff]
        %v3637 = vld [vmem:[%s288 + $0x540] sm:$0xff]
        %v3638 = vld [vmem:[%s288 + $0x548] sm:$0xff]
        %v3639 = vld [vmem:[%s288 + $0x550] sm:$0xff]
        %v3640 = vld [vmem:[%s288 + $0x558] sm:$0xff]
        %v3641 = vld [vmem:[%s288 + $0x560] sm:$0xff]
        %v3642 = vld [vmem:[%s288 + $0x568] sm:$0xff]
        %v3643 = vld [vmem:[%s288 + $0x570] sm:$0xff]
        %v3644 = vld [vmem:[%s288 + $0x578] sm:$0xff]
        %v3645 = vld [vmem:[%s288 + $0x580] sm:$0xff]
        %v3646 = vld [vmem:[%s288 + $0x588] sm:$0xff]
        %v3647 = vld [vmem:[%s288 + $0x590] sm:$0xff]
        %v3648 = vld [vmem:[%s288 + $0x598] sm:$0xff]
        %v3649 = vld [vmem:[%s288 + $0x5a0] sm:$0xff]
        %v3650 = vld [vmem:[%s288 + $0x5a8] sm:$0xff]
        %v3651 = vld [vmem:[%s288 + $0x5b0] sm:$0xff]
        %v3652 = vld [vmem:[%s288 + $0x5b8] sm:$0xff]
        %v3653 = vld [vmem:[%s288 + $0x5c0] sm:$0xff]
        %v3654 = vld [vmem:[%s288 + $0x5c8] sm:$0xff]
        %v3655 = vld [vmem:[%s288 + $0x5d0] sm:$0xff]
        %v3656 = vld [vmem:[%s288 + $0x5d8] sm:$0xff]
        %v3657 = vld [vmem:[%s288 + $0x5e0] sm:$0xff]
        %v3658 = vld [vmem:[%s288 + $0x5e8] sm:$0xff]
        %v3659 = vld [vmem:[%s288 + $0x5f0] sm:$0xff]
        %v3660 = vld [vmem:[%s288 + $0x5f8] sm:$0xff]
        %v3661 = vld [vmem:[%s298] sm:$0xff]
        %v3662 = vld [vmem:[%s298 + $0x8] sm:$0xff]
        %v3663 = vld [vmem:[%s298 + $0x10] sm:$0xff]
        %v3667 = vperm.slane %v3661, 0
        %v3668 = vperm.slane %v3661, 1
        %v3669 = vperm.slane %v3661, 2
        %v3670 = vperm.slane %v3661, 3
        %v3671 = vperm.slane %v3661, 4
        %v3672 = vperm.slane %v3661, 5
        %v3673 = vperm.slane %v3661, 6
        %v3674 = vperm.slane %v3661, 7
        %v3675 = vperm.slane %v3662, 0
        %v3676 = vperm.slane %v3662, 1
        %v3677 = vperm.slane %v3662, 2
        %v3678 = vperm.slane %v3662, 3
        %v3679 = vperm.slane %v3662, 4
        %v3680 = vperm.slane %v3662, 5
        %v3681 = vperm.slane %v3662, 6
        %v3682 = vperm.slane %v3662, 7
        %v3683 = vperm.slane %v3663, 0
        %v3684 = vperm.slane %v3663, 1
        %v3685 = vperm.slane %v3663, 2
        %v3686 = vperm.slane %v3663, 3
        %v3687 = vperm.slane %v3663, 4
        %v3688 = vperm.slane %v3663, 5
        %v3689 = vperm.slane %v3663, 6
        %v3690 = vperm.slane %v3663, 7
        %v3907 = vunpack.c.l.b16 %v3469
        %v3908 = vunpack.c.h.b16 %v3469
        %v3909 = vunpack.c.l.b16 %v3470
        %v3910 = vunpack.c.h.b16 %v3470
        %v3911 = vunpack.c.l.b16 %v3471
        %v3912 = vunpack.c.h.b16 %v3471
        %v3913 = vunpack.c.l.b16 %v3472
        %v3914 = vunpack.c.h.b16 %v3472
        %v3915 = vunpack.c.l.b16 %v3473
        %v3916 = vunpack.c.h.b16 %v3473
        %v3917 = vunpack.c.l.b16 %v3474
        %v3918 = vunpack.c.h.b16 %v3474
        %v3919 = vunpack.c.l.b16 %v3475
        %v3920 = vunpack.c.h.b16 %v3475
        %v3921 = vunpack.c.l.b16 %v3476
        %v3922 = vunpack.c.h.b16 %v3476
        %v3923 = vunpack.c.l.b16 %v3477
        %v3924 = vunpack.c.h.b16 %v3477
        %v3925 = vunpack.c.l.b16 %v3478
        %v3926 = vunpack.c.h.b16 %v3478
        %v3927 = vunpack.c.l.b16 %v3479
        %v3928 = vunpack.c.h.b16 %v3479
        %v3929 = vunpack.c.l.b16 %v3480
        %v3930 = vunpack.c.h.b16 %v3480
        %v3931 = vunpack.c.l.b16 %v3481
        %v3932 = vunpack.c.h.b16 %v3481
        %v3933 = vunpack.c.l.b16 %v3482
        %v3934 = vunpack.c.h.b16 %v3482
        %v3935 = vunpack.c.l.b16 %v3483
        %v3936 = vunpack.c.h.b16 %v3483
        %v3937 = vunpack.c.l.b16 %v3484
        %v3938 = vunpack.c.h.b16 %v3484
        %v3939 = vunpack.c.l.b16 %v3485
        %v3940 = vunpack.c.h.b16 %v3485
        %v3941 = vunpack.c.l.b16 %v3486
        %v3942 = vunpack.c.h.b16 %v3486
        %v3943 = vunpack.c.l.b16 %v3487
        %v3944 = vunpack.c.h.b16 %v3487
        %v3945 = vunpack.c.l.b16 %v3488
        %v3946 = vunpack.c.h.b16 %v3488
        %v3947 = vunpack.c.l.b16 %v3489
        %v3948 = vunpack.c.h.b16 %v3489
        %v3949 = vunpack.c.l.b16 %v3490
        %v3950 = vunpack.c.h.b16 %v3490
        %v3951 = vunpack.c.l.b16 %v3491
        %v3952 = vunpack.c.h.b16 %v3491
        %v3953 = vunpack.c.l.b16 %v3492
        %v3954 = vunpack.c.h.b16 %v3492
        %v3955 = vunpack.c.l.b16 %v3493
        %v3956 = vunpack.c.h.b16 %v3493
        %v3957 = vunpack.c.l.b16 %v3494
        %v3958 = vunpack.c.h.b16 %v3494
        %v3959 = vunpack.c.l.b16 %v3495
        %v3960 = vunpack.c.h.b16 %v3495
        %v3961 = vunpack.c.l.b16 %v3496
        %v3962 = vunpack.c.h.b16 %v3496
        %v3963 = vunpack.c.l.b16 %v3497
        %v3964 = vunpack.c.h.b16 %v3497
        %v3965 = vunpack.c.l.b16 %v3498
        %v3966 = vunpack.c.h.b16 %v3498
        %v3967 = vunpack.c.l.b16 %v3499
        %v3968 = vunpack.c.h.b16 %v3499
        %v3969 = vunpack.c.l.b16 %v3500
        %v3970 = vunpack.c.h.b16 %v3500
        %v3971 = vunpack.c.l.b16 %v3501
        %v3972 = vunpack.c.h.b16 %v3501
        %v3973 = vunpack.c.l.b16 %v3502
        %v3974 = vunpack.c.h.b16 %v3502
        %v3975 = vunpack.c.l.b16 %v3503
        %v3976 = vunpack.c.h.b16 %v3503
        %v3977 = vunpack.c.l.b16 %v3504
        %v3978 = vunpack.c.h.b16 %v3504
        %v3979 = vunpack.c.l.b16 %v3505
        %v3980 = vunpack.c.h.b16 %v3505
        %v3981 = vunpack.c.l.b16 %v3506
        %v3982 = vunpack.c.h.b16 %v3506
        %v3983 = vunpack.c.l.b16 %v3507
        %v3984 = vunpack.c.h.b16 %v3507
        %v3985 = vunpack.c.l.b16 %v3508
        %v3986 = vunpack.c.h.b16 %v3508
        %v3987 = vunpack.c.l.b16 %v3509
        %v3988 = vunpack.c.h.b16 %v3509
        %v3989 = vunpack.c.l.b16 %v3510
        %v3990 = vunpack.c.h.b16 %v3510
        %v3991 = vunpack.c.l.b16 %v3511
        %v3992 = vunpack.c.h.b16 %v3511
        %v3993 = vunpack.c.l.b16 %v3512
        %v3994 = vunpack.c.h.b16 %v3512
        %v3995 = vunpack.c.l.b16 %v3513
        %v3996 = vunpack.c.h.b16 %v3513
        %v3997 = vunpack.c.l.b16 %v3514
        %v3998 = vunpack.c.h.b16 %v3514
        %v3999 = vunpack.c.l.b16 %v3515
        %v4000 = vunpack.c.h.b16 %v3515
        %v4001 = vunpack.c.l.b16 %v3516
        %v4002 = vunpack.c.h.b16 %v3516
        %v4003 = vunpack.c.l.b16 %v3517
        %v4004 = vunpack.c.h.b16 %v3517
        %v4005 = vunpack.c.l.b16 %v3518
        %v4006 = vunpack.c.h.b16 %v3518
        %v4007 = vunpack.c.l.b16 %v3519
        %v4008 = vunpack.c.h.b16 %v3519
        %v4009 = vunpack.c.l.b16 %v3520
        %v4010 = vunpack.c.h.b16 %v3520
        %v4011 = vunpack.c.l.b16 %v3521
        %v4012 = vunpack.c.h.b16 %v3521
        %v4013 = vunpack.c.l.b16 %v3522
        %v4014 = vunpack.c.h.b16 %v3522
        %v4015 = vunpack.c.l.b16 %v3523
        %v4016 = vunpack.c.h.b16 %v3523
        %v4017 = vunpack.c.l.b16 %v3524
        %v4018 = vunpack.c.h.b16 %v3524
        %v4019 = vunpack.c.l.b16 %v3525
        %v4020 = vunpack.c.h.b16 %v3525
        %v4021 = vunpack.c.l.b16 %v3526
        %v4022 = vunpack.c.h.b16 %v3526
        %v4023 = vunpack.c.l.b16 %v3527
        %v4024 = vunpack.c.h.b16 %v3527
        %v4025 = vunpack.c.l.b16 %v3528
        %v4026 = vunpack.c.h.b16 %v3528
        %v4027 = vunpack.c.l.b16 %v3529
        %v4028 = vunpack.c.h.b16 %v3529
        %v4029 = vunpack.c.l.b16 %v3530
        %v4030 = vunpack.c.h.b16 %v3530
        %v4031 = vunpack.c.l.b16 %v3531
        %v4032 = vunpack.c.h.b16 %v3531
        %v4033 = vunpack.c.l.b16 %v3532
        %v4034 = vunpack.c.h.b16 %v3532
        %v4035 = vunpack.c.l.b16 %v3533
        %v4036 = vunpack.c.h.b16 %v3533
        %v4037 = vunpack.c.l.b16 %v3534
        %v4038 = vunpack.c.h.b16 %v3534
        %v4039 = vunpack.c.l.b16 %v3535
        %v4040 = vunpack.c.h.b16 %v3535
        %v4041 = vunpack.c.l.b16 %v3536
        %v4042 = vunpack.c.h.b16 %v3536
        %v4043 = vunpack.c.l.b16 %v3537
        %v4044 = vunpack.c.h.b16 %v3537
        %v4045 = vunpack.c.l.b16 %v3538
        %v4046 = vunpack.c.h.b16 %v3538
        %v4047 = vunpack.c.l.b16 %v3539
        %v4048 = vunpack.c.h.b16 %v3539
        %v4049 = vunpack.c.l.b16 %v3540
        %v4050 = vunpack.c.h.b16 %v3540
        %v4051 = vunpack.c.l.b16 %v3541
        %v4052 = vunpack.c.h.b16 %v3541
        %v4053 = vunpack.c.l.b16 %v3542
        %v4054 = vunpack.c.h.b16 %v3542
        %v4055 = vunpack.c.l.b16 %v3543
        %v4056 = vunpack.c.h.b16 %v3543
        %v4057 = vunpack.c.l.b16 %v3544
        %v4058 = vunpack.c.h.b16 %v3544
        %v4059 = vunpack.c.l.b16 %v3545
        %v4060 = vunpack.c.h.b16 %v3545
        %v4061 = vunpack.c.l.b16 %v3546
        %v4062 = vunpack.c.h.b16 %v3546
        %v4063 = vunpack.c.l.b16 %v3547
        %v4064 = vunpack.c.h.b16 %v3547
        %v4065 = vunpack.c.l.b16 %v3548
        %v4066 = vunpack.c.h.b16 %v3548
        %v4067 = vunpack.c.l.b16 %v3549
        %v4068 = vunpack.c.h.b16 %v3549
        %v4069 = vunpack.c.l.b16 %v3550
        %v4070 = vunpack.c.h.b16 %v3550
        %v4071 = vunpack.c.l.b16 %v3551
        %v4072 = vunpack.c.h.b16 %v3551
        %v4073 = vunpack.c.l.b16 %v3552
        %v4074 = vunpack.c.h.b16 %v3552
        %v4075 = vunpack.c.l.b16 %v3553
        %v4076 = vunpack.c.h.b16 %v3553
        %v4077 = vunpack.c.l.b16 %v3554
        %v4078 = vunpack.c.h.b16 %v3554
        %v4079 = vunpack.c.l.b16 %v3555
        %v4080 = vunpack.c.h.b16 %v3555
        %v4081 = vunpack.c.l.b16 %v3556
        %v4082 = vunpack.c.h.b16 %v3556
        %v4083 = vunpack.c.l.b16 %v3557
        %v4084 = vunpack.c.h.b16 %v3557
        %v4085 = vunpack.c.l.b16 %v3558
        %v4086 = vunpack.c.h.b16 %v3558
        %v4087 = vunpack.c.l.b16 %v3559
        %v4088 = vunpack.c.h.b16 %v3559
        %v4089 = vunpack.c.l.b16 %v3560
        %v4090 = vunpack.c.h.b16 %v3560
        %v4091 = vunpack.c.l.b16 %v3561
        %v4092 = vunpack.c.h.b16 %v3561
        %v4093 = vunpack.c.l.b16 %v3562
        %v4094 = vunpack.c.h.b16 %v3562
        %v4095 = vunpack.c.l.b16 %v3563
        %v4096 = vunpack.c.h.b16 %v3563
        %v4097 = vunpack.c.l.b16 %v3564
        %v4098 = vunpack.c.h.b16 %v3564
        %v4099 = vunpack.c.l.b16 %v3565
        %v4100 = vunpack.c.h.b16 %v3565
        %v4101 = vunpack.c.l.b16 %v3566
        %v4102 = vunpack.c.h.b16 %v3566
        %v4103 = vunpack.c.l.b16 %v3567
        %v4104 = vunpack.c.h.b16 %v3567
        %v4105 = vunpack.c.l.b16 %v3568
        %v4106 = vunpack.c.h.b16 %v3568
        %v4107 = vunpack.c.l.b16 %v3569
        %v4108 = vunpack.c.h.b16 %v3569
        %v4109 = vunpack.c.l.b16 %v3570
        %v4110 = vunpack.c.h.b16 %v3570
        %v4111 = vunpack.c.l.b16 %v3571
        %v4112 = vunpack.c.h.b16 %v3571
        %v4113 = vunpack.c.l.b16 %v3572
        %v4114 = vunpack.c.h.b16 %v3572
        %v4115 = vunpack.c.l.b16 %v3573
        %v4116 = vunpack.c.h.b16 %v3573
        %v4117 = vunpack.c.l.b16 %v3574
        %v4118 = vunpack.c.h.b16 %v3574
        %v4119 = vunpack.c.l.b16 %v3575
        %v4120 = vunpack.c.h.b16 %v3575
        %v4121 = vunpack.c.l.b16 %v3576
        %v4122 = vunpack.c.h.b16 %v3576
        %v4123 = vunpack.c.l.b16 %v3577
        %v4124 = vunpack.c.h.b16 %v3577
        %v4125 = vunpack.c.l.b16 %v3578
        %v4126 = vunpack.c.h.b16 %v3578
        %v4127 = vunpack.c.l.b16 %v3579
        %v4128 = vunpack.c.h.b16 %v3579
        %v4129 = vunpack.c.l.b16 %v3580
        %v4130 = vunpack.c.h.b16 %v3580
        %v4131 = vunpack.c.l.b16 %v3581
        %v4132 = vunpack.c.h.b16 %v3581
        %v4133 = vunpack.c.l.b16 %v3582
        %v4134 = vunpack.c.h.b16 %v3582
        %v4135 = vunpack.c.l.b16 %v3583
        %v4136 = vunpack.c.h.b16 %v3583
        %v4137 = vunpack.c.l.b16 %v3584
        %v4138 = vunpack.c.h.b16 %v3584
        %v4139 = vunpack.c.l.b16 %v3585
        %v4140 = vunpack.c.h.b16 %v3585
        %v4141 = vunpack.c.l.b16 %v3586
        %v4142 = vunpack.c.h.b16 %v3586
        %v4143 = vunpack.c.l.b16 %v3587
        %v4144 = vunpack.c.h.b16 %v3587
        %v4145 = vunpack.c.l.b16 %v3588
        %v4146 = vunpack.c.h.b16 %v3588
        %v4147 = vunpack.c.l.b16 %v3589
        %v4148 = vunpack.c.h.b16 %v3589
        %v4149 = vunpack.c.l.b16 %v3590
        %v4150 = vunpack.c.h.b16 %v3590
        %v4151 = vunpack.c.l.b16 %v3591
        %v4152 = vunpack.c.h.b16 %v3591
        %v4153 = vunpack.c.l.b16 %v3592
        %v4154 = vunpack.c.h.b16 %v3592
        %v4155 = vunpack.c.l.b16 %v3593
        %v4156 = vunpack.c.h.b16 %v3593
        %v4157 = vunpack.c.l.b16 %v3594
        %v4158 = vunpack.c.h.b16 %v3594
        %v4159 = vunpack.c.l.b16 %v3595
        %v4160 = vunpack.c.h.b16 %v3595
        %v4161 = vunpack.c.l.b16 %v3596
        %v4162 = vunpack.c.h.b16 %v3596
        %v4163 = vunpack.c.l.b16 %v3597
        %v4164 = vunpack.c.h.b16 %v3597
        %v4165 = vunpack.c.l.b16 %v3598
        %v4166 = vunpack.c.h.b16 %v3598
        %v4167 = vunpack.c.l.b16 %v3599
        %v4168 = vunpack.c.h.b16 %v3599
        %v4169 = vunpack.c.l.b16 %v3600
        %v4170 = vunpack.c.h.b16 %v3600
        %v4171 = vunpack.c.l.b16 %v3601
        %v4172 = vunpack.c.h.b16 %v3601
        %v4173 = vunpack.c.l.b16 %v3602
        %v4174 = vunpack.c.h.b16 %v3602
        %v4175 = vunpack.c.l.b16 %v3603
        %v4176 = vunpack.c.h.b16 %v3603
        %v4177 = vunpack.c.l.b16 %v3604
        %v4178 = vunpack.c.h.b16 %v3604
        %v4179 = vunpack.c.l.b16 %v3605
        %v4180 = vunpack.c.h.b16 %v3605
        %v4181 = vunpack.c.l.b16 %v3606
        %v4182 = vunpack.c.h.b16 %v3606
        %v4183 = vunpack.c.l.b16 %v3607
        %v4184 = vunpack.c.h.b16 %v3607
        %v4185 = vunpack.c.l.b16 %v3608
        %v4186 = vunpack.c.h.b16 %v3608
        %v4187 = vunpack.c.l.b16 %v3609
        %v4188 = vunpack.c.h.b16 %v3609
        %v4189 = vunpack.c.l.b16 %v3610
        %v4190 = vunpack.c.h.b16 %v3610
        %v4191 = vunpack.c.l.b16 %v3611
        %v4192 = vunpack.c.h.b16 %v3611
        %v4193 = vunpack.c.l.b16 %v3612
        %v4194 = vunpack.c.h.b16 %v3612
        %v4195 = vunpack.c.l.b16 %v3613
        %v4196 = vunpack.c.h.b16 %v3613
        %v4197 = vunpack.c.l.b16 %v3614
        %v4198 = vunpack.c.h.b16 %v3614
        %v4199 = vunpack.c.l.b16 %v3615
        %v4200 = vunpack.c.h.b16 %v3615
        %v4201 = vunpack.c.l.b16 %v3616
        %v4202 = vunpack.c.h.b16 %v3616
        %v4203 = vunpack.c.l.b16 %v3617
        %v4204 = vunpack.c.h.b16 %v3617
        %v4205 = vunpack.c.l.b16 %v3618
        %v4206 = vunpack.c.h.b16 %v3618
        %v4207 = vunpack.c.l.b16 %v3619
        %v4208 = vunpack.c.h.b16 %v3619
        %v4209 = vunpack.c.l.b16 %v3620
        %v4210 = vunpack.c.h.b16 %v3620
        %v4211 = vunpack.c.l.b16 %v3621
        %v4212 = vunpack.c.h.b16 %v3621
        %v4213 = vunpack.c.l.b16 %v3622
        %v4214 = vunpack.c.h.b16 %v3622
        %v4215 = vunpack.c.l.b16 %v3623
        %v4216 = vunpack.c.h.b16 %v3623
        %v4217 = vunpack.c.l.b16 %v3624
        %v4218 = vunpack.c.h.b16 %v3624
        %v4219 = vunpack.c.l.b16 %v3625
        %v4220 = vunpack.c.h.b16 %v3625
        %v4221 = vunpack.c.l.b16 %v3626
        %v4222 = vunpack.c.h.b16 %v3626
        %v4223 = vunpack.c.l.b16 %v3627
        %v4224 = vunpack.c.h.b16 %v3627
        %v4225 = vunpack.c.l.b16 %v3628
        %v4226 = vunpack.c.h.b16 %v3628
        %v4227 = vunpack.c.l.b16 %v3629
        %v4228 = vunpack.c.h.b16 %v3629
        %v4229 = vunpack.c.l.b16 %v3630
        %v4230 = vunpack.c.h.b16 %v3630
        %v4231 = vunpack.c.l.b16 %v3631
        %v4232 = vunpack.c.h.b16 %v3631
        %v4233 = vunpack.c.l.b16 %v3632
        %v4234 = vunpack.c.h.b16 %v3632
        %v4235 = vunpack.c.l.b16 %v3633
        %v4236 = vunpack.c.h.b16 %v3633
        %v4237 = vunpack.c.l.b16 %v3634
        %v4238 = vunpack.c.h.b16 %v3634
        %v4239 = vunpack.c.l.b16 %v3635
        %v4240 = vunpack.c.h.b16 %v3635
        %v4241 = vunpack.c.l.b16 %v3636
        %v4242 = vunpack.c.h.b16 %v3636
        %v4243 = vunpack.c.l.b16 %v3637
        %v4244 = vunpack.c.h.b16 %v3637
        %v4245 = vunpack.c.l.b16 %v3638
        %v4246 = vunpack.c.h.b16 %v3638
        %v4247 = vunpack.c.l.b16 %v3639
        %v4248 = vunpack.c.h.b16 %v3639
        %v4249 = vunpack.c.l.b16 %v3640
        %v4250 = vunpack.c.h.b16 %v3640
        %v4251 = vunpack.c.l.b16 %v3641
        %v4252 = vunpack.c.h.b16 %v3641
        %v4253 = vunpack.c.l.b16 %v3642
        %v4254 = vunpack.c.h.b16 %v3642
        %v4255 = vunpack.c.l.b16 %v3643
        %v4256 = vunpack.c.h.b16 %v3643
        %v4257 = vunpack.c.l.b16 %v3644
        %v4258 = vunpack.c.h.b16 %v3644
        %v4259 = vunpack.c.l.b16 %v3645
        %v4260 = vunpack.c.h.b16 %v3645
        %v4261 = vunpack.c.l.b16 %v3646
        %v4262 = vunpack.c.h.b16 %v3646
        %v4263 = vunpack.c.l.b16 %v3647
        %v4264 = vunpack.c.h.b16 %v3647
        %v4265 = vunpack.c.l.b16 %v3648
        %v4266 = vunpack.c.h.b16 %v3648
        %v4267 = vunpack.c.l.b16 %v3649
        %v4268 = vunpack.c.h.b16 %v3649
        %v4269 = vunpack.c.l.b16 %v3650
        %v4270 = vunpack.c.h.b16 %v3650
        %v4271 = vunpack.c.l.b16 %v3651
        %v4272 = vunpack.c.h.b16 %v3651
        %v4273 = vunpack.c.l.b16 %v3652
        %v4274 = vunpack.c.h.b16 %v3652
        %v4275 = vunpack.c.l.b16 %v3653
        %v4276 = vunpack.c.h.b16 %v3653
        %v4277 = vunpack.c.l.b16 %v3654
        %v4278 = vunpack.c.h.b16 %v3654
        %v4279 = vunpack.c.l.b16 %v3655
        %v4280 = vunpack.c.h.b16 %v3655
        %v4281 = vunpack.c.l.b16 %v3656
        %v4282 = vunpack.c.h.b16 %v3656
        %v4283 = vunpack.c.l.b16 %v3657
        %v4284 = vunpack.c.h.b16 %v3657
        %v4285 = vunpack.c.l.b16 %v3658
        %v4286 = vunpack.c.h.b16 %v3658
        %v4287 = vunpack.c.l.b16 %v3659
        %v4288 = vunpack.c.h.b16 %v3659
        %v4289 = vunpack.c.l.b16 %v3660
        %v4290 = vunpack.c.h.b16 %v3660
        %v4291 = vpack.c.b16 %v3931, %v3907
        %v4292 = vpack.c.b16 %v3932, %v3908
        %v4293 = vpack.c.b16 %v3933, %v3909
        %v4294 = vpack.c.b16 %v3934, %v3910
        %v4295 = vpack.c.b16 %v3935, %v3911
        %v4296 = vpack.c.b16 %v3936, %v3912
        %v4297 = vpack.c.b16 %v3937, %v3913
        %v4298 = vpack.c.b16 %v3938, %v3914
        %v4299 = vpack.c.b16 %v3939, %v3915
        %v4300 = vpack.c.b16 %v3940, %v3916
        %v4301 = vpack.c.b16 %v3941, %v3917
        %v4302 = vpack.c.b16 %v3942, %v3918
        %v4303 = vpack.c.b16 %v3943, %v3919
        %v4304 = vpack.c.b16 %v3944, %v3920
        %v4305 = vpack.c.b16 %v3945, %v3921
        %v4306 = vpack.c.b16 %v3946, %v3922
        %v4307 = vpack.c.b16 %v3947, %v3923
        %v4308 = vpack.c.b16 %v3948, %v3924
        %v4309 = vpack.c.b16 %v3949, %v3925
        %v4310 = vpack.c.b16 %v3950, %v3926
        %v4311 = vpack.c.b16 %v3951, %v3927
        %v4312 = vpack.c.b16 %v3952, %v3928
        %v4313 = vpack.c.b16 %v3953, %v3929
        %v4314 = vpack.c.b16 %v3954, %v3930
        %v4315 = vpack.c.b16 %v3979, %v3955
        %v4316 = vpack.c.b16 %v3980, %v3956
        %v4317 = vpack.c.b16 %v3981, %v3957
        %v4318 = vpack.c.b16 %v3982, %v3958
        %v4319 = vpack.c.b16 %v3983, %v3959
        %v4320 = vpack.c.b16 %v3984, %v3960
        %v4321 = vpack.c.b16 %v3985, %v3961
        %v4322 = vpack.c.b16 %v3986, %v3962
        %v4323 = vpack.c.b16 %v3987, %v3963
        %v4324 = vpack.c.b16 %v3988, %v3964
        %v4325 = vpack.c.b16 %v3989, %v3965
        %v4326 = vpack.c.b16 %v3990, %v3966
        %v4327 = vpack.c.b16 %v3991, %v3967
        %v4328 = vpack.c.b16 %v3992, %v3968
        %v4329 = vpack.c.b16 %v3993, %v3969
        %v4330 = vpack.c.b16 %v3994, %v3970
        %v4331 = vpack.c.b16 %v3995, %v3971
        %v4332 = vpack.c.b16 %v3996, %v3972
        %v4333 = vpack.c.b16 %v3997, %v3973
        %v4334 = vpack.c.b16 %v3998, %v3974
        %v4335 = vpack.c.b16 %v3999, %v3975
        %v4336 = vpack.c.b16 %v4000, %v3976
        %v4337 = vpack.c.b16 %v4001, %v3977
        %v4338 = vpack.c.b16 %v4002, %v3978
        %v4339 = vpack.c.b16 %v4027, %v4003
        %v4340 = vpack.c.b16 %v4028, %v4004
        %v4341 = vpack.c.b16 %v4029, %v4005
        %v4342 = vpack.c.b16 %v4030, %v4006
        %v4343 = vpack.c.b16 %v4031, %v4007
        %v4344 = vpack.c.b16 %v4032, %v4008
        %v4345 = vpack.c.b16 %v4033, %v4009
        %v4346 = vpack.c.b16 %v4034, %v4010
        %v4347 = vpack.c.b16 %v4035, %v4011
        %v4348 = vpack.c.b16 %v4036, %v4012
        %v4349 = vpack.c.b16 %v4037, %v4013
        %v4350 = vpack.c.b16 %v4038, %v4014
        %v4351 = vpack.c.b16 %v4039, %v4015
        %v4352 = vpack.c.b16 %v4040, %v4016
        %v4353 = vpack.c.b16 %v4041, %v4017
        %v4354 = vpack.c.b16 %v4042, %v4018
        %v4355 = vpack.c.b16 %v4043, %v4019
        %v4356 = vpack.c.b16 %v4044, %v4020
        %v4357 = vpack.c.b16 %v4045, %v4021
        %v4358 = vpack.c.b16 %v4046, %v4022
        %v4359 = vpack.c.b16 %v4047, %v4023
        %v4360 = vpack.c.b16 %v4048, %v4024
        %v4361 = vpack.c.b16 %v4049, %v4025
        %v4362 = vpack.c.b16 %v4050, %v4026
        %v4363 = vpack.c.b16 %v4075, %v4051
        %v4364 = vpack.c.b16 %v4076, %v4052
        %v4365 = vpack.c.b16 %v4077, %v4053
        %v4366 = vpack.c.b16 %v4078, %v4054
        %v4367 = vpack.c.b16 %v4079, %v4055
        %v4368 = vpack.c.b16 %v4080, %v4056
        %v4369 = vpack.c.b16 %v4081, %v4057
        %v4370 = vpack.c.b16 %v4082, %v4058
        %v4371 = vpack.c.b16 %v4083, %v4059
        %v4372 = vpack.c.b16 %v4084, %v4060
        %v4373 = vpack.c.b16 %v4085, %v4061
        %v4374 = vpack.c.b16 %v4086, %v4062
        %v4375 = vpack.c.b16 %v4087, %v4063
        %v4376 = vpack.c.b16 %v4088, %v4064
        %v4377 = vpack.c.b16 %v4089, %v4065
        %v4378 = vpack.c.b16 %v4090, %v4066
        %v4379 = vpack.c.b16 %v4091, %v4067
        %v4380 = vpack.c.b16 %v4092, %v4068
        %v4381 = vpack.c.b16 %v4093, %v4069
        %v4382 = vpack.c.b16 %v4094, %v4070
        %v4383 = vpack.c.b16 %v4095, %v4071
        %v4384 = vpack.c.b16 %v4096, %v4072
        %v4385 = vpack.c.b16 %v4097, %v4073
        %v4386 = vpack.c.b16 %v4098, %v4074
        %v4387 = vpack.c.b16 %v4123, %v4099
        %v4388 = vpack.c.b16 %v4124, %v4100
        %v4389 = vpack.c.b16 %v4125, %v4101
        %v4390 = vpack.c.b16 %v4126, %v4102
        %v4391 = vpack.c.b16 %v4127, %v4103
        %v4392 = vpack.c.b16 %v4128, %v4104
        %v4393 = vpack.c.b16 %v4129, %v4105
        %v4394 = vpack.c.b16 %v4130, %v4106
        %v4395 = vpack.c.b16 %v4131, %v4107
        %v4396 = vpack.c.b16 %v4132, %v4108
        %v4397 = vpack.c.b16 %v4133, %v4109
        %v4398 = vpack.c.b16 %v4134, %v4110
        %v4399 = vpack.c.b16 %v4135, %v4111
        %v4400 = vpack.c.b16 %v4136, %v4112
        %v4401 = vpack.c.b16 %v4137, %v4113
        %v4402 = vpack.c.b16 %v4138, %v4114
        %v4403 = vpack.c.b16 %v4139, %v4115
        %v4404 = vpack.c.b16 %v4140, %v4116
        %v4405 = vpack.c.b16 %v4141, %v4117
        %v4406 = vpack.c.b16 %v4142, %v4118
        %v4407 = vpack.c.b16 %v4143, %v4119
        %v4408 = vpack.c.b16 %v4144, %v4120
        %v4409 = vpack.c.b16 %v4145, %v4121
        %v4410 = vpack.c.b16 %v4146, %v4122
        %v4411 = vpack.c.b16 %v4171, %v4147
        %v4412 = vpack.c.b16 %v4172, %v4148
        %v4413 = vpack.c.b16 %v4173, %v4149
        %v4414 = vpack.c.b16 %v4174, %v4150
        %v4415 = vpack.c.b16 %v4175, %v4151
        %v4416 = vpack.c.b16 %v4176, %v4152
        %v4417 = vpack.c.b16 %v4177, %v4153
        %v4418 = vpack.c.b16 %v4178, %v4154
        %v4419 = vpack.c.b16 %v4179, %v4155
        %v4420 = vpack.c.b16 %v4180, %v4156
        %v4421 = vpack.c.b16 %v4181, %v4157
        %v4422 = vpack.c.b16 %v4182, %v4158
        %v4423 = vpack.c.b16 %v4183, %v4159
        %v4424 = vpack.c.b16 %v4184, %v4160
        %v4425 = vpack.c.b16 %v4185, %v4161
        %v4426 = vpack.c.b16 %v4186, %v4162
        %v4427 = vpack.c.b16 %v4187, %v4163
        %v4428 = vpack.c.b16 %v4188, %v4164
        %v4429 = vpack.c.b16 %v4189, %v4165
        %v4430 = vpack.c.b16 %v4190, %v4166
        %v4431 = vpack.c.b16 %v4191, %v4167
        %v4432 = vpack.c.b16 %v4192, %v4168
        %v4433 = vpack.c.b16 %v4193, %v4169
        %v4434 = vpack.c.b16 %v4194, %v4170
        %v4435 = vpack.c.b16 %v4219, %v4195
        %v4436 = vpack.c.b16 %v4220, %v4196
        %v4437 = vpack.c.b16 %v4221, %v4197
        %v4438 = vpack.c.b16 %v4222, %v4198
        %v4439 = vpack.c.b16 %v4223, %v4199
        %v4440 = vpack.c.b16 %v4224, %v4200
        %v4441 = vpack.c.b16 %v4225, %v4201
        %v4442 = vpack.c.b16 %v4226, %v4202
        %v4443 = vpack.c.b16 %v4227, %v4203
        %v4444 = vpack.c.b16 %v4228, %v4204
        %v4445 = vpack.c.b16 %v4229, %v4205
        %v4446 = vpack.c.b16 %v4230, %v4206
        %v4447 = vpack.c.b16 %v4231, %v4207
        %v4448 = vpack.c.b16 %v4232, %v4208
        %v4449 = vpack.c.b16 %v4233, %v4209
        %v4450 = vpack.c.b16 %v4234, %v4210
        %v4451 = vpack.c.b16 %v4235, %v4211
        %v4452 = vpack.c.b16 %v4236, %v4212
        %v4453 = vpack.c.b16 %v4237, %v4213
        %v4454 = vpack.c.b16 %v4238, %v4214
        %v4455 = vpack.c.b16 %v4239, %v4215
        %v4456 = vpack.c.b16 %v4240, %v4216
        %v4457 = vpack.c.b16 %v4241, %v4217
        %v4458 = vpack.c.b16 %v4242, %v4218
        %v4459 = vpack.c.b16 %v4267, %v4243
        %v4460 = vpack.c.b16 %v4268, %v4244
        %v4461 = vpack.c.b16 %v4269, %v4245
        %v4462 = vpack.c.b16 %v4270, %v4246
        %v4463 = vpack.c.b16 %v4271, %v4247
        %v4464 = vpack.c.b16 %v4272, %v4248
        %v4465 = vpack.c.b16 %v4273, %v4249
        %v4466 = vpack.c.b16 %v4274, %v4250
        %v4467 = vpack.c.b16 %v4275, %v4251
        %v4468 = vpack.c.b16 %v4276, %v4252
        %v4469 = vpack.c.b16 %v4277, %v4253
        %v4470 = vpack.c.b16 %v4278, %v4254
        %v4471 = vpack.c.b16 %v4279, %v4255
        %v4472 = vpack.c.b16 %v4280, %v4256
        %v4473 = vpack.c.b16 %v4281, %v4257
        %v4474 = vpack.c.b16 %v4282, %v4258
        %v4475 = vpack.c.b16 %v4283, %v4259
        %v4476 = vpack.c.b16 %v4284, %v4260
        %v4477 = vpack.c.b16 %v4285, %v4261
        %v4478 = vpack.c.b16 %v4286, %v4262
        %v4479 = vpack.c.b16 %v4287, %v4263
        %v4480 = vpack.c.b16 %v4288, %v4264
        %v4481 = vpack.c.b16 %v4289, %v4265
        %v4482 = vpack.c.b16 %v4290, %v4266
        %4675 = vmatpush.bf16.msra.mxu0 %v4459
        %4676 = vmatpush.bf16.msra.mxu0 %v4435
        %4677 = vmatpush.bf16.msra.mxu0 %v4411
        %4678 = vmatpush.bf16.msra.mxu0 %v4387
        %4679 = vmatpush.bf16.msra.mxu0 %v4363
        %4680 = vmatpush.bf16.msra.mxu0 %v4339
        %4681 = vmatpush.bf16.msra.mxu0 %v4315
        %4682 = vmatpush.bf16.msra.mxu0 %v4291
        %4683 = vmatmul.bf16.gmra.mxu0 %v3468
        %v4684 = vpop.f32.mrf.mxu0
        %v4685 = vadd.f32 %v3667, %v4684
        %v4686 = vpop.f32.mrf.mxu0
        %4687 = vdwg.mxu0
        %4688 = vmatpush.bf16.msra.mxu0 %v4460
        %4689 = vmatpush.bf16.msra.mxu0 %v4436
        %4690 = vmatpush.bf16.msra.mxu0 %v4412
        %4691 = vmatpush.bf16.msra.mxu0 %v4388
        %4692 = vmatpush.bf16.msra.mxu0 %v4364
        %4693 = vmatpush.bf16.msra.mxu0 %v4340
        %4694 = vmatpush.bf16.msra.mxu0 %v4316
        %4695 = vmatpush.bf16.msra.mxu0 %v4292
        %4696 = vmatmul.bf16.gmra.mxu0 %v3468
        %v4697 = vpop.f32.mrf.mxu0
        %v4698 = vadd.f32 %v3668, %v4697
        %v4699 = vpop.f32.mrf.mxu0
        %4700 = vdwg.mxu0
        %4701 = vmatpush.bf16.msra.mxu0 %v4461
        %4702 = vmatpush.bf16.msra.mxu0 %v4437
        %4703 = vmatpush.bf16.msra.mxu0 %v4413
        %4704 = vmatpush.bf16.msra.mxu0 %v4389
        %4705 = vmatpush.bf16.msra.mxu0 %v4365
        %4706 = vmatpush.bf16.msra.mxu0 %v4341
        %4707 = vmatpush.bf16.msra.mxu0 %v4317
        %4708 = vmatpush.bf16.msra.mxu0 %v4293
        %4709 = vmatmul.bf16.gmra.mxu0 %v3468
        %v4710 = vpop.f32.mrf.mxu0
        %v4711 = vadd.f32 %v3669, %v4710
        %v4712 = vpop.f32.mrf.mxu0
        %4713 = vdwg.mxu0
        %4714 = vmatpush.bf16.msra.mxu0 %v4462
        %4715 = vmatpush.bf16.msra.mxu0 %v4438
        %4716 = vmatpush.bf16.msra.mxu0 %v4414
        %4717 = vmatpush.bf16.msra.mxu0 %v4390
        %4718 = vmatpush.bf16.msra.mxu0 %v4366
        %4719 = vmatpush.bf16.msra.mxu0 %v4342
        %4720 = vmatpush.bf16.msra.mxu0 %v4318
        %4721 = vmatpush.bf16.msra.mxu0 %v4294
        %4722 = vmatmul.bf16.gmra.mxu0 %v3468
        %v4723 = vpop.f32.mrf.mxu0
        %v4724 = vadd.f32 %v3670, %v4723
        %v4725 = vpop.f32.mrf.mxu0
        %4726 = vdwg.mxu0
        %4727 = vmatpush.bf16.msra.mxu0 %v4463
        %4728 = vmatpush.bf16.msra.mxu0 %v4439
        %4729 = vmatpush.bf16.msra.mxu0 %v4415
        %4730 = vmatpush.bf16.msra.mxu0 %v4391
        %4731 = vmatpush.bf16.msra.mxu0 %v4367
        %4732 = vmatpush.bf16.msra.mxu0 %v4343
        %4733 = vmatpush.bf16.msra.mxu0 %v4319
        %4734 = vmatpush.bf16.msra.mxu0 %v4295
        %4735 = vmatmul.bf16.gmra.mxu0 %v3468
        %v4736 = vpop.f32.mrf.mxu0
        %v4737 = vadd.f32 %v3671, %v4736
        %v4738 = vpop.f32.mrf.mxu0
        %4739 = vdwg.mxu0
        %4740 = vmatpush.bf16.msra.mxu0 %v4464
        %4741 = vmatpush.bf16.msra.mxu0 %v4440
        %4742 = vmatpush.bf16.msra.mxu0 %v4416
        %4743 = vmatpush.bf16.msra.mxu0 %v4392
        %4744 = vmatpush.bf16.msra.mxu0 %v4368
        %4745 = vmatpush.bf16.msra.mxu0 %v4344
        %4746 = vmatpush.bf16.msra.mxu0 %v4320
        %4747 = vmatpush.bf16.msra.mxu0 %v4296
        %4748 = vmatmul.bf16.gmra.mxu0 %v3468
        %v4749 = vpop.f32.mrf.mxu0
        %v4750 = vadd.f32 %v3672, %v4749
        %v4751 = vpop.f32.mrf.mxu0
        %4752 = vdwg.mxu0
        %4753 = vmatpush.bf16.msra.mxu0 %v4465
        %4754 = vmatpush.bf16.msra.mxu0 %v4441
        %4755 = vmatpush.bf16.msra.mxu0 %v4417
        %4756 = vmatpush.bf16.msra.mxu0 %v4393
        %4757 = vmatpush.bf16.msra.mxu0 %v4369
        %4758 = vmatpush.bf16.msra.mxu0 %v4345
        %4759 = vmatpush.bf16.msra.mxu0 %v4321
        %4760 = vmatpush.bf16.msra.mxu0 %v4297
        %4761 = vmatmul.bf16.gmra.mxu0 %v3468
        %v4762 = vpop.f32.mrf.mxu0
        %v4763 = vadd.f32 %v3673, %v4762
        %v4764 = vpop.f32.mrf.mxu0
        %4765 = vdwg.mxu0
        %4766 = vmatpush.bf16.msra.mxu0 %v4466
        %4767 = vmatpush.bf16.msra.mxu0 %v4442
        %4768 = vmatpush.bf16.msra.mxu0 %v4418
        %4769 = vmatpush.bf16.msra.mxu0 %v4394
        %4770 = vmatpush.bf16.msra.mxu0 %v4370
        %4771 = vmatpush.bf16.msra.mxu0 %v4346
        %4772 = vmatpush.bf16.msra.mxu0 %v4322
        %4773 = vmatpush.bf16.msra.mxu0 %v4298
        %4774 = vmatmul.bf16.gmra.mxu0 %v3468
        %v4775 = vpop.f32.mrf.mxu0
        %v4776 = vadd.f32 %v3674, %v4775
        %v4777 = vpop.f32.mrf.mxu0
        %4778 = vdwg.mxu0
        %4779 = vmatpush.bf16.msra.mxu0 %v4467
        %4780 = vmatpush.bf16.msra.mxu0 %v4443
        %4781 = vmatpush.bf16.msra.mxu0 %v4419
        %4782 = vmatpush.bf16.msra.mxu0 %v4395
        %4783 = vmatpush.bf16.msra.mxu0 %v4371
        %4784 = vmatpush.bf16.msra.mxu0 %v4347
        %4785 = vmatpush.bf16.msra.mxu0 %v4323
        %4786 = vmatpush.bf16.msra.mxu0 %v4299
        %4787 = vmatmul.bf16.gmra.mxu0 %v3468
        %v4788 = vpop.f32.mrf.mxu0
        %v4789 = vadd.f32 %v3675, %v4788
        %v4790 = vpop.f32.mrf.mxu0
        %4791 = vdwg.mxu0
        %4792 = vmatpush.bf16.msra.mxu0 %v4468
        %4793 = vmatpush.bf16.msra.mxu0 %v4444
        %4794 = vmatpush.bf16.msra.mxu0 %v4420
        %4795 = vmatpush.bf16.msra.mxu0 %v4396
        %4796 = vmatpush.bf16.msra.mxu0 %v4372
        %4797 = vmatpush.bf16.msra.mxu0 %v4348
        %4798 = vmatpush.bf16.msra.mxu0 %v4324
        %4799 = vmatpush.bf16.msra.mxu0 %v4300
        %4800 = vmatmul.bf16.gmra.mxu0 %v3468
        %v4801 = vpop.f32.mrf.mxu0
        %v4802 = vadd.f32 %v3676, %v4801
        %v4803 = vpop.f32.mrf.mxu0
        %4804 = vdwg.mxu0
        %4805 = vmatpush.bf16.msra.mxu0 %v4469
        %4806 = vmatpush.bf16.msra.mxu0 %v4445
        %4807 = vmatpush.bf16.msra.mxu0 %v4421
        %4808 = vmatpush.bf16.msra.mxu0 %v4397
        %4809 = vmatpush.bf16.msra.mxu0 %v4373
        %4810 = vmatpush.bf16.msra.mxu0 %v4349
        %4811 = vmatpush.bf16.msra.mxu0 %v4325
        %4812 = vmatpush.bf16.msra.mxu0 %v4301
        %4813 = vmatmul.bf16.gmra.mxu0 %v3468
        %v4814 = vpop.f32.mrf.mxu0
        %v4815 = vadd.f32 %v3677, %v4814
        %v4816 = vpop.f32.mrf.mxu0
        %4817 = vdwg.mxu0
        %4818 = vmatpush.bf16.msra.mxu0 %v4470
        %4819 = vmatpush.bf16.msra.mxu0 %v4446
        %4820 = vmatpush.bf16.msra.mxu0 %v4422
        %4821 = vmatpush.bf16.msra.mxu0 %v4398
        %4822 = vmatpush.bf16.msra.mxu0 %v4374
        %4823 = vmatpush.bf16.msra.mxu0 %v4350
        %4824 = vmatpush.bf16.msra.mxu0 %v4326
        %4825 = vmatpush.bf16.msra.mxu0 %v4302
        %4826 = vmatmul.bf16.gmra.mxu0 %v3468
        %v4827 = vpop.f32.mrf.mxu0
        %v4828 = vadd.f32 %v3678, %v4827
        %v4829 = vpop.f32.mrf.mxu0
        %4830 = vdwg.mxu0
        %4831 = vmatpush.bf16.msra.mxu0 %v4471
        %4832 = vmatpush.bf16.msra.mxu0 %v4447
        %4833 = vmatpush.bf16.msra.mxu0 %v4423
        %4834 = vmatpush.bf16.msra.mxu0 %v4399
        %4835 = vmatpush.bf16.msra.mxu0 %v4375
        %4836 = vmatpush.bf16.msra.mxu0 %v4351
        %4837 = vmatpush.bf16.msra.mxu0 %v4327
        %4838 = vmatpush.bf16.msra.mxu0 %v4303
        %4839 = vmatmul.bf16.gmra.mxu0 %v3468
        %v4840 = vpop.f32.mrf.mxu0
        %v4841 = vadd.f32 %v3679, %v4840
        %v4842 = vpop.f32.mrf.mxu0
        %4843 = vdwg.mxu0
        %4844 = vmatpush.bf16.msra.mxu0 %v4472
        %4845 = vmatpush.bf16.msra.mxu0 %v4448
        %4846 = vmatpush.bf16.msra.mxu0 %v4424
        %4847 = vmatpush.bf16.msra.mxu0 %v4400
        %4848 = vmatpush.bf16.msra.mxu0 %v4376
        %4849 = vmatpush.bf16.msra.mxu0 %v4352
        %4850 = vmatpush.bf16.msra.mxu0 %v4328
        %4851 = vmatpush.bf16.msra.mxu0 %v4304
        %4852 = vmatmul.bf16.gmra.mxu0 %v3468
        %v4853 = vpop.f32.mrf.mxu0
        %v4854 = vadd.f32 %v3680, %v4853
        %v4855 = vpop.f32.mrf.mxu0
        %4856 = vdwg.mxu0
        %4857 = vmatpush.bf16.msra.mxu0 %v4473
        %4858 = vmatpush.bf16.msra.mxu0 %v4449
        %4859 = vmatpush.bf16.msra.mxu0 %v4425
        %4860 = vmatpush.bf16.msra.mxu0 %v4401
        %4861 = vmatpush.bf16.msra.mxu0 %v4377
        %4862 = vmatpush.bf16.msra.mxu0 %v4353
        %4863 = vmatpush.bf16.msra.mxu0 %v4329
        %4864 = vmatpush.bf16.msra.mxu0 %v4305
        %4865 = vmatmul.bf16.gmra.mxu0 %v3468
        %v4866 = vpop.f32.mrf.mxu0
        %v4867 = vadd.f32 %v3681, %v4866
        %v4868 = vpop.f32.mrf.mxu0
        %4869 = vdwg.mxu0
        %4870 = vmatpush.bf16.msra.mxu0 %v4474
        %4871 = vmatpush.bf16.msra.mxu0 %v4450
        %4872 = vmatpush.bf16.msra.mxu0 %v4426
        %4873 = vmatpush.bf16.msra.mxu0 %v4402
        %4874 = vmatpush.bf16.msra.mxu0 %v4378
        %4875 = vmatpush.bf16.msra.mxu0 %v4354
        %4876 = vmatpush.bf16.msra.mxu0 %v4330
        %4877 = vmatpush.bf16.msra.mxu0 %v4306
        %4878 = vmatmul.bf16.gmra.mxu0 %v3468
        %v4879 = vpop.f32.mrf.mxu0
        %v4880 = vadd.f32 %v3682, %v4879
        %v4881 = vpop.f32.mrf.mxu0
        %4882 = vdwg.mxu0
        %4883 = vmatpush.bf16.msra.mxu0 %v4475
        %4884 = vmatpush.bf16.msra.mxu0 %v4451
        %4885 = vmatpush.bf16.msra.mxu0 %v4427
        %4886 = vmatpush.bf16.msra.mxu0 %v4403
        %4887 = vmatpush.bf16.msra.mxu0 %v4379
        %4888 = vmatpush.bf16.msra.mxu0 %v4355
        %4889 = vmatpush.bf16.msra.mxu0 %v4331
        %4890 = vmatpush.bf16.msra.mxu0 %v4307
        %4891 = vmatmul.bf16.gmra.mxu0 %v3468
        %v4892 = vpop.f32.mrf.mxu0
        %v4893 = vadd.f32 %v3683, %v4892
        %v4894 = vpop.f32.mrf.mxu0
        %4895 = vdwg.mxu0
        %4896 = vmatpush.bf16.msra.mxu0 %v4476
        %4897 = vmatpush.bf16.msra.mxu0 %v4452
        %4898 = vmatpush.bf16.msra.mxu0 %v4428
        %4899 = vmatpush.bf16.msra.mxu0 %v4404
        %4900 = vmatpush.bf16.msra.mxu0 %v4380
        %4901 = vmatpush.bf16.msra.mxu0 %v4356
        %4902 = vmatpush.bf16.msra.mxu0 %v4332
        %4903 = vmatpush.bf16.msra.mxu0 %v4308
        %4904 = vmatmul.bf16.gmra.mxu0 %v3468
        %v4905 = vpop.f32.mrf.mxu0
        %v4906 = vadd.f32 %v3684, %v4905
        %v4907 = vpop.f32.mrf.mxu0
        %4908 = vdwg.mxu0
        %4909 = vmatpush.bf16.msra.mxu0 %v4477
        %4910 = vmatpush.bf16.msra.mxu0 %v4453
        %4911 = vmatpush.bf16.msra.mxu0 %v4429
        %4912 = vmatpush.bf16.msra.mxu0 %v4405
        %4913 = vmatpush.bf16.msra.mxu0 %v4381
        %4914 = vmatpush.bf16.msra.mxu0 %v4357
        %4915 = vmatpush.bf16.msra.mxu0 %v4333
        %4916 = vmatpush.bf16.msra.mxu0 %v4309
        %4917 = vmatmul.bf16.gmra.mxu0 %v3468
        %v4918 = vpop.f32.mrf.mxu0
        %v4919 = vadd.f32 %v3685, %v4918
        %v4920 = vpop.f32.mrf.mxu0
        %4921 = vdwg.mxu0
        %4922 = vmatpush.bf16.msra.mxu0 %v4478
        %4923 = vmatpush.bf16.msra.mxu0 %v4454
        %4924 = vmatpush.bf16.msra.mxu0 %v4430
        %4925 = vmatpush.bf16.msra.mxu0 %v4406
        %4926 = vmatpush.bf16.msra.mxu0 %v4382
        %4927 = vmatpush.bf16.msra.mxu0 %v4358
        %4928 = vmatpush.bf16.msra.mxu0 %v4334
        %4929 = vmatpush.bf16.msra.mxu0 %v4310
        %4930 = vmatmul.bf16.gmra.mxu0 %v3468
        %v4931 = vpop.f32.mrf.mxu0
        %v4932 = vadd.f32 %v3686, %v4931
        %v4933 = vpop.f32.mrf.mxu0
        %4934 = vdwg.mxu0
        %4935 = vmatpush.bf16.msra.mxu0 %v4479
        %4936 = vmatpush.bf16.msra.mxu0 %v4455
        %4937 = vmatpush.bf16.msra.mxu0 %v4431
        %4938 = vmatpush.bf16.msra.mxu0 %v4407
        %4939 = vmatpush.bf16.msra.mxu0 %v4383
        %4940 = vmatpush.bf16.msra.mxu0 %v4359
        %4941 = vmatpush.bf16.msra.mxu0 %v4335
        %4942 = vmatpush.bf16.msra.mxu0 %v4311
        %4943 = vmatmul.bf16.gmra.mxu0 %v3468
        %v4944 = vpop.f32.mrf.mxu0
        %v4945 = vadd.f32 %v3687, %v4944
        %v4946 = vpop.f32.mrf.mxu0
        %4947 = vdwg.mxu0
        %4948 = vmatpush.bf16.msra.mxu0 %v4480
        %4949 = vmatpush.bf16.msra.mxu0 %v4456
        %4950 = vmatpush.bf16.msra.mxu0 %v4432
        %4951 = vmatpush.bf16.msra.mxu0 %v4408
        %4952 = vmatpush.bf16.msra.mxu0 %v4384
        %4953 = vmatpush.bf16.msra.mxu0 %v4360
        %4954 = vmatpush.bf16.msra.mxu0 %v4336
        %4955 = vmatpush.bf16.msra.mxu0 %v4312
        %4956 = vmatmul.bf16.gmra.mxu0 %v3468
        %v4957 = vpop.f32.mrf.mxu0
        %v4958 = vadd.f32 %v3688, %v4957
        %v4959 = vpop.f32.mrf.mxu0
        %4960 = vdwg.mxu0
        %4961 = vmatpush.bf16.msra.mxu0 %v4481
        %4962 = vmatpush.bf16.msra.mxu0 %v4457
        %4963 = vmatpush.bf16.msra.mxu0 %v4433
        %4964 = vmatpush.bf16.msra.mxu0 %v4409
        %4965 = vmatpush.bf16.msra.mxu0 %v4385
        %4966 = vmatpush.bf16.msra.mxu0 %v4361
        %4967 = vmatpush.bf16.msra.mxu0 %v4337
        %4968 = vmatpush.bf16.msra.mxu0 %v4313
        %4969 = vmatmul.bf16.gmra.mxu0 %v3468
        %v4970 = vpop.f32.mrf.mxu0
        %v4971 = vadd.f32 %v3689, %v4970
        %v4972 = vpop.f32.mrf.mxu0
        %4973 = vdwg.mxu0
        %4974 = vmatpush.bf16.msra.mxu0 %v4482
        %4975 = vmatpush.bf16.msra.mxu0 %v4458
        %4976 = vmatpush.bf16.msra.mxu0 %v4434
        %4977 = vmatpush.bf16.msra.mxu0 %v4410
        %4978 = vmatpush.bf16.msra.mxu0 %v4386
        %4979 = vmatpush.bf16.msra.mxu0 %v4362
        %4980 = vmatpush.bf16.msra.mxu0 %v4338
        %4981 = vmatpush.bf16.msra.mxu0 %v4314
        %4982 = vmatmul.bf16.gmra.mxu0 %v3468
        %v4983 = vpop.f32.mrf.mxu0
        %v4984 = vadd.f32 %v3690, %v4983
        %v4985 = vpop.f32.mrf.mxu0
        %4986 = vdwg.mxu0
        %v4987 = vmax.f32 %v4685, 0.0
        %v4988 = vmax.f32 %v4698, 0.0
        %v4989 = vmax.f32 %v4711, 0.0
        %v4990 = vmax.f32 %v4724, 0.0
        %v4991 = vmax.f32 %v4737, 0.0
        %v4992 = vmax.f32 %v4750, 0.0
        %v4993 = vmax.f32 %v4763, 0.0
        %v4994 = vmax.f32 %v4776, 0.0
        %v4995 = vmax.f32 %v4789, 0.0
        %v4996 = vmax.f32 %v4802, 0.0
        %v4997 = vmax.f32 %v4815, 0.0
        %v4998 = vmax.f32 %v4828, 0.0
        %v4999 = vmax.f32 %v4841, 0.0
        %v5000 = vmax.f32 %v4854, 0.0
        %v5001 = vmax.f32 %v4867, 0.0
        %v5002 = vmax.f32 %v4880, 0.0
        %v5003 = vmax.f32 %v4893, 0.0
        %v5004 = vmax.f32 %v4906, 0.0
        %v5005 = vmax.f32 %v4919, 0.0
        %v5006 = vmax.f32 %v4932, 0.0
        %v5007 = vmax.f32 %v4945, 0.0
        %v5008 = vmax.f32 %v4958, 0.0
        %v5009 = vmax.f32 %v4971, 0.0
        %v5010 = vmax.f32 %v4984, 0.0
        %v5035 = vrot.slane %v4988, 6
        %v5036 = vrot.slane %v4989, 4
        %v5037 = vrot.slane %v4990, 2
        %v5038 = vrot.slane %v4992, 6
        %v5039 = vrot.slane %v4993, 4
        %v5040 = vrot.slane %v4994, 2
        %v5041 = vrot.slane %v4996, 6
        %v5042 = vrot.slane %v4997, 4
        %v5043 = vrot.slane %v4998, 2
        %v5044 = vrot.slane %v5000, 6
        %v5045 = vrot.slane %v5001, 4
        %v5046 = vrot.slane %v5002, 2
        %v5047 = vrot.slane %v5004, 6
        %v5048 = vrot.slane %v5005, 4
        %v5049 = vrot.slane %v5006, 2
        %v5050 = vrot.slane %v5008, 6
        %v5051 = vrot.slane %v5009, 4
        %v5052 = vrot.slane %v5010, 2
        %vm5053 = vcmask 1041408
        %v5054 = vsel %vm5053, %v4987, %v5035
        %vm5055 = vcmask 1045508
        %v5056 = vsel %vm5055, %v5036, %v5037
        %vm5057 = vcmask 1043456
        %v5058 = vsel %vm5057, %v5054, %v5056
        %v5059 = vsel %vm5053, %v4991, %v5038
        %v5060 = vsel %vm5055, %v5039, %v5040
        %v5061 = vsel %vm5057, %v5059, %v5060
        %v5062 = vsel %vm5053, %v4995, %v5041
        %v5063 = vsel %vm5055, %v5042, %v5043
        %v5064 = vsel %vm5057, %v5062, %v5063
        %v5065 = vsel %vm5053, %v4999, %v5044
        %v5066 = vsel %vm5055, %v5045, %v5046
        %v5067 = vsel %vm5057, %v5065, %v5066
        %v5068 = vsel %vm5053, %v5003, %v5047
        %v5069 = vsel %vm5055, %v5048, %v5049
        %v5070 = vsel %vm5057, %v5068, %v5069
        %v5071 = vsel %vm5053, %v5007, %v5050
        %v5072 = vsel %vm5055, %v5051, %v5052
        %v5073 = vsel %vm5057, %v5071, %v5072
        %5080 = vst [vmem:[%s355] sm:$0xff] %v5058
        %5081 = vst [vmem:[%s355 + $0x8] sm:$0xff] %v5061
        %5082 = vst [vmem:[%s355 + $0x10] sm:$0xff] %v5064
        %5083 = vst [vmem:[%s355 + $0x18] sm:$0xff] %v5067
        %5084 = vst [vmem:[%s355 + $0x20] sm:$0xff] %v5070
        %5085 = vst [vmem:[%s355 + $0x28] sm:$0xff] %v5073
        %s5086 = smul.u32 24, %s23
        %p5087 = scmp.lt.s32.totalorder %s22, 0
        %s5088 = scalar_select %p5087, %s22, 0
        %p5089 = scmp.lt.s32.totalorder %s5086, 47
        %s5090 = scalar_select %p5089, %s5086, 47
        %s5091 = smul.addr %s5088, 48
        %s5092 = sadd.s32 %s5090, %s5091
        %s5093 = smul.addr %s5092, 2
        %s5094 = scalar_lea.vmem %s5, %s5093
        // Predicated region
        $region61: #{model_forward.3} parent=39 // pred_check
          %p5095 = pneg %p170
        $region62: #{model_forward.3} parent=39 // pred_check_branch
          %5097 = sbr.rel (%p5095) target = $region64
        $region63: #{model_forward.3} parent=39 // pred_region
          %s5098 = smul.u32 24, %s23
        $region64: #{model_forward.3} parent=39 // pred_fallthru
          _
      $region40: #{model_forward.3} parent=5 // pred_fallthru
        _
      %p5099 = scmp.le.s32.totalorder 2, %s13
      // Predicated region
      $region65: #{model_forward.3} parent=5 // pred_check
        %p5100 = pneg %p5099
      $region66: #{model_forward.3} parent=5 // pred_check_branch
        %5102 = sbr.rel (%p5100) target = $region68
      $region67: #{model_forward.3} parent=5 // pred_region
        %s5103 = ssub.s32 %s13, 2
        // Predicated region
        $region69: #{model_forward.3} parent=67 // pred_check
          %p5104 = pneg %p176
        $region70: #{model_forward.3} parent=67 // pred_check_branch
          %5106 = sbr.rel (%p5104) target = $region72
        $region71: #{model_forward.3} parent=67 // pred_region
          %s5107 = smul.u32 24, %s25
          %p5108 = scmp.lt.s32.totalorder %s24, 0
          %s5109 = scalar_select %p5108, %s24, 0
          %p5110 = scmp.lt.s32.totalorder %s5107, 47
          %s5111 = scalar_select %p5110, %s5107, 47
          %s5112 = smul.addr %s5109, 48
          %s5113 = sadd.s32 %s5111, %s5112
          %s5114 = smul.addr %s5113, 2
          %s5115 = scalar_lea.vmem %s5, %s5114
        $region72: #{model_forward.3} parent=67 // pred_fallthru
          _
      $region68: #{model_forward.3} parent=5 // pred_fallthru
        _
    $region6: #{model_forward.3} parent=1 // loop_footer
      %s17 = sadd.s32 1, %s13
    $region7: #{model_forward.3} parent=1 // loop_footer_branch
      %12 = sbr.rel target = $region3
    $region8: #{model_forward.3} parent=1 // loop_exit
      _
    %5116 = vsyncpa [#allocation4], 1
    %s5117 = scalar_lea.sflag [#allocation4], 1
    %5118 = vsyncpa %s5117, 1
    %5119 = vsyncpa [#allocation6], 1

// kernel: model_forward.2
$region0: #{model_forward.2}
  #allocation0 [shape = 'u32[]', space=smem, size = 0x4, offset = 0x4, fixed_abs, tag = 'smem constant byte address 0x4 - core index']
  #allocation1 [shape = 'u32[72,128]{1,0:T(1,128)}', space=vmem, size = 0x9000, scoped, tag = 'internal scratch']
  #allocation2 [shape = 'f32[9,118,170]{2,1,0:T(8,128)}', space=vmem, size = 0x10e000, scoped, tag = 'scratch operand']
  #allocation3 [shape = 'f32[8,4,58,84]{3,2,1,0:T(8,128)}', space=vmem, size = 0x100000, scoped, tag = 'scratch operand']
  %s0 = inlined_call_operand.vmem [shape: f32[2,120,172], index: 0, kind: input, shape index: {}]
  %s1 = inlined_call_operand.hbm [shape: f32[59,117], index: 1, kind: input, shape index: {}]
  %s2 = inlined_call_operand.hbm [shape: f32[169,85], index: 2, kind: input, shape index: {}]
  %s3 = inlined_call_operand.hbm [shape: f32[29,57], index: 3, kind: input, shape index: {}]
  %s4 = inlined_call_operand.vmem [shape: f32[83,42], index: 4, kind: input, shape index: {}]
  %s5 = inlined_call_operand.hbm [shape: f32[8,9], index: 5, kind: input, shape index: {}]
  %s6 = inlined_call_operand.hbm [shape: f32[8], index: 6, kind: input, shape index: {}]
  %s7 = inlined_call_operand.hbm [shape: f32[4,32], index: 7, kind: input, shape index: {}]
  %s8 = inlined_call_operand.hbm [shape: f32[4], index: 8, kind: input, shape index: {}]
  %s9 = inlined_call_operand.vmem [shape: f32[2,4,29,42], index: 9, kind: output, shape index: {}]
  %s10 = sld [smem:[#allocation0]]
  $region111: #{model_forward.2} parent=0
    _
  %s12 = ssub.s32 1, %s10
  %s13 = scalar_select 0, %s12, %s10
  $region1: #{model_forward.2} parent=0
    #allocation4 [shape = 'u8[32768]{0}', space=vmem, size = 0x8000, scoped, tag = 'input window, operand 1, single buffered']
    #allocation5 [shape = 's32[2]{0}', space=sflag, size = 0x8, scoped, tag = 'scoped memory for model_forward.2']
    #allocation6 [shape = 's32[2]{0}', space=sflag, size = 0x8, scoped, tag = 'scoped memory for model_forward.2']
    #allocation7 [shape = 'u8[90112]{0}', space=vmem, size = 0x16000, scoped, tag = 'input window, operand 2, single buffered']
    #allocation8 [shape = 's32[1]{0}', space=sflag, size = 0x4, scoped, tag = 'scoped memory for model_forward.2']
    #allocation9 [shape = 'u8[16384]{0}', space=vmem, size = 0x4000, scoped, tag = 'input window, operand 3, single buffered']
    #allocation10 [shape = 'u8[4096]{0}', space=smem, size = 0x1000, scoped, tag = 'input window, operand 5, single buffered']
    #allocation11 [shape = 'u8[512]{0}', space=smem, size = 0x200, scoped, tag = 'input window, operand 6, single buffered']
    #allocation12 [shape = 's32[1]{0}', space=sflag, size = 0x4, scoped, tag = 'scoped memory for model_forward.2']
    #allocation13 [shape = 'u8[2048]{0}', space=smem, size = 0x800, scoped, tag = 'input window, operand 7, single buffered']
    #allocation14 [shape = 'u8[512]{0}', space=smem, size = 0x200, scoped, tag = 'input window, operand 8, single buffered']
    #allocation15 [shape = 's32[1]{0}', space=sflag, size = 0x4, scoped, tag = 'scoped memory for model_forward.2']
    %14 = vsyncpa [#allocation5], 0
    %15 = vsyncpa [#allocation8], 0
    %16 = vsyncpa [#allocation6], 0
    %17 = vsyncpa [#allocation12], 0
    %18 = vsyncpa [#allocation15], 0
    loop: start=0, step=1, limit=4
    $region2: #{model_forward.2} parent=1 // loop_pre_header
      _
    $region3: #{model_forward.2} parent=1 // loop_header
      %s20 = sphi 0, %s24
      %p21 = scmp.ge.s32.totalorder %s20, 4
      %s30 = sphi 0, %s32
      %s33 = sphi 0, %s30
      %s34 = sphi 0, %s33
      %s50 = sphi 0, %s34
      %s54 = sphi 0, %s54
      %s56 = sphi 0, %s54
      %s57 = sphi 0, %s56
      %s71 = sphi 0, %s57
      %s75 = sphi 0, %s75
      %s77 = sphi 0, %s75
      %s78 = sphi 0, %s77
      %s92 = sphi 0, %s78
      %s96 = sphi 0, %s96
      %s98 = sphi 0, %s96
      %s99 = sphi 0, %s98
      %s113 = sphi 0, %s99
      %s117 = sphi 0, %s117
      %s119 = sphi 0, %s117
      %s120 = sphi 0, %s119
      %s134 = sphi 0, %s120
      %s138 = sphi 0, %s138
      %s140 = sphi 0, %s138
      %s141 = sphi 0, %s140
      %s155 = sphi 0, %s141
      %s159 = sphi 0, %s159
      %s161 = sphi 0, %s159
      %s162 = sphi 0, %s161
      %s176 = sphi 0, %s162
      %s180 = sphi 0, %s180
      %s182 = sphi 0, %s180
      %s183 = sphi 0, %s182
      %s197 = sphi 0, %s183
      %s201 = sphi 0, %s201
      %s203 = sphi 0, %s201
      %s204 = sphi 0, %s203
      %s218 = sphi 0, %s204
      %s224 = sphi 0, %s226
      %s227 = sphi 0, %s224
      %s228 = sphi 0, %s227
      %s244 = sphi 0, %s228
    $region4: #{model_forward.2} parent=1 // loop_header_branch
      %23 = sbr.rel (%p21) target = $region8
    $region5: #{model_forward.2} parent=1 // loop_body
      %s25 = ssub.s32 %s20, 1
      %s26 = ssub.s32 %s20, 2
      %s27 = sadd.s32 %s20, 1
      %s28 = ssub.s32 %s20, %s27
      %p29 = scmp.eq.s32.totalorder %s28, 0
      %s31 = sadd.s32 %s30, 1
      %s32 = scalar_select %p29, %s30, %s31
      %p35 = pneg %p29
      %p36 = scmp.eq.s32.totalorder %s20, 1
      %p37 = por %p35, %p36
      %p38 = scmp.ne.s32.totalorder %s30, %s33
      %p39 = scmp.eq.s32.totalorder %s20, 0
      %p40 = por %p38, %p39
      %p41 = scmp.ne.s32.totalorder %s30, %s33
      %p42 = scmp.eq.s32.totalorder %s25, 1
      %p43 = por %p41, %p42
      %p44 = scmp.ne.s32.totalorder %s33, %s34
      %p45 = scmp.eq.s32.totalorder %s25, 0
      %p46 = por %p44, %p45
      %p47 = scmp.ne.s32.totalorder %s33, %s34
      %p48 = scmp.eq.s32.totalorder %s26, 1
      %p49 = por %p47, %p48
      %p51 = scmp.ne.s32.totalorder %s34, %s50
      %p52 = scmp.eq.s32.totalorder %s26, 0
      %p53 = por %p51, %p52
      %s55 = sadd.s32 %s54, 1
      %p58 = scmp.eq.s32.totalorder %s20, 1
      %p59 = scmp.ne.s32.totalorder %s54, %s56
      %p60 = scmp.eq.s32.totalorder %s20, 0
      %p61 = por %p59, %p60
      %p62 = scmp.ne.s32.totalorder %s54, %s56
      %p63 = scmp.eq.s32.totalorder %s25, 1
      %p64 = por %p62, %p63
      %p65 = scmp.ne.s32.totalorder %s56, %s57
      %p66 = scmp.eq.s32.totalorder %s25, 0
      %p67 = por %p65, %p66
      %p68 = scmp.ne.s32.totalorder %s56, %s57
      %p69 = scmp.eq.s32.totalorder %s26, 1
      %p70 = por %p68, %p69
      %p72 = scmp.ne.s32.totalorder %s57, %s71
      %p73 = scmp.eq.s32.totalorder %s26, 0
      %p74 = por %p72, %p73
      %s76 = sadd.s32 %s75, 1
      %p79 = scmp.eq.s32.totalorder %s20, 1
      %p80 = scmp.ne.s32.totalorder %s75, %s77
      %p81 = scmp.eq.s32.totalorder %s20, 0
      %p82 = por %p80, %p81
      %p83 = scmp.ne.s32.totalorder %s75, %s77
      %p84 = scmp.eq.s32.totalorder %s25, 1
      %p85 = por %p83, %p84
      %p86 = scmp.ne.s32.totalorder %s77, %s78
      %p87 = scmp.eq.s32.totalorder %s25, 0
      %p88 = por %p86, %p87
      %p89 = scmp.ne.s32.totalorder %s77, %s78
      %p90 = scmp.eq.s32.totalorder %s26, 1
      %p91 = por %p89, %p90
      %p93 = scmp.ne.s32.totalorder %s78, %s92
      %p94 = scmp.eq.s32.totalorder %s26, 0
      %p95 = por %p93, %p94
      %s97 = sadd.s32 %s96, 1
      %p100 = scmp.eq.s32.totalorder %s20, 1
      %p101 = scmp.ne.s32.totalorder %s96, %s98
      %p102 = scmp.eq.s32.totalorder %s20, 0
      %p103 = por %p101, %p102
      %p104 = scmp.ne.s32.totalorder %s96, %s98
      %p105 = scmp.eq.s32.totalorder %s25, 1
      %p106 = por %p104, %p105
      %p107 = scmp.ne.s32.totalorder %s98, %s99
      %p108 = scmp.eq.s32.totalorder %s25, 0
      %p109 = por %p107, %p108
      %p110 = scmp.ne.s32.totalorder %s98, %s99
      %p111 = scmp.eq.s32.totalorder %s26, 1
      %p112 = por %p110, %p111
      %p114 = scmp.ne.s32.totalorder %s99, %s113
      %p115 = scmp.eq.s32.totalorder %s26, 0
      %p116 = por %p114, %p115
      %s118 = sadd.s32 %s117, 1
      %p121 = scmp.eq.s32.totalorder %s20, 1
      %p122 = scmp.ne.s32.totalorder %s117, %s119
      %p123 = scmp.eq.s32.totalorder %s20, 0
      %p124 = por %p122, %p123
      %p125 = scmp.ne.s32.totalorder %s117, %s119
      %p126 = scmp.eq.s32.totalorder %s25, 1
      %p127 = por %p125, %p126
      %p128 = scmp.ne.s32.totalorder %s119, %s120
      %p129 = scmp.eq.s32.totalorder %s25, 0
      %p130 = por %p128, %p129
      %p131 = scmp.ne.s32.totalorder %s119, %s120
      %p132 = scmp.eq.s32.totalorder %s26, 1
      %p133 = por %p131, %p132
      %p135 = scmp.ne.s32.totalorder %s120, %s134
      %p136 = scmp.eq.s32.totalorder %s26, 0
      %p137 = por %p135, %p136
      %s139 = sadd.s32 %s138, 1
      %p142 = scmp.eq.s32.totalorder %s20, 1
      %p143 = scmp.ne.s32.totalorder %s138, %s140
      %p144 = scmp.eq.s32.totalorder %s20, 0
      %p145 = por %p143, %p144
      %p146 = scmp.ne.s32.totalorder %s138, %s140
      %p147 = scmp.eq.s32.totalorder %s25, 1
      %p148 = por %p146, %p147
      %p149 = scmp.ne.s32.totalorder %s140, %s141
      %p150 = scmp.eq.s32.totalorder %s25, 0
      %p151 = por %p149, %p150
      %p152 = scmp.ne.s32.totalorder %s140, %s141
      %p153 = scmp.eq.s32.totalorder %s26, 1
      %p154 = por %p152, %p153
      %p156 = scmp.ne.s32.totalorder %s141, %s155
      %p157 = scmp.eq.s32.totalorder %s26, 0
      %p158 = por %p156, %p157
      %s160 = sadd.s32 %s159, 1
      %p163 = scmp.eq.s32.totalorder %s20, 1
      %p164 = scmp.ne.s32.totalorder %s159, %s161
      %p165 = scmp.eq.s32.totalorder %s20, 0
      %p166 = por %p164, %p165
      %p167 = scmp.ne.s32.totalorder %s159, %s161
      %p168 = scmp.eq.s32.totalorder %s25, 1
      %p169 = por %p167, %p168
      %p170 = scmp.ne.s32.totalorder %s161, %s162
      %p171 = scmp.eq.s32.totalorder %s25, 0
      %p172 = por %p170, %p171
      %p173 = scmp.ne.s32.totalorder %s161, %s162
      %p174 = scmp.eq.s32.totalorder %s26, 1
      %p175 = por %p173, %p174
      %p177 = scmp.ne.s32.totalorder %s162, %s176
      %p178 = scmp.eq.s32.totalorder %s26, 0
      %p179 = por %p177, %p178
      %s181 = sadd.s32 %s180, 1
      %p184 = scmp.eq.s32.totalorder %s20, 1
      %p185 = scmp.ne.s32.totalorder %s180, %s182
      %p186 = scmp.eq.s32.totalorder %s20, 0
      %p187 = por %p185, %p186
      %p188 = scmp.ne.s32.totalorder %s180, %s182
      %p189 = scmp.eq.s32.totalorder %s25, 1
      %p190 = por %p188, %p189
      %p191 = scmp.ne.s32.totalorder %s182, %s183
      %p192 = scmp.eq.s32.totalorder %s25, 0
      %p193 = por %p191, %p192
      %p194 = scmp.ne.s32.totalorder %s182, %s183
      %p195 = scmp.eq.s32.totalorder %s26, 1
      %p196 = por %p194, %p195
      %p198 = scmp.ne.s32.totalorder %s183, %s197
      %p199 = scmp.eq.s32.totalorder %s26, 0
      %p200 = por %p198, %p199
      %s202 = sadd.s32 %s201, 1
      %p205 = scmp.eq.s32.totalorder %s20, 1
      %p206 = scmp.ne.s32.totalorder %s201, %s203
      %p207 = scmp.eq.s32.totalorder %s20, 0
      %p208 = por %p206, %p207
      %p209 = scmp.ne.s32.totalorder %s201, %s203
      %p210 = scmp.eq.s32.totalorder %s25, 1
      %p211 = por %p209, %p210
      %p212 = scmp.ne.s32.totalorder %s203, %s204
      %p213 = scmp.eq.s32.totalorder %s25, 0
      %p214 = por %p212, %p213
      %p215 = scmp.ne.s32.totalorder %s203, %s204
      %p216 = scmp.eq.s32.totalorder %s26, 1
      %p217 = por %p215, %p216
      %p219 = scmp.ne.s32.totalorder %s204, %s218
      %p220 = scmp.eq.s32.totalorder %s26, 0
      %p221 = por %p219, %p220
      %s222 = ssub.s32 %s20, %s27
      %p223 = scmp.eq.s32.totalorder %s222, 0
      %s225 = sadd.s32 %s224, 1
      %s226 = scalar_select %p223, %s224, %s225
      %p229 = pneg %p223
      %p230 = scmp.eq.s32.totalorder %s20, 1
      %p231 = por %p229, %p230
      %p232 = scmp.ne.s32.totalorder %s224, %s227
      %p233 = scmp.eq.s32.totalorder %s20, 0
      %p234 = por %p232, %p233
      %p235 = scmp.ne.s32.totalorder %s224, %s227
      %p236 = scmp.eq.s32.totalorder %s25, 1
      %p237 = por %p235, %p236
      %p238 = scmp.ne.s32.totalorder %s227, %s228
      %p239 = scmp.eq.s32.totalorder %s25, 0
      %p240 = por %p238, %p239
      %p241 = scmp.ne.s32.totalorder %s227, %s228
      %p242 = scmp.eq.s32.totalorder %s26, 1
      %p243 = por %p241, %p242
      %p245 = scmp.ne.s32.totalorder %s228, %s244
      %p246 = scmp.eq.s32.totalorder %s26, 0
      %p247 = por %p245, %p246
      %p248 = scmp.le.s32.totalorder 1, %s20
      %p249 = scmp.lt.s32.totalorder %s20, 3
      %p250 = pnand %p248, %p249
      %p251 = pneg %p250
      // Predicated region
      $region9: #{model_forward.2} parent=5 // pred_check
        _
      $region10: #{model_forward.2} parent=5 // pred_check_branch
        %253 = sbr.rel (%p250) target = $region12
      $region11: #{model_forward.2} parent=5 // pred_region
        %s254 = ssub.s32 %s20, 1
        // Predicated region
        $region13: #{model_forward.2} parent=11 // pred_check
          %p255 = pneg %p67
        $region14: #{model_forward.2} parent=11 // pred_check_branch
          %257 = sbr.rel (%p255) target = $region16
        $region15: #{model_forward.2} parent=11 // pred_region
          %259 = vsyncadd [#allocation5], 0
          %s260 = sshll.u32 %s1, 4
          %s261 = int_to_ptr.hbm [resolvable:$true] %s260
          %s262 = sshll.u32 [#allocation4], 4
          %s263 = int_to_ptr.vmem [resolvable:$true] %s262
          %268 = dma.hbm_to_vmem [thread:$0]  %s261, 1024, %s263, [#allocation5], 128, 128, 8
        $region16: #{model_forward.2} parent=11 // pred_fallthru
          _
        // Predicated region
        $region17: #{model_forward.2} parent=11 // pred_check
          %p269 = pneg %p88
        $region18: #{model_forward.2} parent=11 // pred_check_branch
          %271 = sbr.rel (%p269) target = $region20
        $region19: #{model_forward.2} parent=11 // pred_region
          %273 = vsyncadd [#allocation8], 0
          %s274 = sshll.u32 %s2, 4
          %s275 = int_to_ptr.hbm [resolvable:$true] %s274
          %s276 = sshll.u32 [#allocation7], 4
          %s277 = int_to_ptr.vmem [resolvable:$true] %s276
          %282 = dma.hbm_to_vmem [thread:$0]  %s275, 2816, %s277, [#allocation8], 128, 128, 8
        $region20: #{model_forward.2} parent=11 // pred_fallthru
          _
        // Predicated region
        $region21: #{model_forward.2} parent=11 // pred_check
          %p283 = pneg %p109
        $region22: #{model_forward.2} parent=11 // pred_check_branch
          %285 = sbr.rel (%p283) target = $region24
        $region23: #{model_forward.2} parent=11 // pred_region
          %287 = vsyncadd [#allocation8], 0
          %s288 = sshll.u32 %s3, 4
          %s289 = int_to_ptr.hbm [resolvable:$true] %s288
          %s290 = sshll.u32 [#allocation9], 4
          %s291 = int_to_ptr.vmem [resolvable:$true] %s290
          %296 = dma.hbm_to_vmem [thread:$0]  %s289, 512, %s291, [#allocation8], 128, 128, 8
        $region24: #{model_forward.2} parent=11 // pred_fallthru
          _
        // Predicated region
        $region25: #{model_forward.2} parent=11 // pred_check
          %p297 = pneg %p130
        $region26: #{model_forward.2} parent=11 // pred_check_branch
          %299 = sbr.rel (%p297) target = $region28
        $region27: #{model_forward.2} parent=11 // pred_region
          _
        $region28: #{model_forward.2} parent=11 // pred_fallthru
          _
        // Predicated region
        $region29: #{model_forward.2} parent=11 // pred_check
          %p300 = pneg %p151
        $region30: #{model_forward.2} parent=11 // pred_check_branch
          %302 = sbr.rel (%p300) target = $region32
        $region31: #{model_forward.2} parent=11 // pred_region
          %304 = vsyncadd [#allocation6], 0
          %s306 = sshll.u32 %s5, 4
          %s307 = int_to_ptr.hbm [resolvable:$true] %s306
          %309 = dma.hbm_to_smem %s307, 128, [#allocation10], [#allocation6]
        $region32: #{model_forward.2} parent=11 // pred_fallthru
          _
        // Predicated region
        $region33: #{model_forward.2} parent=11 // pred_check
          %p310 = pneg %p172
        $region34: #{model_forward.2} parent=11 // pred_check_branch
          %312 = sbr.rel (%p310) target = $region36
        $region35: #{model_forward.2} parent=11 // pred_region
          %314 = vsyncadd [#allocation12], 0
          %s316 = sshll.u32 %s6, 4
          %s317 = int_to_ptr.hbm [resolvable:$true] %s316
          %319 = dma.hbm_to_smem %s317, 16, [#allocation11], [#allocation12]
        $region36: #{model_forward.2} parent=11 // pred_fallthru
          _
        // Predicated region
        $region37: #{model_forward.2} parent=11 // pred_check
          %p320 = pneg %p193
        $region38: #{model_forward.2} parent=11 // pred_check_branch
          %322 = sbr.rel (%p320) target = $region40
        $region39: #{model_forward.2} parent=11 // pred_region
          %324 = vsyncadd [#allocation12], 0
          %s326 = sshll.u32 %s7, 4
          %s327 = int_to_ptr.hbm [resolvable:$true] %s326
          %329 = dma.hbm_to_smem %s327, 64, [#allocation13], [#allocation12]
        $region40: #{model_forward.2} parent=11 // pred_fallthru
          _
        // Predicated region
        $region41: #{model_forward.2} parent=11 // pred_check
          %p330 = pneg %p214
        $region42: #{model_forward.2} parent=11 // pred_check_branch
          %332 = sbr.rel (%p330) target = $region44
        $region43: #{model_forward.2} parent=11 // pred_region
          %334 = vsyncadd [#allocation15], 0
          %s336 = sshll.u32 %s8, 4
          %s337 = int_to_ptr.hbm [resolvable:$true] %s336
          %339 = dma.hbm_to_smem %s337, 16, [#allocation14], [#allocation15]
        $region44: #{model_forward.2} parent=11 // pred_fallthru
          _
      $region12: #{model_forward.2} parent=5 // pred_fallthru
        _
      %p340 = scmp.lt.s32.totalorder %s20, 2
      // Predicated region
      $region45: #{model_forward.2} parent=5 // pred_check
        %p341 = pneg %p340
      $region46: #{model_forward.2} parent=5 // pred_check_branch
        %343 = sbr.rel (%p341) target = $region48
      $region47: #{model_forward.2} parent=5 // pred_region
        // Predicated region
        $region49: #{model_forward.2} parent=47 // pred_check
          %p344 = pneg %p40
        $region50: #{model_forward.2} parent=47 // pred_check_branch
          %346 = sbr.rel (%p344) target = $region52
        $region51: #{model_forward.2} parent=47 // pred_region
          %p347 = scmp.lt.s32.totalorder %s20, 1
          %s348 = scalar_select %p347, %s20, 1
          %s349 = smul.addr %s348, 30
          %s350 = smul.addr %s349, 8
          %s351 = scalar_lea.vmem %s0, %s350
        $region52: #{model_forward.2} parent=47 // pred_fallthru
          _
      $region48: #{model_forward.2} parent=5 // pred_fallthru
        _
      %p352 = scmp.le.s32.totalorder 1, %s20
      %p353 = scmp.lt.s32.totalorder %s20, 3
      %p354 = pnand %p352, %p353
      %p355 = pneg %p354
      // Predicated region
      $region53: #{model_forward.2} parent=5 // pred_check
        _
      $region54: #{model_forward.2} parent=5 // pred_check_branch
        %357 = sbr.rel (%p354) target = $region56
      $region55: #{model_forward.2} parent=5 // pred_region
        %s358 = ssub.s32 %s20, 1
        // Predicated region
        $region57: #{model_forward.2} parent=55 // pred_check
          %p359 = pneg %p67
        $region58: #{model_forward.2} parent=55 // pred_check_branch
          %361 = sbr.rel (%p359) target = $region60
        $region59: #{model_forward.2} parent=55 // pred_region
          %363 = dma.done [#allocation5], 1024
        $region60: #{model_forward.2} parent=55 // pred_fallthru
          _
        // Predicated region
        $region61: #{model_forward.2} parent=55 // pred_check
          %p364 = pneg %p88
        $region62: #{model_forward.2} parent=55 // pred_check_branch
          %366 = sbr.rel (%p364) target = $region64
        $region63: #{model_forward.2} parent=55 // pred_region
          %368 = dma.done [#allocation8], 2816
        $region64: #{model_forward.2} parent=55 // pred_fallthru
          _
        // Predicated region
        $region65: #{model_forward.2} parent=55 // pred_check
          %p369 = pneg %p109
        $region66: #{model_forward.2} parent=55 // pred_check_branch
          %371 = sbr.rel (%p369) target = $region68
        $region67: #{model_forward.2} parent=55 // pred_region
          %373 = dma.done [#allocation8], 512
        $region68: #{model_forward.2} parent=55 // pred_fallthru
          _
        // Predicated region
        $region69: #{model_forward.2} parent=55 // pred_check
          %p374 = pneg %p151
        $region70: #{model_forward.2} parent=55 // pred_check_branch
          %376 = sbr.rel (%p374) target = $region72
        $region71: #{model_forward.2} parent=55 // pred_region
          %378 = dma.done [#allocation6], 128
        $region72: #{model_forward.2} parent=55 // pred_fallthru
          _
        // Predicated region
        $region73: #{model_forward.2} parent=55 // pred_check
          %p379 = pneg %p172
        $region74: #{model_forward.2} parent=55 // pred_check_branch
          %381 = sbr.rel (%p379) target = $region76
        $region75: #{model_forward.2} parent=55 // pred_region
          %383 = dma.done [#allocation12], 16
        $region76: #{model_forward.2} parent=55 // pred_fallthru
          _
        // Predicated region
        $region77: #{model_forward.2} parent=55 // pred_check
          %p384 = pneg %p193
        $region78: #{model_forward.2} parent=55 // pred_check_branch
          %386 = sbr.rel (%p384) target = $region80
        $region79: #{model_forward.2} parent=55 // pred_region
          %388 = dma.done [#allocation12], 64
        $region80: #{model_forward.2} parent=55 // pred_fallthru
          _
        // Predicated region
        $region81: #{model_forward.2} parent=55 // pred_check
          %p389 = pneg %p214
        $region82: #{model_forward.2} parent=55 // pred_check_branch
          %391 = sbr.rel (%p389) target = $region84
        $region83: #{model_forward.2} parent=55 // pred_region
          %393 = dma.done [#allocation15], 16
        $region84: #{model_forward.2} parent=55 // pred_fallthru
          _
        %394 = sfence
        %p395 = scmp.lt.s32.totalorder %s25, 1
        %s396 = scalar_select %p395, %s25, 1
        %s397 = smul.addr %s396, 30
        %s398 = smul.addr %s397, 8
        %s399 = scalar_lea.vmem %s0, %s398
        %p400 = pneg %p46
        %p401 = pneg %p43
        %p402 = pneg %p67
        %p403 = pneg %p64
        %p404 = pneg %p88
        %p405 = pneg %p85
        %p406 = pneg %p109
        %p407 = pneg %p106
        %p408 = pneg %p130
        %p409 = pneg %p127
        %p410 = pneg %p151
        %p411 = pneg %p148
        %p412 = pneg %p172
        %p413 = pneg %p169
        %p414 = pneg %p193
        %p415 = pneg %p190
        %p416 = pneg %p214
        %p417 = pneg %p211
        %p418 = pneg %p240
        %p419 = pneg %p237
        %p420 = scmp.lt.s32.totalorder %s25, 1
        %s421 = scalar_select %p420, %s25, 1
        %s422 = smul.addr %s421, 16
        %s423 = smul.addr %s422, 8
        %s424 = scalar_lea.vmem %s9, %s423
        %p425 = scmp.lt.s32.totalorder %s25, 1
        %s426 = scalar_select %p425, %s25, 1
        %s427 = smul.addr %s426, 30
        %s428 = smul.addr %s427, 8
        %s429 = scalar_lea.vmem %s0, %s428
        %p430 = scmp.lt.s32.totalorder %s25, 1
        %s431 = scalar_select %p430, %s25, 1
        %s432 = smul.addr %s431, 16
        %s433 = smul.addr %s432, 8
        %s434 = scalar_lea.vmem %s9, %s433
        %v435 = vld [vmem:[%s429] sm:$0xff]
        %v436 = vld [vmem:[%s429 + $0x8] sm:$0xff]
        %v437 = vld [vmem:[%s429 + $0x10] sm:$0xff]
        %v438 = vld [vmem:[%s429 + $0x18] sm:$0xff]
        %v439 = vld [vmem:[%s429 + $0x20] sm:$0xff]
        %v440 = vld [vmem:[%s429 + $0x28] sm:$0xff]
        %v441 = vld [vmem:[%s429 + $0x30] sm:$0xff]
        %v442 = vld [vmem:[%s429 + $0x38] sm:$0xff]
        %v443 = vld [vmem:[%s429 + $0x40] sm:$0xff]
        %v444 = vld [vmem:[%s429 + $0x48] sm:$0xff]
        %v445 = vld [vmem:[%s429 + $0x50] sm:$0xff]
        %v446 = vld [vmem:[%s429 + $0x58] sm:$0xff]
        %v447 = vld [vmem:[%s429 + $0x60] sm:$0xff]
        %v448 = vld [vmem:[%s429 + $0x68] sm:$0xff]
        %v449 = vld [vmem:[%s429 + $0x70] sm:$0xff]
        %v450 = vld [vmem:[%s429 + $0x78] sm:$0xff]
        %v451 = vld [vmem:[%s429 + $0x80] sm:$0xff]
        %v452 = vld [vmem:[%s429 + $0x88] sm:$0xff]
        %v453 = vld [vmem:[%s429 + $0x90] sm:$0xff]
        %v454 = vld [vmem:[%s429 + $0x98] sm:$0xff]
        %v455 = vld [vmem:[%s429 + $0xa0] sm:$0xff]
        %v456 = vld [vmem:[%s429 + $0xa8] sm:$0xff]
        %v457 = vld [vmem:[%s429 + $0xb0] sm:$0xff]
        %v458 = vld [vmem:[%s429 + $0xb8] sm:$0xff]
        %v459 = vld [vmem:[%s429 + $0xc0] sm:$0xff]
        %v460 = vld [vmem:[%s429 + $0xc8] sm:$0xff]
        %v461 = vld [vmem:[%s429 + $0xd0] sm:$0xff]
        %v462 = vld [vmem:[%s429 + $0xd8] sm:$0xff]
        %v463 = vld [vmem:[%s429 + $0xe0] sm:$0x3f]
        %v464 = vld [vmem:[%s429 + $0xe8] sm:$0x3f]
        %465 = vst [vmem:[#allocation2] sm:$0xff] %v435
        %vm466 = vcmask 343040
        %467 = vst.msk [vmem:[#allocation2 + $0x8] sm:$0xff] %vm466, %v436
        %468 = vst [vmem:[#allocation2 + $0x10] sm:$0xff] %v437
        %469 = vst.msk [vmem:[#allocation2 + $0x18] sm:$0xff] %vm466, %v438
        %470 = vst [vmem:[#allocation2 + $0x20] sm:$0xff] %v439
        %471 = vst.msk [vmem:[#allocation2 + $0x28] sm:$0xff] %vm466, %v440
        %472 = vst [vmem:[#allocation2 + $0x30] sm:$0xff] %v441
        %473 = vst.msk [vmem:[#allocation2 + $0x38] sm:$0xff] %vm466, %v442
        %474 = vst [vmem:[#allocation2 + $0x40] sm:$0xff] %v443
        %475 = vst.msk [vmem:[#allocation2 + $0x48] sm:$0xff] %vm466, %v444
        %476 = vst [vmem:[#allocation2 + $0x50] sm:$0xff] %v445
        %477 = vst.msk [vmem:[#allocation2 + $0x58] sm:$0xff] %vm466, %v446
        %478 = vst [vmem:[#allocation2 + $0x60] sm:$0xff] %v447
        %479 = vst.msk [vmem:[#allocation2 + $0x68] sm:$0xff] %vm466, %v448
        %480 = vst [vmem:[#allocation2 + $0x70] sm:$0xff] %v449
        %481 = vst.msk [vmem:[#allocation2 + $0x78] sm:$0xff] %vm466, %v450
        %482 = vst [vmem:[#allocation2 + $0x80] sm:$0xff] %v451
        %483 = vst.msk [vmem:[#allocation2 + $0x88] sm:$0xff] %vm466, %v452
        %484 = vst [vmem:[#allocation2 + $0x90] sm:$0xff] %v453
        %485 = vst.msk [vmem:[#allocation2 + $0x98] sm:$0xff] %vm466, %v454
        %486 = vst [vmem:[#allocation2 + $0xa0] sm:$0xff] %v455
        %487 = vst.msk [vmem:[#allocation2 + $0xa8] sm:$0xff] %vm466, %v456
        %488 = vst [vmem:[#allocation2 + $0xb0] sm:$0xff] %v457
        %489 = vst.msk [vmem:[#allocation2 + $0xb8] sm:$0xff] %vm466, %v458
        %490 = vst [vmem:[#allocation2 + $0xc0] sm:$0xff] %v459
        %491 = vst.msk [vmem:[#allocation2 + $0xc8] sm:$0xff] %vm466, %v460
        %492 = vst [vmem:[#allocation2 + $0xd0] sm:$0xff] %v461
        %493 = vst.msk [vmem:[#allocation2 + $0xd8] sm:$0xff] %vm466, %v462
        %494 = vst [vmem:[#allocation2 + $0xe0] sm:$0x3f] %v463
        %vm495 = vcmask 340992
        %496 = vst.msk [vmem:[#allocation2 + $0xe8] sm:$0x3f] %vm495, %v464
        %v497 = vld [vmem:[%s429] sm:$0xff]
        %v498 = vld [vmem:[%s429 + $0x8] sm:$0xff]
        %v499 = vld [vmem:[%s429 + $0x10] sm:$0xff]
        %v500 = vld [vmem:[%s429 + $0x18] sm:$0xff]
        %v501 = vld [vmem:[%s429 + $0x20] sm:$0xff]
        %v502 = vld [vmem:[%s429 + $0x28] sm:$0xff]
        %v503 = vld [vmem:[%s429 + $0x30] sm:$0xff]
        %v504 = vld [vmem:[%s429 + $0x38] sm:$0xff]
        %v505 = vld [vmem:[%s429 + $0x40] sm:$0xff]
        %v506 = vld [vmem:[%s429 + $0x48] sm:$0xff]
        %v507 = vld [vmem:[%s429 + $0x50] sm:$0xff]
        %v508 = vld [vmem:[%s429 + $0x58] sm:$0xff]
        %v509 = vld [vmem:[%s429 + $0x60] sm:$0xff]
        %v510 = vld [vmem:[%s429 + $0x68] sm:$0xff]
        %v511 = vld [vmem:[%s429 + $0x70] sm:$0xff]
        %v512 = vld [vmem:[%s429 + $0x78] sm:$0xff]
        %v513 = vld [vmem:[%s429 + $0x80] sm:$0xff]
        %v514 = vld [vmem:[%s429 + $0x88] sm:$0xff]
        %v515 = vld [vmem:[%s429 + $0x90] sm:$0xff]
        %v516 = vld [vmem:[%s429 + $0x98] sm:$0xff]
        %v517 = vld [vmem:[%s429 + $0xa0] sm:$0xff]
        %v518 = vld [vmem:[%s429 + $0xa8] sm:$0xff]
        %v519 = vld [vmem:[%s429 + $0xb0] sm:$0xff]
        %v520 = vld [vmem:[%s429 + $0xb8] sm:$0xff]
        %v521 = vld [vmem:[%s429 + $0xc0] sm:$0xff]
        %v522 = vld [vmem:[%s429 + $0xc8] sm:$0xff]
        %v523 = vld [vmem:[%s429 + $0xd0] sm:$0xff]
        %v524 = vld [vmem:[%s429 + $0xd8] sm:$0xff]
        %v525 = vld [vmem:[%s429 + $0xe0] sm:$0x3f]
        %v526 = vld [vmem:[%s429 + $0xe8] sm:$0x3f]
        %557 = vrot.lane.b32.xlu0 %v497, 127
        %v558 = vpop.permute.xlu0 %557
        %559 = vrot.lane.b32.xlu0 %v498, 127
        %v560 = vpop.permute.xlu0 %559
        %561 = vrot.lane.b32.xlu0 %v499, 127
        %v562 = vpop.permute.xlu0 %561
        %563 = vrot.lane.b32.xlu0 %v500, 127
        %v564 = vpop.permute.xlu0 %563
        %565 = vrot.lane.b32.xlu0 %v501, 127
        %v566 = vpop.permute.xlu0 %565
        %567 = vrot.lane.b32.xlu0 %v502, 127
        %v568 = vpop.permute.xlu0 %567
        %569 = vrot.lane.b32.xlu0 %v503, 127
        %v570 = vpop.permute.xlu0 %569
        %571 = vrot.lane.b32.xlu0 %v504, 127
        %v572 = vpop.permute.xlu0 %571
        %573 = vrot.lane.b32.xlu0 %v505, 127
        %v574 = vpop.permute.xlu0 %573
        %575 = vrot.lane.b32.xlu0 %v506, 127
        %v576 = vpop.permute.xlu0 %575
        %577 = vrot.lane.b32.xlu0 %v507, 127
        %v578 = vpop.permute.xlu0 %577
        %579 = vrot.lane.b32.xlu0 %v508, 127
        %v580 = vpop.permute.xlu0 %579
        %581 = vrot.lane.b32.xlu0 %v509, 127
        %v582 = vpop.permute.xlu0 %581
        %583 = vrot.lane.b32.xlu0 %v510, 127
        %v584 = vpop.permute.xlu0 %583
        %585 = vrot.lane.b32.xlu0 %v511, 127
        %v586 = vpop.permute.xlu0 %585
        %587 = vrot.lane.b32.xlu0 %v512, 127
        %v588 = vpop.permute.xlu0 %587
        %589 = vrot.lane.b32.xlu0 %v513, 127
        %v590 = vpop.permute.xlu0 %589
        %591 = vrot.lane.b32.xlu0 %v514, 127
        %v592 = vpop.permute.xlu0 %591
        %593 = vrot.lane.b32.xlu0 %v515, 127
        %v594 = vpop.permute.xlu0 %593
        %595 = vrot.lane.b32.xlu0 %v516, 127
        %v596 = vpop.permute.xlu0 %595
        %597 = vrot.lane.b32.xlu0 %v517, 127
        %v598 = vpop.permute.xlu0 %597
        %599 = vrot.lane.b32.xlu0 %v518, 127
        %v600 = vpop.permute.xlu0 %599
        %601 = vrot.lane.b32.xlu0 %v519, 127
        %v602 = vpop.permute.xlu0 %601
        %603 = vrot.lane.b32.xlu0 %v520, 127
        %v604 = vpop.permute.xlu0 %603
        %605 = vrot.lane.b32.xlu0 %v521, 127
        %v606 = vpop.permute.xlu0 %605
        %607 = vrot.lane.b32.xlu0 %v522, 127
        %v608 = vpop.permute.xlu0 %607
        %609 = vrot.lane.b32.xlu0 %v523, 127
        %v610 = vpop.permute.xlu0 %609
        %611 = vrot.lane.b32.xlu0 %v524, 127
        %v612 = vpop.permute.xlu0 %611
        %613 = vrot.lane.b32.xlu0 %v525, 127
        %v614 = vpop.permute.xlu0 %613
        %615 = vrot.lane.b32.xlu0 %v526, 127
        %v616 = vpop.permute.xlu0 %615
        %vm617 = vcmask 1039360
        %v618 = vsel %vm617, %v558, %v560
        %v619 = vsel %vm617, %v562, %v564
        %v620 = vsel %vm617, %v566, %v568
        %v621 = vsel %vm617, %v570, %v572
        %v622 = vsel %vm617, %v574, %v576
        %v623 = vsel %vm617, %v578, %v580
        %v624 = vsel %vm617, %v582, %v584
        %v625 = vsel %vm617, %v586, %v588
        %v626 = vsel %vm617, %v590, %v592
        %v627 = vsel %vm617, %v594, %v596
        %v628 = vsel %vm617, %v598, %v600
        %v629 = vsel %vm617, %v602, %v604
        %v630 = vsel %vm617, %v606, %v608
        %v631 = vsel %vm617, %v610, %v612
        %v632 = vsel %vm617, %v614, %v616
        %s663 = scalar_lea.vmem [#allocation2], 240
        %664 = vst [vmem:[%s663] sm:$0xff] %v618
        %665 = vst.msk [vmem:[%s663 + $0x8] sm:$0xff] %vm466, %v560
        %666 = vst [vmem:[%s663 + $0x10] sm:$0xff] %v619
        %667 = vst.msk [vmem:[%s663 + $0x18] sm:$0xff] %vm466, %v564
        %668 = vst [vmem:[%s663 + $0x20] sm:$0xff] %v620
        %669 = vst.msk [vmem:[%s663 + $0x28] sm:$0xff] %vm466, %v568
        %670 = vst [vmem:[%s663 + $0x30] sm:$0xff] %v621
        %671 = vst.msk [vmem:[%s663 + $0x38] sm:$0xff] %vm466, %v572
        %672 = vst [vmem:[%s663 + $0x40] sm:$0xff] %v622
        %673 = vst.msk [vmem:[%s663 + $0x48] sm:$0xff] %vm466, %v576
        %674 = vst [vmem:[%s663 + $0x50] sm:$0xff] %v623
        %675 = vst.msk [vmem:[%s663 + $0x58] sm:$0xff] %vm466, %v580
        %676 = vst [vmem:[%s663 + $0x60] sm:$0xff] %v624
        %677 = vst.msk [vmem:[%s663 + $0x68] sm:$0xff] %vm466, %v584
        %678 = vst [vmem:[%s663 + $0x70] sm:$0xff] %v625
        %679 = vst.msk [vmem:[%s663 + $0x78] sm:$0xff] %vm466, %v588
        %680 = vst [vmem:[%s663 + $0x80] sm:$0xff] %v626
        %681 = vst.msk [vmem:[%s663 + $0x88] sm:$0xff] %vm466, %v592
        %682 = vst [vmem:[%s663 + $0x90] sm:$0xff] %v627
        %683 = vst.msk [vmem:[%s663 + $0x98] sm:$0xff] %vm466, %v596
        %684 = vst [vmem:[%s663 + $0xa0] sm:$0xff] %v628
        %685 = vst.msk [vmem:[%s663 + $0xa8] sm:$0xff] %vm466, %v600
        %686 = vst [vmem:[%s663 + $0xb0] sm:$0xff] %v629
        %687 = vst.msk [vmem:[%s663 + $0xb8] sm:$0xff] %vm466, %v604
        %688 = vst [vmem:[%s663 + $0xc0] sm:$0xff] %v630
        %689 = vst.msk [vmem:[%s663 + $0xc8] sm:$0xff] %vm466, %v608
        %690 = vst [vmem:[%s663 + $0xd0] sm:$0xff] %v631
        %691 = vst.msk [vmem:[%s663 + $0xd8] sm:$0xff] %vm466, %v612
        %692 = vst [vmem:[%s663 + $0xe0] sm:$0x3f] %v632
        %693 = vst.msk [vmem:[%s663 + $0xe8] sm:$0x3f] %vm495, %v616
        %v694 = vld [vmem:[%s429] sm:$0xff]
        %v695 = vld [vmem:[%s429 + $0x8] sm:$0xff]
        %v696 = vld [vmem:[%s429 + $0x10] sm:$0xff]
        %v697 = vld [vmem:[%s429 + $0x18] sm:$0xff]
        %v698 = vld [vmem:[%s429 + $0x20] sm:$0xff]
        %v699 = vld [vmem:[%s429 + $0x28] sm:$0xff]
        %v700 = vld [vmem:[%s429 + $0x30] sm:$0xff]
        %v701 = vld [vmem:[%s429 + $0x38] sm:$0xff]
        %v702 = vld [vmem:[%s429 + $0x40] sm:$0xff]
        %v703 = vld [vmem:[%s429 + $0x48] sm:$0xff]
        %v704 = vld [vmem:[%s429 + $0x50] sm:$0xff]
        %v705 = vld [vmem:[%s429 + $0x58] sm:$0xff]
        %v706 = vld [vmem:[%s429 + $0x60] sm:$0xff]
        %v707 = vld [vmem:[%s429 + $0x68] sm:$0xff]
        %v708 = vld [vmem:[%s429 + $0x70] sm:$0xff]
        %v709 = vld [vmem:[%s429 + $0x78] sm:$0xff]
        %v710 = vld [vmem:[%s429 + $0x80] sm:$0xff]
        %v711 = vld [vmem:[%s429 + $0x88] sm:$0xff]
        %v712 = vld [vmem:[%s429 + $0x90] sm:$0xff]
        %v713 = vld [vmem:[%s429 + $0x98] sm:$0xff]
        %v714 = vld [vmem:[%s429 + $0xa0] sm:$0xff]
        %v715 = vld [vmem:[%s429 + $0xa8] sm:$0xff]
        %v716 = vld [vmem:[%s429 + $0xb0] sm:$0xff]
        %v717 = vld [vmem:[%s429 + $0xb8] sm:$0xff]
        %v718 = vld [vmem:[%s429 + $0xc0] sm:$0xff]
        %v719 = vld [vmem:[%s429 + $0xc8] sm:$0xff]
        %v720 = vld [vmem:[%s429 + $0xd0] sm:$0xff]
        %v721 = vld [vmem:[%s429 + $0xd8] sm:$0xff]
        %v722 = vld [vmem:[%s429 + $0xe0] sm:$0x3f]
        %v723 = vld [vmem:[%s429 + $0xe8] sm:$0x3f]
        %754 = vrot.lane.b32.xlu0 %v694, 126
        %v755 = vpop.permute.xlu0 %754
        %756 = vrot.lane.b32.xlu0 %v695, 126
        %v757 = vpop.permute.xlu0 %756
        %758 = vrot.lane.b32.xlu0 %v696, 126
        %v759 = vpop.permute.xlu0 %758
        %760 = vrot.lane.b32.xlu0 %v697, 126
        %v761 = vpop.permute.xlu0 %760
        %762 = vrot.lane.b32.xlu0 %v698, 126
        %v763 = vpop.permute.xlu0 %762
        %764 = vrot.lane.b32.xlu0 %v699, 126
        %v765 = vpop.permute.xlu0 %764
        %766 = vrot.lane.b32.xlu0 %v700, 126
        %v767 = vpop.permute.xlu0 %766
        %768 = vrot.lane.b32.xlu0 %v701, 126
        %v769 = vpop.permute.xlu0 %768
        %770 = vrot.lane.b32.xlu0 %v702, 126
        %v771 = vpop.permute.xlu0 %770
        %772 = vrot.lane.b32.xlu0 %v703, 126
        %v773 = vpop.permute.xlu0 %772
        %774 = vrot.lane.b32.xlu0 %v704, 126
        %v775 = vpop.permute.xlu0 %774
        %776 = vrot.lane.b32.xlu0 %v705, 126
        %v777 = vpop.permute.xlu0 %776
        %778 = vrot.lane.b32.xlu0 %v706, 126
        %v779 = vpop.permute.xlu0 %778
        %780 = vrot.lane.b32.xlu0 %v707, 126
        %v781 = vpop.permute.xlu0 %780
        %782 = vrot.lane.b32.xlu0 %v708, 126
        %v783 = vpop.permute.xlu0 %782
        %784 = vrot.lane.b32.xlu0 %v709, 126
        %v785 = vpop.permute.xlu0 %784
        %786 = vrot.lane.b32.xlu0 %v710, 126
        %v787 = vpop.permute.xlu0 %786
        %788 = vrot.lane.b32.xlu0 %v711, 126
        %v789 = vpop.permute.xlu0 %788
        %790 = vrot.lane.b32.xlu0 %v712, 126
        %v791 = vpop.permute.xlu0 %790
        %792 = vrot.lane.b32.xlu0 %v713, 126
        %v793 = vpop.permute.xlu0 %792
        %794 = vrot.lane.b32.xlu0 %v714, 126
        %v795 = vpop.permute.xlu0 %794
        %796 = vrot.lane.b32.xlu0 %v715, 126
        %v797 = vpop.permute.xlu0 %796
        %798 = vrot.lane.b32.xlu0 %v716, 126
        %v799 = vpop.permute.xlu0 %798
        %800 = vrot.lane.b32.xlu0 %v717, 126
        %v801 = vpop.permute.xlu0 %800
        %802 = vrot.lane.b32.xlu0 %v718, 126
        %v803 = vpop.permute.xlu0 %802
        %804 = vrot.lane.b32.xlu0 %v719, 126
        %v805 = vpop.permute.xlu0 %804
        %806 = vrot.lane.b32.xlu0 %v720, 126
        %v807 = vpop.permute.xlu0 %806
        %808 = vrot.lane.b32.xlu0 %v721, 126
        %v809 = vpop.permute.xlu0 %808
        %810 = vrot.lane.b32.xlu0 %v722, 126
        %v811 = vpop.permute.xlu0 %810
        %812 = vrot.lane.b32.xlu0 %v723, 126
        %v813 = vpop.permute.xlu0 %812
        %vm814 = vcmask 1031168
        %v815 = vsel %vm814, %v755, %v757
        %v816 = vsel %vm814, %v759, %v761
        %v817 = vsel %vm814, %v763, %v765
        %v818 = vsel %vm814, %v767, %v769
        %v819 = vsel %vm814, %v771, %v773
        %v820 = vsel %vm814, %v775, %v777
        %v821 = vsel %vm814, %v779, %v781
        %v822 = vsel %vm814, %v783, %v785
        %v823 = vsel %vm814, %v787, %v789
        %v824 = vsel %vm814, %v791, %v793
        %v825 = vsel %vm814, %v795, %v797
        %v826 = vsel %vm814, %v799, %v801
        %v827 = vsel %vm814, %v803, %v805
        %v828 = vsel %vm814, %v807, %v809
        %v829 = vsel %vm814, %v811, %v813
        %s860 = scalar_lea.vmem [#allocation2], 480
        %861 = vst [vmem:[%s860] sm:$0xff] %v815
        %862 = vst.msk [vmem:[%s860 + $0x8] sm:$0xff] %vm466, %v757
        %863 = vst [vmem:[%s860 + $0x10] sm:$0xff] %v816
        %864 = vst.msk [vmem:[%s860 + $0x18] sm:$0xff] %vm466, %v761
        %865 = vst [vmem:[%s860 + $0x20] sm:$0xff] %v817
        %866 = vst.msk [vmem:[%s860 + $0x28] sm:$0xff] %vm466, %v765
        %867 = vst [vmem:[%s860 + $0x30] sm:$0xff] %v818
        %868 = vst.msk [vmem:[%s860 + $0x38] sm:$0xff] %vm466, %v769
        %869 = vst [vmem:[%s860 + $0x40] sm:$0xff] %v819
        %870 = vst.msk [vmem:[%s860 + $0x48] sm:$0xff] %vm466, %v773
        %871 = vst [vmem:[%s860 + $0x50] sm:$0xff] %v820
        %872 = vst.msk [vmem:[%s860 + $0x58] sm:$0xff] %vm466, %v777
        %873 = vst [vmem:[%s860 + $0x60] sm:$0xff] %v821
        %874 = vst.msk [vmem:[%s860 + $0x68] sm:$0xff] %vm466, %v781
        %875 = vst [vmem:[%s860 + $0x70] sm:$0xff] %v822
        %876 = vst.msk [vmem:[%s860 + $0x78] sm:$0xff] %vm466, %v785
        %877 = vst [vmem:[%s860 + $0x80] sm:$0xff] %v823
        %878 = vst.msk [vmem:[%s860 + $0x88] sm:$0xff] %vm466, %v789
        %879 = vst [vmem:[%s860 + $0x90] sm:$0xff] %v824
        %880 = vst.msk [vmem:[%s860 + $0x98] sm:$0xff] %vm466, %v793
        %881 = vst [vmem:[%s860 + $0xa0] sm:$0xff] %v825
        %882 = vst.msk [vmem:[%s860 + $0xa8] sm:$0xff] %vm466, %v797
        %883 = vst [vmem:[%s860 + $0xb0] sm:$0xff] %v826
        %884 = vst.msk [vmem:[%s860 + $0xb8] sm:$0xff] %vm466, %v801
        %885 = vst [vmem:[%s860 + $0xc0] sm:$0xff] %v827
        %886 = vst.msk [vmem:[%s860 + $0xc8] sm:$0xff] %vm466, %v805
        %887 = vst [vmem:[%s860 + $0xd0] sm:$0xff] %v828
        %888 = vst.msk [vmem:[%s860 + $0xd8] sm:$0xff] %vm466, %v809
        %889 = vst [vmem:[%s860 + $0xe0] sm:$0x3f] %v829
        %890 = vst.msk [vmem:[%s860 + $0xe8] sm:$0x3f] %vm495, %v813
        %v891 = vld [vmem:[%s429] sm:$0xfe]
        %v892 = vld [vmem:[%s429 + $0x8] sm:$0xfe]
        %v893 = vld [vmem:[%s429 + $0x10] sm:$0xff]
        %v894 = vld [vmem:[%s429 + $0x18] sm:$0xff]
        %v895 = vld [vmem:[%s429 + $0x20] sm:$0xff]
        %v896 = vld [vmem:[%s429 + $0x28] sm:$0xff]
        %v897 = vld [vmem:[%s429 + $0x30] sm:$0xff]
        %v898 = vld [vmem:[%s429 + $0x38] sm:$0xff]
        %v899 = vld [vmem:[%s429 + $0x40] sm:$0xff]
        %v900 = vld [vmem:[%s429 + $0x48] sm:$0xff]
        %v901 = vld [vmem:[%s429 + $0x50] sm:$0xff]
        %v902 = vld [vmem:[%s429 + $0x58] sm:$0xff]
        %v903 = vld [vmem:[%s429 + $0x60] sm:$0xff]
        %v904 = vld [vmem:[%s429 + $0x68] sm:$0xff]
        %v905 = vld [vmem:[%s429 + $0x70] sm:$0xff]
        %v906 = vld [vmem:[%s429 + $0x78] sm:$0xff]
        %v907 = vld [vmem:[%s429 + $0x80] sm:$0xff]
        %v908 = vld [vmem:[%s429 + $0x88] sm:$0xff]
        %v909 = vld [vmem:[%s429 + $0x90] sm:$0xff]
        %v910 = vld [vmem:[%s429 + $0x98] sm:$0xff]
        %v911 = vld [vmem:[%s429 + $0xa0] sm:$0xff]
        %v912 = vld [vmem:[%s429 + $0xa8] sm:$0xff]
        %v913 = vld [vmem:[%s429 + $0xb0] sm:$0xff]
        %v914 = vld [vmem:[%s429 + $0xb8] sm:$0xff]
        %v915 = vld [vmem:[%s429 + $0xc0] sm:$0xff]
        %v916 = vld [vmem:[%s429 + $0xc8] sm:$0xff]
        %v917 = vld [vmem:[%s429 + $0xd0] sm:$0xff]
        %v918 = vld [vmem:[%s429 + $0xd8] sm:$0xff]
        %v919 = vld [vmem:[%s429 + $0xe0] sm:$0x7f]
        %v920 = vld [vmem:[%s429 + $0xe8] sm:$0x7f]
        %vm951 = vcmask 1046528
        %v952 = vrot.slane %v891, 1
        %v953 = vrot.slane %v893, 1
        %v954 = vsel %vm951, %v952, %v953
        %v955 = vrot.slane %v892, 1
        %v956 = vrot.slane %v894, 1
        %v957 = vsel %vm951, %v955, %v956
        %v958 = vrot.slane %v895, 1
        %v959 = vsel %vm951, %v953, %v958
        %v960 = vrot.slane %v896, 1
        %v961 = vsel %vm951, %v956, %v960
        %v962 = vrot.slane %v897, 1
        %v963 = vsel %vm951, %v958, %v962
        %v964 = vrot.slane %v898, 1
        %v965 = vsel %vm951, %v960, %v964
        %v966 = vrot.slane %v899, 1
        %v967 = vsel %vm951, %v962, %v966
        %v968 = vrot.slane %v900, 1
        %v969 = vsel %vm951, %v964, %v968
        %v970 = vrot.slane %v901, 1
        %v971 = vsel %vm951, %v966, %v970
        %v972 = vrot.slane %v902, 1
        %v973 = vsel %vm951, %v968, %v972
        %v974 = vrot.slane %v903, 1
        %v975 = vsel %vm951, %v970, %v974
        %v976 = vrot.slane %v904, 1
        %v977 = vsel %vm951, %v972, %v976
        %v978 = vrot.slane %v905, 1
        %v979 = vsel %vm951, %v974, %v978
        %v980 = vrot.slane %v906, 1
        %v981 = vsel %vm951, %v976, %v980
        %v982 = vrot.slane %v907, 1
        %v983 = vsel %vm951, %v978, %v982
        %v984 = vrot.slane %v908, 1
        %v985 = vsel %vm951, %v980, %v984
        %v986 = vrot.slane %v909, 1
        %v987 = vsel %vm951, %v982, %v986
        %v988 = vrot.slane %v910, 1
        %v989 = vsel %vm951, %v984, %v988
        %v990 = vrot.slane %v911, 1
        %v991 = vsel %vm951, %v986, %v990
        %v992 = vrot.slane %v912, 1
        %v993 = vsel %vm951, %v988, %v992
        %v994 = vrot.slane %v913, 1
        %v995 = vsel %vm951, %v990, %v994
        %v996 = vrot.slane %v914, 1
        %v997 = vsel %vm951, %v992, %v996
        %v998 = vrot.slane %v915, 1
        %v999 = vsel %vm951, %v994, %v998
        %v1000 = vrot.slane %v916, 1
        %v1001 = vsel %vm951, %v996, %v1000
        %v1002 = vrot.slane %v917, 1
        %v1003 = vsel %vm951, %v998, %v1002
        %v1004 = vrot.slane %v918, 1
        %v1005 = vsel %vm951, %v1000, %v1004
        %v1006 = vrot.slane %v919, 1
        %v1007 = vsel %vm951, %v1002, %v1006
        %v1008 = vrot.slane %v920, 1
        %v1009 = vsel %vm951, %v1004, %v1008
        %s1040 = scalar_lea.vmem [#allocation2], 720
        %1041 = vst [vmem:[%s1040] sm:$0xff] %v954
        %1042 = vst.msk [vmem:[%s1040 + $0x8] sm:$0xff] %vm466, %v957
        %1043 = vst [vmem:[%s1040 + $0x10] sm:$0xff] %v959
        %1044 = vst.msk [vmem:[%s1040 + $0x18] sm:$0xff] %vm466, %v961
        %1045 = vst [vmem:[%s1040 + $0x20] sm:$0xff] %v963
        %1046 = vst.msk [vmem:[%s1040 + $0x28] sm:$0xff] %vm466, %v965
        %1047 = vst [vmem:[%s1040 + $0x30] sm:$0xff] %v967
        %1048 = vst.msk [vmem:[%s1040 + $0x38] sm:$0xff] %vm466, %v969
        %1049 = vst [vmem:[%s1040 + $0x40] sm:$0xff] %v971
        %1050 = vst.msk [vmem:[%s1040 + $0x48] sm:$0xff] %vm466, %v973
        %1051 = vst [vmem:[%s1040 + $0x50] sm:$0xff] %v975
        %1052 = vst.msk [vmem:[%s1040 + $0x58] sm:$0xff] %vm466, %v977
        %1053 = vst [vmem:[%s1040 + $0x60] sm:$0xff] %v979
        %1054 = vst.msk [vmem:[%s1040 + $0x68] sm:$0xff] %vm466, %v981
        %1055 = vst [vmem:[%s1040 + $0x70] sm:$0xff] %v983
        %1056 = vst.msk [vmem:[%s1040 + $0x78] sm:$0xff] %vm466, %v985
        %1057 = vst [vmem:[%s1040 + $0x80] sm:$0xff] %v987
        %1058 = vst.msk [vmem:[%s1040 + $0x88] sm:$0xff] %vm466, %v989
        %1059 = vst [vmem:[%s1040 + $0x90] sm:$0xff] %v991
        %1060 = vst.msk [vmem:[%s1040 + $0x98] sm:$0xff] %vm466, %v993
        %1061 = vst [vmem:[%s1040 + $0xa0] sm:$0xff] %v995
        %1062 = vst.msk [vmem:[%s1040 + $0xa8] sm:$0xff] %vm466, %v997
        %1063 = vst [vmem:[%s1040 + $0xb0] sm:$0xff] %v999
        %1064 = vst.msk [vmem:[%s1040 + $0xb8] sm:$0xff] %vm466, %v1001
        %1065 = vst [vmem:[%s1040 + $0xc0] sm:$0xff] %v1003
        %1066 = vst.msk [vmem:[%s1040 + $0xc8] sm:$0xff] %vm466, %v1005
        %1067 = vst [vmem:[%s1040 + $0xd0] sm:$0xff] %v1007
        %1068 = vst.msk [vmem:[%s1040 + $0xd8] sm:$0xff] %vm466, %v1009
        %1069 = vst [vmem:[%s1040 + $0xe0] sm:$0x3f] %v1006
        %1070 = vst.msk [vmem:[%s1040 + $0xe8] sm:$0x3f] %vm495, %v1008
        %v1071 = vld [vmem:[%s429] sm:$0xfe]
        %v1072 = vld [vmem:[%s429 + $0x8] sm:$0xfe]
        %v1073 = vld [vmem:[%s429 + $0x10] sm:$0xff]
        %v1074 = vld [vmem:[%s429 + $0x18] sm:$0xff]
        %v1075 = vld [vmem:[%s429 + $0x20] sm:$0xff]
        %v1076 = vld [vmem:[%s429 + $0x28] sm:$0xff]
        %v1077 = vld [vmem:[%s429 + $0x30] sm:$0xff]
        %v1078 = vld [vmem:[%s429 + $0x38] sm:$0xff]
        %v1079 = vld [vmem:[%s429 + $0x40] sm:$0xff]
        %v1080 = vld [vmem:[%s429 + $0x48] sm:$0xff]
        %v1081 = vld [vmem:[%s429 + $0x50] sm:$0xff]
        %v1082 = vld [vmem:[%s429 + $0x58] sm:$0xff]
        %v1083 = vld [vmem:[%s429 + $0x60] sm:$0xff]
        %v1084 = vld [vmem:[%s429 + $0x68] sm:$0xff]
        %v1085 = vld [vmem:[%s429 + $0x70] sm:$0xff]
        %v1086 = vld [vmem:[%s429 + $0x78] sm:$0xff]
        %v1087 = vld [vmem:[%s429 + $0x80] sm:$0xff]
        %v1088 = vld [vmem:[%s429 + $0x88] sm:$0xff]
        %v1089 = vld [vmem:[%s429 + $0x90] sm:$0xff]
        %v1090 = vld [vmem:[%s429 + $0x98] sm:$0xff]
        %v1091 = vld [vmem:[%s429 + $0xa0] sm:$0xff]
        %v1092 = vld [vmem:[%s429 + $0xa8] sm:$0xff]
        %v1093 = vld [vmem:[%s429 + $0xb0] sm:$0xff]
        %v1094 = vld [vmem:[%s429 + $0xb8] sm:$0xff]
        %v1095 = vld [vmem:[%s429 + $0xc0] sm:$0xff]
        %v1096 = vld [vmem:[%s429 + $0xc8] sm:$0xff]
        %v1097 = vld [vmem:[%s429 + $0xd0] sm:$0xff]
        %v1098 = vld [vmem:[%s429 + $0xd8] sm:$0xff]
        %v1099 = vld [vmem:[%s429 + $0xe0] sm:$0x7f]
        %v1100 = vld [vmem:[%s429 + $0xe8] sm:$0x7f]
        %v1131 = vrot.slane %v1071, 1
        %v1132 = vrot.slane %v1073, 1
        %v1133 = vsel %vm951, %v1131, %v1132
        %v1134 = vrot.slane %v1072, 1
        %v1135 = vrot.slane %v1074, 1
        %v1136 = vsel %vm951, %v1134, %v1135
        %v1137 = vrot.slane %v1075, 1
        %v1138 = vsel %vm951, %v1132, %v1137
        %v1139 = vrot.slane %v1076, 1
        %v1140 = vsel %vm951, %v1135, %v1139
        %v1141 = vrot.slane %v1077, 1
        %v1142 = vsel %vm951, %v1137, %v1141
        %v1143 = vrot.slane %v1078, 1
        %v1144 = vsel %vm951, %v1139, %v1143
        %v1145 = vrot.slane %v1079, 1
        %v1146 = vsel %vm951, %v1141, %v1145
        %v1147 = vrot.slane %v1080, 1
        %v1148 = vsel %vm951, %v1143, %v1147
        %v1149 = vrot.slane %v1081, 1
        %v1150 = vsel %vm951, %v1145, %v1149
        %v1151 = vrot.slane %v1082, 1
        %v1152 = vsel %vm951, %v1147, %v1151
        %v1153 = vrot.slane %v1083, 1
        %v1154 = vsel %vm951, %v1149, %v1153
        %v1155 = vrot.slane %v1084, 1
        %v1156 = vsel %vm951, %v1151, %v1155
        %v1157 = vrot.slane %v1085, 1
        %v1158 = vsel %vm951, %v1153, %v1157
        %v1159 = vrot.slane %v1086, 1
        %v1160 = vsel %vm951, %v1155, %v1159
        %v1161 = vrot.slane %v1087, 1
        %v1162 = vsel %vm951, %v1157, %v1161
        %v1163 = vrot.slane %v1088, 1
        %v1164 = vsel %vm951, %v1159, %v1163
        %v1165 = vrot.slane %v1089, 1
        %v1166 = vsel %vm951, %v1161, %v1165
        %v1167 = vrot.slane %v1090, 1
        %v1168 = vsel %vm951, %v1163, %v1167
        %v1169 = vrot.slane %v1091, 1
        %v1170 = vsel %vm951, %v1165, %v1169
        %v1171 = vrot.slane %v1092, 1
        %v1172 = vsel %vm951, %v1167, %v1171
        %v1173 = vrot.slane %v1093, 1
        %v1174 = vsel %vm951, %v1169, %v1173
        %v1175 = vrot.slane %v1094, 1
        %v1176 = vsel %vm951, %v1171, %v1175
        %v1177 = vrot.slane %v1095, 1
        %v1178 = vsel %vm951, %v1173, %v1177
        %v1179 = vrot.slane %v1096, 1
        %v1180 = vsel %vm951, %v1175, %v1179
        %v1181 = vrot.slane %v1097, 1
        %v1182 = vsel %vm951, %v1177, %v1181
        %v1183 = vrot.slane %v1098, 1
        %v1184 = vsel %vm951, %v1179, %v1183
        %v1185 = vrot.slane %v1099, 1
        %v1186 = vsel %vm951, %v1181, %v1185
        %v1187 = vrot.slane %v1100, 1
        %v1188 = vsel %vm951, %v1183, %v1187
        %1189 = vrot.lane.b32.xlu0 %v1133, 127
        %v1190 = vpop.permute.xlu0 %1189
        %1191 = vrot.lane.b32.xlu0 %v1136, 127
        %v1192 = vpop.permute.xlu0 %1191
        %1193 = vrot.lane.b32.xlu0 %v1138, 127
        %v1194 = vpop.permute.xlu0 %1193
        %1195 = vrot.lane.b32.xlu0 %v1140, 127
        %v1196 = vpop.permute.xlu0 %1195
        %1197 = vrot.lane.b32.xlu0 %v1142, 127
        %v1198 = vpop.permute.xlu0 %1197
        %1199 = vrot.lane.b32.xlu0 %v1144, 127
        %v1200 = vpop.permute.xlu0 %1199
        %1201 = vrot.lane.b32.xlu0 %v1146, 127
        %v1202 = vpop.permute.xlu0 %1201
        %1203 = vrot.lane.b32.xlu0 %v1148, 127
        %v1204 = vpop.permute.xlu0 %1203
        %1205 = vrot.lane.b32.xlu0 %v1150, 127
        %v1206 = vpop.permute.xlu0 %1205
        %1207 = vrot.lane.b32.xlu0 %v1152, 127
        %v1208 = vpop.permute.xlu0 %1207
        %1209 = vrot.lane.b32.xlu0 %v1154, 127
        %v1210 = vpop.permute.xlu0 %1209
        %1211 = vrot.lane.b32.xlu0 %v1156, 127
        %v1212 = vpop.permute.xlu0 %1211
        %1213 = vrot.lane.b32.xlu0 %v1158, 127
        %v1214 = vpop.permute.xlu0 %1213
        %1215 = vrot.lane.b32.xlu0 %v1160, 127
        %v1216 = vpop.permute.xlu0 %1215
        %1217 = vrot.lane.b32.xlu0 %v1162, 127
        %v1218 = vpop.permute.xlu0 %1217
        %1219 = vrot.lane.b32.xlu0 %v1164, 127
        %v1220 = vpop.permute.xlu0 %1219
        %1221 = vrot.lane.b32.xlu0 %v1166, 127
        %v1222 = vpop.permute.xlu0 %1221
        %1223 = vrot.lane.b32.xlu0 %v1168, 127
        %v1224 = vpop.permute.xlu0 %1223
        %1225 = vrot.lane.b32.xlu0 %v1170, 127
        %v1226 = vpop.permute.xlu0 %1225
        %1227 = vrot.lane.b32.xlu0 %v1172, 127
        %v1228 = vpop.permute.xlu0 %1227
        %1229 = vrot.lane.b32.xlu0 %v1174, 127
        %v1230 = vpop.permute.xlu0 %1229
        %1231 = vrot.lane.b32.xlu0 %v1176, 127
        %v1232 = vpop.permute.xlu0 %1231
        %1233 = vrot.lane.b32.xlu0 %v1178, 127
        %v1234 = vpop.permute.xlu0 %1233
        %1235 = vrot.lane.b32.xlu0 %v1180, 127
        %v1236 = vpop.permute.xlu0 %1235
        %1237 = vrot.lane.b32.xlu0 %v1182, 127
        %v1238 = vpop.permute.xlu0 %1237
        %1239 = vrot.lane.b32.xlu0 %v1184, 127
        %v1240 = vpop.permute.xlu0 %1239
        %1241 = vrot.lane.b32.xlu0 %v1186, 127
        %v1242 = vpop.permute.xlu0 %1241
        %1243 = vrot.lane.b32.xlu0 %v1188, 127
        %v1244 = vpop.permute.xlu0 %1243
        %1245 = vrot.lane.b32.xlu0 %v1185, 127
        %v1246 = vpop.permute.xlu0 %1245
        %1247 = vrot.lane.b32.xlu0 %v1187, 127
        %v1248 = vpop.permute.xlu0 %1247
        %v1249 = vsel %vm617, %v1190, %v1192
        %v1250 = vsel %vm617, %v1194, %v1196
        %v1251 = vsel %vm617, %v1198, %v1200
        %v1252 = vsel %vm617, %v1202, %v1204
        %v1253 = vsel %vm617, %v1206, %v1208
        %v1254 = vsel %vm617, %v1210, %v1212
        %v1255 = vsel %vm617, %v1214, %v1216
        %v1256 = vsel %vm617, %v1218, %v1220
        %v1257 = vsel %vm617, %v1222, %v1224
        %v1258 = vsel %vm617, %v1226, %v1228
        %v1259 = vsel %vm617, %v1230, %v1232
        %v1260 = vsel %vm617, %v1234, %v1236
        %v1261 = vsel %vm617, %v1238, %v1240
        %v1262 = vsel %vm617, %v1242, %v1244
        %v1263 = vsel %vm617, %v1246, %v1248
        %s1294 = scalar_lea.vmem [#allocation2], 960
        %1295 = vst [vmem:[%s1294] sm:$0xff] %v1249
        %1296 = vst.msk [vmem:[%s1294 + $0x8] sm:$0xff] %vm466, %v1192
        %1297 = vst [vmem:[%s1294 + $0x10] sm:$0xff] %v1250
        %1298 = vst.msk [vmem:[%s1294 + $0x18] sm:$0xff] %vm466, %v1196
        %1299 = vst [vmem:[%s1294 + $0x20] sm:$0xff] %v1251
        %1300 = vst.msk [vmem:[%s1294 + $0x28] sm:$0xff] %vm466, %v1200
        %1301 = vst [vmem:[%s1294 + $0x30] sm:$0xff] %v1252
        %1302 = vst.msk [vmem:[%s1294 + $0x38] sm:$0xff] %vm466, %v1204
        %1303 = vst [vmem:[%s1294 + $0x40] sm:$0xff] %v1253
        %1304 = vst.msk [vmem:[%s1294 + $0x48] sm:$0xff] %vm466, %v1208
        %1305 = vst [vmem:[%s1294 + $0x50] sm:$0xff] %v1254
        %1306 = vst.msk [vmem:[%s1294 + $0x58] sm:$0xff] %vm466, %v1212
        %1307 = vst [vmem:[%s1294 + $0x60] sm:$0xff] %v1255
        %1308 = vst.msk [vmem:[%s1294 + $0x68] sm:$0xff] %vm466, %v1216
        %1309 = vst [vmem:[%s1294 + $0x70] sm:$0xff] %v1256
        %1310 = vst.msk [vmem:[%s1294 + $0x78] sm:$0xff] %vm466, %v1220
        %1311 = vst [vmem:[%s1294 + $0x80] sm:$0xff] %v1257
        %1312 = vst.msk [vmem:[%s1294 + $0x88] sm:$0xff] %vm466, %v1224
        %1313 = vst [vmem:[%s1294 + $0x90] sm:$0xff] %v1258
        %1314 = vst.msk [vmem:[%s1294 + $0x98] sm:$0xff] %vm466, %v1228
        %1315 = vst [vmem:[%s1294 + $0xa0] sm:$0xff] %v1259
        %1316 = vst.msk [vmem:[%s1294 + $0xa8] sm:$0xff] %vm466, %v1232
        %1317 = vst [vmem:[%s1294 + $0xb0] sm:$0xff] %v1260
        %1318 = vst.msk [vmem:[%s1294 + $0xb8] sm:$0xff] %vm466, %v1236
        %1319 = vst [vmem:[%s1294 + $0xc0] sm:$0xff] %v1261
        %1320 = vst.msk [vmem:[%s1294 + $0xc8] sm:$0xff] %vm466, %v1240
        %1321 = vst [vmem:[%s1294 + $0xd0] sm:$0xff] %v1262
        %1322 = vst.msk [vmem:[%s1294 + $0xd8] sm:$0xff] %vm466, %v1244
        %1323 = vst [vmem:[%s1294 + $0xe0] sm:$0x3f] %v1263
        %1324 = vst.msk [vmem:[%s1294 + $0xe8] sm:$0x3f] %vm495, %v1248
        %v1325 = vld [vmem:[%s429] sm:$0xfe]
        %v1326 = vld [vmem:[%s429 + $0x8] sm:$0xfe]
        %v1327 = vld [vmem:[%s429 + $0x10] sm:$0xff]
        %v1328 = vld [vmem:[%s429 + $0x18] sm:$0xff]
        %v1329 = vld [vmem:[%s429 + $0x20] sm:$0xff]
        %v1330 = vld [vmem:[%s429 + $0x28] sm:$0xff]
        %v1331 = vld [vmem:[%s429 + $0x30] sm:$0xff]
        %v1332 = vld [vmem:[%s429 + $0x38] sm:$0xff]
        %v1333 = vld [vmem:[%s429 + $0x40] sm:$0xff]
        %v1334 = vld [vmem:[%s429 + $0x48] sm:$0xff]
        %v1335 = vld [vmem:[%s429 + $0x50] sm:$0xff]
        %v1336 = vld [vmem:[%s429 + $0x58] sm:$0xff]
        %v1337 = vld [vmem:[%s429 + $0x60] sm:$0xff]
        %v1338 = vld [vmem:[%s429 + $0x68] sm:$0xff]
        %v1339 = vld [vmem:[%s429 + $0x70] sm:$0xff]
        %v1340 = vld [vmem:[%s429 + $0x78] sm:$0xff]
        %v1341 = vld [vmem:[%s429 + $0x80] sm:$0xff]
        %v1342 = vld [vmem:[%s429 + $0x88] sm:$0xff]
        %v1343 = vld [vmem:[%s429 + $0x90] sm:$0xff]
        %v1344 = vld [vmem:[%s429 + $0x98] sm:$0xff]
        %v1345 = vld [vmem:[%s429 + $0xa0] sm:$0xff]
        %v1346 = vld [vmem:[%s429 + $0xa8] sm:$0xff]
        %v1347 = vld [vmem:[%s429 + $0xb0] sm:$0xff]
        %v1348 = vld [vmem:[%s429 + $0xb8] sm:$0xff]
        %v1349 = vld [vmem:[%s429 + $0xc0] sm:$0xff]
        %v1350 = vld [vmem:[%s429 + $0xc8] sm:$0xff]
        %v1351 = vld [vmem:[%s429 + $0xd0] sm:$0xff]
        %v1352 = vld [vmem:[%s429 + $0xd8] sm:$0xff]
        %v1353 = vld [vmem:[%s429 + $0xe0] sm:$0x7f]
        %v1354 = vld [vmem:[%s429 + $0xe8] sm:$0x7f]
        %v1385 = vrot.slane %v1325, 1
        %v1386 = vrot.slane %v1327, 1
        %v1387 = vsel %vm951, %v1385, %v1386
        %v1388 = vrot.slane %v1326, 1
        %v1389 = vrot.slane %v1328, 1
        %v1390 = vsel %vm951, %v1388, %v1389
        %v1391 = vrot.slane %v1329, 1
        %v1392 = vsel %vm951, %v1386, %v1391
        %v1393 = vrot.slane %v1330, 1
        %v1394 = vsel %vm951, %v1389, %v1393
        %v1395 = vrot.slane %v1331, 1
        %v1396 = vsel %vm951, %v1391, %v1395
        %v1397 = vrot.slane %v1332, 1
        %v1398 = vsel %vm951, %v1393, %v1397
        %v1399 = vrot.slane %v1333, 1
        %v1400 = vsel %vm951, %v1395, %v1399
        %v1401 = vrot.slane %v1334, 1
        %v1402 = vsel %vm951, %v1397, %v1401
        %v1403 = vrot.slane %v1335, 1
        %v1404 = vsel %vm951, %v1399, %v1403
        %v1405 = vrot.slane %v1336, 1
        %v1406 = vsel %vm951, %v1401, %v1405
        %v1407 = vrot.slane %v1337, 1
        %v1408 = vsel %vm951, %v1403, %v1407
        %v1409 = vrot.slane %v1338, 1
        %v1410 = vsel %vm951, %v1405, %v1409
        %v1411 = vrot.slane %v1339, 1
        %v1412 = vsel %vm951, %v1407, %v1411
        %v1413 = vrot.slane %v1340, 1
        %v1414 = vsel %vm951, %v1409, %v1413
        %v1415 = vrot.slane %v1341, 1
        %v1416 = vsel %vm951, %v1411, %v1415
        %v1417 = vrot.slane %v1342, 1
        %v1418 = vsel %vm951, %v1413, %v1417
        %v1419 = vrot.slane %v1343, 1
        %v1420 = vsel %vm951, %v1415, %v1419
        %v1421 = vrot.slane %v1344, 1
        %v1422 = vsel %vm951, %v1417, %v1421
        %v1423 = vrot.slane %v1345, 1
        %v1424 = vsel %vm951, %v1419, %v1423
        %v1425 = vrot.slane %v1346, 1
        %v1426 = vsel %vm951, %v1421, %v1425
        %v1427 = vrot.slane %v1347, 1
        %v1428 = vsel %vm951, %v1423, %v1427
        %v1429 = vrot.slane %v1348, 1
        %v1430 = vsel %vm951, %v1425, %v1429
        %v1431 = vrot.slane %v1349, 1
        %v1432 = vsel %vm951, %v1427, %v1431
        %v1433 = vrot.slane %v1350, 1
        %v1434 = vsel %vm951, %v1429, %v1433
        %v1435 = vrot.slane %v1351, 1
        %v1436 = vsel %vm951, %v1431, %v1435
        %v1437 = vrot.slane %v1352, 1
        %v1438 = vsel %vm951, %v1433, %v1437
        %v1439 = vrot.slane %v1353, 1
        %v1440 = vsel %vm951, %v1435, %v1439
        %v1441 = vrot.slane %v1354, 1
        %v1442 = vsel %vm951, %v1437, %v1441
        %1443 = vrot.lane.b32.xlu0 %v1387, 126
        %v1444 = vpop.permute.xlu0 %1443
        %1445 = vrot.lane.b32.xlu0 %v1390, 126
        %v1446 = vpop.permute.xlu0 %1445
        %1447 = vrot.lane.b32.xlu0 %v1392, 126
        %v1448 = vpop.permute.xlu0 %1447
        %1449 = vrot.lane.b32.xlu0 %v1394, 126
        %v1450 = vpop.permute.xlu0 %1449
        %1451 = vrot.lane.b32.xlu0 %v1396, 126
        %v1452 = vpop.permute.xlu0 %1451
        %1453 = vrot.lane.b32.xlu0 %v1398, 126
        %v1454 = vpop.permute.xlu0 %1453
        %1455 = vrot.lane.b32.xlu0 %v1400, 126
        %v1456 = vpop.permute.xlu0 %1455
        %1457 = vrot.lane.b32.xlu0 %v1402, 126
        %v1458 = vpop.permute.xlu0 %1457
        %1459 = vrot.lane.b32.xlu0 %v1404, 126
        %v1460 = vpop.permute.xlu0 %1459
        %1461 = vrot.lane.b32.xlu0 %v1406, 126
        %v1462 = vpop.permute.xlu0 %1461
        %1463 = vrot.lane.b32.xlu0 %v1408, 126
        %v1464 = vpop.permute.xlu0 %1463
        %1465 = vrot.lane.b32.xlu0 %v1410, 126
        %v1466 = vpop.permute.xlu0 %1465
        %1467 = vrot.lane.b32.xlu0 %v1412, 126
        %v1468 = vpop.permute.xlu0 %1467
        %1469 = vrot.lane.b32.xlu0 %v1414, 126
        %v1470 = vpop.permute.xlu0 %1469
        %1471 = vrot.lane.b32.xlu0 %v1416, 126
        %v1472 = vpop.permute.xlu0 %1471
        %1473 = vrot.lane.b32.xlu0 %v1418, 126
        %v1474 = vpop.permute.xlu0 %1473
        %1475 = vrot.lane.b32.xlu0 %v1420, 126
        %v1476 = vpop.permute.xlu0 %1475
        %1477 = vrot.lane.b32.xlu0 %v1422, 126
        %v1478 = vpop.permute.xlu0 %1477
        %1479 = vrot.lane.b32.xlu0 %v1424, 126
        %v1480 = vpop.permute.xlu0 %1479
        %1481 = vrot.lane.b32.xlu0 %v1426, 126
        %v1482 = vpop.permute.xlu0 %1481
        %1483 = vrot.lane.b32.xlu0 %v1428, 126
        %v1484 = vpop.permute.xlu0 %1483
        %1485 = vrot.lane.b32.xlu0 %v1430, 126
        %v1486 = vpop.permute.xlu0 %1485
        %1487 = vrot.lane.b32.xlu0 %v1432, 126
        %v1488 = vpop.permute.xlu0 %1487
        %1489 = vrot.lane.b32.xlu0 %v1434, 126
        %v1490 = vpop.permute.xlu0 %1489
        %1491 = vrot.lane.b32.xlu0 %v1436, 126
        %v1492 = vpop.permute.xlu0 %1491
        %1493 = vrot.lane.b32.xlu0 %v1438, 126
        %v1494 = vpop.permute.xlu0 %1493
        %1495 = vrot.lane.b32.xlu0 %v1440, 126
        %v1496 = vpop.permute.xlu0 %1495
        %1497 = vrot.lane.b32.xlu0 %v1442, 126
        %v1498 = vpop.permute.xlu0 %1497
        %1499 = vrot.lane.b32.xlu0 %v1439, 126
        %v1500 = vpop.permute.xlu0 %1499
        %1501 = vrot.lane.b32.xlu0 %v1441, 126
        %v1502 = vpop.permute.xlu0 %1501
        %v1503 = vsel %vm814, %v1444, %v1446
        %v1504 = vsel %vm814, %v1448, %v1450
        %v1505 = vsel %vm814, %v1452, %v1454
        %v1506 = vsel %vm814, %v1456, %v1458
        %v1507 = vsel %vm814, %v1460, %v1462
        %v1508 = vsel %vm814, %v1464, %v1466
        %v1509 = vsel %vm814, %v1468, %v1470
        %v1510 = vsel %vm814, %v1472, %v1474
        %v1511 = vsel %vm814, %v1476, %v1478
        %v1512 = vsel %vm814, %v1480, %v1482
        %v1513 = vsel %vm814, %v1484, %v1486
        %v1514 = vsel %vm814, %v1488, %v1490
        %v1515 = vsel %vm814, %v1492, %v1494
        %v1516 = vsel %vm814, %v1496, %v1498
        %v1517 = vsel %vm814, %v1500, %v1502
        %s1548 = scalar_lea.vmem [#allocation2], 1200
        %1549 = vst [vmem:[%s1548] sm:$0xff] %v1503
        %1550 = vst.msk [vmem:[%s1548 + $0x8] sm:$0xff] %vm466, %v1446
        %1551 = vst [vmem:[%s1548 + $0x10] sm:$0xff] %v1504
        %1552 = vst.msk [vmem:[%s1548 + $0x18] sm:$0xff] %vm466, %v1450
        %1553 = vst [vmem:[%s1548 + $0x20] sm:$0xff] %v1505
        %1554 = vst.msk [vmem:[%s1548 + $0x28] sm:$0xff] %vm466, %v1454
        %1555 = vst [vmem:[%s1548 + $0x30] sm:$0xff] %v1506
        %1556 = vst.msk [vmem:[%s1548 + $0x38] sm:$0xff] %vm466, %v1458
        %1557 = vst [vmem:[%s1548 + $0x40] sm:$0xff] %v1507
        %1558 = vst.msk [vmem:[%s1548 + $0x48] sm:$0xff] %vm466, %v1462
        %1559 = vst [vmem:[%s1548 + $0x50] sm:$0xff] %v1508
        %1560 = vst.msk [vmem:[%s1548 + $0x58] sm:$0xff] %vm466, %v1466
        %1561 = vst [vmem:[%s1548 + $0x60] sm:$0xff] %v1509
        %1562 = vst.msk [vmem:[%s1548 + $0x68] sm:$0xff] %vm466, %v1470
        %1563 = vst [vmem:[%s1548 + $0x70] sm:$0xff] %v1510
        %1564 = vst.msk [vmem:[%s1548 + $0x78] sm:$0xff] %vm466, %v1474
        %1565 = vst [vmem:[%s1548 + $0x80] sm:$0xff] %v1511
        %1566 = vst.msk [vmem:[%s1548 + $0x88] sm:$0xff] %vm466, %v1478
        %1567 = vst [vmem:[%s1548 + $0x90] sm:$0xff] %v1512
        %1568 = vst.msk [vmem:[%s1548 + $0x98] sm:$0xff] %vm466, %v1482
        %1569 = vst [vmem:[%s1548 + $0xa0] sm:$0xff] %v1513
        %1570 = vst.msk [vmem:[%s1548 + $0xa8] sm:$0xff] %vm466, %v1486
        %1571 = vst [vmem:[%s1548 + $0xb0] sm:$0xff] %v1514
        %1572 = vst.msk [vmem:[%s1548 + $0xb8] sm:$0xff] %vm466, %v1490
        %1573 = vst [vmem:[%s1548 + $0xc0] sm:$0xff] %v1515
        %1574 = vst.msk [vmem:[%s1548 + $0xc8] sm:$0xff] %vm466, %v1494
        %1575 = vst [vmem:[%s1548 + $0xd0] sm:$0xff] %v1516
        %1576 = vst.msk [vmem:[%s1548 + $0xd8] sm:$0xff] %vm466, %v1498
        %1577 = vst [vmem:[%s1548 + $0xe0] sm:$0x3f] %v1517
        %1578 = vst.msk [vmem:[%s1548 + $0xe8] sm:$0x3f] %vm495, %v1502
        %v1579 = vld [vmem:[%s429] sm:$0xfc]
        %v1580 = vld [vmem:[%s429 + $0x8] sm:$0xfc]
        %v1581 = vld [vmem:[%s429 + $0x10] sm:$0xff]
        %v1582 = vld [vmem:[%s429 + $0x18] sm:$0xff]
        %v1583 = vld [vmem:[%s429 + $0x20] sm:$0xff]
        %v1584 = vld [vmem:[%s429 + $0x28] sm:$0xff]
        %v1585 = vld [vmem:[%s429 + $0x30] sm:$0xff]
        %v1586 = vld [vmem:[%s429 + $0x38] sm:$0xff]
        %v1587 = vld [vmem:[%s429 + $0x40] sm:$0xff]
        %v1588 = vld [vmem:[%s429 + $0x48] sm:$0xff]
        %v1589 = vld [vmem:[%s429 + $0x50] sm:$0xff]
        %v1590 = vld [vmem:[%s429 + $0x58] sm:$0xff]
        %v1591 = vld [vmem:[%s429 + $0x60] sm:$0xff]
        %v1592 = vld [vmem:[%s429 + $0x68] sm:$0xff]
        %v1593 = vld [vmem:[%s429 + $0x70] sm:$0xff]
        %v1594 = vld [vmem:[%s429 + $0x78] sm:$0xff]
        %v1595 = vld [vmem:[%s429 + $0x80] sm:$0xff]
        %v1596 = vld [vmem:[%s429 + $0x88] sm:$0xff]
        %v1597 = vld [vmem:[%s429 + $0x90] sm:$0xff]
        %v1598 = vld [vmem:[%s429 + $0x98] sm:$0xff]
        %v1599 = vld [vmem:[%s429 + $0xa0] sm:$0xff]
        %v1600 = vld [vmem:[%s429 + $0xa8] sm:$0xff]
        %v1601 = vld [vmem:[%s429 + $0xb0] sm:$0xff]
        %v1602 = vld [vmem:[%s429 + $0xb8] sm:$0xff]
        %v1603 = vld [vmem:[%s429 + $0xc0] sm:$0xff]
        %v1604 = vld [vmem:[%s429 + $0xc8] sm:$0xff]
        %v1605 = vld [vmem:[%s429 + $0xd0] sm:$0xff]
        %v1606 = vld [vmem:[%s429 + $0xd8] sm:$0xff]
        %v1607 = vld [vmem:[%s429 + $0xe0] sm:$0xff]
        %v1608 = vld [vmem:[%s429 + $0xe8] sm:$0xff]
        %vm1639 = vcmask 1045504
        %v1640 = vrot.slane %v1579, 2
        %v1641 = vrot.slane %v1581, 2
        %v1642 = vsel %vm1639, %v1640, %v1641
        %v1643 = vrot.slane %v1580, 2
        %v1644 = vrot.slane %v1582, 2
        %v1645 = vsel %vm1639, %v1643, %v1644
        %v1646 = vrot.slane %v1583, 2
        %v1647 = vsel %vm1639, %v1641, %v1646
        %v1648 = vrot.slane %v1584, 2
        %v1649 = vsel %vm1639, %v1644, %v1648
        %v1650 = vrot.slane %v1585, 2
        %v1651 = vsel %vm1639, %v1646, %v1650
        %v1652 = vrot.slane %v1586, 2
        %v1653 = vsel %vm1639, %v1648, %v1652
        %v1654 = vrot.slane %v1587, 2
        %v1655 = vsel %vm1639, %v1650, %v1654
        %v1656 = vrot.slane %v1588, 2
        %v1657 = vsel %vm1639, %v1652, %v1656
        %v1658 = vrot.slane %v1589, 2
        %v1659 = vsel %vm1639, %v1654, %v1658
        %v1660 = vrot.slane %v1590, 2
        %v1661 = vsel %vm1639, %v1656, %v1660
        %v1662 = vrot.slane %v1591, 2
        %v1663 = vsel %vm1639, %v1658, %v1662
        %v1664 = vrot.slane %v1592, 2
        %v1665 = vsel %vm1639, %v1660, %v1664
        %v1666 = vrot.slane %v1593, 2
        %v1667 = vsel %vm1639, %v1662, %v1666
        %v1668 = vrot.slane %v1594, 2
        %v1669 = vsel %vm1639, %v1664, %v1668
        %v1670 = vrot.slane %v1595, 2
        %v1671 = vsel %vm1639, %v1666, %v1670
        %v1672 = vrot.slane %v1596, 2
        %v1673 = vsel %vm1639, %v1668, %v1672
        %v1674 = vrot.slane %v1597, 2
        %v1675 = vsel %vm1639, %v1670, %v1674
        %v1676 = vrot.slane %v1598, 2
        %v1677 = vsel %vm1639, %v1672, %v1676
        %v1678 = vrot.slane %v1599, 2
        %v1679 = vsel %vm1639, %v1674, %v1678
        %v1680 = vrot.slane %v1600, 2
        %v1681 = vsel %vm1639, %v1676, %v1680
        %v1682 = vrot.slane %v1601, 2
        %v1683 = vsel %vm1639, %v1678, %v1682
        %v1684 = vrot.slane %v1602, 2
        %v1685 = vsel %vm1639, %v1680, %v1684
        %v1686 = vrot.slane %v1603, 2
        %v1687 = vsel %vm1639, %v1682, %v1686
        %v1688 = vrot.slane %v1604, 2
        %v1689 = vsel %vm1639, %v1684, %v1688
        %v1690 = vrot.slane %v1605, 2
        %v1691 = vsel %vm1639, %v1686, %v1690
        %v1692 = vrot.slane %v1606, 2
        %v1693 = vsel %vm1639, %v1688, %v1692
        %v1694 = vrot.slane %v1607, 2
        %v1695 = vsel %vm1639, %v1690, %v1694
        %v1696 = vrot.slane %v1608, 2
        %v1697 = vsel %vm1639, %v1692, %v1696
        %s1728 = scalar_lea.vmem [#allocation2], 1440
        %1729 = vst [vmem:[%s1728] sm:$0xff] %v1642
        %1730 = vst.msk [vmem:[%s1728 + $0x8] sm:$0xff] %vm466, %v1645
        %1731 = vst [vmem:[%s1728 + $0x10] sm:$0xff] %v1647
        %1732 = vst.msk [vmem:[%s1728 + $0x18] sm:$0xff] %vm466, %v1649
        %1733 = vst [vmem:[%s1728 + $0x20] sm:$0xff] %v1651
        %1734 = vst.msk [vmem:[%s1728 + $0x28] sm:$0xff] %vm466, %v1653
        %1735 = vst [vmem:[%s1728 + $0x30] sm:$0xff] %v1655
        %1736 = vst.msk [vmem:[%s1728 + $0x38] sm:$0xff] %vm466, %v1657
        %1737 = vst [vmem:[%s1728 + $0x40] sm:$0xff] %v1659
        %1738 = vst.msk [vmem:[%s1728 + $0x48] sm:$0xff] %vm466, %v1661
        %1739 = vst [vmem:[%s1728 + $0x50] sm:$0xff] %v1663
        %1740 = vst.msk [vmem:[%s1728 + $0x58] sm:$0xff] %vm466, %v1665
        %1741 = vst [vmem:[%s1728 + $0x60] sm:$0xff] %v1667
        %1742 = vst.msk [vmem:[%s1728 + $0x68] sm:$0xff] %vm466, %v1669
        %1743 = vst [vmem:[%s1728 + $0x70] sm:$0xff] %v1671
        %1744 = vst.msk [vmem:[%s1728 + $0x78] sm:$0xff] %vm466, %v1673
        %1745 = vst [vmem:[%s1728 + $0x80] sm:$0xff] %v1675
        %1746 = vst.msk [vmem:[%s1728 + $0x88] sm:$0xff] %vm466, %v1677
        %1747 = vst [vmem:[%s1728 + $0x90] sm:$0xff] %v1679
        %1748 = vst.msk [vmem:[%s1728 + $0x98] sm:$0xff] %vm466, %v1681
        %1749 = vst [vmem:[%s1728 + $0xa0] sm:$0xff] %v1683
        %1750 = vst.msk [vmem:[%s1728 + $0xa8] sm:$0xff] %vm466, %v1685
        %1751 = vst [vmem:[%s1728 + $0xb0] sm:$0xff] %v1687
        %1752 = vst.msk [vmem:[%s1728 + $0xb8] sm:$0xff] %vm466, %v1689
        %1753 = vst [vmem:[%s1728 + $0xc0] sm:$0xff] %v1691
        %1754 = vst.msk [vmem:[%s1728 + $0xc8] sm:$0xff] %vm466, %v1693
        %1755 = vst [vmem:[%s1728 + $0xd0] sm:$0xff] %v1695
        %1756 = vst.msk [vmem:[%s1728 + $0xd8] sm:$0xff] %vm466, %v1697
        %1757 = vst [vmem:[%s1728 + $0xe0] sm:$0x3f] %v1694
        %1758 = vst.msk [vmem:[%s1728 + $0xe8] sm:$0x3f] %vm495, %v1696
        %v1759 = vld [vmem:[%s429] sm:$0xfc]
        %v1760 = vld [vmem:[%s429 + $0x8] sm:$0xfc]
        %v1761 = vld [vmem:[%s429 + $0x10] sm:$0xff]
        %v1762 = vld [vmem:[%s429 + $0x18] sm:$0xff]
        %v1763 = vld [vmem:[%s429 + $0x20] sm:$0xff]
        %v1764 = vld [vmem:[%s429 + $0x28] sm:$0xff]
        %v1765 = vld [vmem:[%s429 + $0x30] sm:$0xff]
        %v1766 = vld [vmem:[%s429 + $0x38] sm:$0xff]
        %v1767 = vld [vmem:[%s429 + $0x40] sm:$0xff]
        %v1768 = vld [vmem:[%s429 + $0x48] sm:$0xff]
        %v1769 = vld [vmem:[%s429 + $0x50] sm:$0xff]
        %v1770 = vld [vmem:[%s429 + $0x58] sm:$0xff]
        %v1771 = vld [vmem:[%s429 + $0x60] sm:$0xff]
        %v1772 = vld [vmem:[%s429 + $0x68] sm:$0xff]
        %v1773 = vld [vmem:[%s429 + $0x70] sm:$0xff]
        %v1774 = vld [vmem:[%s429 + $0x78] sm:$0xff]
        %v1775 = vld [vmem:[%s429 + $0x80] sm:$0xff]
        %v1776 = vld [vmem:[%s429 + $0x88] sm:$0xff]
        %v1777 = vld [vmem:[%s429 + $0x90] sm:$0xff]
        %v1778 = vld [vmem:[%s429 + $0x98] sm:$0xff]
        %v1779 = vld [vmem:[%s429 + $0xa0] sm:$0xff]
        %v1780 = vld [vmem:[%s429 + $0xa8] sm:$0xff]
        %v1781 = vld [vmem:[%s429 + $0xb0] sm:$0xff]
        %v1782 = vld [vmem:[%s429 + $0xb8] sm:$0xff]
        %v1783 = vld [vmem:[%s429 + $0xc0] sm:$0xff]
        %v1784 = vld [vmem:[%s429 + $0xc8] sm:$0xff]
        %v1785 = vld [vmem:[%s429 + $0xd0] sm:$0xff]
        %v1786 = vld [vmem:[%s429 + $0xd8] sm:$0xff]
        %v1787 = vld [vmem:[%s429 + $0xe0] sm:$0xff]
        %v1788 = vld [vmem:[%s429 + $0xe8] sm:$0xff]
        %v1819 = vrot.slane %v1759, 2
        %v1820 = vrot.slane %v1761, 2
        %v1821 = vsel %vm1639, %v1819, %v1820
        %v1822 = vrot.slane %v1760, 2
        %v1823 = vrot.slane %v1762, 2
        %v1824 = vsel %vm1639, %v1822, %v1823
        %v1825 = vrot.slane %v1763, 2
        %v1826 = vsel %vm1639, %v1820, %v1825
        %v1827 = vrot.slane %v1764, 2
        %v1828 = vsel %vm1639, %v1823, %v1827
        %v1829 = vrot.slane %v1765, 2
        %v1830 = vsel %vm1639, %v1825, %v1829
        %v1831 = vrot.slane %v1766, 2
        %v1832 = vsel %vm1639, %v1827, %v1831
        %v1833 = vrot.slane %v1767, 2
        %v1834 = vsel %vm1639, %v1829, %v1833
        %v1835 = vrot.slane %v1768, 2
        %v1836 = vsel %vm1639, %v1831, %v1835
        %v1837 = vrot.slane %v1769, 2
        %v1838 = vsel %vm1639, %v1833, %v1837
        %v1839 = vrot.slane %v1770, 2
        %v1840 = vsel %vm1639, %v1835, %v1839
        %v1841 = vrot.slane %v1771, 2
        %v1842 = vsel %vm1639, %v1837, %v1841
        %v1843 = vrot.slane %v1772, 2
        %v1844 = vsel %vm1639, %v1839, %v1843
        %v1845 = vrot.slane %v1773, 2
        %v1846 = vsel %vm1639, %v1841, %v1845
        %v1847 = vrot.slane %v1774, 2
        %v1848 = vsel %vm1639, %v1843, %v1847
        %v1849 = vrot.slane %v1775, 2
        %v1850 = vsel %vm1639, %v1845, %v1849
        %v1851 = vrot.slane %v1776, 2
        %v1852 = vsel %vm1639, %v1847, %v1851
        %v1853 = vrot.slane %v1777, 2
        %v1854 = vsel %vm1639, %v1849, %v1853
        %v1855 = vrot.slane %v1778, 2
        %v1856 = vsel %vm1639, %v1851, %v1855
        %v1857 = vrot.slane %v1779, 2
        %v1858 = vsel %vm1639, %v1853, %v1857
        %v1859 = vrot.slane %v1780, 2
        %v1860 = vsel %vm1639, %v1855, %v1859
        %v1861 = vrot.slane %v1781, 2
        %v1862 = vsel %vm1639, %v1857, %v1861
        %v1863 = vrot.slane %v1782, 2
        %v1864 = vsel %vm1639, %v1859, %v1863
        %v1865 = vrot.slane %v1783, 2
        %v1866 = vsel %vm1639, %v1861, %v1865
        %v1867 = vrot.slane %v1784, 2
        %v1868 = vsel %vm1639, %v1863, %v1867
        %v1869 = vrot.slane %v1785, 2
        %v1870 = vsel %vm1639, %v1865, %v1869
        %v1871 = vrot.slane %v1786, 2
        %v1872 = vsel %vm1639, %v1867, %v1871
        %v1873 = vrot.slane %v1787, 2
        %v1874 = vsel %vm1639, %v1869, %v1873
        %v1875 = vrot.slane %v1788, 2
        %v1876 = vsel %vm1639, %v1871, %v1875
        %1877 = vrot.lane.b32.xlu0 %v1821, 127
        %v1878 = vpop.permute.xlu0 %1877
        %1879 = vrot.lane.b32.xlu0 %v1824, 127
        %v1880 = vpop.permute.xlu0 %1879
        %1881 = vrot.lane.b32.xlu0 %v1826, 127
        %v1882 = vpop.permute.xlu0 %1881
        %1883 = vrot.lane.b32.xlu0 %v1828, 127
        %v1884 = vpop.permute.xlu0 %1883
        %1885 = vrot.lane.b32.xlu0 %v1830, 127
        %v1886 = vpop.permute.xlu0 %1885
        %1887 = vrot.lane.b32.xlu0 %v1832, 127
        %v1888 = vpop.permute.xlu0 %1887
        %1889 = vrot.lane.b32.xlu0 %v1834, 127
        %v1890 = vpop.permute.xlu0 %1889
        %1891 = vrot.lane.b32.xlu0 %v1836, 127
        %v1892 = vpop.permute.xlu0 %1891
        %1893 = vrot.lane.b32.xlu0 %v1838, 127
        %v1894 = vpop.permute.xlu0 %1893
        %1895 = vrot.lane.b32.xlu0 %v1840, 127
        %v1896 = vpop.permute.xlu0 %1895
        %1897 = vrot.lane.b32.xlu0 %v1842, 127
        %v1898 = vpop.permute.xlu0 %1897
        %1899 = vrot.lane.b32.xlu0 %v1844, 127
        %v1900 = vpop.permute.xlu0 %1899
        %1901 = vrot.lane.b32.xlu0 %v1846, 127
        %v1902 = vpop.permute.xlu0 %1901
        %1903 = vrot.lane.b32.xlu0 %v1848, 127
        %v1904 = vpop.permute.xlu0 %1903
        %1905 = vrot.lane.b32.xlu0 %v1850, 127
        %v1906 = vpop.permute.xlu0 %1905
        %1907 = vrot.lane.b32.xlu0 %v1852, 127
        %v1908 = vpop.permute.xlu0 %1907
        %1909 = vrot.lane.b32.xlu0 %v1854, 127
        %v1910 = vpop.permute.xlu0 %1909
        %1911 = vrot.lane.b32.xlu0 %v1856, 127
        %v1912 = vpop.permute.xlu0 %1911
        %1913 = vrot.lane.b32.xlu0 %v1858, 127
        %v1914 = vpop.permute.xlu0 %1913
        %1915 = vrot.lane.b32.xlu0 %v1860, 127
        %v1916 = vpop.permute.xlu0 %1915
        %1917 = vrot.lane.b32.xlu0 %v1862, 127
        %v1918 = vpop.permute.xlu0 %1917
        %1919 = vrot.lane.b32.xlu0 %v1864, 127
        %v1920 = vpop.permute.xlu0 %1919
        %1921 = vrot.lane.b32.xlu0 %v1866, 127
        %v1922 = vpop.permute.xlu0 %1921
        %1923 = vrot.lane.b32.xlu0 %v1868, 127
        %v1924 = vpop.permute.xlu0 %1923
        %1925 = vrot.lane.b32.xlu0 %v1870, 127
        %v1926 = vpop.permute.xlu0 %1925
        %1927 = vrot.lane.b32.xlu0 %v1872, 127
        %v1928 = vpop.permute.xlu0 %1927
        %1929 = vrot.lane.b32.xlu0 %v1874, 127
        %v1930 = vpop.permute.xlu0 %1929
        %1931 = vrot.lane.b32.xlu0 %v1876, 127
        %v1932 = vpop.permute.xlu0 %1931
        %1933 = vrot.lane.b32.xlu0 %v1873, 127
        %v1934 = vpop.permute.xlu0 %1933
        %1935 = vrot.lane.b32.xlu0 %v1875, 127
        %v1936 = vpop.permute.xlu0 %1935
        %v1937 = vsel %vm617, %v1878, %v1880
        %v1938 = vsel %vm617, %v1882, %v1884
        %v1939 = vsel %vm617, %v1886, %v1888
        %v1940 = vsel %vm617, %v1890, %v1892
        %v1941 = vsel %vm617, %v1894, %v1896
        %v1942 = vsel %vm617, %v1898, %v1900
        %v1943 = vsel %vm617, %v1902, %v1904
        %v1944 = vsel %vm617, %v1906, %v1908
        %v1945 = vsel %vm617, %v1910, %v1912
        %v1946 = vsel %vm617, %v1914, %v1916
        %v1947 = vsel %vm617, %v1918, %v1920
        %v1948 = vsel %vm617, %v1922, %v1924
        %v1949 = vsel %vm617, %v1926, %v1928
        %v1950 = vsel %vm617, %v1930, %v1932
        %v1951 = vsel %vm617, %v1934, %v1936
        %s1982 = scalar_lea.vmem [#allocation2], 1680
        %1983 = vst [vmem:[%s1982] sm:$0xff] %v1937
        %1984 = vst.msk [vmem:[%s1982 + $0x8] sm:$0xff] %vm466, %v1880
        %1985 = vst [vmem:[%s1982 + $0x10] sm:$0xff] %v1938
        %1986 = vst.msk [vmem:[%s1982 + $0x18] sm:$0xff] %vm466, %v1884
        %1987 = vst [vmem:[%s1982 + $0x20] sm:$0xff] %v1939
        %1988 = vst.msk [vmem:[%s1982 + $0x28] sm:$0xff] %vm466, %v1888
        %1989 = vst [vmem:[%s1982 + $0x30] sm:$0xff] %v1940
        %1990 = vst.msk [vmem:[%s1982 + $0x38] sm:$0xff] %vm466, %v1892
        %1991 = vst [vmem:[%s1982 + $0x40] sm:$0xff] %v1941
        %1992 = vst.msk [vmem:[%s1982 + $0x48] sm:$0xff] %vm466, %v1896
        %1993 = vst [vmem:[%s1982 + $0x50] sm:$0xff] %v1942
        %1994 = vst.msk [vmem:[%s1982 + $0x58] sm:$0xff] %vm466, %v1900
        %1995 = vst [vmem:[%s1982 + $0x60] sm:$0xff] %v1943
        %1996 = vst.msk [vmem:[%s1982 + $0x68] sm:$0xff] %vm466, %v1904
        %1997 = vst [vmem:[%s1982 + $0x70] sm:$0xff] %v1944
        %1998 = vst.msk [vmem:[%s1982 + $0x78] sm:$0xff] %vm466, %v1908
        %1999 = vst [vmem:[%s1982 + $0x80] sm:$0xff] %v1945
        %2000 = vst.msk [vmem:[%s1982 + $0x88] sm:$0xff] %vm466, %v1912
        %2001 = vst [vmem:[%s1982 + $0x90] sm:$0xff] %v1946
        %2002 = vst.msk [vmem:[%s1982 + $0x98] sm:$0xff] %vm466, %v1916
        %2003 = vst [vmem:[%s1982 + $0xa0] sm:$0xff] %v1947
        %2004 = vst.msk [vmem:[%s1982 + $0xa8] sm:$0xff] %vm466, %v1920
        %2005 = vst [vmem:[%s1982 + $0xb0] sm:$0xff] %v1948
        %2006 = vst.msk [vmem:[%s1982 + $0xb8] sm:$0xff] %vm466, %v1924
        %2007 = vst [vmem:[%s1982 + $0xc0] sm:$0xff] %v1949
        %2008 = vst.msk [vmem:[%s1982 + $0xc8] sm:$0xff] %vm466, %v1928
        %2009 = vst [vmem:[%s1982 + $0xd0] sm:$0xff] %v1950
        %2010 = vst.msk [vmem:[%s1982 + $0xd8] sm:$0xff] %vm466, %v1932
        %2011 = vst [vmem:[%s1982 + $0xe0] sm:$0x3f] %v1951
        %2012 = vst.msk [vmem:[%s1982 + $0xe8] sm:$0x3f] %vm495, %v1936
        %v2013 = vld [vmem:[%s429] sm:$0xfc]
        %v2014 = vld [vmem:[%s429 + $0x8] sm:$0xfc]
        %v2015 = vld [vmem:[%s429 + $0x10] sm:$0xff]
        %v2016 = vld [vmem:[%s429 + $0x18] sm:$0xff]
        %v2017 = vld [vmem:[%s429 + $0x20] sm:$0xff]
        %v2018 = vld [vmem:[%s429 + $0x28] sm:$0xff]
        %v2019 = vld [vmem:[%s429 + $0x30] sm:$0xff]
        %v2020 = vld [vmem:[%s429 + $0x38] sm:$0xff]
        %v2021 = vld [vmem:[%s429 + $0x40] sm:$0xff]
        %v2022 = vld [vmem:[%s429 + $0x48] sm:$0xff]
        %v2023 = vld [vmem:[%s429 + $0x50] sm:$0xff]
        %v2024 = vld [vmem:[%s429 + $0x58] sm:$0xff]
        %v2025 = vld [vmem:[%s429 + $0x60] sm:$0xff]
        %v2026 = vld [vmem:[%s429 + $0x68] sm:$0xff]
        %v2027 = vld [vmem:[%s429 + $0x70] sm:$0xff]
        %v2028 = vld [vmem:[%s429 + $0x78] sm:$0xff]
        %v2029 = vld [vmem:[%s429 + $0x80] sm:$0xff]
        %v2030 = vld [vmem:[%s429 + $0x88] sm:$0xff]
        %v2031 = vld [vmem:[%s429 + $0x90] sm:$0xff]
        %v2032 = vld [vmem:[%s429 + $0x98] sm:$0xff]
        %v2033 = vld [vmem:[%s429 + $0xa0] sm:$0xff]
        %v2034 = vld [vmem:[%s429 + $0xa8] sm:$0xff]
        %v2035 = vld [vmem:[%s429 + $0xb0] sm:$0xff]
        %v2036 = vld [vmem:[%s429 + $0xb8] sm:$0xff]
        %v2037 = vld [vmem:[%s429 + $0xc0] sm:$0xff]
        %v2038 = vld [vmem:[%s429 + $0xc8] sm:$0xff]
        %v2039 = vld [vmem:[%s429 + $0xd0] sm:$0xff]
        %v2040 = vld [vmem:[%s429 + $0xd8] sm:$0xff]
        %v2041 = vld [vmem:[%s429 + $0xe0] sm:$0xff]
        %v2042 = vld [vmem:[%s429 + $0xe8] sm:$0xff]
        %v2073 = vrot.slane %v2013, 2
        %v2074 = vrot.slane %v2015, 2
        %v2075 = vsel %vm1639, %v2073, %v2074
        %v2076 = vrot.slane %v2014, 2
        %v2077 = vrot.slane %v2016, 2
        %v2078 = vsel %vm1639, %v2076, %v2077
        %v2079 = vrot.slane %v2017, 2
        %v2080 = vsel %vm1639, %v2074, %v2079
        %v2081 = vrot.slane %v2018, 2
        %v2082 = vsel %vm1639, %v2077, %v2081
        %v2083 = vrot.slane %v2019, 2
        %v2084 = vsel %vm1639, %v2079, %v2083
        %v2085 = vrot.slane %v2020, 2
        %v2086 = vsel %vm1639, %v2081, %v2085
        %v2087 = vrot.slane %v2021, 2
        %v2088 = vsel %vm1639, %v2083, %v2087
        %v2089 = vrot.slane %v2022, 2
        %v2090 = vsel %vm1639, %v2085, %v2089
        %v2091 = vrot.slane %v2023, 2
        %v2092 = vsel %vm1639, %v2087, %v2091
        %v2093 = vrot.slane %v2024, 2
        %v2094 = vsel %vm1639, %v2089, %v2093
        %v2095 = vrot.slane %v2025, 2
        %v2096 = vsel %vm1639, %v2091, %v2095
        %v2097 = vrot.slane %v2026, 2
        %v2098 = vsel %vm1639, %v2093, %v2097
        %v2099 = vrot.slane %v2027, 2
        %v2100 = vsel %vm1639, %v2095, %v2099
        %v2101 = vrot.slane %v2028, 2
        %v2102 = vsel %vm1639, %v2097, %v2101
        %v2103 = vrot.slane %v2029, 2
        %v2104 = vsel %vm1639, %v2099, %v2103
        %v2105 = vrot.slane %v2030, 2
        %v2106 = vsel %vm1639, %v2101, %v2105
        %v2107 = vrot.slane %v2031, 2
        %v2108 = vsel %vm1639, %v2103, %v2107
        %v2109 = vrot.slane %v2032, 2
        %v2110 = vsel %vm1639, %v2105, %v2109
        %v2111 = vrot.slane %v2033, 2
        %v2112 = vsel %vm1639, %v2107, %v2111
        %v2113 = vrot.slane %v2034, 2
        %v2114 = vsel %vm1639, %v2109, %v2113
        %v2115 = vrot.slane %v2035, 2
        %v2116 = vsel %vm1639, %v2111, %v2115
        %v2117 = vrot.slane %v2036, 2
        %v2118 = vsel %vm1639, %v2113, %v2117
        %v2119 = vrot.slane %v2037, 2
        %v2120 = vsel %vm1639, %v2115, %v2119
        %v2121 = vrot.slane %v2038, 2
        %v2122 = vsel %vm1639, %v2117, %v2121
        %v2123 = vrot.slane %v2039, 2
        %v2124 = vsel %vm1639, %v2119, %v2123
        %v2125 = vrot.slane %v2040, 2
        %v2126 = vsel %vm1639, %v2121, %v2125
        %v2127 = vrot.slane %v2041, 2
        %v2128 = vsel %vm1639, %v2123, %v2127
        %v2129 = vrot.slane %v2042, 2
        %v2130 = vsel %vm1639, %v2125, %v2129
        %2131 = vrot.lane.b32.xlu0 %v2075, 126
        %v2132 = vpop.permute.xlu0 %2131
        %2133 = vrot.lane.b32.xlu0 %v2078, 126
        %v2134 = vpop.permute.xlu0 %2133
        %2135 = vrot.lane.b32.xlu0 %v2080, 126
        %v2136 = vpop.permute.xlu0 %2135
        %2137 = vrot.lane.b32.xlu0 %v2082, 126
        %v2138 = vpop.permute.xlu0 %2137
        %2139 = vrot.lane.b32.xlu0 %v2084, 126
        %v2140 = vpop.permute.xlu0 %2139
        %2141 = vrot.lane.b32.xlu0 %v2086, 126
        %v2142 = vpop.permute.xlu0 %2141
        %2143 = vrot.lane.b32.xlu0 %v2088, 126
        %v2144 = vpop.permute.xlu0 %2143
        %2145 = vrot.lane.b32.xlu0 %v2090, 126
        %v2146 = vpop.permute.xlu0 %2145
        %2147 = vrot.lane.b32.xlu0 %v2092, 126
        %v2148 = vpop.permute.xlu0 %2147
        %2149 = vrot.lane.b32.xlu0 %v2094, 126
        %v2150 = vpop.permute.xlu0 %2149
        %2151 = vrot.lane.b32.xlu0 %v2096, 126
        %v2152 = vpop.permute.xlu0 %2151
        %2153 = vrot.lane.b32.xlu0 %v2098, 126
        %v2154 = vpop.permute.xlu0 %2153
        %2155 = vrot.lane.b32.xlu0 %v2100, 126
        %v2156 = vpop.permute.xlu0 %2155
        %2157 = vrot.lane.b32.xlu0 %v2102, 126
        %v2158 = vpop.permute.xlu0 %2157
        %2159 = vrot.lane.b32.xlu0 %v2104, 126
        %v2160 = vpop.permute.xlu0 %2159
        %2161 = vrot.lane.b32.xlu0 %v2106, 126
        %v2162 = vpop.permute.xlu0 %2161
        %2163 = vrot.lane.b32.xlu0 %v2108, 126
        %v2164 = vpop.permute.xlu0 %2163
        %2165 = vrot.lane.b32.xlu0 %v2110, 126
        %v2166 = vpop.permute.xlu0 %2165
        %2167 = vrot.lane.b32.xlu0 %v2112, 126
        %v2168 = vpop.permute.xlu0 %2167
        %2169 = vrot.lane.b32.xlu0 %v2114, 126
        %v2170 = vpop.permute.xlu0 %2169
        %2171 = vrot.lane.b32.xlu0 %v2116, 126
        %v2172 = vpop.permute.xlu0 %2171
        %2173 = vrot.lane.b32.xlu0 %v2118, 126
        %v2174 = vpop.permute.xlu0 %2173
        %2175 = vrot.lane.b32.xlu0 %v2120, 126
        %v2176 = vpop.permute.xlu0 %2175
        %2177 = vrot.lane.b32.xlu0 %v2122, 126
        %v2178 = vpop.permute.xlu0 %2177
        %2179 = vrot.lane.b32.xlu0 %v2124, 126
        %v2180 = vpop.permute.xlu0 %2179
        %2181 = vrot.lane.b32.xlu0 %v2126, 126
        %v2182 = vpop.permute.xlu0 %2181
        %2183 = vrot.lane.b32.xlu0 %v2128, 126
        %v2184 = vpop.permute.xlu0 %2183
        %2185 = vrot.lane.b32.xlu0 %v2130, 126
        %v2186 = vpop.permute.xlu0 %2185
        %2187 = vrot.lane.b32.xlu0 %v2127, 126
        %v2188 = vpop.permute.xlu0 %2187
        %2189 = vrot.lane.b32.xlu0 %v2129, 126
        %v2190 = vpop.permute.xlu0 %2189
        %v2191 = vsel %vm814, %v2132, %v2134
        %v2192 = vsel %vm814, %v2136, %v2138
        %v2193 = vsel %vm814, %v2140, %v2142
        %v2194 = vsel %vm814, %v2144, %v2146
        %v2195 = vsel %vm814, %v2148, %v2150
        %v2196 = vsel %vm814, %v2152, %v2154
        %v2197 = vsel %vm814, %v2156, %v2158
        %v2198 = vsel %vm814, %v2160, %v2162
        %v2199 = vsel %vm814, %v2164, %v2166
        %v2200 = vsel %vm814, %v2168, %v2170
        %v2201 = vsel %vm814, %v2172, %v2174
        %v2202 = vsel %vm814, %v2176, %v2178
        %v2203 = vsel %vm814, %v2180, %v2182
        %v2204 = vsel %vm814, %v2184, %v2186
        %v2205 = vsel %vm814, %v2188, %v2190
        %s2236 = scalar_lea.vmem [#allocation2], 1920
        %2237 = vst [vmem:[%s2236] sm:$0xff] %v2191
        %2238 = vst.msk [vmem:[%s2236 + $0x8] sm:$0xff] %vm466, %v2134
        %2239 = vst [vmem:[%s2236 + $0x10] sm:$0xff] %v2192
        %2240 = vst.msk [vmem:[%s2236 + $0x18] sm:$0xff] %vm466, %v2138
        %2241 = vst [vmem:[%s2236 + $0x20] sm:$0xff] %v2193
        %2242 = vst.msk [vmem:[%s2236 + $0x28] sm:$0xff] %vm466, %v2142
        %2243 = vst [vmem:[%s2236 + $0x30] sm:$0xff] %v2194
        %2244 = vst.msk [vmem:[%s2236 + $0x38] sm:$0xff] %vm466, %v2146
        %2245 = vst [vmem:[%s2236 + $0x40] sm:$0xff] %v2195
        %2246 = vst.msk [vmem:[%s2236 + $0x48] sm:$0xff] %vm466, %v2150
        %2247 = vst [vmem:[%s2236 + $0x50] sm:$0xff] %v2196
        %2248 = vst.msk [vmem:[%s2236 + $0x58] sm:$0xff] %vm466, %v2154
        %2249 = vst [vmem:[%s2236 + $0x60] sm:$0xff] %v2197
        %2250 = vst.msk [vmem:[%s2236 + $0x68] sm:$0xff] %vm466, %v2158
        %2251 = vst [vmem:[%s2236 + $0x70] sm:$0xff] %v2198
        %2252 = vst.msk [vmem:[%s2236 + $0x78] sm:$0xff] %vm466, %v2162
        %2253 = vst [vmem:[%s2236 + $0x80] sm:$0xff] %v2199
        %2254 = vst.msk [vmem:[%s2236 + $0x88] sm:$0xff] %vm466, %v2166
        %2255 = vst [vmem:[%s2236 + $0x90] sm:$0xff] %v2200
        %2256 = vst.msk [vmem:[%s2236 + $0x98] sm:$0xff] %vm466, %v2170
        %2257 = vst [vmem:[%s2236 + $0xa0] sm:$0xff] %v2201
        %2258 = vst.msk [vmem:[%s2236 + $0xa8] sm:$0xff] %vm466, %v2174
        %2259 = vst [vmem:[%s2236 + $0xb0] sm:$0xff] %v2202
        %2260 = vst.msk [vmem:[%s2236 + $0xb8] sm:$0xff] %vm466, %v2178
        %2261 = vst [vmem:[%s2236 + $0xc0] sm:$0xff] %v2203
        %2262 = vst.msk [vmem:[%s2236 + $0xc8] sm:$0xff] %vm466, %v2182
        %2263 = vst [vmem:[%s2236 + $0xd0] sm:$0xff] %v2204
        %2264 = vst.msk [vmem:[%s2236 + $0xd8] sm:$0xff] %vm466, %v2186
        %2265 = vst [vmem:[%s2236 + $0xe0] sm:$0x3f] %v2205
        %2266 = vst.msk [vmem:[%s2236 + $0xe8] sm:$0x3f] %vm495, %v2190
        loop: start=0, step=1, limit=8
        $region85: #{model_forward.2} parent=55 // loop_pre_header
          _
        $region86: #{model_forward.2} parent=55 // loop_header
          %s2268 = sphi 0, %s2272
          %p2269 = scmp.ge.s32.totalorder %s2268, 8
        $region87: #{model_forward.2} parent=55 // loop_header_branch
          %2271 = sbr.rel (%p2269) target = $region91
        $region88: #{model_forward.2} parent=55 // loop_body
          %s2273 = smul.u32 %s2268, 128
          %s2274 = sld [smem:[#allocation10 + %s2273]]
          %v2275 = vld [vmem:[#allocation2] sm:$0xff]
          %v2276 = vld [vmem:[#allocation2 + $0x8] sm:$0xff]
          %v2277 = vld [vmem:[#allocation2 + $0x10] sm:$0xff]
          %v2278 = vld [vmem:[#allocation2 + $0x18] sm:$0xff]
          %v2279 = vld [vmem:[#allocation2 + $0x20] sm:$0xff]
          %v2280 = vld [vmem:[#allocation2 + $0x28] sm:$0xff]
          %v2281 = vld [vmem:[#allocation2 + $0x30] sm:$0xff]
          %v2282 = vld [vmem:[#allocation2 + $0x38] sm:$0xff]
          %v2283 = vld [vmem:[#allocation2 + $0x40] sm:$0xff]
          %v2284 = vld [vmem:[#allocation2 + $0x48] sm:$0xff]
          %v2285 = vld [vmem:[#allocation2 + $0x50] sm:$0xff]
          %v2286 = vld [vmem:[#allocation2 + $0x58] sm:$0xff]
          %v2287 = vld [vmem:[#allocation2 + $0x60] sm:$0xff]
          %v2288 = vld [vmem:[#allocation2 + $0x68] sm:$0xff]
          %v2289 = vld [vmem:[#allocation2 + $0x70] sm:$0xff]
          %v2290 = vld [vmem:[#allocation2 + $0x78] sm:$0xff]
          %v2291 = vld [vmem:[#allocation2 + $0x80] sm:$0xff]
          %v2292 = vld [vmem:[#allocation2 + $0x88] sm:$0xff]
          %v2293 = vld [vmem:[#allocation2 + $0x90] sm:$0xff]
          %v2294 = vld [vmem:[#allocation2 + $0x98] sm:$0xff]
          %v2295 = vld [vmem:[#allocation2 + $0xa0] sm:$0xff]
          %v2296 = vld [vmem:[#allocation2 + $0xa8] sm:$0xff]
          %v2297 = vld [vmem:[#allocation2 + $0xb0] sm:$0xff]
          %v2298 = vld [vmem:[#allocation2 + $0xb8] sm:$0xff]
          %v2299 = vld [vmem:[#allocation2 + $0xc0] sm:$0xff]
          %v2300 = vld [vmem:[#allocation2 + $0xc8] sm:$0xff]
          %v2301 = vld [vmem:[#allocation2 + $0xd0] sm:$0xff]
          %v2302 = vld [vmem:[#allocation2 + $0xd8] sm:$0xff]
          %v2303 = vld [vmem:[#allocation2 + $0xe0] sm:$0x3f]
          %v2304 = vld [vmem:[#allocation2 + $0xe8] sm:$0x3f]
          %v2305 = vstv %s2274
          %v2306 = vmul.f32 %v2305, %v2275
          %v2307 = vmul.f32 %v2305, %v2276
          %v2308 = vmul.f32 %v2305, %v2277
          %v2309 = vmul.f32 %v2305, %v2278
          %v2310 = vmul.f32 %v2305, %v2279
          %v2311 = vmul.f32 %v2305, %v2280
          %v2312 = vmul.f32 %v2305, %v2281
          %v2313 = vmul.f32 %v2305, %v2282
          %v2314 = vmul.f32 %v2305, %v2283
          %v2315 = vmul.f32 %v2305, %v2284
          %v2316 = vmul.f32 %v2305, %v2285
          %v2317 = vmul.f32 %v2305, %v2286
          %v2318 = vmul.f32 %v2305, %v2287
          %v2319 = vmul.f32 %v2305, %v2288
          %v2320 = vmul.f32 %v2305, %v2289
          %v2321 = vmul.f32 %v2305, %v2290
          %v2322 = vmul.f32 %v2305, %v2291
          %v2323 = vmul.f32 %v2305, %v2292
          %v2324 = vmul.f32 %v2305, %v2293
          %v2325 = vmul.f32 %v2305, %v2294
          %v2326 = vmul.f32 %v2305, %v2295
          %v2327 = vmul.f32 %v2305, %v2296
          %v2328 = vmul.f32 %v2305, %v2297
          %v2329 = vmul.f32 %v2305, %v2298
          %v2330 = vmul.f32 %v2305, %v2299
          %v2331 = vmul.f32 %v2305, %v2300
          %v2332 = vmul.f32 %v2305, %v2301
          %v2333 = vmul.f32 %v2305, %v2302
          %v2334 = vmul.f32 %v2305, %v2303
          %v2335 = vmul.f32 %v2305, %v2304
          %s2336 = sadd.s32 %s2273, 1
          %s2337 = sld [smem:[#allocation10 + %s2336]]
          %v2338 = vld [vmem:[%s663] sm:$0xff]
          %v2339 = vld [vmem:[%s663 + $0x8] sm:$0xff]
          %v2340 = vld [vmem:[%s663 + $0x10] sm:$0xff]
          %v2341 = vld [vmem:[%s663 + $0x18] sm:$0xff]
          %v2342 = vld [vmem:[%s663 + $0x20] sm:$0xff]
          %v2343 = vld [vmem:[%s663 + $0x28] sm:$0xff]
          %v2344 = vld [vmem:[%s663 + $0x30] sm:$0xff]
          %v2345 = vld [vmem:[%s663 + $0x38] sm:$0xff]
          %v2346 = vld [vmem:[%s663 + $0x40] sm:$0xff]
          %v2347 = vld [vmem:[%s663 + $0x48] sm:$0xff]
          %v2348 = vld [vmem:[%s663 + $0x50] sm:$0xff]
          %v2349 = vld [vmem:[%s663 + $0x58] sm:$0xff]
          %v2350 = vld [vmem:[%s663 + $0x60] sm:$0xff]
          %v2351 = vld [vmem:[%s663 + $0x68] sm:$0xff]
          %v2352 = vld [vmem:[%s663 + $0x70] sm:$0xff]
          %v2353 = vld [vmem:[%s663 + $0x78] sm:$0xff]
          %v2354 = vld [vmem:[%s663 + $0x80] sm:$0xff]
          %v2355 = vld [vmem:[%s663 + $0x88] sm:$0xff]
          %v2356 = vld [vmem:[%s663 + $0x90] sm:$0xff]
          %v2357 = vld [vmem:[%s663 + $0x98] sm:$0xff]
          %v2358 = vld [vmem:[%s663 + $0xa0] sm:$0xff]
          %v2359 = vld [vmem:[%s663 + $0xa8] sm:$0xff]
          %v2360 = vld [vmem:[%s663 + $0xb0] sm:$0xff]
          %v2361 = vld [vmem:[%s663 + $0xb8] sm:$0xff]
          %v2362 = vld [vmem:[%s663 + $0xc0] sm:$0xff]
          %v2363 = vld [vmem:[%s663 + $0xc8] sm:$0xff]
          %v2364 = vld [vmem:[%s663 + $0xd0] sm:$0xff]
          %v2365 = vld [vmem:[%s663 + $0xd8] sm:$0xff]
          %v2366 = vld [vmem:[%s663 + $0xe0] sm:$0x3f]
          %v2367 = vld [vmem:[%s663 + $0xe8] sm:$0x3f]
          %v2368 = vstv %s2337
          %v2369 = vmul.f32 %v2368, %v2338
          %v2370 = vmul.f32 %v2368, %v2339
          %v2371 = vmul.f32 %v2368, %v2340
          %v2372 = vmul.f32 %v2368, %v2341
          %v2373 = vmul.f32 %v2368, %v2342
          %v2374 = vmul.f32 %v2368, %v2343
          %v2375 = vmul.f32 %v2368, %v2344
          %v2376 = vmul.f32 %v2368, %v2345
          %v2377 = vmul.f32 %v2368, %v2346
          %v2378 = vmul.f32 %v2368, %v2347
          %v2379 = vmul.f32 %v2368, %v2348
          %v2380 = vmul.f32 %v2368, %v2349
          %v2381 = vmul.f32 %v2368, %v2350
          %v2382 = vmul.f32 %v2368, %v2351
          %v2383 = vmul.f32 %v2368, %v2352
          %v2384 = vmul.f32 %v2368, %v2353
          %v2385 = vmul.f32 %v2368, %v2354
          %v2386 = vmul.f32 %v2368, %v2355
          %v2387 = vmul.f32 %v2368, %v2356
          %v2388 = vmul.f32 %v2368, %v2357
          %v2389 = vmul.f32 %v2368, %v2358
          %v2390 = vmul.f32 %v2368, %v2359
          %v2391 = vmul.f32 %v2368, %v2360
          %v2392 = vmul.f32 %v2368, %v2361
          %v2393 = vmul.f32 %v2368, %v2362
          %v2394 = vmul.f32 %v2368, %v2363
          %v2395 = vmul.f32 %v2368, %v2364
          %v2396 = vmul.f32 %v2368, %v2365
          %v2397 = vmul.f32 %v2368, %v2366
          %v2398 = vmul.f32 %v2368, %v2367
          %v2399 = vadd.f32 %v2306, %v2369
          %v2400 = vadd.f32 %v2307, %v2370
          %v2401 = vadd.f32 %v2308, %v2371
          %v2402 = vadd.f32 %v2309, %v2372
          %v2403 = vadd.f32 %v2310, %v2373
          %v2404 = vadd.f32 %v2311, %v2374
          %v2405 = vadd.f32 %v2312, %v2375
          %v2406 = vadd.f32 %v2313, %v2376
          %v2407 = vadd.f32 %v2314, %v2377
          %v2408 = vadd.f32 %v2315, %v2378
          %v2409 = vadd.f32 %v2316, %v2379
          %v2410 = vadd.f32 %v2317, %v2380
          %v2411 = vadd.f32 %v2318, %v2381
          %v2412 = vadd.f32 %v2319, %v2382
          %v2413 = vadd.f32 %v2320, %v2383
          %v2414 = vadd.f32 %v2321, %v2384
          %v2415 = vadd.f32 %v2322, %v2385
          %v2416 = vadd.f32 %v2323, %v2386
          %v2417 = vadd.f32 %v2324, %v2387
          %v2418 = vadd.f32 %v2325, %v2388
          %v2419 = vadd.f32 %v2326, %v2389
          %v2420 = vadd.f32 %v2327, %v2390
          %v2421 = vadd.f32 %v2328, %v2391
          %v2422 = vadd.f32 %v2329, %v2392
          %v2423 = vadd.f32 %v2330, %v2393
          %v2424 = vadd.f32 %v2331, %v2394
          %v2425 = vadd.f32 %v2332, %v2395
          %v2426 = vadd.f32 %v2333, %v2396
          %v2427 = vadd.f32 %v2334, %v2397
          %v2428 = vadd.f32 %v2335, %v2398
          %s2429 = sadd.s32 %s2273, 2
          %s2430 = sld [smem:[#allocation10 + %s2429]]
          %v2431 = vld [vmem:[%s860] sm:$0xff]
          %v2432 = vld [vmem:[%s860 + $0x8] sm:$0xff]
          %v2433 = vld [vmem:[%s860 + $0x10] sm:$0xff]
          %v2434 = vld [vmem:[%s860 + $0x18] sm:$0xff]
          %v2435 = vld [vmem:[%s860 + $0x20] sm:$0xff]
          %v2436 = vld [vmem:[%s860 + $0x28] sm:$0xff]
          %v2437 = vld [vmem:[%s860 + $0x30] sm:$0xff]
          %v2438 = vld [vmem:[%s860 + $0x38] sm:$0xff]
          %v2439 = vld [vmem:[%s860 + $0x40] sm:$0xff]
          %v2440 = vld [vmem:[%s860 + $0x48] sm:$0xff]
          %v2441 = vld [vmem:[%s860 + $0x50] sm:$0xff]
          %v2442 = vld [vmem:[%s860 + $0x58] sm:$0xff]
          %v2443 = vld [vmem:[%s860 + $0x60] sm:$0xff]
          %v2444 = vld [vmem:[%s860 + $0x68] sm:$0xff]
          %v2445 = vld [vmem:[%s860 + $0x70] sm:$0xff]
          %v2446 = vld [vmem:[%s860 + $0x78] sm:$0xff]
          %v2447 = vld [vmem:[%s860 + $0x80] sm:$0xff]
          %v2448 = vld [vmem:[%s860 + $0x88] sm:$0xff]
          %v2449 = vld [vmem:[%s860 + $0x90] sm:$0xff]
          %v2450 = vld [vmem:[%s860 + $0x98] sm:$0xff]
          %v2451 = vld [vmem:[%s860 + $0xa0] sm:$0xff]
          %v2452 = vld [vmem:[%s860 + $0xa8] sm:$0xff]
          %v2453 = vld [vmem:[%s860 + $0xb0] sm:$0xff]
          %v2454 = vld [vmem:[%s860 + $0xb8] sm:$0xff]
          %v2455 = vld [vmem:[%s860 + $0xc0] sm:$0xff]
          %v2456 = vld [vmem:[%s860 + $0xc8] sm:$0xff]
          %v2457 = vld [vmem:[%s860 + $0xd0] sm:$0xff]
          %v2458 = vld [vmem:[%s860 + $0xd8] sm:$0xff]
          %v2459 = vld [vmem:[%s860 + $0xe0] sm:$0x3f]
          %v2460 = vld [vmem:[%s860 + $0xe8] sm:$0x3f]
          %v2461 = vstv %s2430
          %v2462 = vmul.f32 %v2461, %v2431
          %v2463 = vmul.f32 %v2461, %v2432
          %v2464 = vmul.f32 %v2461, %v2433
          %v2465 = vmul.f32 %v2461, %v2434
          %v2466 = vmul.f32 %v2461, %v2435
          %v2467 = vmul.f32 %v2461, %v2436
          %v2468 = vmul.f32 %v2461, %v2437
          %v2469 = vmul.f32 %v2461, %v2438
          %v2470 = vmul.f32 %v2461, %v2439
          %v2471 = vmul.f32 %v2461, %v2440
          %v2472 = vmul.f32 %v2461, %v2441
          %v2473 = vmul.f32 %v2461, %v2442
          %v2474 = vmul.f32 %v2461, %v2443
          %v2475 = vmul.f32 %v2461, %v2444
          %v2476 = vmul.f32 %v2461, %v2445
          %v2477 = vmul.f32 %v2461, %v2446
          %v2478 = vmul.f32 %v2461, %v2447
          %v2479 = vmul.f32 %v2461, %v2448
          %v2480 = vmul.f32 %v2461, %v2449
          %v2481 = vmul.f32 %v2461, %v2450
          %v2482 = vmul.f32 %v2461, %v2451
          %v2483 = vmul.f32 %v2461, %v2452
          %v2484 = vmul.f32 %v2461, %v2453
          %v2485 = vmul.f32 %v2461, %v2454
          %v2486 = vmul.f32 %v2461, %v2455
          %v2487 = vmul.f32 %v2461, %v2456
          %v2488 = vmul.f32 %v2461, %v2457
          %v2489 = vmul.f32 %v2461, %v2458
          %v2490 = vmul.f32 %v2461, %v2459
          %v2491 = vmul.f32 %v2461, %v2460
          %v2492 = vadd.f32 %v2399, %v2462
          %v2493 = vadd.f32 %v2400, %v2463
          %v2494 = vadd.f32 %v2401, %v2464
          %v2495 = vadd.f32 %v2402, %v2465
          %v2496 = vadd.f32 %v2403, %v2466
          %v2497 = vadd.f32 %v2404, %v2467
          %v2498 = vadd.f32 %v2405, %v2468
          %v2499 = vadd.f32 %v2406, %v2469
          %v2500 = vadd.f32 %v2407, %v2470
          %v2501 = vadd.f32 %v2408, %v2471
          %v2502 = vadd.f32 %v2409, %v2472
          %v2503 = vadd.f32 %v2410, %v2473
          %v2504 = vadd.f32 %v2411, %v2474
          %v2505 = vadd.f32 %v2412, %v2475
          %v2506 = vadd.f32 %v2413, %v2476
          %v2507 = vadd.f32 %v2414, %v2477
          %v2508 = vadd.f32 %v2415, %v2478
          %v2509 = vadd.f32 %v2416, %v2479
          %v2510 = vadd.f32 %v2417, %v2480
          %v2511 = vadd.f32 %v2418, %v2481
          %v2512 = vadd.f32 %v2419, %v2482
          %v2513 = vadd.f32 %v2420, %v2483
          %v2514 = vadd.f32 %v2421, %v2484
          %v2515 = vadd.f32 %v2422, %v2485
          %v2516 = vadd.f32 %v2423, %v2486
          %v2517 = vadd.f32 %v2424, %v2487
          %v2518 = vadd.f32 %v2425, %v2488
          %v2519 = vadd.f32 %v2426, %v2489
          %v2520 = vadd.f32 %v2427, %v2490
          %v2521 = vadd.f32 %v2428, %v2491
          %s2522 = sadd.s32 %s2273, 3
          %s2523 = sld [smem:[#allocation10 + %s2522]]
          %v2524 = vld [vmem:[%s1040] sm:$0xff]
          %v2525 = vld [vmem:[%s1040 + $0x8] sm:$0xff]
          %v2526 = vld [vmem:[%s1040 + $0x10] sm:$0xff]
          %v2527 = vld [vmem:[%s1040 + $0x18] sm:$0xff]
          %v2528 = vld [vmem:[%s1040 + $0x20] sm:$0xff]
          %v2529 = vld [vmem:[%s1040 + $0x28] sm:$0xff]
          %v2530 = vld [vmem:[%s1040 + $0x30] sm:$0xff]
          %v2531 = vld [vmem:[%s1040 + $0x38] sm:$0xff]
          %v2532 = vld [vmem:[%s1040 + $0x40] sm:$0xff]
          %v2533 = vld [vmem:[%s1040 + $0x48] sm:$0xff]
          %v2534 = vld [vmem:[%s1040 + $0x50] sm:$0xff]
          %v2535 = vld [vmem:[%s1040 + $0x58] sm:$0xff]
          %v2536 = vld [vmem:[%s1040 + $0x60] sm:$0xff]
          %v2537 = vld [vmem:[%s1040 + $0x68] sm:$0xff]
          %v2538 = vld [vmem:[%s1040 + $0x70] sm:$0xff]
          %v2539 = vld [vmem:[%s1040 + $0x78] sm:$0xff]
          %v2540 = vld [vmem:[%s1040 + $0x80] sm:$0xff]
          %v2541 = vld [vmem:[%s1040 + $0x88] sm:$0xff]
          %v2542 = vld [vmem:[%s1040 + $0x90] sm:$0xff]
          %v2543 = vld [vmem:[%s1040 + $0x98] sm:$0xff]
          %v2544 = vld [vmem:[%s1040 + $0xa0] sm:$0xff]
          %v2545 = vld [vmem:[%s1040 + $0xa8] sm:$0xff]
          %v2546 = vld [vmem:[%s1040 + $0xb0] sm:$0xff]
          %v2547 = vld [vmem:[%s1040 + $0xb8] sm:$0xff]
          %v2548 = vld [vmem:[%s1040 + $0xc0] sm:$0xff]
          %v2549 = vld [vmem:[%s1040 + $0xc8] sm:$0xff]
          %v2550 = vld [vmem:[%s1040 + $0xd0] sm:$0xff]
          %v2551 = vld [vmem:[%s1040 + $0xd8] sm:$0xff]
          %v2552 = vld [vmem:[%s1040 + $0xe0] sm:$0x3f]
          %v2553 = vld [vmem:[%s1040 + $0xe8] sm:$0x3f]
          %v2554 = vstv %s2523
          %v2555 = vmul.f32 %v2554, %v2524
          %v2556 = vmul.f32 %v2554, %v2525
          %v2557 = vmul.f32 %v2554, %v2526
          %v2558 = vmul.f32 %v2554, %v2527
          %v2559 = vmul.f32 %v2554, %v2528
          %v2560 = vmul.f32 %v2554, %v2529
          %v2561 = vmul.f32 %v2554, %v2530
          %v2562 = vmul.f32 %v2554, %v2531
          %v2563 = vmul.f32 %v2554, %v2532
          %v2564 = vmul.f32 %v2554, %v2533
          %v2565 = vmul.f32 %v2554, %v2534
          %v2566 = vmul.f32 %v2554, %v2535
          %v2567 = vmul.f32 %v2554, %v2536
          %v2568 = vmul.f32 %v2554, %v2537
          %v2569 = vmul.f32 %v2554, %v2538
          %v2570 = vmul.f32 %v2554, %v2539
          %v2571 = vmul.f32 %v2554, %v2540
          %v2572 = vmul.f32 %v2554, %v2541
          %v2573 = vmul.f32 %v2554, %v2542
          %v2574 = vmul.f32 %v2554, %v2543
          %v2575 = vmul.f32 %v2554, %v2544
          %v2576 = vmul.f32 %v2554, %v2545
          %v2577 = vmul.f32 %v2554, %v2546
          %v2578 = vmul.f32 %v2554, %v2547
          %v2579 = vmul.f32 %v2554, %v2548
          %v2580 = vmul.f32 %v2554, %v2549
          %v2581 = vmul.f32 %v2554, %v2550
          %v2582 = vmul.f32 %v2554, %v2551
          %v2583 = vmul.f32 %v2554, %v2552
          %v2584 = vmul.f32 %v2554, %v2553
          %v2585 = vadd.f32 %v2492, %v2555
          %v2586 = vadd.f32 %v2493, %v2556
          %v2587 = vadd.f32 %v2494, %v2557
          %v2588 = vadd.f32 %v2495, %v2558
          %v2589 = vadd.f32 %v2496, %v2559
          %v2590 = vadd.f32 %v2497, %v2560
          %v2591 = vadd.f32 %v2498, %v2561
          %v2592 = vadd.f32 %v2499, %v2562
          %v2593 = vadd.f32 %v2500, %v2563
          %v2594 = vadd.f32 %v2501, %v2564
          %v2595 = vadd.f32 %v2502, %v2565
          %v2596 = vadd.f32 %v2503, %v2566
          %v2597 = vadd.f32 %v2504, %v2567
          %v2598 = vadd.f32 %v2505, %v2568
          %v2599 = vadd.f32 %v2506, %v2569
          %v2600 = vadd.f32 %v2507, %v2570
          %v2601 = vadd.f32 %v2508, %v2571
          %v2602 = vadd.f32 %v2509, %v2572
          %v2603 = vadd.f32 %v2510, %v2573
          %v2604 = vadd.f32 %v2511, %v2574
          %v2605 = vadd.f32 %v2512, %v2575
          %v2606 = vadd.f32 %v2513, %v2576
          %v2607 = vadd.f32 %v2514, %v2577
          %v2608 = vadd.f32 %v2515, %v2578
          %v2609 = vadd.f32 %v2516, %v2579
          %v2610 = vadd.f32 %v2517, %v2580
          %v2611 = vadd.f32 %v2518, %v2581
          %v2612 = vadd.f32 %v2519, %v2582
          %v2613 = vadd.f32 %v2520, %v2583
          %v2614 = vadd.f32 %v2521, %v2584
          %s2615 = sadd.s32 %s2273, 4
          %s2616 = sld [smem:[#allocation10 + %s2615]]
          %v2617 = vld [vmem:[%s1294] sm:$0xff]
          %v2618 = vld [vmem:[%s1294 + $0x8] sm:$0xff]
          %v2619 = vld [vmem:[%s1294 + $0x10] sm:$0xff]
          %v2620 = vld [vmem:[%s1294 + $0x18] sm:$0xff]
          %v2621 = vld [vmem:[%s1294 + $0x20] sm:$0xff]
          %v2622 = vld [vmem:[%s1294 + $0x28] sm:$0xff]
          %v2623 = vld [vmem:[%s1294 + $0x30] sm:$0xff]
          %v2624 = vld [vmem:[%s1294 + $0x38] sm:$0xff]
          %v2625 = vld [vmem:[%s1294 + $0x40] sm:$0xff]
          %v2626 = vld [vmem:[%s1294 + $0x48] sm:$0xff]
          %v2627 = vld [vmem:[%s1294 + $0x50] sm:$0xff]
          %v2628 = vld [vmem:[%s1294 + $0x58] sm:$0xff]
          %v2629 = vld [vmem:[%s1294 + $0x60] sm:$0xff]
          %v2630 = vld [vmem:[%s1294 + $0x68] sm:$0xff]
          %v2631 = vld [vmem:[%s1294 + $0x70] sm:$0xff]
          %v2632 = vld [vmem:[%s1294 + $0x78] sm:$0xff]
          %v2633 = vld [vmem:[%s1294 + $0x80] sm:$0xff]
          %v2634 = vld [vmem:[%s1294 + $0x88] sm:$0xff]
          %v2635 = vld [vmem:[%s1294 + $0x90] sm:$0xff]
          %v2636 = vld [vmem:[%s1294 + $0x98] sm:$0xff]
          %v2637 = vld [vmem:[%s1294 + $0xa0] sm:$0xff]
          %v2638 = vld [vmem:[%s1294 + $0xa8] sm:$0xff]
          %v2639 = vld [vmem:[%s1294 + $0xb0] sm:$0xff]
          %v2640 = vld [vmem:[%s1294 + $0xb8] sm:$0xff]
          %v2641 = vld [vmem:[%s1294 + $0xc0] sm:$0xff]
          %v2642 = vld [vmem:[%s1294 + $0xc8] sm:$0xff]
          %v2643 = vld [vmem:[%s1294 + $0xd0] sm:$0xff]
          %v2644 = vld [vmem:[%s1294 + $0xd8] sm:$0xff]
          %v2645 = vld [vmem:[%s1294 + $0xe0] sm:$0x3f]
          %v2646 = vld [vmem:[%s1294 + $0xe8] sm:$0x3f]
          %v2647 = vstv %s2616
          %v2648 = vmul.f32 %v2647, %v2617
          %v2649 = vmul.f32 %v2647, %v2618
          %v2650 = vmul.f32 %v2647, %v2619
          %v2651 = vmul.f32 %v2647, %v2620
          %v2652 = vmul.f32 %v2647, %v2621
          %v2653 = vmul.f32 %v2647, %v2622
          %v2654 = vmul.f32 %v2647, %v2623
          %v2655 = vmul.f32 %v2647, %v2624
          %v2656 = vmul.f32 %v2647, %v2625
          %v2657 = vmul.f32 %v2647, %v2626
          %v2658 = vmul.f32 %v2647, %v2627
          %v2659 = vmul.f32 %v2647, %v2628
          %v2660 = vmul.f32 %v2647, %v2629
          %v2661 = vmul.f32 %v2647, %v2630
          %v2662 = vmul.f32 %v2647, %v2631
          %v2663 = vmul.f32 %v2647, %v2632
          %v2664 = vmul.f32 %v2647, %v2633
          %v2665 = vmul.f32 %v2647, %v2634
          %v2666 = vmul.f32 %v2647, %v2635
          %v2667 = vmul.f32 %v2647, %v2636
          %v2668 = vmul.f32 %v2647, %v2637
          %v2669 = vmul.f32 %v2647, %v2638
          %v2670 = vmul.f32 %v2647, %v2639
          %v2671 = vmul.f32 %v2647, %v2640
          %v2672 = vmul.f32 %v2647, %v2641
          %v2673 = vmul.f32 %v2647, %v2642
          %v2674 = vmul.f32 %v2647, %v2643
          %v2675 = vmul.f32 %v2647, %v2644
          %v2676 = vmul.f32 %v2647, %v2645
          %v2677 = vmul.f32 %v2647, %v2646
          %v2678 = vadd.f32 %v2585, %v2648
          %v2679 = vadd.f32 %v2586, %v2649
          %v2680 = vadd.f32 %v2587, %v2650
          %v2681 = vadd.f32 %v2588, %v2651
          %v2682 = vadd.f32 %v2589, %v2652
          %v2683 = vadd.f32 %v2590, %v2653
          %v2684 = vadd.f32 %v2591, %v2654
          %v2685 = vadd.f32 %v2592, %v2655
          %v2686 = vadd.f32 %v2593, %v2656
          %v2687 = vadd.f32 %v2594, %v2657
          %v2688 = vadd.f32 %v2595, %v2658
          %v2689 = vadd.f32 %v2596, %v2659
          %v2690 = vadd.f32 %v2597, %v2660
          %v2691 = vadd.f32 %v2598, %v2661
          %v2692 = vadd.f32 %v2599, %v2662
          %v2693 = vadd.f32 %v2600, %v2663
          %v2694 = vadd.f32 %v2601, %v2664
          %v2695 = vadd.f32 %v2602, %v2665
          %v2696 = vadd.f32 %v2603, %v2666
          %v2697 = vadd.f32 %v2604, %v2667
          %v2698 = vadd.f32 %v2605, %v2668
          %v2699 = vadd.f32 %v2606, %v2669
          %v2700 = vadd.f32 %v2607, %v2670
          %v2701 = vadd.f32 %v2608, %v2671
          %v2702 = vadd.f32 %v2609, %v2672
          %v2703 = vadd.f32 %v2610, %v2673
          %v2704 = vadd.f32 %v2611, %v2674
          %v2705 = vadd.f32 %v2612, %v2675
          %v2706 = vadd.f32 %v2613, %v2676
          %v2707 = vadd.f32 %v2614, %v2677
          %s2708 = sadd.s32 %s2273, 5
          %s2709 = sld [smem:[#allocation10 + %s2708]]
          %v2710 = vld [vmem:[%s1548] sm:$0xff]
          %v2711 = vld [vmem:[%s1548 + $0x8] sm:$0xff]
          %v2712 = vld [vmem:[%s1548 + $0x10] sm:$0xff]
          %v2713 = vld [vmem:[%s1548 + $0x18] sm:$0xff]
          %v2714 = vld [vmem:[%s1548 + $0x20] sm:$0xff]
          %v2715 = vld [vmem:[%s1548 + $0x28] sm:$0xff]
          %v2716 = vld [vmem:[%s1548 + $0x30] sm:$0xff]
          %v2717 = vld [vmem:[%s1548 + $0x38] sm:$0xff]
          %v2718 = vld [vmem:[%s1548 + $0x40] sm:$0xff]
          %v2719 = vld [vmem:[%s1548 + $0x48] sm:$0xff]
          %v2720 = vld [vmem:[%s1548 + $0x50] sm:$0xff]
          %v2721 = vld [vmem:[%s1548 + $0x58] sm:$0xff]
          %v2722 = vld [vmem:[%s1548 + $0x60] sm:$0xff]
          %v2723 = vld [vmem:[%s1548 + $0x68] sm:$0xff]
          %v2724 = vld [vmem:[%s1548 + $0x70] sm:$0xff]
          %v2725 = vld [vmem:[%s1548 + $0x78] sm:$0xff]
          %v2726 = vld [vmem:[%s1548 + $0x80] sm:$0xff]
          %v2727 = vld [vmem:[%s1548 + $0x88] sm:$0xff]
          %v2728 = vld [vmem:[%s1548 + $0x90] sm:$0xff]
          %v2729 = vld [vmem:[%s1548 + $0x98] sm:$0xff]
          %v2730 = vld [vmem:[%s1548 + $0xa0] sm:$0xff]
          %v2731 = vld [vmem:[%s1548 + $0xa8] sm:$0xff]
          %v2732 = vld [vmem:[%s1548 + $0xb0] sm:$0xff]
          %v2733 = vld [vmem:[%s1548 + $0xb8] sm:$0xff]
          %v2734 = vld [vmem:[%s1548 + $0xc0] sm:$0xff]
          %v2735 = vld [vmem:[%s1548 + $0xc8] sm:$0xff]
          %v2736 = vld [vmem:[%s1548 + $0xd0] sm:$0xff]
          %v2737 = vld [vmem:[%s1548 + $0xd8] sm:$0xff]
          %v2738 = vld [vmem:[%s1548 + $0xe0] sm:$0x3f]
          %v2739 = vld [vmem:[%s1548 + $0xe8] sm:$0x3f]
          %v2740 = vstv %s2709
          %v2741 = vmul.f32 %v2740, %v2710
          %v2742 = vmul.f32 %v2740, %v2711
          %v2743 = vmul.f32 %v2740, %v2712
          %v2744 = vmul.f32 %v2740, %v2713
          %v2745 = vmul.f32 %v2740, %v2714
          %v2746 = vmul.f32 %v2740, %v2715
          %v2747 = vmul.f32 %v2740, %v2716
          %v2748 = vmul.f32 %v2740, %v2717
          %v2749 = vmul.f32 %v2740, %v2718
          %v2750 = vmul.f32 %v2740, %v2719
          %v2751 = vmul.f32 %v2740, %v2720
          %v2752 = vmul.f32 %v2740, %v2721
          %v2753 = vmul.f32 %v2740, %v2722
          %v2754 = vmul.f32 %v2740, %v2723
          %v2755 = vmul.f32 %v2740, %v2724
          %v2756 = vmul.f32 %v2740, %v2725
          %v2757 = vmul.f32 %v2740, %v2726
          %v2758 = vmul.f32 %v2740, %v2727
          %v2759 = vmul.f32 %v2740, %v2728
          %v2760 = vmul.f32 %v2740, %v2729
          %v2761 = vmul.f32 %v2740, %v2730
          %v2762 = vmul.f32 %v2740, %v2731
          %v2763 = vmul.f32 %v2740, %v2732
          %v2764 = vmul.f32 %v2740, %v2733
          %v2765 = vmul.f32 %v2740, %v2734
          %v2766 = vmul.f32 %v2740, %v2735
          %v2767 = vmul.f32 %v2740, %v2736
          %v2768 = vmul.f32 %v2740, %v2737
          %v2769 = vmul.f32 %v2740, %v2738
          %v2770 = vmul.f32 %v2740, %v2739
          %v2771 = vadd.f32 %v2678, %v2741
          %v2772 = vadd.f32 %v2679, %v2742
          %v2773 = vadd.f32 %v2680, %v2743
          %v2774 = vadd.f32 %v2681, %v2744
          %v2775 = vadd.f32 %v2682, %v2745
          %v2776 = vadd.f32 %v2683, %v2746
          %v2777 = vadd.f32 %v2684, %v2747
          %v2778 = vadd.f32 %v2685, %v2748
          %v2779 = vadd.f32 %v2686, %v2749
          %v2780 = vadd.f32 %v2687, %v2750
          %v2781 = vadd.f32 %v2688, %v2751
          %v2782 = vadd.f32 %v2689, %v2752
          %v2783 = vadd.f32 %v2690, %v2753
          %v2784 = vadd.f32 %v2691, %v2754
          %v2785 = vadd.f32 %v2692, %v2755
          %v2786 = vadd.f32 %v2693, %v2756
          %v2787 = vadd.f32 %v2694, %v2757
          %v2788 = vadd.f32 %v2695, %v2758
          %v2789 = vadd.f32 %v2696, %v2759
          %v2790 = vadd.f32 %v2697, %v2760
          %v2791 = vadd.f32 %v2698, %v2761
          %v2792 = vadd.f32 %v2699, %v2762
          %v2793 = vadd.f32 %v2700, %v2763
          %v2794 = vadd.f32 %v2701, %v2764
          %v2795 = vadd.f32 %v2702, %v2765
          %v2796 = vadd.f32 %v2703, %v2766
          %v2797 = vadd.f32 %v2704, %v2767
          %v2798 = vadd.f32 %v2705, %v2768
          %v2799 = vadd.f32 %v2706, %v2769
          %v2800 = vadd.f32 %v2707, %v2770
          %s2801 = sadd.s32 %s2273, 6
          %s2802 = sld [smem:[#allocation10 + %s2801]]
          %v2803 = vld [vmem:[%s1728] sm:$0xff]
          %v2804 = vld [vmem:[%s1728 + $0x8] sm:$0xff]
          %v2805 = vld [vmem:[%s1728 + $0x10] sm:$0xff]
          %v2806 = vld [vmem:[%s1728 + $0x18] sm:$0xff]
          %v2807 = vld [vmem:[%s1728 + $0x20] sm:$0xff]
          %v2808 = vld [vmem:[%s1728 + $0x28] sm:$0xff]
          %v2809 = vld [vmem:[%s1728 + $0x30] sm:$0xff]
          %v2810 = vld [vmem:[%s1728 + $0x38] sm:$0xff]
          %v2811 = vld [vmem:[%s1728 + $0x40] sm:$0xff]
          %v2812 = vld [vmem:[%s1728 + $0x48] sm:$0xff]
          %v2813 = vld [vmem:[%s1728 + $0x50] sm:$0xff]
          %v2814 = vld [vmem:[%s1728 + $0x58] sm:$0xff]
          %v2815 = vld [vmem:[%s1728 + $0x60] sm:$0xff]
          %v2816 = vld [vmem:[%s1728 + $0x68] sm:$0xff]
          %v2817 = vld [vmem:[%s1728 + $0x70] sm:$0xff]
          %v2818 = vld [vmem:[%s1728 + $0x78] sm:$0xff]
          %v2819 = vld [vmem:[%s1728 + $0x80] sm:$0xff]
          %v2820 = vld [vmem:[%s1728 + $0x88] sm:$0xff]
          %v2821 = vld [vmem:[%s1728 + $0x90] sm:$0xff]
          %v2822 = vld [vmem:[%s1728 + $0x98] sm:$0xff]
          %v2823 = vld [vmem:[%s1728 + $0xa0] sm:$0xff]
          %v2824 = vld [vmem:[%s1728 + $0xa8] sm:$0xff]
          %v2825 = vld [vmem:[%s1728 + $0xb0] sm:$0xff]
          %v2826 = vld [vmem:[%s1728 + $0xb8] sm:$0xff]
          %v2827 = vld [vmem:[%s1728 + $0xc0] sm:$0xff]
          %v2828 = vld [vmem:[%s1728 + $0xc8] sm:$0xff]
          %v2829 = vld [vmem:[%s1728 + $0xd0] sm:$0xff]
          %v2830 = vld [vmem:[%s1728 + $0xd8] sm:$0xff]
          %v2831 = vld [vmem:[%s1728 + $0xe0] sm:$0x3f]
          %v2832 = vld [vmem:[%s1728 + $0xe8] sm:$0x3f]
          %v2833 = vstv %s2802
          %v2834 = vmul.f32 %v2833, %v2803
          %v2835 = vmul.f32 %v2833, %v2804
          %v2836 = vmul.f32 %v2833, %v2805
          %v2837 = vmul.f32 %v2833, %v2806
          %v2838 = vmul.f32 %v2833, %v2807
          %v2839 = vmul.f32 %v2833, %v2808
          %v2840 = vmul.f32 %v2833, %v2809
          %v2841 = vmul.f32 %v2833, %v2810
          %v2842 = vmul.f32 %v2833, %v2811
          %v2843 = vmul.f32 %v2833, %v2812
          %v2844 = vmul.f32 %v2833, %v2813
          %v2845 = vmul.f32 %v2833, %v2814
          %v2846 = vmul.f32 %v2833, %v2815
          %v2847 = vmul.f32 %v2833, %v2816
          %v2848 = vmul.f32 %v2833, %v2817
          %v2849 = vmul.f32 %v2833, %v2818
          %v2850 = vmul.f32 %v2833, %v2819
          %v2851 = vmul.f32 %v2833, %v2820
          %v2852 = vmul.f32 %v2833, %v2821
          %v2853 = vmul.f32 %v2833, %v2822
          %v2854 = vmul.f32 %v2833, %v2823
          %v2855 = vmul.f32 %v2833, %v2824
          %v2856 = vmul.f32 %v2833, %v2825
          %v2857 = vmul.f32 %v2833, %v2826
          %v2858 = vmul.f32 %v2833, %v2827
          %v2859 = vmul.f32 %v2833, %v2828
          %v2860 = vmul.f32 %v2833, %v2829
          %v2861 = vmul.f32 %v2833, %v2830
          %v2862 = vmul.f32 %v2833, %v2831
          %v2863 = vmul.f32 %v2833, %v2832
          %v2864 = vadd.f32 %v2771, %v2834
          %v2865 = vadd.f32 %v2772, %v2835
          %v2866 = vadd.f32 %v2773, %v2836
          %v2867 = vadd.f32 %v2774, %v2837
          %v2868 = vadd.f32 %v2775, %v2838
          %v2869 = vadd.f32 %v2776, %v2839
          %v2870 = vadd.f32 %v2777, %v2840
          %v2871 = vadd.f32 %v2778, %v2841
          %v2872 = vadd.f32 %v2779, %v2842
          %v2873 = vadd.f32 %v2780, %v2843
          %v2874 = vadd.f32 %v2781, %v2844
          %v2875 = vadd.f32 %v2782, %v2845
          %v2876 = vadd.f32 %v2783, %v2846
          %v2877 = vadd.f32 %v2784, %v2847
          %v2878 = vadd.f32 %v2785, %v2848
          %v2879 = vadd.f32 %v2786, %v2849
          %v2880 = vadd.f32 %v2787, %v2850
          %v2881 = vadd.f32 %v2788, %v2851
          %v2882 = vadd.f32 %v2789, %v2852
          %v2883 = vadd.f32 %v2790, %v2853
          %v2884 = vadd.f32 %v2791, %v2854
          %v2885 = vadd.f32 %v2792, %v2855
          %v2886 = vadd.f32 %v2793, %v2856
          %v2887 = vadd.f32 %v2794, %v2857
          %v2888 = vadd.f32 %v2795, %v2858
          %v2889 = vadd.f32 %v2796, %v2859
          %v2890 = vadd.f32 %v2797, %v2860
          %v2891 = vadd.f32 %v2798, %v2861
          %v2892 = vadd.f32 %v2799, %v2862
          %v2893 = vadd.f32 %v2800, %v2863
          %s2894 = sadd.s32 %s2273, 7
          %s2895 = sld [smem:[#allocation10 + %s2894]]
          %v2896 = vld [vmem:[%s1982] sm:$0xff]
          %v2897 = vld [vmem:[%s1982 + $0x8] sm:$0xff]
          %v2898 = vld [vmem:[%s1982 + $0x10] sm:$0xff]
          %v2899 = vld [vmem:[%s1982 + $0x18] sm:$0xff]
          %v2900 = vld [vmem:[%s1982 + $0x20] sm:$0xff]
          %v2901 = vld [vmem:[%s1982 + $0x28] sm:$0xff]
          %v2902 = vld [vmem:[%s1982 + $0x30] sm:$0xff]
          %v2903 = vld [vmem:[%s1982 + $0x38] sm:$0xff]
          %v2904 = vld [vmem:[%s1982 + $0x40] sm:$0xff]
          %v2905 = vld [vmem:[%s1982 + $0x48] sm:$0xff]
          %v2906 = vld [vmem:[%s1982 + $0x50] sm:$0xff]
          %v2907 = vld [vmem:[%s1982 + $0x58] sm:$0xff]
          %v2908 = vld [vmem:[%s1982 + $0x60] sm:$0xff]
          %v2909 = vld [vmem:[%s1982 + $0x68] sm:$0xff]
          %v2910 = vld [vmem:[%s1982 + $0x70] sm:$0xff]
          %v2911 = vld [vmem:[%s1982 + $0x78] sm:$0xff]
          %v2912 = vld [vmem:[%s1982 + $0x80] sm:$0xff]
          %v2913 = vld [vmem:[%s1982 + $0x88] sm:$0xff]
          %v2914 = vld [vmem:[%s1982 + $0x90] sm:$0xff]
          %v2915 = vld [vmem:[%s1982 + $0x98] sm:$0xff]
          %v2916 = vld [vmem:[%s1982 + $0xa0] sm:$0xff]
          %v2917 = vld [vmem:[%s1982 + $0xa8] sm:$0xff]
          %v2918 = vld [vmem:[%s1982 + $0xb0] sm:$0xff]
          %v2919 = vld [vmem:[%s1982 + $0xb8] sm:$0xff]
          %v2920 = vld [vmem:[%s1982 + $0xc0] sm:$0xff]
          %v2921 = vld [vmem:[%s1982 + $0xc8] sm:$0xff]
          %v2922 = vld [vmem:[%s1982 + $0xd0] sm:$0xff]
          %v2923 = vld [vmem:[%s1982 + $0xd8] sm:$0xff]
          %v2924 = vld [vmem:[%s1982 + $0xe0] sm:$0x3f]
          %v2925 = vld [vmem:[%s1982 + $0xe8] sm:$0x3f]
          %v2926 = vstv %s2895
          %v2927 = vmul.f32 %v2926, %v2896
          %v2928 = vmul.f32 %v2926, %v2897
          %v2929 = vmul.f32 %v2926, %v2898
          %v2930 = vmul.f32 %v2926, %v2899
          %v2931 = vmul.f32 %v2926, %v2900
          %v2932 = vmul.f32 %v2926, %v2901
          %v2933 = vmul.f32 %v2926, %v2902
          %v2934 = vmul.f32 %v2926, %v2903
          %v2935 = vmul.f32 %v2926, %v2904
          %v2936 = vmul.f32 %v2926, %v2905
          %v2937 = vmul.f32 %v2926, %v2906
          %v2938 = vmul.f32 %v2926, %v2907
          %v2939 = vmul.f32 %v2926, %v2908
          %v2940 = vmul.f32 %v2926, %v2909
          %v2941 = vmul.f32 %v2926, %v2910
          %v2942 = vmul.f32 %v2926, %v2911
          %v2943 = vmul.f32 %v2926, %v2912
          %v2944 = vmul.f32 %v2926, %v2913
          %v2945 = vmul.f32 %v2926, %v2914
          %v2946 = vmul.f32 %v2926, %v2915
          %v2947 = vmul.f32 %v2926, %v2916
          %v2948 = vmul.f32 %v2926, %v2917
          %v2949 = vmul.f32 %v2926, %v2918
          %v2950 = vmul.f32 %v2926, %v2919
          %v2951 = vmul.f32 %v2926, %v2920
          %v2952 = vmul.f32 %v2926, %v2921
          %v2953 = vmul.f32 %v2926, %v2922
          %v2954 = vmul.f32 %v2926, %v2923
          %v2955 = vmul.f32 %v2926, %v2924
          %v2956 = vmul.f32 %v2926, %v2925
          %v2957 = vadd.f32 %v2864, %v2927
          %v2958 = vadd.f32 %v2865, %v2928
          %v2959 = vadd.f32 %v2866, %v2929
          %v2960 = vadd.f32 %v2867, %v2930
          %v2961 = vadd.f32 %v2868, %v2931
          %v2962 = vadd.f32 %v2869, %v2932
          %v2963 = vadd.f32 %v2870, %v2933
          %v2964 = vadd.f32 %v2871, %v2934
          %v2965 = vadd.f32 %v2872, %v2935
          %v2966 = vadd.f32 %v2873, %v2936
          %v2967 = vadd.f32 %v2874, %v2937
          %v2968 = vadd.f32 %v2875, %v2938
          %v2969 = vadd.f32 %v2876, %v2939
          %v2970 = vadd.f32 %v2877, %v2940
          %v2971 = vadd.f32 %v2878, %v2941
          %v2972 = vadd.f32 %v2879, %v2942
          %v2973 = vadd.f32 %v2880, %v2943
          %v2974 = vadd.f32 %v2881, %v2944
          %v2975 = vadd.f32 %v2882, %v2945
          %v2976 = vadd.f32 %v2883, %v2946
          %v2977 = vadd.f32 %v2884, %v2947
          %v2978 = vadd.f32 %v2885, %v2948
          %v2979 = vadd.f32 %v2886, %v2949
          %v2980 = vadd.f32 %v2887, %v2950
          %v2981 = vadd.f32 %v2888, %v2951
          %v2982 = vadd.f32 %v2889, %v2952
          %v2983 = vadd.f32 %v2890, %v2953
          %v2984 = vadd.f32 %v2891, %v2954
          %v2985 = vadd.f32 %v2892, %v2955
          %v2986 = vadd.f32 %v2893, %v2956
          %s2987 = sadd.s32 %s2273, 8
          %s2988 = sld [smem:[#allocation10 + %s2987]]
          %v2989 = vld [vmem:[%s2236] sm:$0xff]
          %v2990 = vld [vmem:[%s2236 + $0x8] sm:$0xff]
          %v2991 = vld [vmem:[%s2236 + $0x10] sm:$0xff]
          %v2992 = vld [vmem:[%s2236 + $0x18] sm:$0xff]
          %v2993 = vld [vmem:[%s2236 + $0x20] sm:$0xff]
          %v2994 = vld [vmem:[%s2236 + $0x28] sm:$0xff]
          %v2995 = vld [vmem:[%s2236 + $0x30] sm:$0xff]
          %v2996 = vld [vmem:[%s2236 + $0x38] sm:$0xff]
          %v2997 = vld [vmem:[%s2236 + $0x40] sm:$0xff]
          %v2998 = vld [vmem:[%s2236 + $0x48] sm:$0xff]
          %v2999 = vld [vmem:[%s2236 + $0x50] sm:$0xff]
          %v3000 = vld [vmem:[%s2236 + $0x58] sm:$0xff]
          %v3001 = vld [vmem:[%s2236 + $0x60] sm:$0xff]
          %v3002 = vld [vmem:[%s2236 + $0x68] sm:$0xff]
          %v3003 = vld [vmem:[%s2236 + $0x70] sm:$0xff]
          %v3004 = vld [vmem:[%s2236 + $0x78] sm:$0xff]
          %v3005 = vld [vmem:[%s2236 + $0x80] sm:$0xff]
          %v3006 = vld [vmem:[%s2236 + $0x88] sm:$0xff]
          %v3007 = vld [vmem:[%s2236 + $0x90] sm:$0xff]
          %v3008 = vld [vmem:[%s2236 + $0x98] sm:$0xff]
          %v3009 = vld [vmem:[%s2236 + $0xa0] sm:$0xff]
          %v3010 = vld [vmem:[%s2236 + $0xa8] sm:$0xff]
          %v3011 = vld [vmem:[%s2236 + $0xb0] sm:$0xff]
          %v3012 = vld [vmem:[%s2236 + $0xb8] sm:$0xff]
          %v3013 = vld [vmem:[%s2236 + $0xc0] sm:$0xff]
          %v3014 = vld [vmem:[%s2236 + $0xc8] sm:$0xff]
          %v3015 = vld [vmem:[%s2236 + $0xd0] sm:$0xff]
          %v3016 = vld [vmem:[%s2236 + $0xd8] sm:$0xff]
          %v3017 = vld [vmem:[%s2236 + $0xe0] sm:$0x3f]
          %v3018 = vld [vmem:[%s2236 + $0xe8] sm:$0x3f]
          %v3019 = vstv %s2988
          %v3020 = vmul.f32 %v3019, %v2989
          %v3021 = vmul.f32 %v3019, %v2990
          %v3022 = vmul.f32 %v3019, %v2991
          %v3023 = vmul.f32 %v3019, %v2992
          %v3024 = vmul.f32 %v3019, %v2993
          %v3025 = vmul.f32 %v3019, %v2994
          %v3026 = vmul.f32 %v3019, %v2995
          %v3027 = vmul.f32 %v3019, %v2996
          %v3028 = vmul.f32 %v3019, %v2997
          %v3029 = vmul.f32 %v3019, %v2998
          %v3030 = vmul.f32 %v3019, %v2999
          %v3031 = vmul.f32 %v3019, %v3000
          %v3032 = vmul.f32 %v3019, %v3001
          %v3033 = vmul.f32 %v3019, %v3002
          %v3034 = vmul.f32 %v3019, %v3003
          %v3035 = vmul.f32 %v3019, %v3004
          %v3036 = vmul.f32 %v3019, %v3005
          %v3037 = vmul.f32 %v3019, %v3006
          %v3038 = vmul.f32 %v3019, %v3007
          %v3039 = vmul.f32 %v3019, %v3008
          %v3040 = vmul.f32 %v3019, %v3009
          %v3041 = vmul.f32 %v3019, %v3010
          %v3042 = vmul.f32 %v3019, %v3011
          %v3043 = vmul.f32 %v3019, %v3012
          %v3044 = vmul.f32 %v3019, %v3013
          %v3045 = vmul.f32 %v3019, %v3014
          %v3046 = vmul.f32 %v3019, %v3015
          %v3047 = vmul.f32 %v3019, %v3016
          %v3048 = vmul.f32 %v3019, %v3017
          %v3049 = vmul.f32 %v3019, %v3018
          %v3050 = vadd.f32 %v2957, %v3020
          %v3051 = vadd.f32 %v2958, %v3021
          %v3052 = vadd.f32 %v2959, %v3022
          %v3053 = vadd.f32 %v2960, %v3023
          %v3054 = vadd.f32 %v2961, %v3024
          %v3055 = vadd.f32 %v2962, %v3025
          %v3056 = vadd.f32 %v2963, %v3026
          %v3057 = vadd.f32 %v2964, %v3027
          %v3058 = vadd.f32 %v2965, %v3028
          %v3059 = vadd.f32 %v2966, %v3029
          %v3060 = vadd.f32 %v2967, %v3030
          %v3061 = vadd.f32 %v2968, %v3031
          %v3062 = vadd.f32 %v2969, %v3032
          %v3063 = vadd.f32 %v2970, %v3033
          %v3064 = vadd.f32 %v2971, %v3034
          %v3065 = vadd.f32 %v2972, %v3035
          %v3066 = vadd.f32 %v2973, %v3036
          %v3067 = vadd.f32 %v2974, %v3037
          %v3068 = vadd.f32 %v2975, %v3038
          %v3069 = vadd.f32 %v2976, %v3039
          %v3070 = vadd.f32 %v2977, %v3040
          %v3071 = vadd.f32 %v2978, %v3041
          %v3072 = vadd.f32 %v2979, %v3042
          %v3073 = vadd.f32 %v2980, %v3043
          %v3074 = vadd.f32 %v2981, %v3044
          %v3075 = vadd.f32 %v2982, %v3045
          %v3076 = vadd.f32 %v2983, %v3046
          %v3077 = vadd.f32 %v2984, %v3047
          %v3078 = vadd.f32 %v2985, %v3048
          %v3079 = vadd.f32 %v2986, %v3049
          %s3080 = sld [smem:[#allocation11 + %s2268]]
          %v3081 = vstv %s3080
          %v3082 = vadd.f32 %v3050, %v3081
          %v3083 = vadd.f32 %v3051, %v3081
          %v3084 = vadd.f32 %v3052, %v3081
          %v3085 = vadd.f32 %v3053, %v3081
          %v3086 = vadd.f32 %v3054, %v3081
          %v3087 = vadd.f32 %v3055, %v3081
          %v3088 = vadd.f32 %v3056, %v3081
          %v3089 = vadd.f32 %v3057, %v3081
          %v3090 = vadd.f32 %v3058, %v3081
          %v3091 = vadd.f32 %v3059, %v3081
          %v3092 = vadd.f32 %v3060, %v3081
          %v3093 = vadd.f32 %v3061, %v3081
          %v3094 = vadd.f32 %v3062, %v3081
          %v3095 = vadd.f32 %v3063, %v3081
          %v3096 = vadd.f32 %v3064, %v3081
          %v3097 = vadd.f32 %v3065, %v3081
          %v3098 = vadd.f32 %v3066, %v3081
          %v3099 = vadd.f32 %v3067, %v3081
          %v3100 = vadd.f32 %v3068, %v3081
          %v3101 = vadd.f32 %v3069, %v3081
          %v3102 = vadd.f32 %v3070, %v3081
          %v3103 = vadd.f32 %v3071, %v3081
          %v3104 = vadd.f32 %v3072, %v3081
          %v3105 = vadd.f32 %v3073, %v3081
          %v3106 = vadd.f32 %v3074, %v3081
          %v3107 = vadd.f32 %v3075, %v3081
          %v3108 = vadd.f32 %v3076, %v3081
          %v3109 = vadd.f32 %v3077, %v3081
          %v3110 = vadd.f32 %v3078, %v3081
          %v3111 = vadd.f32 %v3079, %v3081
          %v3112 = vmax.f32 %v3082, 0.0
          %v3113 = vmax.f32 %v3083, 0.0
          %v3114 = vmax.f32 %v3084, 0.0
          %v3115 = vmax.f32 %v3085, 0.0
          %v3116 = vmax.f32 %v3086, 0.0
          %v3117 = vmax.f32 %v3087, 0.0
          %v3118 = vmax.f32 %v3088, 0.0
          %v3119 = vmax.f32 %v3089, 0.0
          %v3120 = vmax.f32 %v3090, 0.0
          %v3121 = vmax.f32 %v3091, 0.0
          %v3122 = vmax.f32 %v3092, 0.0
          %v3123 = vmax.f32 %v3093, 0.0
          %v3124 = vmax.f32 %v3094, 0.0
          %v3125 = vmax.f32 %v3095, 0.0
          %v3126 = vmax.f32 %v3096, 0.0
          %v3127 = vmax.f32 %v3097, 0.0
          %v3128 = vmax.f32 %v3098, 0.0
          %v3129 = vmax.f32 %v3099, 0.0
          %v3130 = vmax.f32 %v3100, 0.0
          %v3131 = vmax.f32 %v3101, 0.0
          %v3132 = vmax.f32 %v3102, 0.0
          %v3133 = vmax.f32 %v3103, 0.0
          %v3134 = vmax.f32 %v3104, 0.0
          %v3135 = vmax.f32 %v3105, 0.0
          %v3136 = vmax.f32 %v3106, 0.0
          %v3137 = vmax.f32 %v3107, 0.0
          %v3138 = vmax.f32 %v3108, 0.0
          %v3139 = vmax.f32 %v3109, 0.0
          %v3140 = vmax.f32 %v3110, 0.0
          %v3141 = vmax.f32 %v3111, 0.0
          %v3172 = vrot.slane %v3112, 1
          %v3173 = vrot.slane %v3114, 1
          %v3174 = vsel %vm951, %v3172, %v3173
          %v3175 = vrot.slane %v3113, 1
          %v3176 = vrot.slane %v3115, 1
          %v3177 = vsel %vm951, %v3175, %v3176
          %v3178 = vrot.slane %v3116, 1
          %v3179 = vsel %vm951, %v3173, %v3178
          %v3180 = vrot.slane %v3117, 1
          %v3181 = vsel %vm951, %v3176, %v3180
          %v3182 = vrot.slane %v3118, 1
          %v3183 = vsel %vm951, %v3178, %v3182
          %v3184 = vrot.slane %v3119, 1
          %v3185 = vsel %vm951, %v3180, %v3184
          %v3186 = vrot.slane %v3120, 1
          %v3187 = vsel %vm951, %v3182, %v3186
          %v3188 = vrot.slane %v3121, 1
          %v3189 = vsel %vm951, %v3184, %v3188
          %v3190 = vrot.slane %v3122, 1
          %v3191 = vsel %vm951, %v3186, %v3190
          %v3192 = vrot.slane %v3123, 1
          %v3193 = vsel %vm951, %v3188, %v3192
          %v3194 = vrot.slane %v3124, 1
          %v3195 = vsel %vm951, %v3190, %v3194
          %v3196 = vrot.slane %v3125, 1
          %v3197 = vsel %vm951, %v3192, %v3196
          %v3198 = vrot.slane %v3126, 1
          %v3199 = vsel %vm951, %v3194, %v3198
          %v3200 = vrot.slane %v3127, 1
          %v3201 = vsel %vm951, %v3196, %v3200
          %v3202 = vrot.slane %v3128, 1
          %v3203 = vsel %vm951, %v3198, %v3202
          %v3204 = vrot.slane %v3129, 1
          %v3205 = vsel %vm951, %v3200, %v3204
          %v3206 = vrot.slane %v3130, 1
          %v3207 = vsel %vm951, %v3202, %v3206
          %v3208 = vrot.slane %v3131, 1
          %v3209 = vsel %vm951, %v3204, %v3208
          %v3210 = vrot.slane %v3132, 1
          %v3211 = vsel %vm951, %v3206, %v3210
          %v3212 = vrot.slane %v3133, 1
          %v3213 = vsel %vm951, %v3208, %v3212
          %v3214 = vrot.slane %v3134, 1
          %v3215 = vsel %vm951, %v3210, %v3214
          %v3216 = vrot.slane %v3135, 1
          %v3217 = vsel %vm951, %v3212, %v3216
          %v3218 = vrot.slane %v3136, 1
          %v3219 = vsel %vm951, %v3214, %v3218
          %v3220 = vrot.slane %v3137, 1
          %v3221 = vsel %vm951, %v3216, %v3220
          %v3222 = vrot.slane %v3138, 1
          %v3223 = vsel %vm951, %v3218, %v3222
          %v3224 = vrot.slane %v3139, 1
          %v3225 = vsel %vm951, %v3220, %v3224
          %v3226 = vrot.slane %v3140, 1
          %v3227 = vsel %vm951, %v3222, %v3226
          %v3228 = vrot.slane %v3141, 1
          %v3229 = vsel %vm951, %v3224, %v3228
          %v3260 = vmax.f32 %v3112, %v3174
          %v3261 = vmax.f32 %v3113, %v3177
          %v3262 = vmax.f32 %v3114, %v3179
          %v3263 = vmax.f32 %v3115, %v3181
          %v3264 = vmax.f32 %v3116, %v3183
          %v3265 = vmax.f32 %v3117, %v3185
          %v3266 = vmax.f32 %v3118, %v3187
          %v3267 = vmax.f32 %v3119, %v3189
          %v3268 = vmax.f32 %v3120, %v3191
          %v3269 = vmax.f32 %v3121, %v3193
          %v3270 = vmax.f32 %v3122, %v3195
          %v3271 = vmax.f32 %v3123, %v3197
          %v3272 = vmax.f32 %v3124, %v3199
          %v3273 = vmax.f32 %v3125, %v3201
          %v3274 = vmax.f32 %v3126, %v3203
          %v3275 = vmax.f32 %v3127, %v3205
          %v3276 = vmax.f32 %v3128, %v3207
          %v3277 = vmax.f32 %v3129, %v3209
          %v3278 = vmax.f32 %v3130, %v3211
          %v3279 = vmax.f32 %v3131, %v3213
          %v3280 = vmax.f32 %v3132, %v3215
          %v3281 = vmax.f32 %v3133, %v3217
          %v3282 = vmax.f32 %v3134, %v3219
          %v3283 = vmax.f32 %v3135, %v3221
          %v3284 = vmax.f32 %v3136, %v3223
          %v3285 = vmax.f32 %v3137, %v3225
          %v3286 = vmax.f32 %v3138, %v3227
          %v3287 = vmax.f32 %v3139, %v3229
          %v3288 = vmax.f32 %v3140, %v3226
          %v3289 = vmax.f32 %v3141, %v3228
          %v3290 = vld [vmem:[#allocation4] sm:$0xff]
          %v3291 = vld [vmem:[#allocation4 + $0x8] sm:$0xff]
          %v3292 = vld [vmem:[#allocation4 + $0x10] sm:$0xff]
          %v3293 = vld [vmem:[#allocation4 + $0x18] sm:$0xff]
          %v3294 = vld [vmem:[#allocation4 + $0x20] sm:$0xff]
          %v3295 = vld [vmem:[#allocation4 + $0x28] sm:$0xff]
          %v3296 = vld [vmem:[#allocation4 + $0x30] sm:$0xff]
          %v3297 = vld [vmem:[#allocation4 + $0x38] sm:$0x7]
          %vm3298 = vcmask 957440
          %v3300 = vsel %vm3298, %v3290, 0
          %v3303 = vsel %vm3298, %v3291, 0
          %v3306 = vsel %vm3298, %v3292, 0
          %v3309 = vsel %vm3298, %v3293, 0
          %v3312 = vsel %vm3298, %v3294, 0
          %v3315 = vsel %vm3298, %v3295, 0
          %v3318 = vsel %vm3298, %v3296, 0
          %v3321 = vsel %vm3298, %v3297, 0
          %vm3323 = vcmask 1044480
          %v3325 = vsel %vm3323, %v3288, 0
          %v3328 = vsel %vm3323, %v3289, 0
          %3330 = vmatpush.msra.mxu0 0.0
          %3331 = vmatpush.msra.mxu0 %v3325
          %3332 = vmatpush.msra.mxu0 %v3286
          %3333 = vmatpush.msra.mxu0 %v3284
          %3334 = vmatpush.msra.mxu0 %v3282
          %3335 = vmatpush.msra.mxu0 %v3280
          %3336 = vmatpush.msra.mxu0 %v3278
          %3337 = vmatpush.msra.mxu0 %v3276
          %3338 = vmatpush.msra.mxu0 %v3274
          %3339 = vmatpush.msra.mxu0 %v3272
          %3340 = vmatpush.msra.mxu0 %v3270
          %3341 = vmatpush.msra.mxu0 %v3268
          %3342 = vmatpush.msra.mxu0 %v3266
          %3343 = vmatpush.msra.mxu0 %v3264
          %3344 = vmatpush.msra.mxu0 %v3262
          %3345 = vmatpush.msra.mxu0 %v3260
          %3346 = vmatmul.f32.gmra.mxu0 %v3300
          %v3347 = vpop.f32.mrf.mxu0
          %v3348 = vadd.f32 0.0, %v3347
          %3349 = vmatmul.f32.gmra.mxu0 %v3303
          %v3350 = vpop.f32.mrf.mxu0
          %v3351 = vadd.f32 0.0, %v3350
          %3352 = vmatmul.f32.gmra.mxu0 %v3306
          %v3353 = vpop.f32.mrf.mxu0
          %v3354 = vadd.f32 0.0, %v3353
          %3355 = vmatmul.f32.gmra.mxu0 %v3309
          %v3356 = vpop.f32.mrf.mxu0
          %v3357 = vadd.f32 0.0, %v3356
          %3358 = vmatmul.f32.gmra.mxu0 %v3312
          %v3359 = vpop.f32.mrf.mxu0
          %v3360 = vadd.f32 0.0, %v3359
          %3361 = vmatmul.f32.gmra.mxu0 %v3315
          %v3362 = vpop.f32.mrf.mxu0
          %v3363 = vadd.f32 0.0, %v3362
          %3364 = vmatmul.f32.gmra.mxu0 %v3318
          %v3365 = vpop.f32.mrf.mxu0
          %v3366 = vadd.f32 0.0, %v3365
          %3367 = vmatmul.f32.gmra.mxu0 %v3321
          %v3368 = vpop.f32.mrf.mxu0
          %v3369 = vadd.f32 0.0, %v3368
          %3370 = vdwg.mxu0
          %3371 = vmatpush.msra.mxu0 0.0
          %3372 = vmatpush.msra.mxu0 %v3328
          %3373 = vmatpush.msra.mxu0 %v3287
          %3374 = vmatpush.msra.mxu0 %v3285
          %3375 = vmatpush.msra.mxu0 %v3283
          %3376 = vmatpush.msra.mxu0 %v3281
          %3377 = vmatpush.msra.mxu0 %v3279
          %3378 = vmatpush.msra.mxu0 %v3277
          %3379 = vmatpush.msra.mxu0 %v3275
          %3380 = vmatpush.msra.mxu0 %v3273
          %3381 = vmatpush.msra.mxu0 %v3271
          %3382 = vmatpush.msra.mxu0 %v3269
          %3383 = vmatpush.msra.mxu0 %v3267
          %3384 = vmatpush.msra.mxu0 %v3265
          %3385 = vmatpush.msra.mxu0 %v3263
          %3386 = vmatpush.msra.mxu0 %v3261
          %3387 = vmatmul.f32.gmra.mxu0 %v3300
          %v3388 = vpop.f32.mrf.mxu0
          %v3389 = vadd.f32 0.0, %v3388
          %3390 = vmatmul.f32.gmra.mxu0 %v3303
          %v3391 = vpop.f32.mrf.mxu0
          %v3392 = vadd.f32 0.0, %v3391
          %3393 = vmatmul.f32.gmra.mxu0 %v3306
          %v3394 = vpop.f32.mrf.mxu0
          %v3395 = vadd.f32 0.0, %v3394
          %3396 = vmatmul.f32.gmra.mxu0 %v3309
          %v3397 = vpop.f32.mrf.mxu0
          %v3398 = vadd.f32 0.0, %v3397
          %3399 = vmatmul.f32.gmra.mxu0 %v3312
          %v3400 = vpop.f32.mrf.mxu0
          %v3401 = vadd.f32 0.0, %v3400
          %3402 = vmatmul.f32.gmra.mxu0 %v3315
          %v3403 = vpop.f32.mrf.mxu0
          %v3404 = vadd.f32 0.0, %v3403
          %3405 = vmatmul.f32.gmra.mxu0 %v3318
          %v3406 = vpop.f32.mrf.mxu0
          %v3407 = vadd.f32 0.0, %v3406
          %3408 = vmatmul.f32.gmra.mxu0 %v3321
          %v3409 = vpop.f32.mrf.mxu0
          %v3410 = vadd.f32 0.0, %v3409
          %3411 = vdwg.mxu0
          %3428 = vrot.lane.b32.xlu0 %v3348, 127
          %v3429 = vpop.permute.xlu0 %3428
          %3430 = vrot.lane.b32.xlu0 %v3389, 127
          %v3431 = vpop.permute.xlu0 %3430
          %3432 = vrot.lane.b32.xlu0 %v3351, 127
          %v3433 = vpop.permute.xlu0 %3432
          %3434 = vrot.lane.b32.xlu0 %v3392, 127
          %v3435 = vpop.permute.xlu0 %3434
          %3436 = vrot.lane.b32.xlu0 %v3354, 127
          %v3437 = vpop.permute.xlu0 %3436
          %3438 = vrot.lane.b32.xlu0 %v3395, 127
          %v3439 = vpop.permute.xlu0 %3438
          %3440 = vrot.lane.b32.xlu0 %v3357, 127
          %v3441 = vpop.permute.xlu0 %3440
          %3442 = vrot.lane.b32.xlu0 %v3398, 127
          %v3443 = vpop.permute.xlu0 %3442
          %3444 = vrot.lane.b32.xlu0 %v3360, 127
          %v3445 = vpop.permute.xlu0 %3444
          %3446 = vrot.lane.b32.xlu0 %v3401, 127
          %v3447 = vpop.permute.xlu0 %3446
          %3448 = vrot.lane.b32.xlu0 %v3363, 127
          %v3449 = vpop.permute.xlu0 %3448
          %3450 = vrot.lane.b32.xlu0 %v3404, 127
          %v3451 = vpop.permute.xlu0 %3450
          %3452 = vrot.lane.b32.xlu0 %v3366, 127
          %v3453 = vpop.permute.xlu0 %3452
          %3454 = vrot.lane.b32.xlu0 %v3407, 127
          %v3455 = vpop.permute.xlu0 %3454
          %3456 = vrot.lane.b32.xlu0 %v3369, 127
          %v3457 = vpop.permute.xlu0 %3456
          %3458 = vrot.lane.b32.xlu0 %v3410, 127
          %v3459 = vpop.permute.xlu0 %3458
          %v3460 = vsel %vm617, %v3429, %v3431
          %v3461 = vsel %vm617, %v3433, %v3435
          %v3462 = vsel %vm617, %v3437, %v3439
          %v3463 = vsel %vm617, %v3441, %v3443
          %v3464 = vsel %vm617, %v3445, %v3447
          %v3465 = vsel %vm617, %v3449, %v3451
          %v3466 = vsel %vm617, %v3453, %v3455
          %v3467 = vsel %vm617, %v3457, %v3459
          %v3484 = vmax.f32 %v3348, %v3460
          %v3485 = vmax.f32 %v3389, %v3431
          %v3486 = vmax.f32 %v3351, %v3461
          %v3487 = vmax.f32 %v3392, %v3435
          %v3488 = vmax.f32 %v3354, %v3462
          %v3489 = vmax.f32 %v3395, %v3439
          %v3490 = vmax.f32 %v3357, %v3463
          %v3491 = vmax.f32 %v3398, %v3443
          %v3492 = vmax.f32 %v3360, %v3464
          %v3493 = vmax.f32 %v3401, %v3447
          %v3494 = vmax.f32 %v3363, %v3465
          %v3495 = vmax.f32 %v3404, %v3451
          %v3496 = vmax.f32 %v3366, %v3466
          %v3497 = vmax.f32 %v3407, %v3455
          %v3498 = vmax.f32 %v3369, %v3467
          %v3499 = vmax.f32 %v3410, %v3459
          %v3500 = vld [vmem:[#allocation7] sm:$0xff]
          %v3501 = vld [vmem:[#allocation7 + $0x8] sm:$0xff]
          %v3502 = vld [vmem:[#allocation7 + $0x10] sm:$0xff]
          %v3503 = vld [vmem:[#allocation7 + $0x18] sm:$0xff]
          %v3504 = vld [vmem:[#allocation7 + $0x20] sm:$0xff]
          %v3505 = vld [vmem:[#allocation7 + $0x28] sm:$0xff]
          %v3506 = vld [vmem:[#allocation7 + $0x30] sm:$0xff]
          %v3507 = vld [vmem:[#allocation7 + $0x38] sm:$0xff]
          %v3508 = vld [vmem:[#allocation7 + $0x40] sm:$0xff]
          %v3509 = vld [vmem:[#allocation7 + $0x48] sm:$0xff]
          %v3510 = vld [vmem:[#allocation7 + $0x50] sm:$0xff]
          %v3511 = vld [vmem:[#allocation7 + $0x58] sm:$0xff]
          %v3512 = vld [vmem:[#allocation7 + $0x60] sm:$0xff]
          %v3513 = vld [vmem:[#allocation7 + $0x68] sm:$0xff]
          %v3514 = vld [vmem:[#allocation7 + $0x70] sm:$0xff]
          %v3515 = vld [vmem:[#allocation7 + $0x78] sm:$0xff]
          %v3516 = vld [vmem:[#allocation7 + $0x80] sm:$0xff]
          %v3517 = vld [vmem:[#allocation7 + $0x88] sm:$0xff]
          %v3518 = vld [vmem:[#allocation7 + $0x90] sm:$0xff]
          %v3519 = vld [vmem:[#allocation7 + $0x98] sm:$0xff]
          %v3520 = vld [vmem:[#allocation7 + $0xa0] sm:$0xff]
          %v3521 = vld [vmem:[#allocation7 + $0xa8] sm:$0x1]
          %vm3522 = vcmask 334848
          %v3524 = vsel %vm3522, %v3485, 0
          %v3527 = vsel %vm3522, %v3487, 0
          %v3530 = vsel %vm3522, %v3489, 0
          %v3533 = vsel %vm3522, %v3491, 0
          %v3536 = vsel %vm3522, %v3493, 0
          %v3539 = vsel %vm3522, %v3495, 0
          %v3542 = vsel %vm3522, %v3497, 0
          %v3545 = vsel %vm3522, %v3499, 0
          %vm3547 = vcmask 1040384
          %v3549 = vsel %vm3547, %v3521, 0
          %3551 = vmatpush.msra.mxu0 %v3515
          %3552 = vmatpush.msra.mxu0 %v3514
          %3553 = vmatpush.msra.mxu0 %v3513
          %3554 = vmatpush.msra.mxu0 %v3512
          %3555 = vmatpush.msra.mxu0 %v3511
          %3556 = vmatpush.msra.mxu0 %v3510
          %3557 = vmatpush.msra.mxu0 %v3509
          %3558 = vmatpush.msra.mxu0 %v3508
          %3559 = vmatpush.msra.mxu0 %v3507
          %3560 = vmatpush.msra.mxu0 %v3506
          %3561 = vmatpush.msra.mxu0 %v3505
          %3562 = vmatpush.msra.mxu0 %v3504
          %3563 = vmatpush.msra.mxu0 %v3503
          %3564 = vmatpush.msra.mxu0 %v3502
          %3565 = vmatpush.msra.mxu0 %v3501
          %3566 = vmatpush.msra.mxu0 %v3500
          %3567 = vmatmul.f32.gmra.mxu0 %v3484
          %v3568 = vpop.f32.mrf.mxu0
          %v3569 = vadd.f32 0.0, %v3568
          %3570 = vmatmul.f32.gmra.mxu0 %v3486
          %v3571 = vpop.f32.mrf.mxu0
          %v3572 = vadd.f32 0.0, %v3571
          %3573 = vmatmul.f32.gmra.mxu0 %v3488
          %v3574 = vpop.f32.mrf.mxu0
          %v3575 = vadd.f32 0.0, %v3574
          %3576 = vmatmul.f32.gmra.mxu0 %v3490
          %v3577 = vpop.f32.mrf.mxu0
          %v3578 = vadd.f32 0.0, %v3577
          %3579 = vmatmul.f32.gmra.mxu0 %v3492
          %v3580 = vpop.f32.mrf.mxu0
          %v3581 = vadd.f32 0.0, %v3580
          %3582 = vmatmul.f32.gmra.mxu0 %v3494
          %v3583 = vpop.f32.mrf.mxu0
          %v3584 = vadd.f32 0.0, %v3583
          %3585 = vmatmul.f32.gmra.mxu0 %v3496
          %v3586 = vpop.f32.mrf.mxu0
          %v3587 = vadd.f32 0.0, %v3586
          %3588 = vmatmul.f32.gmra.mxu0 %v3498
          %v3589 = vpop.f32.mrf.mxu0
          %v3590 = vadd.f32 0.0, %v3589
          %3591 = vdwg.mxu0
          %3592 = vmatpush.msra.mxu0 0.0
          %3593 = vmatpush.msra.mxu0 0.0
          %3594 = vmatpush.msra.mxu0 0.0
          %3595 = vmatpush.msra.mxu0 0.0
          %3596 = vmatpush.msra.mxu0 0.0
          %3597 = vmatpush.msra.mxu0 0.0
          %3598 = vmatpush.msra.mxu0 0.0
          %3599 = vmatpush.msra.mxu0 0.0
          %3600 = vmatpush.msra.mxu0 0.0
          %3601 = vmatpush.msra.mxu0 0.0
          %3602 = vmatpush.msra.mxu0 %v3549
          %3603 = vmatpush.msra.mxu0 %v3520
          %3604 = vmatpush.msra.mxu0 %v3519
          %3605 = vmatpush.msra.mxu0 %v3518
          %3606 = vmatpush.msra.mxu0 %v3517
          %3607 = vmatpush.msra.mxu0 %v3516
          %3608 = vmatmul.f32.gmra.mxu0 %v3524
          %v3609 = vpop.f32.mrf.mxu0
          %v3610 = vadd.f32 %v3569, %v3609
          %3611 = vmatmul.f32.gmra.mxu0 %v3527
          %v3612 = vpop.f32.mrf.mxu0
          %v3613 = vadd.f32 %v3572, %v3612
          %3614 = vmatmul.f32.gmra.mxu0 %v3530
          %v3615 = vpop.f32.mrf.mxu0
          %v3616 = vadd.f32 %v3575, %v3615
          %3617 = vmatmul.f32.gmra.mxu0 %v3533
          %v3618 = vpop.f32.mrf.mxu0
          %v3619 = vadd.f32 %v3578, %v3618
          %3620 = vmatmul.f32.gmra.mxu0 %v3536
          %v3621 = vpop.f32.mrf.mxu0
          %v3622 = vadd.f32 %v3581, %v3621
          %3623 = vmatmul.f32.gmra.mxu0 %v3539
          %v3624 = vpop.f32.mrf.mxu0
          %v3625 = vadd.f32 %v3584, %v3624
          %3626 = vmatmul.f32.gmra.mxu0 %v3542
          %v3627 = vpop.f32.mrf.mxu0
          %v3628 = vadd.f32 %v3587, %v3627
          %3629 = vmatmul.f32.gmra.mxu0 %v3545
          %v3630 = vpop.f32.mrf.mxu0
          %v3631 = vadd.f32 %v3590, %v3630
          %3632 = vdwg.mxu0
          %s3633 = smul.u32 %s2268, 256
          %s3634 = scalar_lea.vmem [#allocation3], %s3633
          %vm3635 = vcmask 687104
          %3636 = vst.msk [vmem:[%s3634] sm:$0xff] %vm3635, %v3610
          %3637 = vst.msk [vmem:[%s3634 + $0x8] sm:$0xff] %vm3635, %v3613
          %3638 = vst.msk [vmem:[%s3634 + $0x10] sm:$0xff] %vm3635, %v3616
          %3639 = vst.msk [vmem:[%s3634 + $0x18] sm:$0xff] %vm3635, %v3619
          %3640 = vst.msk [vmem:[%s3634 + $0x20] sm:$0xff] %vm3635, %v3622
          %3641 = vst.msk [vmem:[%s3634 + $0x28] sm:$0xff] %vm3635, %v3625
          %3642 = vst.msk [vmem:[%s3634 + $0x30] sm:$0xff] %vm3635, %v3628
          %vm3643 = vcmask 680960
          %3644 = vst.msk [vmem:[%s3634 + $0x38] sm:$0x3] %vm3643, %v3631
          %3653 = vrot.lane.b32.xlu0 %v3610, 127
          %v3654 = vpop.permute.xlu0 %3653
          %3655 = vrot.lane.b32.xlu0 %v3613, 127
          %v3656 = vpop.permute.xlu0 %3655
          %3657 = vrot.lane.b32.xlu0 %v3616, 127
          %v3658 = vpop.permute.xlu0 %3657
          %3659 = vrot.lane.b32.xlu0 %v3619, 127
          %v3660 = vpop.permute.xlu0 %3659
          %3661 = vrot.lane.b32.xlu0 %v3622, 127
          %v3662 = vpop.permute.xlu0 %3661
          %3663 = vrot.lane.b32.xlu0 %v3625, 127
          %v3664 = vpop.permute.xlu0 %3663
          %3665 = vrot.lane.b32.xlu0 %v3628, 127
          %v3666 = vpop.permute.xlu0 %3665
          %3667 = vrot.lane.b32.xlu0 %v3631, 127
          %v3668 = vpop.permute.xlu0 %3667
          %s3677 = sadd.s32 64, %s3633
          %s3678 = scalar_lea.vmem [#allocation3], %s3677
          %3679 = vst.msk [vmem:[%s3678] sm:$0xff] %vm3635, %v3654
          %3680 = vst.msk [vmem:[%s3678 + $0x8] sm:$0xff] %vm3635, %v3656
          %3681 = vst.msk [vmem:[%s3678 + $0x10] sm:$0xff] %vm3635, %v3658
          %3682 = vst.msk [vmem:[%s3678 + $0x18] sm:$0xff] %vm3635, %v3660
          %3683 = vst.msk [vmem:[%s3678 + $0x20] sm:$0xff] %vm3635, %v3662
          %3684 = vst.msk [vmem:[%s3678 + $0x28] sm:$0xff] %vm3635, %v3664
          %3685 = vst.msk [vmem:[%s3678 + $0x30] sm:$0xff] %vm3635, %v3666
          %3686 = vst.msk [vmem:[%s3678 + $0x38] sm:$0x3] %vm3643, %v3668
          %s3687 = sadd.s32 128, %s3633
          %s3688 = scalar_lea.vmem [#allocation3], %s3687
          %vm3689 = vcmask 687105
          %3690 = vst.msk [vmem:[%s3688 - $0x1] sm:$0xfe] %vm3689, %v3610
          %3691 = vst.msk [vmem:[%s3688 + $0x7] sm:$0xff] %vm3635, %v3613
          %3692 = vst.msk [vmem:[%s3688 + $0xf] sm:$0xff] %vm3635, %v3616
          %3693 = vst.msk [vmem:[%s3688 + $0x17] sm:$0xff] %vm3635, %v3619
          %3694 = vst.msk [vmem:[%s3688 + $0x1f] sm:$0xff] %vm3635, %v3622
          %3695 = vst.msk [vmem:[%s3688 + $0x27] sm:$0xff] %vm3635, %v3625
          %3696 = vst.msk [vmem:[%s3688 + $0x2f] sm:$0xff] %vm3635, %v3628
          %vm3697 = vcmask 681984
          %3698 = vst.msk [vmem:[%s3688 + $0x37] sm:$0x7] %vm3697, %v3631
          %s3699 = sadd.s32 192, %s3633
          %s3700 = scalar_lea.vmem [#allocation3], %s3699
          %3701 = vst.msk [vmem:[%s3700 - $0x1] sm:$0xfe] %vm3689, %v3654
          %3702 = vst.msk [vmem:[%s3700 + $0x7] sm:$0xff] %vm3635, %v3656
          %3703 = vst.msk [vmem:[%s3700 + $0xf] sm:$0xff] %vm3635, %v3658
          %3704 = vst.msk [vmem:[%s3700 + $0x17] sm:$0xff] %vm3635, %v3660
          %3705 = vst.msk [vmem:[%s3700 + $0x1f] sm:$0xff] %vm3635, %v3662
          %3706 = vst.msk [vmem:[%s3700 + $0x27] sm:$0xff] %vm3635, %v3664
          %3707 = vst.msk [vmem:[%s3700 + $0x2f] sm:$0xff] %vm3635, %v3666
          %3708 = vst.msk [vmem:[%s3700 + $0x37] sm:$0x7] %vm3697, %v3668
        $region89: #{model_forward.2} parent=55 // loop_footer
          %s2272 = sadd.s32 1, %s2268
        $region90: #{model_forward.2} parent=55 // loop_footer_branch
          %2267 = sbr.rel target = $region86
        $region91: #{model_forward.2} parent=55 // loop_exit
          _
        loop: start=0, step=1, limit=4
        $region92: #{model_forward.2} parent=55 // loop_pre_header
          _
        $region93: #{model_forward.2} parent=55 // loop_header
          %s3710 = sphi 0, %s3714
          %p3711 = scmp.ge.s32.totalorder %s3710, 4
        $region94: #{model_forward.2} parent=55 // loop_header_branch
          %3713 = sbr.rel (%p3711) target = $region98
        $region95: #{model_forward.2} parent=55 // loop_body
          %s3715 = smul.u32 %s3710, 128
          %s3716 = sld [smem:[#allocation13 + %s3715]]
          %v3717 = vld [vmem:[#allocation3] sm:$0xff]
          %v3718 = vld [vmem:[#allocation3 + $0x8] sm:$0xff]
          %v3719 = vld [vmem:[#allocation3 + $0x10] sm:$0xff]
          %v3720 = vld [vmem:[#allocation3 + $0x18] sm:$0xff]
          %v3721 = vld [vmem:[#allocation3 + $0x20] sm:$0xff]
          %v3722 = vld [vmem:[#allocation3 + $0x28] sm:$0xff]
          %v3723 = vld [vmem:[#allocation3 + $0x30] sm:$0xff]
          %v3724 = vld [vmem:[#allocation3 + $0x38] sm:$0x3]
          %v3725 = vstv %s3716
          %v3726 = vmul.f32 %v3725, %v3717
          %v3727 = vmul.f32 %v3725, %v3718
          %v3728 = vmul.f32 %v3725, %v3719
          %v3729 = vmul.f32 %v3725, %v3720
          %v3730 = vmul.f32 %v3725, %v3721
          %v3731 = vmul.f32 %v3725, %v3722
          %v3732 = vmul.f32 %v3725, %v3723
          %v3733 = vmul.f32 %v3725, %v3724
          %s3734 = sadd.s32 %s3715, 1
          %s3735 = sld [smem:[#allocation13 + %s3734]]
          %s3736 = scalar_lea.vmem [#allocation3], 64
          %v3737 = vld [vmem:[%s3736] sm:$0xff]
          %v3738 = vld [vmem:[%s3736 + $0x8] sm:$0xff]
          %v3739 = vld [vmem:[%s3736 + $0x10] sm:$0xff]
          %v3740 = vld [vmem:[%s3736 + $0x18] sm:$0xff]
          %v3741 = vld [vmem:[%s3736 + $0x20] sm:$0xff]
          %v3742 = vld [vmem:[%s3736 + $0x28] sm:$0xff]
          %v3743 = vld [vmem:[%s3736 + $0x30] sm:$0xff]
          %v3744 = vld [vmem:[%s3736 + $0x38] sm:$0x3]
          %v3745 = vstv %s3735
          %v3746 = vmul.f32 %v3745, %v3737
          %v3747 = vmul.f32 %v3745, %v3738
          %v3748 = vmul.f32 %v3745, %v3739
          %v3749 = vmul.f32 %v3745, %v3740
          %v3750 = vmul.f32 %v3745, %v3741
          %v3751 = vmul.f32 %v3745, %v3742
          %v3752 = vmul.f32 %v3745, %v3743
          %v3753 = vmul.f32 %v3745, %v3744
          %v3754 = vadd.f32 %v3726, %v3746
          %v3755 = vadd.f32 %v3727, %v3747
          %v3756 = vadd.f32 %v3728, %v3748
          %v3757 = vadd.f32 %v3729, %v3749
          %v3758 = vadd.f32 %v3730, %v3750
          %v3759 = vadd.f32 %v3731, %v3751
          %v3760 = vadd.f32 %v3732, %v3752
          %v3761 = vadd.f32 %v3733, %v3753
          %s3762 = sadd.s32 %s3715, 2
          %s3763 = sld [smem:[#allocation13 + %s3762]]
          %s3764 = scalar_lea.vmem [#allocation3], 128
          %v3765 = vld [vmem:[%s3764] sm:$0xff]
          %v3766 = vld [vmem:[%s3764 + $0x8] sm:$0xff]
          %v3767 = vld [vmem:[%s3764 + $0x10] sm:$0xff]
          %v3768 = vld [vmem:[%s3764 + $0x18] sm:$0xff]
          %v3769 = vld [vmem:[%s3764 + $0x20] sm:$0xff]
          %v3770 = vld [vmem:[%s3764 + $0x28] sm:$0xff]
          %v3771 = vld [vmem:[%s3764 + $0x30] sm:$0xff]
          %v3772 = vld [vmem:[%s3764 + $0x38] sm:$0x3]
          %v3773 = vstv %s3763
          %v3774 = vmul.f32 %v3773, %v3765
          %v3775 = vmul.f32 %v3773, %v3766
          %v3776 = vmul.f32 %v3773, %v3767
          %v3777 = vmul.f32 %v3773, %v3768
          %v3778 = vmul.f32 %v3773, %v3769
          %v3779 = vmul.f32 %v3773, %v3770
          %v3780 = vmul.f32 %v3773, %v3771
          %v3781 = vmul.f32 %v3773, %v3772
          %v3782 = vadd.f32 %v3754, %v3774
          %v3783 = vadd.f32 %v3755, %v3775
          %v3784 = vadd.f32 %v3756, %v3776
          %v3785 = vadd.f32 %v3757, %v3777
          %v3786 = vadd.f32 %v3758, %v3778
          %v3787 = vadd.f32 %v3759, %v3779
          %v3788 = vadd.f32 %v3760, %v3780
          %v3789 = vadd.f32 %v3761, %v3781
          %s3790 = sadd.s32 %s3715, 3
          %s3791 = sld [smem:[#allocation13 + %s3790]]
          %s3792 = scalar_lea.vmem [#allocation3], 192
          %v3793 = vld [vmem:[%s3792] sm:$0xff]
          %v3794 = vld [vmem:[%s3792 + $0x8] sm:$0xff]
          %v3795 = vld [vmem:[%s3792 + $0x10] sm:$0xff]
          %v3796 = vld [vmem:[%s3792 + $0x18] sm:$0xff]
          %v3797 = vld [vmem:[%s3792 + $0x20] sm:$0xff]
          %v3798 = vld [vmem:[%s3792 + $0x28] sm:$0xff]
          %v3799 = vld [vmem:[%s3792 + $0x30] sm:$0xff]
          %v3800 = vld [vmem:[%s3792 + $0x38] sm:$0x3]
          %v3801 = vstv %s3791
          %v3802 = vmul.f32 %v3801, %v3793
          %v3803 = vmul.f32 %v3801, %v3794
          %v3804 = vmul.f32 %v3801, %v3795
          %v3805 = vmul.f32 %v3801, %v3796
          %v3806 = vmul.f32 %v3801, %v3797
          %v3807 = vmul.f32 %v3801, %v3798
          %v3808 = vmul.f32 %v3801, %v3799
          %v3809 = vmul.f32 %v3801, %v3800
          %v3810 = vadd.f32 %v3782, %v3802
          %v3811 = vadd.f32 %v3783, %v3803
          %v3812 = vadd.f32 %v3784, %v3804
          %v3813 = vadd.f32 %v3785, %v3805
          %v3814 = vadd.f32 %v3786, %v3806
          %v3815 = vadd.f32 %v3787, %v3807
          %v3816 = vadd.f32 %v3788, %v3808
          %v3817 = vadd.f32 %v3789, %v3809
          %s3818 = sadd.s32 %s3715, 4
          %s3819 = sld [smem:[#allocation13 + %s3818]]
          %s3820 = scalar_lea.vmem [#allocation3], 256
          %v3821 = vld [vmem:[%s3820] sm:$0xff]
          %v3822 = vld [vmem:[%s3820 + $0x8] sm:$0xff]
          %v3823 = vld [vmem:[%s3820 + $0x10] sm:$0xff]
          %v3824 = vld [vmem:[%s3820 + $0x18] sm:$0xff]
          %v3825 = vld [vmem:[%s3820 + $0x20] sm:$0xff]
          %v3826 = vld [vmem:[%s3820 + $0x28] sm:$0xff]
          %v3827 = vld [vmem:[%s3820 + $0x30] sm:$0xff]
          %v3828 = vld [vmem:[%s3820 + $0x38] sm:$0x3]
          %v3829 = vstv %s3819
          %v3830 = vmul.f32 %v3829, %v3821
          %v3831 = vmul.f32 %v3829, %v3822
          %v3832 = vmul.f32 %v3829, %v3823
          %v3833 = vmul.f32 %v3829, %v3824
          %v3834 = vmul.f32 %v3829, %v3825
          %v3835 = vmul.f32 %v3829, %v3826
          %v3836 = vmul.f32 %v3829, %v3827
          %v3837 = vmul.f32 %v3829, %v3828
          %v3838 = vadd.f32 %v3810, %v3830
          %v3839 = vadd.f32 %v3811, %v3831
          %v3840 = vadd.f32 %v3812, %v3832
          %v3841 = vadd.f32 %v3813, %v3833
          %v3842 = vadd.f32 %v3814, %v3834
          %v3843 = vadd.f32 %v3815, %v3835
          %v3844 = vadd.f32 %v3816, %v3836
          %v3845 = vadd.f32 %v3817, %v3837
          %s3846 = sadd.s32 %s3715, 5
          %s3847 = sld [smem:[#allocation13 + %s3846]]
          %s3848 = scalar_lea.vmem [#allocation3], 320
          %v3849 = vld [vmem:[%s3848] sm:$0xff]
          %v3850 = vld [vmem:[%s3848 + $0x8] sm:$0xff]
          %v3851 = vld [vmem:[%s3848 + $0x10] sm:$0xff]
          %v3852 = vld [vmem:[%s3848 + $0x18] sm:$0xff]
          %v3853 = vld [vmem:[%s3848 + $0x20] sm:$0xff]
          %v3854 = vld [vmem:[%s3848 + $0x28] sm:$0xff]
          %v3855 = vld [vmem:[%s3848 + $0x30] sm:$0xff]
          %v3856 = vld [vmem:[%s3848 + $0x38] sm:$0x3]
          %v3857 = vstv %s3847
          %v3858 = vmul.f32 %v3857, %v3849
          %v3859 = vmul.f32 %v3857, %v3850
          %v3860 = vmul.f32 %v3857, %v3851
          %v3861 = vmul.f32 %v3857, %v3852
          %v3862 = vmul.f32 %v3857, %v3853
          %v3863 = vmul.f32 %v3857, %v3854
          %v3864 = vmul.f32 %v3857, %v3855
          %v3865 = vmul.f32 %v3857, %v3856
          %v3866 = vadd.f32 %v3838, %v3858
          %v3867 = vadd.f32 %v3839, %v3859
          %v3868 = vadd.f32 %v3840, %v3860
          %v3869 = vadd.f32 %v3841, %v3861
          %v3870 = vadd.f32 %v3842, %v3862
          %v3871 = vadd.f32 %v3843, %v3863
          %v3872 = vadd.f32 %v3844, %v3864
          %v3873 = vadd.f32 %v3845, %v3865
          %s3874 = sadd.s32 %s3715, 6
          %s3875 = sld [smem:[#allocation13 + %s3874]]
          %s3876 = scalar_lea.vmem [#allocation3], 384
          %v3877 = vld [vmem:[%s3876] sm:$0xff]
          %v3878 = vld [vmem:[%s3876 + $0x8] sm:$0xff]
          %v3879 = vld [vmem:[%s3876 + $0x10] sm:$0xff]
          %v3880 = vld [vmem:[%s3876 + $0x18] sm:$0xff]
          %v3881 = vld [vmem:[%s3876 + $0x20] sm:$0xff]
          %v3882 = vld [vmem:[%s3876 + $0x28] sm:$0xff]
          %v3883 = vld [vmem:[%s3876 + $0x30] sm:$0xff]
          %v3884 = vld [vmem:[%s3876 + $0x38] sm:$0x3]
          %v3885 = vstv %s3875
          %v3886 = vmul.f32 %v3885, %v3877
          %v3887 = vmul.f32 %v3885, %v3878
          %v3888 = vmul.f32 %v3885, %v3879
          %v3889 = vmul.f32 %v3885, %v3880
          %v3890 = vmul.f32 %v3885, %v3881
          %v3891 = vmul.f32 %v3885, %v3882
          %v3892 = vmul.f32 %v3885, %v3883
          %v3893 = vmul.f32 %v3885, %v3884
          %v3894 = vadd.f32 %v3866, %v3886
          %v3895 = vadd.f32 %v3867, %v3887
          %v3896 = vadd.f32 %v3868, %v3888
          %v3897 = vadd.f32 %v3869, %v3889
          %v3898 = vadd.f32 %v3870, %v3890
          %v3899 = vadd.f32 %v3871, %v3891
          %v3900 = vadd.f32 %v3872, %v3892
          %v3901 = vadd.f32 %v3873, %v3893
          %s3902 = sadd.s32 %s3715, 7
          %s3903 = sld [smem:[#allocation13 + %s3902]]
          %s3904 = scalar_lea.vmem [#allocation3], 448
          %v3905 = vld [vmem:[%s3904] sm:$0xff]
          %v3906 = vld [vmem:[%s3904 + $0x8] sm:$0xff]
          %v3907 = vld [vmem:[%s3904 + $0x10] sm:$0xff]
          %v3908 = vld [vmem:[%s3904 + $0x18] sm:$0xff]
          %v3909 = vld [vmem:[%s3904 + $0x20] sm:$0xff]
          %v3910 = vld [vmem:[%s3904 + $0x28] sm:$0xff]
          %v3911 = vld [vmem:[%s3904 + $0x30] sm:$0xff]
          %v3912 = vld [vmem:[%s3904 + $0x38] sm:$0x3]
          %v3913 = vstv %s3903
          %v3914 = vmul.f32 %v3913, %v3905
          %v3915 = vmul.f32 %v3913, %v3906
          %v3916 = vmul.f32 %v3913, %v3907
          %v3917 = vmul.f32 %v3913, %v3908
          %v3918 = vmul.f32 %v3913, %v3909
          %v3919 = vmul.f32 %v3913, %v3910
          %v3920 = vmul.f32 %v3913, %v3911
          %v3921 = vmul.f32 %v3913, %v3912
          %v3922 = vadd.f32 %v3894, %v3914
          %v3923 = vadd.f32 %v3895, %v3915
          %v3924 = vadd.f32 %v3896, %v3916
          %v3925 = vadd.f32 %v3897, %v3917
          %v3926 = vadd.f32 %v3898, %v3918
          %v3927 = vadd.f32 %v3899, %v3919
          %v3928 = vadd.f32 %v3900, %v3920
          %v3929 = vadd.f32 %v3901, %v3921
          %s3930 = sadd.s32 %s3715, 8
          %s3931 = sld [smem:[#allocation13 + %s3930]]
          %s3932 = scalar_lea.vmem [#allocation3], 512
          %v3933 = vld [vmem:[%s3932] sm:$0xff]
          %v3934 = vld [vmem:[%s3932 + $0x8] sm:$0xff]
          %v3935 = vld [vmem:[%s3932 + $0x10] sm:$0xff]
          %v3936 = vld [vmem:[%s3932 + $0x18] sm:$0xff]
          %v3937 = vld [vmem:[%s3932 + $0x20] sm:$0xff]
          %v3938 = vld [vmem:[%s3932 + $0x28] sm:$0xff]
          %v3939 = vld [vmem:[%s3932 + $0x30] sm:$0xff]
          %v3940 = vld [vmem:[%s3932 + $0x38] sm:$0x3]
          %v3941 = vstv %s3931
          %v3942 = vmul.f32 %v3941, %v3933
          %v3943 = vmul.f32 %v3941, %v3934
          %v3944 = vmul.f32 %v3941, %v3935
          %v3945 = vmul.f32 %v3941, %v3936
          %v3946 = vmul.f32 %v3941, %v3937
          %v3947 = vmul.f32 %v3941, %v3938
          %v3948 = vmul.f32 %v3941, %v3939
          %v3949 = vmul.f32 %v3941, %v3940
          %v3950 = vadd.f32 %v3922, %v3942
          %v3951 = vadd.f32 %v3923, %v3943
          %v3952 = vadd.f32 %v3924, %v3944
          %v3953 = vadd.f32 %v3925, %v3945
          %v3954 = vadd.f32 %v3926, %v3946
          %v3955 = vadd.f32 %v3927, %v3947
          %v3956 = vadd.f32 %v3928, %v3948
          %v3957 = vadd.f32 %v3929, %v3949
          %s3958 = sadd.s32 %s3715, 9
          %s3959 = sld [smem:[#allocation13 + %s3958]]
          %s3960 = scalar_lea.vmem [#allocation3], 576
          %v3961 = vld [vmem:[%s3960] sm:$0xff]
          %v3962 = vld [vmem:[%s3960 + $0x8] sm:$0xff]
          %v3963 = vld [vmem:[%s3960 + $0x10] sm:$0xff]
          %v3964 = vld [vmem:[%s3960 + $0x18] sm:$0xff]
          %v3965 = vld [vmem:[%s3960 + $0x20] sm:$0xff]
          %v3966 = vld [vmem:[%s3960 + $0x28] sm:$0xff]
          %v3967 = vld [vmem:[%s3960 + $0x30] sm:$0xff]
          %v3968 = vld [vmem:[%s3960 + $0x38] sm:$0x3]
          %v3969 = vstv %s3959
          %v3970 = vmul.f32 %v3969, %v3961
          %v3971 = vmul.f32 %v3969, %v3962
          %v3972 = vmul.f32 %v3969, %v3963
          %v3973 = vmul.f32 %v3969, %v3964
          %v3974 = vmul.f32 %v3969, %v3965
          %v3975 = vmul.f32 %v3969, %v3966
          %v3976 = vmul.f32 %v3969, %v3967
          %v3977 = vmul.f32 %v3969, %v3968
          %v3978 = vadd.f32 %v3950, %v3970
          %v3979 = vadd.f32 %v3951, %v3971
          %v3980 = vadd.f32 %v3952, %v3972
          %v3981 = vadd.f32 %v3953, %v3973
          %v3982 = vadd.f32 %v3954, %v3974
          %v3983 = vadd.f32 %v3955, %v3975
          %v3984 = vadd.f32 %v3956, %v3976
          %v3985 = vadd.f32 %v3957, %v3977
          %s3986 = sadd.s32 %s3715, 10
          %s3987 = sld [smem:[#allocation13 + %s3986]]
          %s3988 = scalar_lea.vmem [#allocation3], 640
          %v3989 = vld [vmem:[%s3988] sm:$0xff]
          %v3990 = vld [vmem:[%s3988 + $0x8] sm:$0xff]
          %v3991 = vld [vmem:[%s3988 + $0x10] sm:$0xff]
          %v3992 = vld [vmem:[%s3988 + $0x18] sm:$0xff]
          %v3993 = vld [vmem:[%s3988 + $0x20] sm:$0xff]
          %v3994 = vld [vmem:[%s3988 + $0x28] sm:$0xff]
          %v3995 = vld [vmem:[%s3988 + $0x30] sm:$0xff]
          %v3996 = vld [vmem:[%s3988 + $0x38] sm:$0x3]
          %v3997 = vstv %s3987
          %v3998 = vmul.f32 %v3997, %v3989
          %v3999 = vmul.f32 %v3997, %v3990
          %v4000 = vmul.f32 %v3997, %v3991
          %v4001 = vmul.f32 %v3997, %v3992
          %v4002 = vmul.f32 %v3997, %v3993
          %v4003 = vmul.f32 %v3997, %v3994
          %v4004 = vmul.f32 %v3997, %v3995
          %v4005 = vmul.f32 %v3997, %v3996
          %v4006 = vadd.f32 %v3978, %v3998
          %v4007 = vadd.f32 %v3979, %v3999
          %v4008 = vadd.f32 %v3980, %v4000
          %v4009 = vadd.f32 %v3981, %v4001
          %v4010 = vadd.f32 %v3982, %v4002
          %v4011 = vadd.f32 %v3983, %v4003
          %v4012 = vadd.f32 %v3984, %v4004
          %v4013 = vadd.f32 %v3985, %v4005
          %s4014 = sadd.s32 %s3715, 11
          %s4015 = sld [smem:[#allocation13 + %s4014]]
          %s4016 = scalar_lea.vmem [#allocation3], 704
          %v4017 = vld [vmem:[%s4016] sm:$0xff]
          %v4018 = vld [vmem:[%s4016 + $0x8] sm:$0xff]
          %v4019 = vld [vmem:[%s4016 + $0x10] sm:$0xff]
          %v4020 = vld [vmem:[%s4016 + $0x18] sm:$0xff]
          %v4021 = vld [vmem:[%s4016 + $0x20] sm:$0xff]
          %v4022 = vld [vmem:[%s4016 + $0x28] sm:$0xff]
          %v4023 = vld [vmem:[%s4016 + $0x30] sm:$0xff]
          %v4024 = vld [vmem:[%s4016 + $0x38] sm:$0x3]
          %v4025 = vstv %s4015
          %v4026 = vmul.f32 %v4025, %v4017
          %v4027 = vmul.f32 %v4025, %v4018
          %v4028 = vmul.f32 %v4025, %v4019
          %v4029 = vmul.f32 %v4025, %v4020
          %v4030 = vmul.f32 %v4025, %v4021
          %v4031 = vmul.f32 %v4025, %v4022
          %v4032 = vmul.f32 %v4025, %v4023
          %v4033 = vmul.f32 %v4025, %v4024
          %v4034 = vadd.f32 %v4006, %v4026
          %v4035 = vadd.f32 %v4007, %v4027
          %v4036 = vadd.f32 %v4008, %v4028
          %v4037 = vadd.f32 %v4009, %v4029
          %v4038 = vadd.f32 %v4010, %v4030
          %v4039 = vadd.f32 %v4011, %v4031
          %v4040 = vadd.f32 %v4012, %v4032
          %v4041 = vadd.f32 %v4013, %v4033
          %s4042 = sadd.s32 %s3715, 12
          %s4043 = sld [smem:[#allocation13 + %s4042]]
          %s4044 = scalar_lea.vmem [#allocation3], 768
          %v4045 = vld [vmem:[%s4044] sm:$0xff]
          %v4046 = vld [vmem:[%s4044 + $0x8] sm:$0xff]
          %v4047 = vld [vmem:[%s4044 + $0x10] sm:$0xff]
          %v4048 = vld [vmem:[%s4044 + $0x18] sm:$0xff]
          %v4049 = vld [vmem:[%s4044 + $0x20] sm:$0xff]
          %v4050 = vld [vmem:[%s4044 + $0x28] sm:$0xff]
          %v4051 = vld [vmem:[%s4044 + $0x30] sm:$0xff]
          %v4052 = vld [vmem:[%s4044 + $0x38] sm:$0x3]
          %v4053 = vstv %s4043
          %v4054 = vmul.f32 %v4053, %v4045
          %v4055 = vmul.f32 %v4053, %v4046
          %v4056 = vmul.f32 %v4053, %v4047
          %v4057 = vmul.f32 %v4053, %v4048
          %v4058 = vmul.f32 %v4053, %v4049
          %v4059 = vmul.f32 %v4053, %v4050
          %v4060 = vmul.f32 %v4053, %v4051
          %v4061 = vmul.f32 %v4053, %v4052
          %v4062 = vadd.f32 %v4034, %v4054
          %v4063 = vadd.f32 %v4035, %v4055
          %v4064 = vadd.f32 %v4036, %v4056
          %v4065 = vadd.f32 %v4037, %v4057
          %v4066 = vadd.f32 %v4038, %v4058
          %v4067 = vadd.f32 %v4039, %v4059
          %v4068 = vadd.f32 %v4040, %v4060
          %v4069 = vadd.f32 %v4041, %v4061
          %s4070 = sadd.s32 %s3715, 13
          %s4071 = sld [smem:[#allocation13 + %s4070]]
          %s4072 = scalar_lea.vmem [#allocation3], 832
          %v4073 = vld [vmem:[%s4072] sm:$0xff]
          %v4074 = vld [vmem:[%s4072 + $0x8] sm:$0xff]
          %v4075 = vld [vmem:[%s4072 + $0x10] sm:$0xff]
          %v4076 = vld [vmem:[%s4072 + $0x18] sm:$0xff]
          %v4077 = vld [vmem:[%s4072 + $0x20] sm:$0xff]
          %v4078 = vld [vmem:[%s4072 + $0x28] sm:$0xff]
          %v4079 = vld [vmem:[%s4072 + $0x30] sm:$0xff]
          %v4080 = vld [vmem:[%s4072 + $0x38] sm:$0x3]
          %v4081 = vstv %s4071
          %v4082 = vmul.f32 %v4081, %v4073
          %v4083 = vmul.f32 %v4081, %v4074
          %v4084 = vmul.f32 %v4081, %v4075
          %v4085 = vmul.f32 %v4081, %v4076
          %v4086 = vmul.f32 %v4081, %v4077
          %v4087 = vmul.f32 %v4081, %v4078
          %v4088 = vmul.f32 %v4081, %v4079
          %v4089 = vmul.f32 %v4081, %v4080
          %v4090 = vadd.f32 %v4062, %v4082
          %v4091 = vadd.f32 %v4063, %v4083
          %v4092 = vadd.f32 %v4064, %v4084
          %v4093 = vadd.f32 %v4065, %v4085
          %v4094 = vadd.f32 %v4066, %v4086
          %v4095 = vadd.f32 %v4067, %v4087
          %v4096 = vadd.f32 %v4068, %v4088
          %v4097 = vadd.f32 %v4069, %v4089
          %s4098 = sadd.s32 %s3715, 14
          %s4099 = sld [smem:[#allocation13 + %s4098]]
          %s4100 = scalar_lea.vmem [#allocation3], 896
          %v4101 = vld [vmem:[%s4100] sm:$0xff]
          %v4102 = vld [vmem:[%s4100 + $0x8] sm:$0xff]
          %v4103 = vld [vmem:[%s4100 + $0x10] sm:$0xff]
          %v4104 = vld [vmem:[%s4100 + $0x18] sm:$0xff]
          %v4105 = vld [vmem:[%s4100 + $0x20] sm:$0xff]
          %v4106 = vld [vmem:[%s4100 + $0x28] sm:$0xff]
          %v4107 = vld [vmem:[%s4100 + $0x30] sm:$0xff]
          %v4108 = vld [vmem:[%s4100 + $0x38] sm:$0x3]
          %v4109 = vstv %s4099
          %v4110 = vmul.f32 %v4109, %v4101
          %v4111 = vmul.f32 %v4109, %v4102
          %v4112 = vmul.f32 %v4109, %v4103
          %v4113 = vmul.f32 %v4109, %v4104
          %v4114 = vmul.f32 %v4109, %v4105
          %v4115 = vmul.f32 %v4109, %v4106
          %v4116 = vmul.f32 %v4109, %v4107
          %v4117 = vmul.f32 %v4109, %v4108
          %v4118 = vadd.f32 %v4090, %v4110
          %v4119 = vadd.f32 %v4091, %v4111
          %v4120 = vadd.f32 %v4092, %v4112
          %v4121 = vadd.f32 %v4093, %v4113
          %v4122 = vadd.f32 %v4094, %v4114
          %v4123 = vadd.f32 %v4095, %v4115
          %v4124 = vadd.f32 %v4096, %v4116
          %v4125 = vadd.f32 %v4097, %v4117
          %s4126 = sadd.s32 %s3715, 15
          %s4127 = sld [smem:[#allocation13 + %s4126]]
          %s4128 = scalar_lea.vmem [#allocation3], 960
          %v4129 = vld [vmem:[%s4128] sm:$0xff]
          %v4130 = vld [vmem:[%s4128 + $0x8] sm:$0xff]
          %v4131 = vld [vmem:[%s4128 + $0x10] sm:$0xff]
          %v4132 = vld [vmem:[%s4128 + $0x18] sm:$0xff]
          %v4133 = vld [vmem:[%s4128 + $0x20] sm:$0xff]
          %v4134 = vld [vmem:[%s4128 + $0x28] sm:$0xff]
          %v4135 = vld [vmem:[%s4128 + $0x30] sm:$0xff]
          %v4136 = vld [vmem:[%s4128 + $0x38] sm:$0x3]
          %v4137 = vstv %s4127
          %v4138 = vmul.f32 %v4137, %v4129
          %v4139 = vmul.f32 %v4137, %v4130
          %v4140 = vmul.f32 %v4137, %v4131
          %v4141 = vmul.f32 %v4137, %v4132
          %v4142 = vmul.f32 %v4137, %v4133
          %v4143 = vmul.f32 %v4137, %v4134
          %v4144 = vmul.f32 %v4137, %v4135
          %v4145 = vmul.f32 %v4137, %v4136
          %v4146 = vadd.f32 %v4118, %v4138
          %v4147 = vadd.f32 %v4119, %v4139
          %v4148 = vadd.f32 %v4120, %v4140
          %v4149 = vadd.f32 %v4121, %v4141
          %v4150 = vadd.f32 %v4122, %v4142
          %v4151 = vadd.f32 %v4123, %v4143
          %v4152 = vadd.f32 %v4124, %v4144
          %v4153 = vadd.f32 %v4125, %v4145
          %s4154 = sadd.s32 %s3715, 16
          %s4155 = sld [smem:[#allocation13 + %s4154]]
          %s4156 = scalar_lea.vmem [#allocation3], 1024
          %v4157 = vld [vmem:[%s4156] sm:$0xff]
          %v4158 = vld [vmem:[%s4156 + $0x8] sm:$0xff]
          %v4159 = vld [vmem:[%s4156 + $0x10] sm:$0xff]
          %v4160 = vld [vmem:[%s4156 + $0x18] sm:$0xff]
          %v4161 = vld [vmem:[%s4156 + $0x20] sm:$0xff]
          %v4162 = vld [vmem:[%s4156 + $0x28] sm:$0xff]
          %v4163 = vld [vmem:[%s4156 + $0x30] sm:$0xff]
          %v4164 = vld [vmem:[%s4156 + $0x38] sm:$0x3]
          %v4165 = vstv %s4155
          %v4166 = vmul.f32 %v4165, %v4157
          %v4167 = vmul.f32 %v4165, %v4158
          %v4168 = vmul.f32 %v4165, %v4159
          %v4169 = vmul.f32 %v4165, %v4160
          %v4170 = vmul.f32 %v4165, %v4161
          %v4171 = vmul.f32 %v4165, %v4162
          %v4172 = vmul.f32 %v4165, %v4163
          %v4173 = vmul.f32 %v4165, %v4164
          %v4174 = vadd.f32 %v4146, %v4166
          %v4175 = vadd.f32 %v4147, %v4167
          %v4176 = vadd.f32 %v4148, %v4168
          %v4177 = vadd.f32 %v4149, %v4169
          %v4178 = vadd.f32 %v4150, %v4170
          %v4179 = vadd.f32 %v4151, %v4171
          %v4180 = vadd.f32 %v4152, %v4172
          %v4181 = vadd.f32 %v4153, %v4173
          %s4182 = sadd.s32 %s3715, 17
          %s4183 = sld [smem:[#allocation13 + %s4182]]
          %s4184 = scalar_lea.vmem [#allocation3], 1088
          %v4185 = vld [vmem:[%s4184] sm:$0xff]
          %v4186 = vld [vmem:[%s4184 + $0x8] sm:$0xff]
          %v4187 = vld [vmem:[%s4184 + $0x10] sm:$0xff]
          %v4188 = vld [vmem:[%s4184 + $0x18] sm:$0xff]
          %v4189 = vld [vmem:[%s4184 + $0x20] sm:$0xff]
          %v4190 = vld [vmem:[%s4184 + $0x28] sm:$0xff]
          %v4191 = vld [vmem:[%s4184 + $0x30] sm:$0xff]
          %v4192 = vld [vmem:[%s4184 + $0x38] sm:$0x3]
          %v4193 = vstv %s4183
          %v4194 = vmul.f32 %v4193, %v4185
          %v4195 = vmul.f32 %v4193, %v4186
          %v4196 = vmul.f32 %v4193, %v4187
          %v4197 = vmul.f32 %v4193, %v4188
          %v4198 = vmul.f32 %v4193, %v4189
          %v4199 = vmul.f32 %v4193, %v4190
          %v4200 = vmul.f32 %v4193, %v4191
          %v4201 = vmul.f32 %v4193, %v4192
          %v4202 = vadd.f32 %v4174, %v4194
          %v4203 = vadd.f32 %v4175, %v4195
          %v4204 = vadd.f32 %v4176, %v4196
          %v4205 = vadd.f32 %v4177, %v4197
          %v4206 = vadd.f32 %v4178, %v4198
          %v4207 = vadd.f32 %v4179, %v4199
          %v4208 = vadd.f32 %v4180, %v4200
          %v4209 = vadd.f32 %v4181, %v4201
          %s4210 = sadd.s32 %s3715, 18
          %s4211 = sld [smem:[#allocation13 + %s4210]]
          %s4212 = scalar_lea.vmem [#allocation3], 1152
          %v4213 = vld [vmem:[%s4212] sm:$0xff]
          %v4214 = vld [vmem:[%s4212 + $0x8] sm:$0xff]
          %v4215 = vld [vmem:[%s4212 + $0x10] sm:$0xff]
          %v4216 = vld [vmem:[%s4212 + $0x18] sm:$0xff]
          %v4217 = vld [vmem:[%s4212 + $0x20] sm:$0xff]
          %v4218 = vld [vmem:[%s4212 + $0x28] sm:$0xff]
          %v4219 = vld [vmem:[%s4212 + $0x30] sm:$0xff]
          %v4220 = vld [vmem:[%s4212 + $0x38] sm:$0x3]
          %v4221 = vstv %s4211
          %v4222 = vmul.f32 %v4221, %v4213
          %v4223 = vmul.f32 %v4221, %v4214
          %v4224 = vmul.f32 %v4221, %v4215
          %v4225 = vmul.f32 %v4221, %v4216
          %v4226 = vmul.f32 %v4221, %v4217
          %v4227 = vmul.f32 %v4221, %v4218
          %v4228 = vmul.f32 %v4221, %v4219
          %v4229 = vmul.f32 %v4221, %v4220
          %v4230 = vadd.f32 %v4202, %v4222
          %v4231 = vadd.f32 %v4203, %v4223
          %v4232 = vadd.f32 %v4204, %v4224
          %v4233 = vadd.f32 %v4205, %v4225
          %v4234 = vadd.f32 %v4206, %v4226
          %v4235 = vadd.f32 %v4207, %v4227
          %v4236 = vadd.f32 %v4208, %v4228
          %v4237 = vadd.f32 %v4209, %v4229
          %s4238 = sadd.s32 %s3715, 19
          %s4239 = sld [smem:[#allocation13 + %s4238]]
          %s4240 = scalar_lea.vmem [#allocation3], 1216
          %v4241 = vld [vmem:[%s4240] sm:$0xff]
          %v4242 = vld [vmem:[%s4240 + $0x8] sm:$0xff]
          %v4243 = vld [vmem:[%s4240 + $0x10] sm:$0xff]
          %v4244 = vld [vmem:[%s4240 + $0x18] sm:$0xff]
          %v4245 = vld [vmem:[%s4240 + $0x20] sm:$0xff]
          %v4246 = vld [vmem:[%s4240 + $0x28] sm:$0xff]
          %v4247 = vld [vmem:[%s4240 + $0x30] sm:$0xff]
          %v4248 = vld [vmem:[%s4240 + $0x38] sm:$0x3]
          %v4249 = vstv %s4239
          %v4250 = vmul.f32 %v4249, %v4241
          %v4251 = vmul.f32 %v4249, %v4242
          %v4252 = vmul.f32 %v4249, %v4243
          %v4253 = vmul.f32 %v4249, %v4244
          %v4254 = vmul.f32 %v4249, %v4245
          %v4255 = vmul.f32 %v4249, %v4246
          %v4256 = vmul.f32 %v4249, %v4247
          %v4257 = vmul.f32 %v4249, %v4248
          %v4258 = vadd.f32 %v4230, %v4250
          %v4259 = vadd.f32 %v4231, %v4251
          %v4260 = vadd.f32 %v4232, %v4252
          %v4261 = vadd.f32 %v4233, %v4253
          %v4262 = vadd.f32 %v4234, %v4254
          %v4263 = vadd.f32 %v4235, %v4255
          %v4264 = vadd.f32 %v4236, %v4256
          %v4265 = vadd.f32 %v4237, %v4257
          %s4266 = sadd.s32 %s3715, 20
          %s4267 = sld [smem:[#allocation13 + %s4266]]
          %s4268 = scalar_lea.vmem [#allocation3], 1280
          %v4269 = vld [vmem:[%s4268] sm:$0xff]
          %v4270 = vld [vmem:[%s4268 + $0x8] sm:$0xff]
          %v4271 = vld [vmem:[%s4268 + $0x10] sm:$0xff]
          %v4272 = vld [vmem:[%s4268 + $0x18] sm:$0xff]
          %v4273 = vld [vmem:[%s4268 + $0x20] sm:$0xff]
          %v4274 = vld [vmem:[%s4268 + $0x28] sm:$0xff]
          %v4275 = vld [vmem:[%s4268 + $0x30] sm:$0xff]
          %v4276 = vld [vmem:[%s4268 + $0x38] sm:$0x3]
          %v4277 = vstv %s4267
          %v4278 = vmul.f32 %v4277, %v4269
          %v4279 = vmul.f32 %v4277, %v4270
          %v4280 = vmul.f32 %v4277, %v4271
          %v4281 = vmul.f32 %v4277, %v4272
          %v4282 = vmul.f32 %v4277, %v4273
          %v4283 = vmul.f32 %v4277, %v4274
          %v4284 = vmul.f32 %v4277, %v4275
          %v4285 = vmul.f32 %v4277, %v4276
          %v4286 = vadd.f32 %v4258, %v4278
          %v4287 = vadd.f32 %v4259, %v4279
          %v4288 = vadd.f32 %v4260, %v4280
          %v4289 = vadd.f32 %v4261, %v4281
          %v4290 = vadd.f32 %v4262, %v4282
          %v4291 = vadd.f32 %v4263, %v4283
          %v4292 = vadd.f32 %v4264, %v4284
          %v4293 = vadd.f32 %v4265, %v4285
          %s4294 = sadd.s32 %s3715, 21
          %s4295 = sld [smem:[#allocation13 + %s4294]]
          %s4296 = scalar_lea.vmem [#allocation3], 1344
          %v4297 = vld [vmem:[%s4296] sm:$0xff]
          %v4298 = vld [vmem:[%s4296 + $0x8] sm:$0xff]
          %v4299 = vld [vmem:[%s4296 + $0x10] sm:$0xff]
          %v4300 = vld [vmem:[%s4296 + $0x18] sm:$0xff]
          %v4301 = vld [vmem:[%s4296 + $0x20] sm:$0xff]
          %v4302 = vld [vmem:[%s4296 + $0x28] sm:$0xff]
          %v4303 = vld [vmem:[%s4296 + $0x30] sm:$0xff]
          %v4304 = vld [vmem:[%s4296 + $0x38] sm:$0x3]
          %v4305 = vstv %s4295
          %v4306 = vmul.f32 %v4305, %v4297
          %v4307 = vmul.f32 %v4305, %v4298
          %v4308 = vmul.f32 %v4305, %v4299
          %v4309 = vmul.f32 %v4305, %v4300
          %v4310 = vmul.f32 %v4305, %v4301
          %v4311 = vmul.f32 %v4305, %v4302
          %v4312 = vmul.f32 %v4305, %v4303
          %v4313 = vmul.f32 %v4305, %v4304
          %v4314 = vadd.f32 %v4286, %v4306
          %v4315 = vadd.f32 %v4287, %v4307
          %v4316 = vadd.f32 %v4288, %v4308
          %v4317 = vadd.f32 %v4289, %v4309
          %v4318 = vadd.f32 %v4290, %v4310
          %v4319 = vadd.f32 %v4291, %v4311
          %v4320 = vadd.f32 %v4292, %v4312
          %v4321 = vadd.f32 %v4293, %v4313
          %s4322 = sadd.s32 %s3715, 22
          %s4323 = sld [smem:[#allocation13 + %s4322]]
          %s4324 = scalar_lea.vmem [#allocation3], 1408
          %v4325 = vld [vmem:[%s4324] sm:$0xff]
          %v4326 = vld [vmem:[%s4324 + $0x8] sm:$0xff]
          %v4327 = vld [vmem:[%s4324 + $0x10] sm:$0xff]
          %v4328 = vld [vmem:[%s4324 + $0x18] sm:$0xff]
          %v4329 = vld [vmem:[%s4324 + $0x20] sm:$0xff]
          %v4330 = vld [vmem:[%s4324 + $0x28] sm:$0xff]
          %v4331 = vld [vmem:[%s4324 + $0x30] sm:$0xff]
          %v4332 = vld [vmem:[%s4324 + $0x38] sm:$0x3]
          %v4333 = vstv %s4323
          %v4334 = vmul.f32 %v4333, %v4325
          %v4335 = vmul.f32 %v4333, %v4326
          %v4336 = vmul.f32 %v4333, %v4327
          %v4337 = vmul.f32 %v4333, %v4328
          %v4338 = vmul.f32 %v4333, %v4329
          %v4339 = vmul.f32 %v4333, %v4330
          %v4340 = vmul.f32 %v4333, %v4331
          %v4341 = vmul.f32 %v4333, %v4332
          %v4342 = vadd.f32 %v4314, %v4334
          %v4343 = vadd.f32 %v4315, %v4335
          %v4344 = vadd.f32 %v4316, %v4336
          %v4345 = vadd.f32 %v4317, %v4337
          %v4346 = vadd.f32 %v4318, %v4338
          %v4347 = vadd.f32 %v4319, %v4339
          %v4348 = vadd.f32 %v4320, %v4340
          %v4349 = vadd.f32 %v4321, %v4341
          %s4350 = sadd.s32 %s3715, 23
          %s4351 = sld [smem:[#allocation13 + %s4350]]
          %s4352 = scalar_lea.vmem [#allocation3], 1472
          %v4353 = vld [vmem:[%s4352] sm:$0xff]
          %v4354 = vld [vmem:[%s4352 + $0x8] sm:$0xff]
          %v4355 = vld [vmem:[%s4352 + $0x10] sm:$0xff]
          %v4356 = vld [vmem:[%s4352 + $0x18] sm:$0xff]
          %v4357 = vld [vmem:[%s4352 + $0x20] sm:$0xff]
          %v4358 = vld [vmem:[%s4352 + $0x28] sm:$0xff]
          %v4359 = vld [vmem:[%s4352 + $0x30] sm:$0xff]
          %v4360 = vld [vmem:[%s4352 + $0x38] sm:$0x3]
          %v4361 = vstv %s4351
          %v4362 = vmul.f32 %v4361, %v4353
          %v4363 = vmul.f32 %v4361, %v4354
          %v4364 = vmul.f32 %v4361, %v4355
          %v4365 = vmul.f32 %v4361, %v4356
          %v4366 = vmul.f32 %v4361, %v4357
          %v4367 = vmul.f32 %v4361, %v4358
          %v4368 = vmul.f32 %v4361, %v4359
          %v4369 = vmul.f32 %v4361, %v4360
          %v4370 = vadd.f32 %v4342, %v4362
          %v4371 = vadd.f32 %v4343, %v4363
          %v4372 = vadd.f32 %v4344, %v4364
          %v4373 = vadd.f32 %v4345, %v4365
          %v4374 = vadd.f32 %v4346, %v4366
          %v4375 = vadd.f32 %v4347, %v4367
          %v4376 = vadd.f32 %v4348, %v4368
          %v4377 = vadd.f32 %v4349, %v4369
          %s4378 = sadd.s32 %s3715, 24
          %s4379 = sld [smem:[#allocation13 + %s4378]]
          %s4380 = scalar_lea.vmem [#allocation3], 1536
          %v4381 = vld [vmem:[%s4380] sm:$0xff]
          %v4382 = vld [vmem:[%s4380 + $0x8] sm:$0xff]
          %v4383 = vld [vmem:[%s4380 + $0x10] sm:$0xff]
          %v4384 = vld [vmem:[%s4380 + $0x18] sm:$0xff]
          %v4385 = vld [vmem:[%s4380 + $0x20] sm:$0xff]
          %v4386 = vld [vmem:[%s4380 + $0x28] sm:$0xff]
          %v4387 = vld [vmem:[%s4380 + $0x30] sm:$0xff]
          %v4388 = vld [vmem:[%s4380 + $0x38] sm:$0x3]
          %v4389 = vstv %s4379
          %v4390 = vmul.f32 %v4389, %v4381
          %v4391 = vmul.f32 %v4389, %v4382
          %v4392 = vmul.f32 %v4389, %v4383
          %v4393 = vmul.f32 %v4389, %v4384
          %v4394 = vmul.f32 %v4389, %v4385
          %v4395 = vmul.f32 %v4389, %v4386
          %v4396 = vmul.f32 %v4389, %v4387
          %v4397 = vmul.f32 %v4389, %v4388
          %v4398 = vadd.f32 %v4370, %v4390
          %v4399 = vadd.f32 %v4371, %v4391
          %v4400 = vadd.f32 %v4372, %v4392
          %v4401 = vadd.f32 %v4373, %v4393
          %v4402 = vadd.f32 %v4374, %v4394
          %v4403 = vadd.f32 %v4375, %v4395
          %v4404 = vadd.f32 %v4376, %v4396
          %v4405 = vadd.f32 %v4377, %v4397
          %s4406 = sadd.s32 %s3715, 25
          %s4407 = sld [smem:[#allocation13 + %s4406]]
          %s4408 = scalar_lea.vmem [#allocation3], 1600
          %v4409 = vld [vmem:[%s4408] sm:$0xff]
          %v4410 = vld [vmem:[%s4408 + $0x8] sm:$0xff]
          %v4411 = vld [vmem:[%s4408 + $0x10] sm:$0xff]
          %v4412 = vld [vmem:[%s4408 + $0x18] sm:$0xff]
          %v4413 = vld [vmem:[%s4408 + $0x20] sm:$0xff]
          %v4414 = vld [vmem:[%s4408 + $0x28] sm:$0xff]
          %v4415 = vld [vmem:[%s4408 + $0x30] sm:$0xff]
          %v4416 = vld [vmem:[%s4408 + $0x38] sm:$0x3]
          %v4417 = vstv %s4407
          %v4418 = vmul.f32 %v4417, %v4409
          %v4419 = vmul.f32 %v4417, %v4410
          %v4420 = vmul.f32 %v4417, %v4411
          %v4421 = vmul.f32 %v4417, %v4412
          %v4422 = vmul.f32 %v4417, %v4413
          %v4423 = vmul.f32 %v4417, %v4414
          %v4424 = vmul.f32 %v4417, %v4415
          %v4425 = vmul.f32 %v4417, %v4416
          %v4426 = vadd.f32 %v4398, %v4418
          %v4427 = vadd.f32 %v4399, %v4419
          %v4428 = vadd.f32 %v4400, %v4420
          %v4429 = vadd.f32 %v4401, %v4421
          %v4430 = vadd.f32 %v4402, %v4422
          %v4431 = vadd.f32 %v4403, %v4423
          %v4432 = vadd.f32 %v4404, %v4424
          %v4433 = vadd.f32 %v4405, %v4425
          %s4434 = sadd.s32 %s3715, 26
          %s4435 = sld [smem:[#allocation13 + %s4434]]
          %s4436 = scalar_lea.vmem [#allocation3], 1664
          %v4437 = vld [vmem:[%s4436] sm:$0xff]
          %v4438 = vld [vmem:[%s4436 + $0x8] sm:$0xff]
          %v4439 = vld [vmem:[%s4436 + $0x10] sm:$0xff]
          %v4440 = vld [vmem:[%s4436 + $0x18] sm:$0xff]
          %v4441 = vld [vmem:[%s4436 + $0x20] sm:$0xff]
          %v4442 = vld [vmem:[%s4436 + $0x28] sm:$0xff]
          %v4443 = vld [vmem:[%s4436 + $0x30] sm:$0xff]
          %v4444 = vld [vmem:[%s4436 + $0x38] sm:$0x3]
          %v4445 = vstv %s4435
          %v4446 = vmul.f32 %v4445, %v4437
          %v4447 = vmul.f32 %v4445, %v4438
          %v4448 = vmul.f32 %v4445, %v4439
          %v4449 = vmul.f32 %v4445, %v4440
          %v4450 = vmul.f32 %v4445, %v4441
          %v4451 = vmul.f32 %v4445, %v4442
          %v4452 = vmul.f32 %v4445, %v4443
          %v4453 = vmul.f32 %v4445, %v4444
          %v4454 = vadd.f32 %v4426, %v4446
          %v4455 = vadd.f32 %v4427, %v4447
          %v4456 = vadd.f32 %v4428, %v4448
          %v4457 = vadd.f32 %v4429, %v4449
          %v4458 = vadd.f32 %v4430, %v4450
          %v4459 = vadd.f32 %v4431, %v4451
          %v4460 = vadd.f32 %v4432, %v4452
          %v4461 = vadd.f32 %v4433, %v4453
          %s4462 = sadd.s32 %s3715, 27
          %s4463 = sld [smem:[#allocation13 + %s4462]]
          %s4464 = scalar_lea.vmem [#allocation3], 1728
          %v4465 = vld [vmem:[%s4464] sm:$0xff]
          %v4466 = vld [vmem:[%s4464 + $0x8] sm:$0xff]
          %v4467 = vld [vmem:[%s4464 + $0x10] sm:$0xff]
          %v4468 = vld [vmem:[%s4464 + $0x18] sm:$0xff]
          %v4469 = vld [vmem:[%s4464 + $0x20] sm:$0xff]
          %v4470 = vld [vmem:[%s4464 + $0x28] sm:$0xff]
          %v4471 = vld [vmem:[%s4464 + $0x30] sm:$0xff]
          %v4472 = vld [vmem:[%s4464 + $0x38] sm:$0x3]
          %v4473 = vstv %s4463
          %v4474 = vmul.f32 %v4473, %v4465
          %v4475 = vmul.f32 %v4473, %v4466
          %v4476 = vmul.f32 %v4473, %v4467
          %v4477 = vmul.f32 %v4473, %v4468
          %v4478 = vmul.f32 %v4473, %v4469
          %v4479 = vmul.f32 %v4473, %v4470
          %v4480 = vmul.f32 %v4473, %v4471
          %v4481 = vmul.f32 %v4473, %v4472
          %v4482 = vadd.f32 %v4454, %v4474
          %v4483 = vadd.f32 %v4455, %v4475
          %v4484 = vadd.f32 %v4456, %v4476
          %v4485 = vadd.f32 %v4457, %v4477
          %v4486 = vadd.f32 %v4458, %v4478
          %v4487 = vadd.f32 %v4459, %v4479
          %v4488 = vadd.f32 %v4460, %v4480
          %v4489 = vadd.f32 %v4461, %v4481
          %s4490 = sadd.s32 %s3715, 28
          %s4491 = sld [smem:[#allocation13 + %s4490]]
          %s4492 = scalar_lea.vmem [#allocation3], 1792
          %v4493 = vld [vmem:[%s4492] sm:$0xff]
          %v4494 = vld [vmem:[%s4492 + $0x8] sm:$0xff]
          %v4495 = vld [vmem:[%s4492 + $0x10] sm:$0xff]
          %v4496 = vld [vmem:[%s4492 + $0x18] sm:$0xff]
          %v4497 = vld [vmem:[%s4492 + $0x20] sm:$0xff]
          %v4498 = vld [vmem:[%s4492 + $0x28] sm:$0xff]
          %v4499 = vld [vmem:[%s4492 + $0x30] sm:$0xff]
          %v4500 = vld [vmem:[%s4492 + $0x38] sm:$0x3]
          %v4501 = vstv %s4491
          %v4502 = vmul.f32 %v4501, %v4493
          %v4503 = vmul.f32 %v4501, %v4494
          %v4504 = vmul.f32 %v4501, %v4495
          %v4505 = vmul.f32 %v4501, %v4496
          %v4506 = vmul.f32 %v4501, %v4497
          %v4507 = vmul.f32 %v4501, %v4498
          %v4508 = vmul.f32 %v4501, %v4499
          %v4509 = vmul.f32 %v4501, %v4500
          %v4510 = vadd.f32 %v4482, %v4502
          %v4511 = vadd.f32 %v4483, %v4503
          %v4512 = vadd.f32 %v4484, %v4504
          %v4513 = vadd.f32 %v4485, %v4505
          %v4514 = vadd.f32 %v4486, %v4506
          %v4515 = vadd.f32 %v4487, %v4507
          %v4516 = vadd.f32 %v4488, %v4508
          %v4517 = vadd.f32 %v4489, %v4509
          %s4518 = sadd.s32 %s3715, 29
          %s4519 = sld [smem:[#allocation13 + %s4518]]
          %s4520 = scalar_lea.vmem [#allocation3], 1856
          %v4521 = vld [vmem:[%s4520] sm:$0xff]
          %v4522 = vld [vmem:[%s4520 + $0x8] sm:$0xff]
          %v4523 = vld [vmem:[%s4520 + $0x10] sm:$0xff]
          %v4524 = vld [vmem:[%s4520 + $0x18] sm:$0xff]
          %v4525 = vld [vmem:[%s4520 + $0x20] sm:$0xff]
          %v4526 = vld [vmem:[%s4520 + $0x28] sm:$0xff]
          %v4527 = vld [vmem:[%s4520 + $0x30] sm:$0xff]
          %v4528 = vld [vmem:[%s4520 + $0x38] sm:$0x3]
          %v4529 = vstv %s4519
          %v4530 = vmul.f32 %v4529, %v4521
          %v4531 = vmul.f32 %v4529, %v4522
          %v4532 = vmul.f32 %v4529, %v4523
          %v4533 = vmul.f32 %v4529, %v4524
          %v4534 = vmul.f32 %v4529, %v4525
          %v4535 = vmul.f32 %v4529, %v4526
          %v4536 = vmul.f32 %v4529, %v4527
          %v4537 = vmul.f32 %v4529, %v4528
          %v4538 = vadd.f32 %v4510, %v4530
          %v4539 = vadd.f32 %v4511, %v4531
          %v4540 = vadd.f32 %v4512, %v4532
          %v4541 = vadd.f32 %v4513, %v4533
          %v4542 = vadd.f32 %v4514, %v4534
          %v4543 = vadd.f32 %v4515, %v4535
          %v4544 = vadd.f32 %v4516, %v4536
          %v4545 = vadd.f32 %v4517, %v4537
          %s4546 = sadd.s32 %s3715, 30
          %s4547 = sld [smem:[#allocation13 + %s4546]]
          %s4548 = scalar_lea.vmem [#allocation3], 1920
          %v4549 = vld [vmem:[%s4548] sm:$0xff]
          %v4550 = vld [vmem:[%s4548 + $0x8] sm:$0xff]
          %v4551 = vld [vmem:[%s4548 + $0x10] sm:$0xff]
          %v4552 = vld [vmem:[%s4548 + $0x18] sm:$0xff]
          %v4553 = vld [vmem:[%s4548 + $0x20] sm:$0xff]
          %v4554 = vld [vmem:[%s4548 + $0x28] sm:$0xff]
          %v4555 = vld [vmem:[%s4548 + $0x30] sm:$0xff]
          %v4556 = vld [vmem:[%s4548 + $0x38] sm:$0x3]
          %v4557 = vstv %s4547
          %v4558 = vmul.f32 %v4557, %v4549
          %v4559 = vmul.f32 %v4557, %v4550
          %v4560 = vmul.f32 %v4557, %v4551
          %v4561 = vmul.f32 %v4557, %v4552
          %v4562 = vmul.f32 %v4557, %v4553
          %v4563 = vmul.f32 %v4557, %v4554
          %v4564 = vmul.f32 %v4557, %v4555
          %v4565 = vmul.f32 %v4557, %v4556
          %v4566 = vadd.f32 %v4538, %v4558
          %v4567 = vadd.f32 %v4539, %v4559
          %v4568 = vadd.f32 %v4540, %v4560
          %v4569 = vadd.f32 %v4541, %v4561
          %v4570 = vadd.f32 %v4542, %v4562
          %v4571 = vadd.f32 %v4543, %v4563
          %v4572 = vadd.f32 %v4544, %v4564
          %v4573 = vadd.f32 %v4545, %v4565
          %s4574 = sadd.s32 %s3715, 31
          %s4575 = sld [smem:[#allocation13 + %s4574]]
          %s4576 = scalar_lea.vmem [#allocation3], 1984
          %v4577 = vld [vmem:[%s4576] sm:$0xff]
          %v4578 = vld [vmem:[%s4576 + $0x8] sm:$0xff]
          %v4579 = vld [vmem:[%s4576 + $0x10] sm:$0xff]
          %v4580 = vld [vmem:[%s4576 + $0x18] sm:$0xff]
          %v4581 = vld [vmem:[%s4576 + $0x20] sm:$0xff]
          %v4582 = vld [vmem:[%s4576 + $0x28] sm:$0xff]
          %v4583 = vld [vmem:[%s4576 + $0x30] sm:$0xff]
          %v4584 = vld [vmem:[%s4576 + $0x38] sm:$0x3]
          %v4585 = vstv %s4575
          %v4586 = vmul.f32 %v4585, %v4577
          %v4587 = vmul.f32 %v4585, %v4578
          %v4588 = vmul.f32 %v4585, %v4579
          %v4589 = vmul.f32 %v4585, %v4580
          %v4590 = vmul.f32 %v4585, %v4581
          %v4591 = vmul.f32 %v4585, %v4582
          %v4592 = vmul.f32 %v4585, %v4583
          %v4593 = vmul.f32 %v4585, %v4584
          %v4594 = vadd.f32 %v4566, %v4586
          %v4595 = vadd.f32 %v4567, %v4587
          %v4596 = vadd.f32 %v4568, %v4588
          %v4597 = vadd.f32 %v4569, %v4589
          %v4598 = vadd.f32 %v4570, %v4590
          %v4599 = vadd.f32 %v4571, %v4591
          %v4600 = vadd.f32 %v4572, %v4592
          %v4601 = vadd.f32 %v4573, %v4593
          %s4602 = sld [smem:[#allocation14 + %s3710]]
          %v4603 = vstv %s4602
          %v4604 = vadd.f32 %v4594, %v4603
          %v4605 = vadd.f32 %v4595, %v4603
          %v4606 = vadd.f32 %v4596, %v4603
          %v4607 = vadd.f32 %v4597, %v4603
          %v4608 = vadd.f32 %v4598, %v4603
          %v4609 = vadd.f32 %v4599, %v4603
          %v4610 = vadd.f32 %v4600, %v4603
          %v4611 = vadd.f32 %v4601, %v4603
          %v4612 = vmax.f32 %v4604, 0.0
          %v4613 = vmax.f32 %v4605, 0.0
          %v4614 = vmax.f32 %v4606, 0.0
          %v4615 = vmax.f32 %v4607, 0.0
          %v4616 = vmax.f32 %v4608, 0.0
          %v4617 = vmax.f32 %v4609, 0.0
          %v4618 = vmax.f32 %v4610, 0.0
          %v4619 = vmax.f32 %v4611, 0.0
          %v4628 = vrot.slane %v4612, 1
          %v4629 = vrot.slane %v4613, 1
          %v4630 = vsel %vm951, %v4628, %v4629
          %v4631 = vrot.slane %v4614, 1
          %v4632 = vsel %vm951, %v4629, %v4631
          %v4633 = vrot.slane %v4615, 1
          %v4634 = vsel %vm951, %v4631, %v4633
          %v4635 = vrot.slane %v4616, 1
          %v4636 = vsel %vm951, %v4633, %v4635
          %v4637 = vrot.slane %v4617, 1
          %v4638 = vsel %vm951, %v4635, %v4637
          %v4639 = vrot.slane %v4618, 1
          %v4640 = vsel %vm951, %v4637, %v4639
          %v4641 = vrot.slane %v4619, 1
          %v4642 = vsel %vm951, %v4639, %v4641
          %v4651 = vmax.f32 %v4612, %v4630
          %v4652 = vmax.f32 %v4613, %v4632
          %v4653 = vmax.f32 %v4614, %v4634
          %v4654 = vmax.f32 %v4615, %v4636
          %v4655 = vmax.f32 %v4616, %v4638
          %v4656 = vmax.f32 %v4617, %v4640
          %v4657 = vmax.f32 %v4618, %v4642
          %v4658 = vmax.f32 %v4619, %v4641
          %v4659 = vld [vmem:[#allocation9] sm:$0xff]
          %v4660 = vld [vmem:[#allocation9 + $0x8] sm:$0xff]
          %v4661 = vld [vmem:[#allocation9 + $0x10] sm:$0xff]
          %v4662 = vld [vmem:[#allocation9 + $0x18] sm:$0x1f]
          %vm4663 = vcmask 465920
          %v4665 = vsel %vm4663, %v4659, 0
          %v4668 = vsel %vm4663, %v4660, 0
          %v4671 = vsel %vm4663, %v4661, 0
          %v4674 = vsel %vm4663, %v4662, 0
          %vm4676 = vcmask 1040384
          %v4678 = vsel %vm4676, %v4658, 0
          %4680 = vmatpush.msra.mxu0 0.0
          %4681 = vmatpush.msra.mxu0 0.0
          %4682 = vmatpush.msra.mxu0 0.0
          %4683 = vmatpush.msra.mxu0 0.0
          %4684 = vmatpush.msra.mxu0 0.0
          %4685 = vmatpush.msra.mxu0 0.0
          %4686 = vmatpush.msra.mxu0 0.0
          %4687 = vmatpush.msra.mxu0 0.0
          %4688 = vmatpush.msra.mxu0 %v4678
          %4689 = vmatpush.msra.mxu0 %v4657
          %4690 = vmatpush.msra.mxu0 %v4656
          %4691 = vmatpush.msra.mxu0 %v4655
          %4692 = vmatpush.msra.mxu0 %v4654
          %4693 = vmatpush.msra.mxu0 %v4653
          %4694 = vmatpush.msra.mxu0 %v4652
          %4695 = vmatpush.msra.mxu0 %v4651
          %4696 = vmatmul.f32.gmra.mxu0 %v4665
          %v4697 = vpop.f32.mrf.mxu0
          %v4698 = vadd.f32 0.0, %v4697
          %4699 = vmatmul.f32.gmra.mxu0 %v4668
          %v4700 = vpop.f32.mrf.mxu0
          %v4701 = vadd.f32 0.0, %v4700
          %4702 = vmatmul.f32.gmra.mxu0 %v4671
          %v4703 = vpop.f32.mrf.mxu0
          %v4704 = vadd.f32 0.0, %v4703
          %4705 = vmatmul.f32.gmra.mxu0 %v4674
          %v4706 = vpop.f32.mrf.mxu0
          %v4707 = vadd.f32 0.0, %v4706
          %4708 = vdwg.mxu0
          %4713 = vrot.lane.b32.xlu0 %v4698, 127
          %v4714 = vpop.permute.xlu0 %4713
          %4715 = vrot.lane.b32.xlu0 %v4701, 127
          %v4716 = vpop.permute.xlu0 %4715
          %4717 = vrot.lane.b32.xlu0 %v4704, 127
          %v4718 = vpop.permute.xlu0 %4717
          %4719 = vrot.lane.b32.xlu0 %v4707, 127
          %v4720 = vpop.permute.xlu0 %4719
          %v4725 = vmax.f32 %v4698, %v4714
          %v4726 = vmax.f32 %v4701, %v4716
          %v4727 = vmax.f32 %v4704, %v4718
          %v4728 = vmax.f32 %v4707, %v4720
          %v4729 = vld [vmem:[%s4] sm:$0xff]
          %v4730 = vld [vmem:[%s4 + $0x8] sm:$0xff]
          %v4731 = vld [vmem:[%s4 + $0x10] sm:$0xff]
          %v4732 = vld [vmem:[%s4 + $0x18] sm:$0xff]
          %v4733 = vld [vmem:[%s4 + $0x20] sm:$0xff]
          %v4734 = vld [vmem:[%s4 + $0x28] sm:$0xff]
          %v4735 = vld [vmem:[%s4 + $0x30] sm:$0xff]
          %v4736 = vld [vmem:[%s4 + $0x38] sm:$0xff]
          %v4737 = vld [vmem:[%s4 + $0x40] sm:$0xff]
          %v4738 = vld [vmem:[%s4 + $0x48] sm:$0xff]
          %v4739 = vld [vmem:[%s4 + $0x50] sm:$0x7]
          %vm4740 = vcmask 678912
          %v4742 = vsel %vm4740, %v4725, 0
          %v4745 = vsel %vm4740, %v4726, 0
          %v4748 = vsel %vm4740, %v4727, 0
          %v4751 = vsel %vm4740, %v4728, 0
          %vm4753 = vcmask 1042432
          %v4755 = vsel %vm4753, %v4739, 0
          %4757 = vmatpush.msra.mxu0 0.0
          %4758 = vmatpush.msra.mxu0 0.0
          %4759 = vmatpush.msra.mxu0 0.0
          %4760 = vmatpush.msra.mxu0 0.0
          %4761 = vmatpush.msra.mxu0 0.0
          %4762 = vmatpush.msra.mxu0 %v4755
          %4763 = vmatpush.msra.mxu0 %v4738
          %4764 = vmatpush.msra.mxu0 %v4737
          %4765 = vmatpush.msra.mxu0 %v4736
          %4766 = vmatpush.msra.mxu0 %v4735
          %4767 = vmatpush.msra.mxu0 %v4734
          %4768 = vmatpush.msra.mxu0 %v4733
          %4769 = vmatpush.msra.mxu0 %v4732
          %4770 = vmatpush.msra.mxu0 %v4731
          %4771 = vmatpush.msra.mxu0 %v4730
          %4772 = vmatpush.msra.mxu0 %v4729
          %4773 = vmatmul.f32.gmra.mxu0 %v4742
          %v4774 = vpop.f32.mrf.mxu0
          %v4775 = vadd.f32 0.0, %v4774
          %4776 = vmatmul.f32.gmra.mxu0 %v4745
          %v4777 = vpop.f32.mrf.mxu0
          %v4778 = vadd.f32 0.0, %v4777
          %4779 = vmatmul.f32.gmra.mxu0 %v4748
          %v4780 = vpop.f32.mrf.mxu0
          %v4781 = vadd.f32 0.0, %v4780
          %4782 = vmatmul.f32.gmra.mxu0 %v4751
          %v4783 = vpop.f32.mrf.mxu0
          %v4784 = vadd.f32 0.0, %v4783
          %4785 = vdwg.mxu0
          %s4786 = smul.u32 %s3710, 32
          %s4787 = scalar_lea.vmem %s434, %s4786
          %4788 = vst.msk [vmem:[%s4787] sm:$0xff] %vm466, %v4775
          %4789 = vst.msk [vmem:[%s4787 + $0x8] sm:$0xff] %vm466, %v4778
          %4790 = vst.msk [vmem:[%s4787 + $0x10] sm:$0xff] %vm466, %v4781
          %vm4791 = vcmask 339968
          %4792 = vst.msk [vmem:[%s4787 + $0x18] sm:$0x1f] %vm4791, %v4784
        $region96: #{model_forward.2} parent=55 // loop_footer
          %s3714 = sadd.s32 1, %s3710
        $region97: #{model_forward.2} parent=55 // loop_footer_branch
          %3709 = sbr.rel target = $region93
        $region98: #{model_forward.2} parent=55 // loop_exit
          _
        %p4793 = scmp.lt.s32.totalorder %s25, 1
        %s4794 = scalar_select %p4793, %s25, 1
        %s4795 = smul.addr %s4794, 16
        %s4796 = smul.addr %s4795, 8
        %s4797 = scalar_lea.vmem %s9, %s4796
        // Predicated region
        $region99: #{model_forward.2} parent=55 // pred_check
          %p4798 = pneg %p237
        $region100: #{model_forward.2} parent=55 // pred_check_branch
          %4800 = sbr.rel (%p4798) target = $region102
        $region101: #{model_forward.2} parent=55 // pred_region
          _
        $region102: #{model_forward.2} parent=55 // pred_fallthru
          _
      $region56: #{model_forward.2} parent=5 // pred_fallthru
        _
      %p4801 = scmp.le.s32.totalorder 2, %s20
      // Predicated region
      $region103: #{model_forward.2} parent=5 // pred_check
        %p4802 = pneg %p4801
      $region104: #{model_forward.2} parent=5 // pred_check_branch
        %4804 = sbr.rel (%p4802) target = $region106
      $region105: #{model_forward.2} parent=5 // pred_region
        %s4805 = ssub.s32 %s20, 2
        // Predicated region
        $region107: #{model_forward.2} parent=105 // pred_check
          %p4806 = pneg %p243
        $region108: #{model_forward.2} parent=105 // pred_check_branch
          %4808 = sbr.rel (%p4806) target = $region110
        $region109: #{model_forward.2} parent=105 // pred_region
          %p4809 = scmp.lt.s32.totalorder %s26, 1
          %s4810 = scalar_select %p4809, %s26, 1
          %s4811 = smul.addr %s4810, 16
          %s4812 = smul.addr %s4811, 8
          %s4813 = scalar_lea.vmem %s9, %s4812
        $region110: #{model_forward.2} parent=105 // pred_fallthru
          _
      $region106: #{model_forward.2} parent=5 // pred_fallthru
        _
    $region6: #{model_forward.2} parent=1 // loop_footer
      %s24 = sadd.s32 1, %s20
    $region7: #{model_forward.2} parent=1 // loop_footer_branch
      %19 = sbr.rel target = $region3
    $region8: #{model_forward.2} parent=1 // loop_exit
      _
    %4814 = vsyncpa [#allocation5], 1
    %s4815 = scalar_lea.sflag [#allocation5], 1
    %4816 = vsyncpa %s4815, 1
    %4817 = vsyncpa [#allocation8], 1
    %4818 = vsyncpa [#allocation6], 1
    %s4819 = scalar_lea.sflag [#allocation6], 1
    %4820 = vsyncpa %s4819, 1
    %4821 = vsyncpa [#allocation12], 1
    %4822 = vsyncpa [#allocation15], 1

</llo_original>
